<compile_context>
chip_gen: v5e
topology: v5e:2x2
jax: 0.10.0
libtpu: 0.0.40
codegen_flags: <defaults>
</compile_context>

<pallas_src>
import math

import jax
import jax.numpy as jnp
from jax.experimental import pallas as pl
from jax.experimental.pallas import tpu as pltpu

Z_DIM = 50
BN_EPS = 1e-5


def _vmem_spec():
    return pl.BlockSpec(memory_space=pltpu.MemorySpace.VMEM)


# --------------------------------------------------------------------------
# Fused decoder kernel
# --------------------------------------------------------------------------
def decoder_kernel(
    x_ref, wlin_ref, blin_ref,
    t1_ref, b1_ref, s1_ref, s1t_ref, g1_ref, be1_ref,
    tt1_ref, bt1_ref,
    t2_ref, b2_ref, s2_ref, s2t_ref, g2_ref, be2_ref,
    tt2_ref, bt2_ref,
    t3_ref, b3_ref, s3_ref, s3t_ref, g3_ref, be3_ref,
    o_ref,
    xp1, xp2, xp3,
):
    B = x_ref.shape[0]
    f32 = jnp.float32

    def conv_bn_act(xp_ref, H, t_ref, b_ref, s_ref, st_ref, g_ref, be_ref, act):
        # xp_ref: (B, H+2, (W+2)*Cin) padded input, flat-lane layout.
        # Returns (B*H, W*Cout) activation.
        W = s_ref.shape[0] // s_ref.shape[1]     # lanes per channel group
        L = xp_ref.shape[2]
        xpv = xp_ref[...]
        acc = None
        for dy in range(3):                      # 3 big matmuls (one per kernel row)
            rows = xpv[:, dy:dy + H, :].reshape(B * H, L)
            part = jnp.dot(rows, t_ref[dy], preferred_element_type=f32)
            acc = part if acc is None else acc + part
        # conv bias, broadcast (1, Cout) -> (1, W*Cout) via selector matmul
        y = acc + jnp.dot(b_ref[...], st_ref[...], preferred_element_type=f32)

        # BatchNorm2d (training mode): stats over (N, H, W), biased variance.
        n = float(B * H * W)
        ch_sum = jnp.sum(jnp.dot(y, s_ref[...], preferred_element_type=f32),
                         axis=0, keepdims=True)                     # (1, Cout)
        mean_c = ch_sum / n
        mean_l = jnp.dot(mean_c, st_ref[...], preferred_element_type=f32)
        d = y - mean_l
        var_c = jnp.sum(jnp.dot(d * d, s_ref[...], preferred_element_type=f32),
                        axis=0, keepdims=True) / n                  # (1, Cout)
        scale_c = jax.lax.rsqrt(var_c + BN_EPS) * g_ref[...]
        scale_l = jnp.dot(scale_c, st_ref[...], preferred_element_type=f32)
        shift_l = jnp.dot(be_ref[...], st_ref[...], preferred_element_type=f32)
        yn = d * scale_l + shift_l
        return jnp.maximum(yn, 0.0) if act == "relu" else jnp.tanh(yn)

    def conv_transpose_into(xp_out, act, tt_ref, btl_ref, H):
        # act: (B*H, W*Cin). Writes the padded (B, 2H+2, (2W+2)*Cout) input of
        # the next conv directly (depth-to-space + zero padding in VMEM).
        L2 = xp_out.shape[2]
        y0 = jnp.dot(act, tt_ref[0], preferred_element_type=f32) + btl_ref[...]
        y1 = jnp.dot(act, tt_ref[1], preferred_element_type=f32) + btl_ref[...]
        y0r = y0.reshape(B, H, L2)
        y1r = y1.reshape(B, H, L2)
        zrow = jnp.zeros((B, L2), f32)
        xp_out[:, 0, :] = zrow                   # top padding row
        xp_out[:, 2 * H + 1, :] = zrow           # bottom padding row
        for h in range(H):                       # row-interleave (sub-pixel dy)
            xp_out[:, 1 + 2 * h, :] = y0r[:, h, :]
            xp_out[:, 2 + 2 * h, :] = y1r[:, h, :]

    # ---- Stage 0: Linear(50 -> 512) written as padded NHWC rows of xp1 ----
    x = x_ref[...]
    zrow = jnp.zeros((B, xp1.shape[2]), f32)
    xp1[:, 0, :] = zrow
    xp1[:, 9, :] = zrow
    for h in range(8):
        xp1[:, 1 + h, :] = (
            jnp.dot(x, wlin_ref[h], preferred_element_type=f32) + blin_ref[h])

    # ---- conv / bn / act / convT pipeline, all VMEM-resident -------------
    a1 = conv_bn_act(xp1, 8, t1_ref, b1_ref, s1_ref, s1t_ref, g1_ref, be1_ref, "relu")
    conv_transpose_into(xp2, a1, tt1_ref, bt1_ref, 8)
    a2 = conv_bn_act(xp2, 16, t2_ref, b2_ref, s2_ref, s2t_ref, g2_ref, be2_ref, "relu")
    conv_transpose_into(xp3, a2, tt2_ref, bt2_ref, 16)
    a3 = conv_bn_act(xp3, 32, t3_ref, b3_ref, s3_ref, s3t_ref, g3_ref, be3_ref, "tanh")

    o_ref[...] = a3                              # (B*32, 32*3) lane-dense output


# --------------------------------------------------------------------------
# Wrapper-side weight preparation (layout plumbing, done once)
# --------------------------------------------------------------------------
def _conv_toeplitz(w_hwio, W_in):
    # w_hwio: (3, 3, Cin, Cout) -> (3, (W_in+2)*Cin, W_in*Cout)
    mats = []
    for dy in range(3):
        t = None
        for dx in range(3):
            e = jnp.eye(W_in + 2, W_in, k=-dx, dtype=w_hwio.dtype)
            blk = jnp.kron(e, w_hwio[dy, dx])
            t = blk if t is None else t + blk
        mats.append(t)
    return jnp.stack(mats, 0)


def _convt_toeplitz(w, W_in):
    # w: (2, 2, Cin, Cout) -> (2, W_in*Cin, (2*W_in+2)*Cout); output columns are
    # already laid out in the *padded* coordinate system of the next conv.
    mats = []
    for dy in range(2):
        t = None
        for dx in range(2):
            p = jnp.zeros((W_in, 2 * W_in + 2), w.dtype)
            p = p.at[jnp.arange(W_in), 1 + 2 * jnp.arange(W_in) + dx].set(1.0)
            blk = jnp.kron(p, w[dy, dx])
            t = blk if t is None else t + blk
        mats.append(t)
    return jnp.stack(mats, 0)


def _convt_bias_lanes(b, W_in):
    # (Cout,) -> (1, (2*W_in+2)*Cout), zero on the padding lane blocks.
    z = jnp.zeros_like(b)
    return jnp.concatenate([z, jnp.tile(b, 2 * W_in), z])[None, :]


def _selectors(W_in, C):
    # s:  (W*C, C)  sums the W channel groups;  st: (C, W*C) broadcasts back.
    s = jnp.tile(jnp.eye(C, dtype=jnp.float32), (W_in, 1))
    return s, s.T


def _linear_prep(w, b):
    # w: (512, 50) torch layout, output rows ordered (c, h, w). Returns
    # per-output-row weights (8, 50, 80) producing padded flat-lane rows.
    w4 = w.reshape(8, 8, 8, Z_DIM)               # (c, h, w, z)
    w4 = w4.transpose(1, 3, 2, 0)                # (h, z, w, c)
    w4 = jnp.pad(w4, ((0, 0), (0, 0), (1, 1), (0, 0)))   # zero x-border blocks
    wk = w4.reshape(8, Z_DIM, 80)
    b4 = b.reshape(8, 8, 8).transpose(1, 2, 0)   # (h, w, c)
    b4 = jnp.pad(b4, ((0, 0), (1, 1), (0, 0)))
    bk = b4.reshape(8, 1, 80)
    return wk, bk


def prepare_params(p):
    f32 = jnp.float32
    row = lambda v: v.reshape(1, -1).astype(f32)
    wlin, blin = _linear_prep(p["lin_w"].astype(f32), p["lin_b"].astype(f32))
    t1 = _conv_toeplitz(p["conv1_w"], 8)
    s1, s1t = _selectors(8, 16)
    tt1 = _convt_toeplitz(p["ct1_w"], 8)
    bt1 = _convt_bias_lanes(p["ct1_b"], 8)
    t2 = _conv_toeplitz(p["conv2_w"], 16)
    s2, s2t = _selectors(16, 10)
    tt2 = _convt_toeplitz(p["ct2_w"], 16)
    bt2 = _convt_bias_lanes(p["ct2_b"], 16)
    t3 = _conv_toeplitz(p["conv3_w"], 32)
    s3, s3t = _selectors(32, 3)
    return (wlin, blin,
            t1, row(p["conv1_b"]), s1, s1t, row(p["bn1_g"]), row(p["bn1_b"]),
            tt1, bt1,
            t2, row(p["conv2_b"]), s2, s2t, row(p["bn2_g"]), row(p["bn2_b"]),
            tt2, bt2,
            t3, row(p["conv3_b"]), s3, s3t, row(p["bn3_g"]), row(p["bn3_b"]))


# --------------------------------------------------------------------------
# Forward
# --------------------------------------------------------------------------
def decoder_forward(kparams, x):
    """x: (B, 50) f32 -> (B, 3, 32, 32) f32 (NCHW, like PyTorch)."""
    B = x.shape[0]
    args = (x,) + tuple(kparams)
    out = pl.pallas_call(
        decoder_kernel,
        out_shape=jax.ShapeDtypeStruct((B * 32, 32 * 3), jnp.float32),
        in_specs=[_vmem_spec() for _ in range(len(args))],
        out_specs=_vmem_spec(),
        scratch_shapes=[
            pltpu.VMEM((B, 10, 10 * 8), jnp.float32),    # padded 8x8x8
            pltpu.VMEM((B, 18, 18 * 16), jnp.float32),   # padded 16x16x16
            pltpu.VMEM((B, 34, 34 * 10), jnp.float32),   # padded 32x32x10
        ],
        compiler_params=pltpu.CompilerParams(
            vmem_limit_bytes=32 * 1024 * 1024),
    )(*args)
    # (B*H, W*C) -> NHWC -> NCHW; tiny metadata reshape + one small transpose.
    return out.reshape(B, 32, 32, 3).transpose(0, 3, 1, 2)


# --------------------------------------------------------------------------
# Deterministic parameter init (PyTorch-style uniform(-1/sqrt(fan_in), ...))
# --------------------------------------------------------------------------
def init_params():
    key = jax.random.PRNGKey(42)
    keys = iter(jax.random.split(key, 32))

    def u(shape, fan_in):
        bound = 1.0 / math.sqrt(fan_in)
        return jax.random.uniform(next(keys), shape, jnp.float32, -bound, bound)

    p = {}
    p["lin_w"] = u((512, Z_DIM), Z_DIM)          # torch Linear layout (out, in)
    p["lin_b"] = u((512,), Z_DIM)
    # Conv weights stored HWIO (3,3,Cin,Cout); ConvT as (kH,kW,Cin,Cout).
    p["conv1_w"] = u((3, 3, 8, 16), 8 * 9)
    p["conv1_b"] = u((16,), 8 * 9)
    p["bn1_g"] = jnp.ones((16,), jnp.float32)
    p["bn1_b"] = jnp.zeros((16,), jnp.float32)
    p["ct1_w"] = u((2, 2, 16, 16), 16 * 4)
    p["ct1_b"] = u((16,), 16 * 4)
    p["conv2_w"] = u((3, 3, 16, 10), 16 * 9)
    p["conv2_b"] = u((10,), 16 * 9)
    p["bn2_g"] = jnp.ones((10,), jnp.float32)
    p["bn2_b"] = jnp.zeros((10,), jnp.float32)
    p["ct2_w"] = u((2, 2, 10, 10), 10 * 4)
    p["ct2_b"] = u((10,), 10 * 4)
    p["conv3_w"] = u((3, 3, 10, 3), 10 * 9)
    p["conv3_b"] = u((3,), 10 * 9)
    p["bn3_g"] = jnp.ones((3,), jnp.float32)
    p["bn3_b"] = jnp.zeros((3,), jnp.float32)
    return p


if __name__ == "__main__":
    params = init_params()
    kparams = prepare_params(params)             # one-time layout plumbing
    x = jax.random.normal(jax.random.PRNGKey(0), (2, Z_DIM), jnp.float32)

    fwd = jax.jit(decoder_forward)
    out = jax.block_until_ready(fwd(kparams, x))

    assert out.shape == (2, 3, 32, 32), out.shape
    assert out.dtype == jnp.float32
    assert bool(jnp.all(jnp.isfinite(out)))
    # final layer is tanh -> values in (-1, 1)
    assert float(jnp.max(jnp.abs(out))) <= 1.0 + 1e-5
    print("KERNEL_OK")
</pallas_src>

<mosaic_0001>
module attributes {stable_mosaic.version = 11 : i64} {
  func.func @decoder_kernel(%arg0: memref<2x50xf32, #tpu.memory_space<vmem>>, %arg1: memref<8x50x80xf32, #tpu.memory_space<vmem>>, %arg2: memref<8x1x80xf32, #tpu.memory_space<vmem>>, %arg3: memref<3x80x128xf32, #tpu.memory_space<vmem>>, %arg4: memref<1x16xf32, #tpu.memory_space<vmem>>, %arg5: memref<128x16xf32, #tpu.memory_space<vmem>>, %arg6: memref<16x128xf32, #tpu.memory_space<vmem>>, %arg7: memref<1x16xf32, #tpu.memory_space<vmem>>, %arg8: memref<1x16xf32, #tpu.memory_space<vmem>>, %arg9: memref<2x128x288xf32, #tpu.memory_space<vmem>>, %arg10: memref<1x288xf32, #tpu.memory_space<vmem>>, %arg11: memref<3x288x160xf32, #tpu.memory_space<vmem>>, %arg12: memref<1x10xf32, #tpu.memory_space<vmem>>, %arg13: memref<160x10xf32, #tpu.memory_space<vmem>>, %arg14: memref<10x160xf32, #tpu.memory_space<vmem>>, %arg15: memref<1x10xf32, #tpu.memory_space<vmem>>, %arg16: memref<1x10xf32, #tpu.memory_space<vmem>>, %arg17: memref<2x160x340xf32, #tpu.memory_space<vmem>>, %arg18: memref<1x340xf32, #tpu.memory_space<vmem>>, %arg19: memref<3x340x96xf32, #tpu.memory_space<vmem>>, %arg20: memref<1x3xf32, #tpu.memory_space<vmem>>, %arg21: memref<96x3xf32, #tpu.memory_space<vmem>>, %arg22: memref<3x96xf32, #tpu.memory_space<vmem>>, %arg23: memref<1x3xf32, #tpu.memory_space<vmem>>, %arg24: memref<1x3xf32, #tpu.memory_space<vmem>>, %arg25: memref<64x96xf32, #tpu.memory_space<vmem>>, %arg26: memref<2x10x80xf32, #tpu.memory_space<vmem>>, %arg27: memref<2x18x288xf32, #tpu.memory_space<vmem>>, %arg28: memref<2x34x340xf32, #tpu.memory_space<vmem>>) attributes {dimension_semantics = [], scalar_prefetch = 0 : i64, scratch_operands = 3 : i64, tpu.core_type = #tpu.core_type<tc>} {
    %c0 = arith.constant 0 : index
    %c0_0 = arith.constant 0 : index
    %0 = vector.load %arg0[%c0, %c0_0] : memref<2x50xf32, #tpu.memory_space<vmem>>, vector<2x50xf32>
    %cst = arith.constant 0.000000e+00 : f32
    %1 = vector.broadcast %cst : f32 to vector<2x80xf32>
    %c0_1 = arith.constant 0 : index
    %c0_2 = arith.constant 0 : index
    %c0_3 = arith.constant 0 : index
    %2 = vector.load %arg26[%c0_1, %c0_2, %c0_3] : memref<2x10x80xf32, #tpu.memory_space<vmem>>, vector<2x1x80xf32>
    %3 = vector.shape_cast %2 : vector<2x1x80xf32> to vector<2x80xf32>
    %4 = vector.shape_cast %1 : vector<2x80xf32> to vector<2x1x80xf32>
    tpu.vector_store %arg26[%c0_1, %c0_2, %c0_3], %4 {strides = array<i32>} : memref<2x10x80xf32, #tpu.memory_space<vmem>>, vector<2x1x80xf32>,
    %c0_4 = arith.constant 0 : index
    %c9 = arith.constant 9 : index
    %c0_5 = arith.constant 0 : index
    %5 = vector.load %arg26[%c0_4, %c9, %c0_5] : memref<2x10x80xf32, #tpu.memory_space<vmem>>, vector<2x1x80xf32>
    %6 = vector.shape_cast %5 : vector<2x1x80xf32> to vector<2x80xf32>
    %7 = vector.shape_cast %1 : vector<2x80xf32> to vector<2x1x80xf32>
    tpu.vector_store %arg26[%c0_4, %c9, %c0_5], %7 {strides = array<i32>} : memref<2x10x80xf32, #tpu.memory_space<vmem>>, vector<2x1x80xf32>,
    %c0_6 = arith.constant 0 : index
    %c0_7 = arith.constant 0 : index
    %c0_8 = arith.constant 0 : index
    %8 = vector.load %arg1[%c0_6, %c0_7, %c0_8] : memref<8x50x80xf32, #tpu.memory_space<vmem>>, vector<1x50x80xf32>
    %9 = vector.shape_cast %8 : vector<1x50x80xf32> to vector<50x80xf32>
    %cst_9 = arith.constant dense<0.000000e+00> : vector<2x80xf32>
    %10 = tpu.matmul %0, %9, %cst_9 {dimension_numbers = #tpu.dot_dimension_numbers<[1], [0], [0], [1], [0, 0, 1, 1], [], []>} : vector<2x50xf32>, vector<50x80xf32>, vector<2x80xf32> -> vector<2x80xf32>
    %c0_10 = arith.constant 0 : index
    %c0_11 = arith.constant 0 : index
    %c0_12 = arith.constant 0 : index
    %11 = vector.load %arg2[%c0_10, %c0_11, %c0_12] : memref<8x1x80xf32, #tpu.memory_space<vmem>>, vector<1x1x80xf32>
    %12 = vector.shape_cast %11 : vector<1x1x80xf32> to vector<1x80xf32>
    %13 = vector.broadcast %12 : vector<1x80xf32> to vector<2x80xf32>
    %14 = arith.addf %10, %13 : vector<2x80xf32>
    %c0_13 = arith.constant 0 : index
    %c1 = arith.constant 1 : index
    %c0_14 = arith.constant 0 : index
    %15 = vector.load %arg26[%c0_13, %c1, %c0_14] : memref<2x10x80xf32, #tpu.memory_space<vmem>>, vector<2x1x80xf32>
    %16 = vector.shape_cast %15 : vector<2x1x80xf32> to vector<2x80xf32>
    %17 = vector.shape_cast %14 : vector<2x80xf32> to vector<2x1x80xf32>
    tpu.vector_store %arg26[%c0_13, %c1, %c0_14], %17 {strides = array<i32>} : memref<2x10x80xf32, #tpu.memory_space<vmem>>, vector<2x1x80xf32>,
    %c1_15 = arith.constant 1 : index
    %c0_16 = arith.constant 0 : index
    %c0_17 = arith.constant 0 : index
    %18 = vector.load %arg1[%c1_15, %c0_16, %c0_17] : memref<8x50x80xf32, #tpu.memory_space<vmem>>, vector<1x50x80xf32>
    %19 = vector.shape_cast %18 : vector<1x50x80xf32> to vector<50x80xf32>
    %cst_18 = arith.constant dense<0.000000e+00> : vector<2x80xf32>
    %20 = tpu.matmul %0, %19, %cst_18 {dimension_numbers = #tpu.dot_dimension_numbers<[1], [0], [0], [1], [0, 0, 1, 1], [], []>} : vector<2x50xf32>, vector<50x80xf32>, vector<2x80xf32> -> vector<2x80xf32>
    %c1_19 = arith.constant 1 : index
    %c0_20 = arith.constant 0 : index
    %c0_21 = arith.constant 0 : index
    %21 = vector.load %arg2[%c1_19, %c0_20, %c0_21] : memref<8x1x80xf32, #tpu.memory_space<vmem>>, vector<1x1x80xf32>
    %22 = vector.shape_cast %21 : vector<1x1x80xf32> to vector<1x80xf32>
    %23 = vector.broadcast %22 : vector<1x80xf32> to vector<2x80xf32>
    %24 = arith.addf %20, %23 : vector<2x80xf32>
    %c0_22 = arith.constant 0 : index
    %c2 = arith.constant 2 : index
    %c0_23 = arith.constant 0 : index
    %25 = vector.load %arg26[%c0_22, %c2, %c0_23] : memref<2x10x80xf32, #tpu.memory_space<vmem>>, vector<2x1x80xf32>
    %26 = vector.shape_cast %25 : vector<2x1x80xf32> to vector<2x80xf32>
    %27 = vector.shape_cast %24 : vector<2x80xf32> to vector<2x1x80xf32>
    tpu.vector_store %arg26[%c0_22, %c2, %c0_23], %27 {strides = array<i32>} : memref<2x10x80xf32, #tpu.memory_space<vmem>>, vector<2x1x80xf32>,
    %c2_24 = arith.constant 2 : index
    %c0_25 = arith.constant 0 : index
    %c0_26 = arith.constant 0 : index
    %28 = vector.load %arg1[%c2_24, %c0_25, %c0_26] : memref<8x50x80xf32, #tpu.memory_space<vmem>>, vector<1x50x80xf32>
    %29 = vector.shape_cast %28 : vector<1x50x80xf32> to vector<50x80xf32>
    %cst_27 = arith.constant dense<0.000000e+00> : vector<2x80xf32>
    %30 = tpu.matmul %0, %29, %cst_27 {dimension_numbers = #tpu.dot_dimension_numbers<[1], [0], [0], [1], [0, 0, 1, 1], [], []>} : vector<2x50xf32>, vector<50x80xf32>, vector<2x80xf32> -> vector<2x80xf32>
    %c2_28 = arith.constant 2 : index
    %c0_29 = arith.constant 0 : index
    %c0_30 = arith.constant 0 : index
    %31 = vector.load %arg2[%c2_28, %c0_29, %c0_30] : memref<8x1x80xf32, #tpu.memory_space<vmem>>, vector<1x1x80xf32>
    %32 = vector.shape_cast %31 : vector<1x1x80xf32> to vector<1x80xf32>
    %33 = vector.broadcast %32 : vector<1x80xf32> to vector<2x80xf32>
    %34 = arith.addf %30, %33 : vector<2x80xf32>
    %c0_31 = arith.constant 0 : index
    %c3 = arith.constant 3 : index
    %c0_32 = arith.constant 0 : index
    %35 = vector.load %arg26[%c0_31, %c3, %c0_32] : memref<2x10x80xf32, #tpu.memory_space<vmem>>, vector<2x1x80xf32>
    %36 = vector.shape_cast %35 : vector<2x1x80xf32> to vector<2x80xf32>
    %37 = vector.shape_cast %34 : vector<2x80xf32> to vector<2x1x80xf32>
    tpu.vector_store %arg26[%c0_31, %c3, %c0_32], %37 {strides = array<i32>} : memref<2x10x80xf32, #tpu.memory_space<vmem>>, vector<2x1x80xf32>,
    %c3_33 = arith.constant 3 : index
    %c0_34 = arith.constant 0 : index
    %c0_35 = arith.constant 0 : index
    %38 = vector.load %arg1[%c3_33, %c0_34, %c0_35] : memref<8x50x80xf32, #tpu.memory_space<vmem>>, vector<1x50x80xf32>
    %39 = vector.shape_cast %38 : vector<1x50x80xf32> to vector<50x80xf32>
    %cst_36 = arith.constant dense<0.000000e+00> : vector<2x80xf32>
    %40 = tpu.matmul %0, %39, %cst_36 {dimension_numbers = #tpu.dot_dimension_numbers<[1], [0], [0], [1], [0, 0, 1, 1], [], []>} : vector<2x50xf32>, vector<50x80xf32>, vector<2x80xf32> -> vector<2x80xf32>
    %c3_37 = arith.constant 3 : index
    %c0_38 = arith.constant 0 : index
    %c0_39 = arith.constant 0 : index
    %41 = vector.load %arg2[%c3_37, %c0_38, %c0_39] : memref<8x1x80xf32, #tpu.memory_space<vmem>>, vector<1x1x80xf32>
    %42 = vector.shape_cast %41 : vector<1x1x80xf32> to vector<1x80xf32>
    %43 = vector.broadcast %42 : vector<1x80xf32> to vector<2x80xf32>
    %44 = arith.addf %40, %43 : vector<2x80xf32>
    %c0_40 = arith.constant 0 : index
    %c4 = arith.constant 4 : index
    %c0_41 = arith.constant 0 : index
    %45 = vector.load %arg26[%c0_40, %c4, %c0_41] : memref<2x10x80xf32, #tpu.memory_space<vmem>>, vector<2x1x80xf32>
    %46 = vector.shape_cast %45 : vector<2x1x80xf32> to vector<2x80xf32>
    %47 = vector.shape_cast %44 : vector<2x80xf32> to vector<2x1x80xf32>
    tpu.vector_store %arg26[%c0_40, %c4, %c0_41], %47 {strides = array<i32>} : memref<2x10x80xf32, #tpu.memory_space<vmem>>, vector<2x1x80xf32>,
    %c4_42 = arith.constant 4 : index
    %c0_43 = arith.constant 0 : index
    %c0_44 = arith.constant 0 : index
    %48 = vector.load %arg1[%c4_42, %c0_43, %c0_44] : memref<8x50x80xf32, #tpu.memory_space<vmem>>, vector<1x50x80xf32>
    %49 = vector.shape_cast %48 : vector<1x50x80xf32> to vector<50x80xf32>
    %cst_45 = arith.constant dense<0.000000e+00> : vector<2x80xf32>
    %50 = tpu.matmul %0, %49, %cst_45 {dimension_numbers = #tpu.dot_dimension_numbers<[1], [0], [0], [1], [0, 0, 1, 1], [], []>} : vector<2x50xf32>, vector<50x80xf32>, vector<2x80xf32> -> vector<2x80xf32>
    %c4_46 = arith.constant 4 : index
    %c0_47 = arith.constant 0 : index
    %c0_48 = arith.constant 0 : index
    %51 = vector.load %arg2[%c4_46, %c0_47, %c0_48] : memref<8x1x80xf32, #tpu.memory_space<vmem>>, vector<1x1x80xf32>
    %52 = vector.shape_cast %51 : vector<1x1x80xf32> to vector<1x80xf32>
    %53 = vector.broadcast %52 : vector<1x80xf32> to vector<2x80xf32>
    %54 = arith.addf %50, %53 : vector<2x80xf32>
    %c0_49 = arith.constant 0 : index
    %c5 = arith.constant 5 : index
    %c0_50 = arith.constant 0 : index
    %55 = vector.load %arg26[%c0_49, %c5, %c0_50] : memref<2x10x80xf32, #tpu.memory_space<vmem>>, vector<2x1x80xf32>
    %56 = vector.shape_cast %55 : vector<2x1x80xf32> to vector<2x80xf32>
    %57 = vector.shape_cast %54 : vector<2x80xf32> to vector<2x1x80xf32>
    tpu.vector_store %arg26[%c0_49, %c5, %c0_50], %57 {strides = array<i32>} : memref<2x10x80xf32, #tpu.memory_space<vmem>>, vector<2x1x80xf32>,
    %c5_51 = arith.constant 5 : index
    %c0_52 = arith.constant 0 : index
    %c0_53 = arith.constant 0 : index
    %58 = vector.load %arg1[%c5_51, %c0_52, %c0_53] : memref<8x50x80xf32, #tpu.memory_space<vmem>>, vector<1x50x80xf32>
    %59 = vector.shape_cast %58 : vector<1x50x80xf32> to vector<50x80xf32>
    %cst_54 = arith.constant dense<0.000000e+00> : vector<2x80xf32>
    %60 = tpu.matmul %0, %59, %cst_54 {dimension_numbers = #tpu.dot_dimension_numbers<[1], [0], [0], [1], [0, 0, 1, 1], [], []>} : vector<2x50xf32>, vector<50x80xf32>, vector<2x80xf32> -> vector<2x80xf32>
    %c5_55 = arith.constant 5 : index
    %c0_56 = arith.constant 0 : index
    %c0_57 = arith.constant 0 : index
    %61 = vector.load %arg2[%c5_55, %c0_56, %c0_57] : memref<8x1x80xf32, #tpu.memory_space<vmem>>, vector<1x1x80xf32>
    %62 = vector.shape_cast %61 : vector<1x1x80xf32> to vector<1x80xf32>
    %63 = vector.broadcast %62 : vector<1x80xf32> to vector<2x80xf32>
    %64 = arith.addf %60, %63 : vector<2x80xf32>
    %c0_58 = arith.constant 0 : index
    %c6 = arith.constant 6 : index
    %c0_59 = arith.constant 0 : index
    %65 = vector.load %arg26[%c0_58, %c6, %c0_59] : memref<2x10x80xf32, #tpu.memory_space<vmem>>, vector<2x1x80xf32>
    %66 = vector.shape_cast %65 : vector<2x1x80xf32> to vector<2x80xf32>
    %67 = vector.shape_cast %64 : vector<2x80xf32> to vector<2x1x80xf32>
    tpu.vector_store %arg26[%c0_58, %c6, %c0_59], %67 {strides = array<i32>} : memref<2x10x80xf32, #tpu.memory_space<vmem>>, vector<2x1x80xf32>,
    %c6_60 = arith.constant 6 : index
    %c0_61 = arith.constant 0 : index
    %c0_62 = arith.constant 0 : index
    %68 = vector.load %arg1[%c6_60, %c0_61, %c0_62] : memref<8x50x80xf32, #tpu.memory_space<vmem>>, vector<1x50x80xf32>
    %69 = vector.shape_cast %68 : vector<1x50x80xf32> to vector<50x80xf32>
    %cst_63 = arith.constant dense<0.000000e+00> : vector<2x80xf32>
    %70 = tpu.matmul %0, %69, %cst_63 {dimension_numbers = #tpu.dot_dimension_numbers<[1], [0], [0], [1], [0, 0, 1, 1], [], []>} : vector<2x50xf32>, vector<50x80xf32>, vector<2x80xf32> -> vector<2x80xf32>
    %c6_64 = arith.constant 6 : index
    %c0_65 = arith.constant 0 : index
    %c0_66 = arith.constant 0 : index
    %71 = vector.load %arg2[%c6_64, %c0_65, %c0_66] : memref<8x1x80xf32, #tpu.memory_space<vmem>>, vector<1x1x80xf32>
    %72 = vector.shape_cast %71 : vector<1x1x80xf32> to vector<1x80xf32>
    %73 = vector.broadcast %72 : vector<1x80xf32> to vector<2x80xf32>
    %74 = arith.addf %70, %73 : vector<2x80xf32>
    %c0_67 = arith.constant 0 : index
    %c7 = arith.constant 7 : index
    %c0_68 = arith.constant 0 : index
    %75 = vector.load %arg26[%c0_67, %c7, %c0_68] : memref<2x10x80xf32, #tpu.memory_space<vmem>>, vector<2x1x80xf32>
    %76 = vector.shape_cast %75 : vector<2x1x80xf32> to vector<2x80xf32>
    %77 = vector.shape_cast %74 : vector<2x80xf32> to vector<2x1x80xf32>
    tpu.vector_store %arg26[%c0_67, %c7, %c0_68], %77 {strides = array<i32>} : memref<2x10x80xf32, #tpu.memory_space<vmem>>, vector<2x1x80xf32>,
    %c7_69 = arith.constant 7 : index
    %c0_70 = arith.constant 0 : index
    %c0_71 = arith.constant 0 : index
    %78 = vector.load %arg1[%c7_69, %c0_70, %c0_71] : memref<8x50x80xf32, #tpu.memory_space<vmem>>, vector<1x50x80xf32>
    %79 = vector.shape_cast %78 : vector<1x50x80xf32> to vector<50x80xf32>
    %cst_72 = arith.constant dense<0.000000e+00> : vector<2x80xf32>
    %80 = tpu.matmul %0, %79, %cst_72 {dimension_numbers = #tpu.dot_dimension_numbers<[1], [0], [0], [1], [0, 0, 1, 1], [], []>} : vector<2x50xf32>, vector<50x80xf32>, vector<2x80xf32> -> vector<2x80xf32>
    %c7_73 = arith.constant 7 : index
    %c0_74 = arith.constant 0 : index
    %c0_75 = arith.constant 0 : index
    %81 = vector.load %arg2[%c7_73, %c0_74, %c0_75] : memref<8x1x80xf32, #tpu.memory_space<vmem>>, vector<1x1x80xf32>
    %82 = vector.shape_cast %81 : vector<1x1x80xf32> to vector<1x80xf32>
    %83 = vector.broadcast %82 : vector<1x80xf32> to vector<2x80xf32>
    %84 = arith.addf %80, %83 : vector<2x80xf32>
    %c0_76 = arith.constant 0 : index
    %c8 = arith.constant 8 : index
    %c0_77 = arith.constant 0 : index
    %85 = vector.load %arg26[%c0_76, %c8, %c0_77] : memref<2x10x80xf32, #tpu.memory_space<vmem>>, vector<2x1x80xf32>
    %86 = vector.shape_cast %85 : vector<2x1x80xf32> to vector<2x80xf32>
    %87 = vector.shape_cast %84 : vector<2x80xf32> to vector<2x1x80xf32>
    tpu.vector_store %arg26[%c0_76, %c8, %c0_77], %87 {strides = array<i32>} : memref<2x10x80xf32, #tpu.memory_space<vmem>>, vector<2x1x80xf32>,
    %c0_78 = arith.constant 0 : index
    %c0_79 = arith.constant 0 : index
    %c0_80 = arith.constant 0 : index
    %88 = vector.load %arg26[%c0_78, %c0_79, %c0_80] : memref<2x10x80xf32, #tpu.memory_space<vmem>>, vector<2x10x80xf32>
    %89 = vector.extract_strided_slice %88 {offsets = [0, 0, 0], sizes = [2, 8, 80], strides = [1, 1, 1]} : vector<2x10x80xf32> to vector<2x8x80xf32>
    %90 = vector.shape_cast %89 : vector<2x8x80xf32> to vector<16x80xf32>
    %c0_81 = arith.constant 0 : index
    %c0_82 = arith.constant 0 : index
    %c0_83 = arith.constant 0 : index
    %91 = vector.load %arg3[%c0_81, %c0_82, %c0_83] : memref<3x80x128xf32, #tpu.memory_space<vmem>>, vector<1x80x128xf32>
    %92 = vector.shape_cast %91 : vector<1x80x128xf32> to vector<80x128xf32>
    %cst_84 = arith.constant dense<0.000000e+00> : vector<16x128xf32>
    %93 = tpu.matmul %90, %92, %cst_84 {dimension_numbers = #tpu.dot_dimension_numbers<[1], [0], [0], [1], [0, 0, 1, 1], [], []>} : vector<16x80xf32>, vector<80x128xf32>, vector<16x128xf32> -> vector<16x128xf32>
    %94 = vector.extract_strided_slice %88 {offsets = [0, 1, 0], sizes = [2, 8, 80], strides = [1, 1, 1]} : vector<2x10x80xf32> to vector<2x8x80xf32>
    %95 = vector.shape_cast %94 : vector<2x8x80xf32> to vector<16x80xf32>
    %c1_85 = arith.constant 1 : index
    %c0_86 = arith.constant 0 : index
    %c0_87 = arith.constant 0 : index
    %96 = vector.load %arg3[%c1_85, %c0_86, %c0_87] : memref<3x80x128xf32, #tpu.memory_space<vmem>>, vector<1x80x128xf32>
    %97 = vector.shape_cast %96 : vector<1x80x128xf32> to vector<80x128xf32>
    %cst_88 = arith.constant dense<0.000000e+00> : vector<16x128xf32>
    %98 = tpu.matmul %95, %97, %cst_88 {dimension_numbers = #tpu.dot_dimension_numbers<[1], [0], [0], [1], [0, 0, 1, 1], [], []>} : vector<16x80xf32>, vector<80x128xf32>, vector<16x128xf32> -> vector<16x128xf32>
    %99 = arith.addf %93, %98 : vector<16x128xf32>
    %100 = vector.extract_strided_slice %88 {offsets = [0, 2, 0], sizes = [2, 8, 80], strides = [1, 1, 1]} : vector<2x10x80xf32> to vector<2x8x80xf32>
    %101 = vector.shape_cast %100 : vector<2x8x80xf32> to vector<16x80xf32>
    %c2_89 = arith.constant 2 : index
    %c0_90 = arith.constant 0 : index
    %c0_91 = arith.constant 0 : index
    %102 = vector.load %arg3[%c2_89, %c0_90, %c0_91] : memref<3x80x128xf32, #tpu.memory_space<vmem>>, vector<1x80x128xf32>
    %103 = vector.shape_cast %102 : vector<1x80x128xf32> to vector<80x128xf32>
    %cst_92 = arith.constant dense<0.000000e+00> : vector<16x128xf32>
    %104 = tpu.matmul %101, %103, %cst_92 {dimension_numbers = #tpu.dot_dimension_numbers<[1], [0], [0], [1], [0, 0, 1, 1], [], []>} : vector<16x80xf32>, vector<80x128xf32>, vector<16x128xf32> -> vector<16x128xf32>
    %105 = arith.addf %99, %104 : vector<16x128xf32>
    %c0_93 = arith.constant 0 : index
    %c0_94 = arith.constant 0 : index
    %106 = vector.load %arg4[%c0_93, %c0_94] : memref<1x16xf32, #tpu.memory_space<vmem>>, vector<1x16xf32>
    %c0_95 = arith.constant 0 : index
    %c0_96 = arith.constant 0 : index
    %107 = vector.load %arg6[%c0_95, %c0_96] : memref<16x128xf32, #tpu.memory_space<vmem>>, vector<16x128xf32>
    %cst_97 = arith.constant dense<0.000000e+00> : vector<1x128xf32>
    %108 = tpu.matmul %106, %107, %cst_97 {dimension_numbers = #tpu.dot_dimension_numbers<[1], [0], [0], [1], [0, 0, 1, 1], [], []>} : vector<1x16xf32>, vector<16x128xf32>, vector<1x128xf32> -> vector<1x128xf32>
    %109 = vector.broadcast %108 : vector<1x128xf32> to vector<16x128xf32>
    %110 = arith.addf %105, %109 : vector<16x128xf32>
    %c0_98 = arith.constant 0 : index
    %c0_99 = arith.constant 0 : index
    %111 = vector.load %arg5[%c0_98, %c0_99] : memref<128x16xf32, #tpu.memory_space<vmem>>, vector<128x16xf32>
    %cst_100 = arith.constant dense<0.000000e+00> : vector<16x16xf32>
    %112 = tpu.matmul %110, %111, %cst_100 {dimension_numbers = #tpu.dot_dimension_numbers<[1], [0], [0], [1], [0, 0, 1, 1], [], []>} : vector<16x128xf32>, vector<128x16xf32>, vector<16x16xf32> -> vector<16x16xf32>
    %cst_101 = arith.constant dense<0.000000e+00> : vector<16xf32>
    %113 = vector.multi_reduction <add>, %112, %cst_101 [0] : vector<16x16xf32> to vector<16xf32>
    %114 = vector.shape_cast %113 : vector<16xf32> to vector<1x16xf32>
    %cst_102 = arith.constant 1.280000e+02 : f32
    %115 = vector.broadcast %cst_102 : f32 to vector<1x16xf32>
    %116 = arith.divf %114, %115 : vector<1x16xf32>
    %c0_103 = arith.constant 0 : index
    %c0_104 = arith.constant 0 : index
    %117 = vector.load %arg6[%c0_103, %c0_104] : memref<16x128xf32, #tpu.memory_space<vmem>>, vector<16x128xf32>
    %cst_105 = arith.constant dense<0.000000e+00> : vector<1x128xf32>
    %118 = tpu.matmul %116, %117, %cst_105 {dimension_numbers = #tpu.dot_dimension_numbers<[1], [0], [0], [1], [0, 0, 1, 1], [], []>} : vector<1x16xf32>, vector<16x128xf32>, vector<1x128xf32> -> vector<1x128xf32>
    %119 = vector.broadcast %118 : vector<1x128xf32> to vector<16x128xf32>
    %120 = arith.subf %110, %119 : vector<16x128xf32>
    %121 = arith.mulf %120, %120 : vector<16x128xf32>
    %c0_106 = arith.constant 0 : index
    %c0_107 = arith.constant 0 : index
    %122 = vector.load %arg5[%c0_106, %c0_107] : memref<128x16xf32, #tpu.memory_space<vmem>>, vector<128x16xf32>
    %cst_108 = arith.constant dense<0.000000e+00> : vector<16x16xf32>
    %123 = tpu.matmul %121, %122, %cst_108 {dimension_numbers = #tpu.dot_dimension_numbers<[1], [0], [0], [1], [0, 0, 1, 1], [], []>} : vector<16x128xf32>, vector<128x16xf32>, vector<16x16xf32> -> vector<16x16xf32>
    %cst_109 = arith.constant dense<0.000000e+00> : vector<16xf32>
    %124 = vector.multi_reduction <add>, %123, %cst_109 [0] : vector<16x16xf32> to vector<16xf32>
    %125 = vector.shape_cast %124 : vector<16xf32> to vector<1x16xf32>
    %cst_110 = arith.constant 1.280000e+02 : f32
    %126 = vector.broadcast %cst_110 : f32 to vector<1x16xf32>
    %127 = arith.divf %125, %126 : vector<1x16xf32>
    %cst_111 = arith.constant 9.99999974E-6 : f32
    %128 = vector.broadcast %cst_111 : f32 to vector<1x16xf32>
    %129 = arith.addf %127, %128 : vector<1x16xf32>
    %130 = math.rsqrt %129 : vector<1x16xf32>
    %c0_112 = arith.constant 0 : index
    %c0_113 = arith.constant 0 : index
    %131 = vector.load %arg7[%c0_112, %c0_113] : memref<1x16xf32, #tpu.memory_space<vmem>>, vector<1x16xf32>
    %132 = arith.mulf %130, %131 : vector<1x16xf32>
    %c0_114 = arith.constant 0 : index
    %c0_115 = arith.constant 0 : index
    %133 = vector.load %arg6[%c0_114, %c0_115] : memref<16x128xf32, #tpu.memory_space<vmem>>, vector<16x128xf32>
    %cst_116 = arith.constant dense<0.000000e+00> : vector<1x128xf32>
    %134 = tpu.matmul %132, %133, %cst_116 {dimension_numbers = #tpu.dot_dimension_numbers<[1], [0], [0], [1], [0, 0, 1, 1], [], []>} : vector<1x16xf32>, vector<16x128xf32>, vector<1x128xf32> -> vector<1x128xf32>
    %c0_117 = arith.constant 0 : index
    %c0_118 = arith.constant 0 : index
    %135 = vector.load %arg8[%c0_117, %c0_118] : memref<1x16xf32, #tpu.memory_space<vmem>>, vector<1x16xf32>
    %c0_119 = arith.constant 0 : index
    %c0_120 = arith.constant 0 : index
    %136 = vector.load %arg6[%c0_119, %c0_120] : memref<16x128xf32, #tpu.memory_space<vmem>>, vector<16x128xf32>
    %cst_121 = arith.constant dense<0.000000e+00> : vector<1x128xf32>
    %137 = tpu.matmul %135, %136, %cst_121 {dimension_numbers = #tpu.dot_dimension_numbers<[1], [0], [0], [1], [0, 0, 1, 1], [], []>} : vector<1x16xf32>, vector<16x128xf32>, vector<1x128xf32> -> vector<1x128xf32>
    %138 = vector.broadcast %134 : vector<1x128xf32> to vector<16x128xf32>
    %139 = arith.mulf %120, %138 : vector<16x128xf32>
    %140 = vector.broadcast %137 : vector<1x128xf32> to vector<16x128xf32>
    %141 = arith.addf %139, %140 : vector<16x128xf32>
    %cst_122 = arith.constant 0.000000e+00 : f32
    %142 = vector.broadcast %cst_122 : f32 to vector<16x128xf32>
    %143 = arith.maximumf %141, %142 : vector<16x128xf32>
    %c0_123 = arith.constant 0 : index
    %c0_124 = arith.constant 0 : index
    %c0_125 = arith.constant 0 : index
    %144 = vector.load %arg9[%c0_123, %c0_124, %c0_125] : memref<2x128x288xf32, #tpu.memory_space<vmem>>, vector<1x128x288xf32>
    %145 = vector.shape_cast %144 : vector<1x128x288xf32> to vector<128x288xf32>
    %cst_126 = arith.constant dense<0.000000e+00> : vector<16x288xf32>
    %146 = tpu.matmul %143, %145, %cst_126 {dimension_numbers = #tpu.dot_dimension_numbers<[1], [0], [0], [1], [0, 0, 1, 1], [], []>} : vector<16x128xf32>, vector<128x288xf32>, vector<16x288xf32> -> vector<16x288xf32>
    %c0_127 = arith.constant 0 : index
    %c0_128 = arith.constant 0 : index
    %147 = vector.load %arg10[%c0_127, %c0_128] : memref<1x288xf32, #tpu.memory_space<vmem>>, vector<1x288xf32>
    %148 = vector.broadcast %147 : vector<1x288xf32> to vector<16x288xf32>
    %149 = arith.addf %146, %148 : vector<16x288xf32>
    %c1_129 = arith.constant 1 : index
    %c0_130 = arith.constant 0 : index
    %c0_131 = arith.constant 0 : index
    %150 = vector.load %arg9[%c1_129, %c0_130, %c0_131] : memref<2x128x288xf32, #tpu.memory_space<vmem>>, vector<1x128x288xf32>
    %151 = vector.shape_cast %150 : vector<1x128x288xf32> to vector<128x288xf32>
    %cst_132 = arith.constant dense<0.000000e+00> : vector<16x288xf32>
    %152 = tpu.matmul %143, %151, %cst_132 {dimension_numbers = #tpu.dot_dimension_numbers<[1], [0], [0], [1], [0, 0, 1, 1], [], []>} : vector<16x128xf32>, vector<128x288xf32>, vector<16x288xf32> -> vector<16x288xf32>
    %c0_133 = arith.constant 0 : index
    %c0_134 = arith.constant 0 : index
    %153 = vector.load %arg10[%c0_133, %c0_134] : memref<1x288xf32, #tpu.memory_space<vmem>>, vector<1x288xf32>
    %154 = vector.broadcast %153 : vector<1x288xf32> to vector<16x288xf32>
    %155 = arith.addf %152, %154 : vector<16x288xf32>
    %156 = vector.shape_cast %149 : vector<16x288xf32> to vector<2x8x288xf32>
    %157 = vector.shape_cast %155 : vector<16x288xf32> to vector<2x8x288xf32>
    %cst_135 = arith.constant 0.000000e+00 : f32
    %158 = vector.broadcast %cst_135 : f32 to vector<2x288xf32>
    %c0_136 = arith.constant 0 : index
    %c0_137 = arith.constant 0 : index
    %c0_138 = arith.constant 0 : index
    %159 = vector.load %arg27[%c0_136, %c0_137, %c0_138] : memref<2x18x288xf32, #tpu.memory_space<vmem>>, vector<2x1x288xf32>
    %160 = vector.shape_cast %159 : vector<2x1x288xf32> to vector<2x288xf32>
    %161 = vector.shape_cast %158 : vector<2x288xf32> to vector<2x1x288xf32>
    tpu.vector_store %arg27[%c0_136, %c0_137, %c0_138], %161 {strides = array<i32>} : memref<2x18x288xf32, #tpu.memory_space<vmem>>, vector<2x1x288xf32>,
    %c0_139 = arith.constant 0 : index
    %c17 = arith.constant 17 : index
    %c0_140 = arith.constant 0 : index
    %162 = vector.load %arg27[%c0_139, %c17, %c0_140] : memref<2x18x288xf32, #tpu.memory_space<vmem>>, vector<2x1x288xf32>
    %163 = vector.shape_cast %162 : vector<2x1x288xf32> to vector<2x288xf32>
    %164 = vector.shape_cast %158 : vector<2x288xf32> to vector<2x1x288xf32>
    tpu.vector_store %arg27[%c0_139, %c17, %c0_140], %164 {strides = array<i32>} : memref<2x18x288xf32, #tpu.memory_space<vmem>>, vector<2x1x288xf32>,
    %165 = vector.extract_strided_slice %156 {offsets = [0, 0, 0], sizes = [2, 1, 288], strides = [1, 1, 1]} : vector<2x8x288xf32> to vector<2x1x288xf32>
    %166 = vector.shape_cast %165 : vector<2x1x288xf32> to vector<2x288xf32>
    %c0_141 = arith.constant 0 : index
    %c1_142 = arith.constant 1 : index
    %c0_143 = arith.constant 0 : index
    %167 = vector.load %arg27[%c0_141, %c1_142, %c0_143] : memref<2x18x288xf32, #tpu.memory_space<vmem>>, vector<2x1x288xf32>
    %168 = vector.shape_cast %167 : vector<2x1x288xf32> to vector<2x288xf32>
    %169 = vector.shape_cast %166 : vector<2x288xf32> to vector<2x1x288xf32>
    tpu.vector_store %arg27[%c0_141, %c1_142, %c0_143], %169 {strides = array<i32>} : memref<2x18x288xf32, #tpu.memory_space<vmem>>, vector<2x1x288xf32>,
    %170 = vector.extract_strided_slice %157 {offsets = [0, 0, 0], sizes = [2, 1, 288], strides = [1, 1, 1]} : vector<2x8x288xf32> to vector<2x1x288xf32>
    %171 = vector.shape_cast %170 : vector<2x1x288xf32> to vector<2x288xf32>
    %c0_144 = arith.constant 0 : index
    %c2_145 = arith.constant 2 : index
    %c0_146 = arith.constant 0 : index
    %172 = vector.load %arg27[%c0_144, %c2_145, %c0_146] : memref<2x18x288xf32, #tpu.memory_space<vmem>>, vector<2x1x288xf32>
    %173 = vector.shape_cast %172 : vector<2x1x288xf32> to vector<2x288xf32>
    %174 = vector.shape_cast %171 : vector<2x288xf32> to vector<2x1x288xf32>
    tpu.vector_store %arg27[%c0_144, %c2_145, %c0_146], %174 {strides = array<i32>} : memref<2x18x288xf32, #tpu.memory_space<vmem>>, vector<2x1x288xf32>,
    %175 = vector.extract_strided_slice %156 {offsets = [0, 1, 0], sizes = [2, 1, 288], strides = [1, 1, 1]} : vector<2x8x288xf32> to vector<2x1x288xf32>
    %176 = vector.shape_cast %175 : vector<2x1x288xf32> to vector<2x288xf32>
    %c0_147 = arith.constant 0 : index
    %c3_148 = arith.constant 3 : index
    %c0_149 = arith.constant 0 : index
    %177 = vector.load %arg27[%c0_147, %c3_148, %c0_149] : memref<2x18x288xf32, #tpu.memory_space<vmem>>, vector<2x1x288xf32>
    %178 = vector.shape_cast %177 : vector<2x1x288xf32> to vector<2x288xf32>
    %179 = vector.shape_cast %176 : vector<2x288xf32> to vector<2x1x288xf32>
    tpu.vector_store %arg27[%c0_147, %c3_148, %c0_149], %179 {strides = array<i32>} : memref<2x18x288xf32, #tpu.memory_space<vmem>>, vector<2x1x288xf32>,
    %180 = vector.extract_strided_slice %157 {offsets = [0, 1, 0], sizes = [2, 1, 288], strides = [1, 1, 1]} : vector<2x8x288xf32> to vector<2x1x288xf32>
    %181 = vector.shape_cast %180 : vector<2x1x288xf32> to vector<2x288xf32>
    %c0_150 = arith.constant 0 : index
    %c4_151 = arith.constant 4 : index
    %c0_152 = arith.constant 0 : index
    %182 = vector.load %arg27[%c0_150, %c4_151, %c0_152] : memref<2x18x288xf32, #tpu.memory_space<vmem>>, vector<2x1x288xf32>
    %183 = vector.shape_cast %182 : vector<2x1x288xf32> to vector<2x288xf32>
    %184 = vector.shape_cast %181 : vector<2x288xf32> to vector<2x1x288xf32>
    tpu.vector_store %arg27[%c0_150, %c4_151, %c0_152], %184 {strides = array<i32>} : memref<2x18x288xf32, #tpu.memory_space<vmem>>, vector<2x1x288xf32>,
    %185 = vector.extract_strided_slice %156 {offsets = [0, 2, 0], sizes = [2, 1, 288], strides = [1, 1, 1]} : vector<2x8x288xf32> to vector<2x1x288xf32>
    %186 = vector.shape_cast %185 : vector<2x1x288xf32> to vector<2x288xf32>
    %c0_153 = arith.constant 0 : index
    %c5_154 = arith.constant 5 : index
    %c0_155 = arith.constant 0 : index
    %187 = vector.load %arg27[%c0_153, %c5_154, %c0_155] : memref<2x18x288xf32, #tpu.memory_space<vmem>>, vector<2x1x288xf32>
    %188 = vector.shape_cast %187 : vector<2x1x288xf32> to vector<2x288xf32>
    %189 = vector.shape_cast %186 : vector<2x288xf32> to vector<2x1x288xf32>
    tpu.vector_store %arg27[%c0_153, %c5_154, %c0_155], %189 {strides = array<i32>} : memref<2x18x288xf32, #tpu.memory_space<vmem>>, vector<2x1x288xf32>,
    %190 = vector.extract_strided_slice %157 {offsets = [0, 2, 0], sizes = [2, 1, 288], strides = [1, 1, 1]} : vector<2x8x288xf32> to vector<2x1x288xf32>
    %191 = vector.shape_cast %190 : vector<2x1x288xf32> to vector<2x288xf32>
    %c0_156 = arith.constant 0 : index
    %c6_157 = arith.constant 6 : index
    %c0_158 = arith.constant 0 : index
    %192 = vector.load %arg27[%c0_156, %c6_157, %c0_158] : memref<2x18x288xf32, #tpu.memory_space<vmem>>, vector<2x1x288xf32>
    %193 = vector.shape_cast %192 : vector<2x1x288xf32> to vector<2x288xf32>
    %194 = vector.shape_cast %191 : vector<2x288xf32> to vector<2x1x288xf32>
    tpu.vector_store %arg27[%c0_156, %c6_157, %c0_158], %194 {strides = array<i32>} : memref<2x18x288xf32, #tpu.memory_space<vmem>>, vector<2x1x288xf32>,
    %195 = vector.extract_strided_slice %156 {offsets = [0, 3, 0], sizes = [2, 1, 288], strides = [1, 1, 1]} : vector<2x8x288xf32> to vector<2x1x288xf32>
    %196 = vector.shape_cast %195 : vector<2x1x288xf32> to vector<2x288xf32>
    %c0_159 = arith.constant 0 : index
    %c7_160 = arith.constant 7 : index
    %c0_161 = arith.constant 0 : index
    %197 = vector.load %arg27[%c0_159, %c7_160, %c0_161] : memref<2x18x288xf32, #tpu.memory_space<vmem>>, vector<2x1x288xf32>
    %198 = vector.shape_cast %197 : vector<2x1x288xf32> to vector<2x288xf32>
    %199 = vector.shape_cast %196 : vector<2x288xf32> to vector<2x1x288xf32>
    tpu.vector_store %arg27[%c0_159, %c7_160, %c0_161], %199 {strides = array<i32>} : memref<2x18x288xf32, #tpu.memory_space<vmem>>, vector<2x1x288xf32>,
    %200 = vector.extract_strided_slice %157 {offsets = [0, 3, 0], sizes = [2, 1, 288], strides = [1, 1, 1]} : vector<2x8x288xf32> to vector<2x1x288xf32>
    %201 = vector.shape_cast %200 : vector<2x1x288xf32> to vector<2x288xf32>
    %c0_162 = arith.constant 0 : index
    %c8_163 = arith.constant 8 : index
    %c0_164 = arith.constant 0 : index
    %202 = vector.load %arg27[%c0_162, %c8_163, %c0_164] : memref<2x18x288xf32, #tpu.memory_space<vmem>>, vector<2x1x288xf32>
    %203 = vector.shape_cast %202 : vector<2x1x288xf32> to vector<2x288xf32>
    %204 = vector.shape_cast %201 : vector<2x288xf32> to vector<2x1x288xf32>
    tpu.vector_store %arg27[%c0_162, %c8_163, %c0_164], %204 {strides = array<i32>} : memref<2x18x288xf32, #tpu.memory_space<vmem>>, vector<2x1x288xf32>,
    %205 = vector.extract_strided_slice %156 {offsets = [0, 4, 0], sizes = [2, 1, 288], strides = [1, 1, 1]} : vector<2x8x288xf32> to vector<2x1x288xf32>
    %206 = vector.shape_cast %205 : vector<2x1x288xf32> to vector<2x288xf32>
    %c0_165 = arith.constant 0 : index
    %c9_166 = arith.constant 9 : index
    %c0_167 = arith.constant 0 : index
    %207 = vector.load %arg27[%c0_165, %c9_166, %c0_167] : memref<2x18x288xf32, #tpu.memory_space<vmem>>, vector<2x1x288xf32>
    %208 = vector.shape_cast %207 : vector<2x1x288xf32> to vector<2x288xf32>
    %209 = vector.shape_cast %206 : vector<2x288xf32> to vector<2x1x288xf32>
    tpu.vector_store %arg27[%c0_165, %c9_166, %c0_167], %209 {strides = array<i32>} : memref<2x18x288xf32, #tpu.memory_space<vmem>>, vector<2x1x288xf32>,
    %210 = vector.extract_strided_slice %157 {offsets = [0, 4, 0], sizes = [2, 1, 288], strides = [1, 1, 1]} : vector<2x8x288xf32> to vector<2x1x288xf32>
    %211 = vector.shape_cast %210 : vector<2x1x288xf32> to vector<2x288xf32>
    %c0_168 = arith.constant 0 : index
    %c10 = arith.constant 10 : index
    %c0_169 = arith.constant 0 : index
    %212 = vector.load %arg27[%c0_168, %c10, %c0_169] : memref<2x18x288xf32, #tpu.memory_space<vmem>>, vector<2x1x288xf32>
    %213 = vector.shape_cast %212 : vector<2x1x288xf32> to vector<2x288xf32>
    %214 = vector.shape_cast %211 : vector<2x288xf32> to vector<2x1x288xf32>
    tpu.vector_store %arg27[%c0_168, %c10, %c0_169], %214 {strides = array<i32>} : memref<2x18x288xf32, #tpu.memory_space<vmem>>, vector<2x1x288xf32>,
    %215 = vector.extract_strided_slice %156 {offsets = [0, 5, 0], sizes = [2, 1, 288], strides = [1, 1, 1]} : vector<2x8x288xf32> to vector<2x1x288xf32>
    %216 = vector.shape_cast %215 : vector<2x1x288xf32> to vector<2x288xf32>
    %c0_170 = arith.constant 0 : index
    %c11 = arith.constant 11 : index
    %c0_171 = arith.constant 0 : index
    %217 = vector.load %arg27[%c0_170, %c11, %c0_171] : memref<2x18x288xf32, #tpu.memory_space<vmem>>, vector<2x1x288xf32>
    %218 = vector.shape_cast %217 : vector<2x1x288xf32> to vector<2x288xf32>
    %219 = vector.shape_cast %216 : vector<2x288xf32> to vector<2x1x288xf32>
    tpu.vector_store %arg27[%c0_170, %c11, %c0_171], %219 {strides = array<i32>} : memref<2x18x288xf32, #tpu.memory_space<vmem>>, vector<2x1x288xf32>,
    %220 = vector.extract_strided_slice %157 {offsets = [0, 5, 0], sizes = [2, 1, 288], strides = [1, 1, 1]} : vector<2x8x288xf32> to vector<2x1x288xf32>
    %221 = vector.shape_cast %220 : vector<2x1x288xf32> to vector<2x288xf32>
    %c0_172 = arith.constant 0 : index
    %c12 = arith.constant 12 : index
    %c0_173 = arith.constant 0 : index
    %222 = vector.load %arg27[%c0_172, %c12, %c0_173] : memref<2x18x288xf32, #tpu.memory_space<vmem>>, vector<2x1x288xf32>
    %223 = vector.shape_cast %222 : vector<2x1x288xf32> to vector<2x288xf32>
    %224 = vector.shape_cast %221 : vector<2x288xf32> to vector<2x1x288xf32>
    tpu.vector_store %arg27[%c0_172, %c12, %c0_173], %224 {strides = array<i32>} : memref<2x18x288xf32, #tpu.memory_space<vmem>>, vector<2x1x288xf32>,
    %225 = vector.extract_strided_slice %156 {offsets = [0, 6, 0], sizes = [2, 1, 288], strides = [1, 1, 1]} : vector<2x8x288xf32> to vector<2x1x288xf32>
    %226 = vector.shape_cast %225 : vector<2x1x288xf32> to vector<2x288xf32>
    %c0_174 = arith.constant 0 : index
    %c13 = arith.constant 13 : index
    %c0_175 = arith.constant 0 : index
    %227 = vector.load %arg27[%c0_174, %c13, %c0_175] : memref<2x18x288xf32, #tpu.memory_space<vmem>>, vector<2x1x288xf32>
    %228 = vector.shape_cast %227 : vector<2x1x288xf32> to vector<2x288xf32>
    %229 = vector.shape_cast %226 : vector<2x288xf32> to vector<2x1x288xf32>
    tpu.vector_store %arg27[%c0_174, %c13, %c0_175], %229 {strides = array<i32>} : memref<2x18x288xf32, #tpu.memory_space<vmem>>, vector<2x1x288xf32>,
    %230 = vector.extract_strided_slice %157 {offsets = [0, 6, 0], sizes = [2, 1, 288], strides = [1, 1, 1]} : vector<2x8x288xf32> to vector<2x1x288xf32>
    %231 = vector.shape_cast %230 : vector<2x1x288xf32> to vector<2x288xf32>
    %c0_176 = arith.constant 0 : index
    %c14 = arith.constant 14 : index
    %c0_177 = arith.constant 0 : index
    %232 = vector.load %arg27[%c0_176, %c14, %c0_177] : memref<2x18x288xf32, #tpu.memory_space<vmem>>, vector<2x1x288xf32>
    %233 = vector.shape_cast %232 : vector<2x1x288xf32> to vector<2x288xf32>
    %234 = vector.shape_cast %231 : vector<2x288xf32> to vector<2x1x288xf32>
    tpu.vector_store %arg27[%c0_176, %c14, %c0_177], %234 {strides = array<i32>} : memref<2x18x288xf32, #tpu.memory_space<vmem>>, vector<2x1x288xf32>,
    %235 = vector.extract_strided_slice %156 {offsets = [0, 7, 0], sizes = [2, 1, 288], strides = [1, 1, 1]} : vector<2x8x288xf32> to vector<2x1x288xf32>
    %236 = vector.shape_cast %235 : vector<2x1x288xf32> to vector<2x288xf32>
    %c0_178 = arith.constant 0 : index
    %c15 = arith.constant 15 : index
    %c0_179 = arith.constant 0 : index
    %237 = vector.load %arg27[%c0_178, %c15, %c0_179] : memref<2x18x288xf32, #tpu.memory_space<vmem>>, vector<2x1x288xf32>
    %238 = vector.shape_cast %237 : vector<2x1x288xf32> to vector<2x288xf32>
    %239 = vector.shape_cast %236 : vector<2x288xf32> to vector<2x1x288xf32>
    tpu.vector_store %arg27[%c0_178, %c15, %c0_179], %239 {strides = array<i32>} : memref<2x18x288xf32, #tpu.memory_space<vmem>>, vector<2x1x288xf32>,
    %240 = vector.extract_strided_slice %157 {offsets = [0, 7, 0], sizes = [2, 1, 288], strides = [1, 1, 1]} : vector<2x8x288xf32> to vector<2x1x288xf32>
    %241 = vector.shape_cast %240 : vector<2x1x288xf32> to vector<2x288xf32>
    %c0_180 = arith.constant 0 : index
    %c16 = arith.constant 16 : index
    %c0_181 = arith.constant 0 : index
    %242 = vector.load %arg27[%c0_180, %c16, %c0_181] : memref<2x18x288xf32, #tpu.memory_space<vmem>>, vector<2x1x288xf32>
    %243 = vector.shape_cast %242 : vector<2x1x288xf32> to vector<2x288xf32>
    %244 = vector.shape_cast %241 : vector<2x288xf32> to vector<2x1x288xf32>
    tpu.vector_store %arg27[%c0_180, %c16, %c0_181], %244 {strides = array<i32>} : memref<2x18x288xf32, #tpu.memory_space<vmem>>, vector<2x1x288xf32>,
    %c0_182 = arith.constant 0 : index
    %c0_183 = arith.constant 0 : index
    %c0_184 = arith.constant 0 : index
    %245 = vector.load %arg27[%c0_182, %c0_183, %c0_184] : memref<2x18x288xf32, #tpu.memory_space<vmem>>, vector<2x18x288xf32>
    %246 = vector.extract_strided_slice %245 {offsets = [0, 0, 0], sizes = [2, 16, 288], strides = [1, 1, 1]} : vector<2x18x288xf32> to vector<2x16x288xf32>
    %247 = vector.shape_cast %246 : vector<2x16x288xf32> to vector<32x288xf32>
    %c0_185 = arith.constant 0 : index
    %c0_186 = arith.constant 0 : index
    %c0_187 = arith.constant 0 : index
    %248 = vector.load %arg11[%c0_185, %c0_186, %c0_187] : memref<3x288x160xf32, #tpu.memory_space<vmem>>, vector<1x288x160xf32>
    %249 = vector.shape_cast %248 : vector<1x288x160xf32> to vector<288x160xf32>
    %cst_188 = arith.constant dense<0.000000e+00> : vector<32x160xf32>
    %250 = tpu.matmul %247, %249, %cst_188 {dimension_numbers = #tpu.dot_dimension_numbers<[1], [0], [0], [1], [0, 0, 1, 1], [], []>} : vector<32x288xf32>, vector<288x160xf32>, vector<32x160xf32> -> vector<32x160xf32>
    %251 = vector.extract_strided_slice %245 {offsets = [0, 1, 0], sizes = [2, 16, 288], strides = [1, 1, 1]} : vector<2x18x288xf32> to vector<2x16x288xf32>
    %252 = vector.shape_cast %251 : vector<2x16x288xf32> to vector<32x288xf32>
    %c1_189 = arith.constant 1 : index
    %c0_190 = arith.constant 0 : index
    %c0_191 = arith.constant 0 : index
    %253 = vector.load %arg11[%c1_189, %c0_190, %c0_191] : memref<3x288x160xf32, #tpu.memory_space<vmem>>, vector<1x288x160xf32>
    %254 = vector.shape_cast %253 : vector<1x288x160xf32> to vector<288x160xf32>
    %cst_192 = arith.constant dense<0.000000e+00> : vector<32x160xf32>
    %255 = tpu.matmul %252, %254, %cst_192 {dimension_numbers = #tpu.dot_dimension_numbers<[1], [0], [0], [1], [0, 0, 1, 1], [], []>} : vector<32x288xf32>, vector<288x160xf32>, vector<32x160xf32> -> vector<32x160xf32>
    %256 = arith.addf %250, %255 : vector<32x160xf32>
    %257 = vector.extract_strided_slice %245 {offsets = [0, 2, 0], sizes = [2, 16, 288], strides = [1, 1, 1]} : vector<2x18x288xf32> to vector<2x16x288xf32>
    %258 = vector.shape_cast %257 : vector<2x16x288xf32> to vector<32x288xf32>
    %c2_193 = arith.constant 2 : index
    %c0_194 = arith.constant 0 : index
    %c0_195 = arith.constant 0 : index
    %259 = vector.load %arg11[%c2_193, %c0_194, %c0_195] : memref<3x288x160xf32, #tpu.memory_space<vmem>>, vector<1x288x160xf32>
    %260 = vector.shape_cast %259 : vector<1x288x160xf32> to vector<288x160xf32>
    %cst_196 = arith.constant dense<0.000000e+00> : vector<32x160xf32>
    %261 = tpu.matmul %258, %260, %cst_196 {dimension_numbers = #tpu.dot_dimension_numbers<[1], [0], [0], [1], [0, 0, 1, 1], [], []>} : vector<32x288xf32>, vector<288x160xf32>, vector<32x160xf32> -> vector<32x160xf32>
    %262 = arith.addf %256, %261 : vector<32x160xf32>
    %c0_197 = arith.constant 0 : index
    %c0_198 = arith.constant 0 : index
    %263 = vector.load %arg12[%c0_197, %c0_198] : memref<1x10xf32, #tpu.memory_space<vmem>>, vector<1x10xf32>
    %c0_199 = arith.constant 0 : index
    %c0_200 = arith.constant 0 : index
    %264 = vector.load %arg14[%c0_199, %c0_200] : memref<10x160xf32, #tpu.memory_space<vmem>>, vector<10x160xf32>
    %cst_201 = arith.constant dense<0.000000e+00> : vector<1x160xf32>
    %265 = tpu.matmul %263, %264, %cst_201 {dimension_numbers = #tpu.dot_dimension_numbers<[1], [0], [0], [1], [0, 0, 1, 1], [], []>} : vector<1x10xf32>, vector<10x160xf32>, vector<1x160xf32> -> vector<1x160xf32>
    %266 = vector.broadcast %265 : vector<1x160xf32> to vector<32x160xf32>
    %267 = arith.addf %262, %266 : vector<32x160xf32>
    %c0_202 = arith.constant 0 : index
    %c0_203 = arith.constant 0 : index
    %268 = vector.load %arg13[%c0_202, %c0_203] : memref<160x10xf32, #tpu.memory_space<vmem>>, vector<160x10xf32>
    %cst_204 = arith.constant dense<0.000000e+00> : vector<32x10xf32>
    %269 = tpu.matmul %267, %268, %cst_204 {dimension_numbers = #tpu.dot_dimension_numbers<[1], [0], [0], [1], [0, 0, 1, 1], [], []>} : vector<32x160xf32>, vector<160x10xf32>, vector<32x10xf32> -> vector<32x10xf32>
    %cst_205 = arith.constant dense<0.000000e+00> : vector<10xf32>
    %270 = vector.multi_reduction <add>, %269, %cst_205 [0] : vector<32x10xf32> to vector<10xf32>
    %271 = vector.shape_cast %270 : vector<10xf32> to vector<1x10xf32>
    %cst_206 = arith.constant 5.120000e+02 : f32
    %272 = vector.broadcast %cst_206 : f32 to vector<1x10xf32>
    %273 = arith.divf %271, %272 : vector<1x10xf32>
    %c0_207 = arith.constant 0 : index
    %c0_208 = arith.constant 0 : index
    %274 = vector.load %arg14[%c0_207, %c0_208] : memref<10x160xf32, #tpu.memory_space<vmem>>, vector<10x160xf32>
    %cst_209 = arith.constant dense<0.000000e+00> : vector<1x160xf32>
    %275 = tpu.matmul %273, %274, %cst_209 {dimension_numbers = #tpu.dot_dimension_numbers<[1], [0], [0], [1], [0, 0, 1, 1], [], []>} : vector<1x10xf32>, vector<10x160xf32>, vector<1x160xf32> -> vector<1x160xf32>
    %276 = vector.broadcast %275 : vector<1x160xf32> to vector<32x160xf32>
    %277 = arith.subf %267, %276 : vector<32x160xf32>
    %278 = arith.mulf %277, %277 : vector<32x160xf32>
    %c0_210 = arith.constant 0 : index
    %c0_211 = arith.constant 0 : index
    %279 = vector.load %arg13[%c0_210, %c0_211] : memref<160x10xf32, #tpu.memory_space<vmem>>, vector<160x10xf32>
    %cst_212 = arith.constant dense<0.000000e+00> : vector<32x10xf32>
    %280 = tpu.matmul %278, %279, %cst_212 {dimension_numbers = #tpu.dot_dimension_numbers<[1], [0], [0], [1], [0, 0, 1, 1], [], []>} : vector<32x160xf32>, vector<160x10xf32>, vector<32x10xf32> -> vector<32x10xf32>
    %cst_213 = arith.constant dense<0.000000e+00> : vector<10xf32>
    %281 = vector.multi_reduction <add>, %280, %cst_213 [0] : vector<32x10xf32> to vector<10xf32>
    %282 = vector.shape_cast %281 : vector<10xf32> to vector<1x10xf32>
    %cst_214 = arith.constant 5.120000e+02 : f32
    %283 = vector.broadcast %cst_214 : f32 to vector<1x10xf32>
    %284 = arith.divf %282, %283 : vector<1x10xf32>
    %cst_215 = arith.constant 9.99999974E-6 : f32
    %285 = vector.broadcast %cst_215 : f32 to vector<1x10xf32>
    %286 = arith.addf %284, %285 : vector<1x10xf32>
    %287 = math.rsqrt %286 : vector<1x10xf32>
    %c0_216 = arith.constant 0 : index
    %c0_217 = arith.constant 0 : index
    %288 = vector.load %arg15[%c0_216, %c0_217] : memref<1x10xf32, #tpu.memory_space<vmem>>, vector<1x10xf32>
    %289 = arith.mulf %287, %288 : vector<1x10xf32>
    %c0_218 = arith.constant 0 : index
    %c0_219 = arith.constant 0 : index
    %290 = vector.load %arg14[%c0_218, %c0_219] : memref<10x160xf32, #tpu.memory_space<vmem>>, vector<10x160xf32>
    %cst_220 = arith.constant dense<0.000000e+00> : vector<1x160xf32>
    %291 = tpu.matmul %289, %290, %cst_220 {dimension_numbers = #tpu.dot_dimension_numbers<[1], [0], [0], [1], [0, 0, 1, 1], [], []>} : vector<1x10xf32>, vector<10x160xf32>, vector<1x160xf32> -> vector<1x160xf32>
    %c0_221 = arith.constant 0 : index
    %c0_222 = arith.constant 0 : index
    %292 = vector.load %arg16[%c0_221, %c0_222] : memref<1x10xf32, #tpu.memory_space<vmem>>, vector<1x10xf32>
    %c0_223 = arith.constant 0 : index
    %c0_224 = arith.constant 0 : index
    %293 = vector.load %arg14[%c0_223, %c0_224] : memref<10x160xf32, #tpu.memory_space<vmem>>, vector<10x160xf32>
    %cst_225 = arith.constant dense<0.000000e+00> : vector<1x160xf32>
    %294 = tpu.matmul %292, %293, %cst_225 {dimension_numbers = #tpu.dot_dimension_numbers<[1], [0], [0], [1], [0, 0, 1, 1], [], []>} : vector<1x10xf32>, vector<10x160xf32>, vector<1x160xf32> -> vector<1x160xf32>
    %295 = vector.broadcast %291 : vector<1x160xf32> to vector<32x160xf32>
    %296 = arith.mulf %277, %295 : vector<32x160xf32>
    %297 = vector.broadcast %294 : vector<1x160xf32> to vector<32x160xf32>
    %298 = arith.addf %296, %297 : vector<32x160xf32>
    %cst_226 = arith.constant 0.000000e+00 : f32
    %299 = vector.broadcast %cst_226 : f32 to vector<32x160xf32>
    %300 = arith.maximumf %298, %299 : vector<32x160xf32>
    %c0_227 = arith.constant 0 : index
    %c0_228 = arith.constant 0 : index
    %c0_229 = arith.constant 0 : index
    %301 = vector.load %arg17[%c0_227, %c0_228, %c0_229] : memref<2x160x340xf32, #tpu.memory_space<vmem>>, vector<1x160x340xf32>
    %302 = vector.shape_cast %301 : vector<1x160x340xf32> to vector<160x340xf32>
    %cst_230 = arith.constant dense<0.000000e+00> : vector<32x340xf32>
    %303 = tpu.matmul %300, %302, %cst_230 {dimension_numbers = #tpu.dot_dimension_numbers<[1], [0], [0], [1], [0, 0, 1, 1], [], []>} : vector<32x160xf32>, vector<160x340xf32>, vector<32x340xf32> -> vector<32x340xf32>
    %c0_231 = arith.constant 0 : index
    %c0_232 = arith.constant 0 : index
    %304 = vector.load %arg18[%c0_231, %c0_232] : memref<1x340xf32, #tpu.memory_space<vmem>>, vector<1x340xf32>
    %305 = vector.broadcast %304 : vector<1x340xf32> to vector<32x340xf32>
    %306 = arith.addf %303, %305 : vector<32x340xf32>
    %c1_233 = arith.constant 1 : index
    %c0_234 = arith.constant 0 : index
    %c0_235 = arith.constant 0 : index
    %307 = vector.load %arg17[%c1_233, %c0_234, %c0_235] : memref<2x160x340xf32, #tpu.memory_space<vmem>>, vector<1x160x340xf32>
    %308 = vector.shape_cast %307 : vector<1x160x340xf32> to vector<160x340xf32>
    %cst_236 = arith.constant dense<0.000000e+00> : vector<32x340xf32>
    %309 = tpu.matmul %300, %308, %cst_236 {dimension_numbers = #tpu.dot_dimension_numbers<[1], [0], [0], [1], [0, 0, 1, 1], [], []>} : vector<32x160xf32>, vector<160x340xf32>, vector<32x340xf32> -> vector<32x340xf32>
    %c0_237 = arith.constant 0 : index
    %c0_238 = arith.constant 0 : index
    %310 = vector.load %arg18[%c0_237, %c0_238] : memref<1x340xf32, #tpu.memory_space<vmem>>, vector<1x340xf32>
    %311 = vector.broadcast %310 : vector<1x340xf32> to vector<32x340xf32>
    %312 = arith.addf %309, %311 : vector<32x340xf32>
    %313 = vector.shape_cast %306 : vector<32x340xf32> to vector<2x16x340xf32>
    %314 = vector.shape_cast %312 : vector<32x340xf32> to vector<2x16x340xf32>
    %cst_239 = arith.constant 0.000000e+00 : f32
    %315 = vector.broadcast %cst_239 : f32 to vector<2x340xf32>
    %c0_240 = arith.constant 0 : index
    %c0_241 = arith.constant 0 : index
    %c0_242 = arith.constant 0 : index
    %316 = vector.load %arg28[%c0_240, %c0_241, %c0_242] : memref<2x34x340xf32, #tpu.memory_space<vmem>>, vector<2x1x340xf32>
    %317 = vector.shape_cast %316 : vector<2x1x340xf32> to vector<2x340xf32>
    %318 = vector.shape_cast %315 : vector<2x340xf32> to vector<2x1x340xf32>
    tpu.vector_store %arg28[%c0_240, %c0_241, %c0_242], %318 {strides = array<i32>} : memref<2x34x340xf32, #tpu.memory_space<vmem>>, vector<2x1x340xf32>,
    %c0_243 = arith.constant 0 : index
    %c33 = arith.constant 33 : index
    %c0_244 = arith.constant 0 : index
    %319 = vector.load %arg28[%c0_243, %c33, %c0_244] : memref<2x34x340xf32, #tpu.memory_space<vmem>>, vector<2x1x340xf32>
    %320 = vector.shape_cast %319 : vector<2x1x340xf32> to vector<2x340xf32>
    %321 = vector.shape_cast %315 : vector<2x340xf32> to vector<2x1x340xf32>
    tpu.vector_store %arg28[%c0_243, %c33, %c0_244], %321 {strides = array<i32>} : memref<2x34x340xf32, #tpu.memory_space<vmem>>, vector<2x1x340xf32>,
    %322 = vector.extract_strided_slice %313 {offsets = [0, 0, 0], sizes = [2, 1, 340], strides = [1, 1, 1]} : vector<2x16x340xf32> to vector<2x1x340xf32>
    %323 = vector.shape_cast %322 : vector<2x1x340xf32> to vector<2x340xf32>
    %c0_245 = arith.constant 0 : index
    %c1_246 = arith.constant 1 : index
    %c0_247 = arith.constant 0 : index
    %324 = vector.load %arg28[%c0_245, %c1_246, %c0_247] : memref<2x34x340xf32, #tpu.memory_space<vmem>>, vector<2x1x340xf32>
    %325 = vector.shape_cast %324 : vector<2x1x340xf32> to vector<2x340xf32>
    %326 = vector.shape_cast %323 : vector<2x340xf32> to vector<2x1x340xf32>
    tpu.vector_store %arg28[%c0_245, %c1_246, %c0_247], %326 {strides = array<i32>} : memref<2x34x340xf32, #tpu.memory_space<vmem>>, vector<2x1x340xf32>,
    %327 = vector.extract_strided_slice %314 {offsets = [0, 0, 0], sizes = [2, 1, 340], strides = [1, 1, 1]} : vector<2x16x340xf32> to vector<2x1x340xf32>
    %328 = vector.shape_cast %327 : vector<2x1x340xf32> to vector<2x340xf32>
    %c0_248 = arith.constant 0 : index
    %c2_249 = arith.constant 2 : index
    %c0_250 = arith.constant 0 : index
    %329 = vector.load %arg28[%c0_248, %c2_249, %c0_250] : memref<2x34x340xf32, #tpu.memory_space<vmem>>, vector<2x1x340xf32>
    %330 = vector.shape_cast %329 : vector<2x1x340xf32> to vector<2x340xf32>
    %331 = vector.shape_cast %328 : vector<2x340xf32> to vector<2x1x340xf32>
    tpu.vector_store %arg28[%c0_248, %c2_249, %c0_250], %331 {strides = array<i32>} : memref<2x34x340xf32, #tpu.memory_space<vmem>>, vector<2x1x340xf32>,
    %332 = vector.extract_strided_slice %313 {offsets = [0, 1, 0], sizes = [2, 1, 340], strides = [1, 1, 1]} : vector<2x16x340xf32> to vector<2x1x340xf32>
    %333 = vector.shape_cast %332 : vector<2x1x340xf32> to vector<2x340xf32>
    %c0_251 = arith.constant 0 : index
    %c3_252 = arith.constant 3 : index
    %c0_253 = arith.constant 0 : index
    %334 = vector.load %arg28[%c0_251, %c3_252, %c0_253] : memref<2x34x340xf32, #tpu.memory_space<vmem>>, vector<2x1x340xf32>
    %335 = vector.shape_cast %334 : vector<2x1x340xf32> to vector<2x340xf32>
    %336 = vector.shape_cast %333 : vector<2x340xf32> to vector<2x1x340xf32>
    tpu.vector_store %arg28[%c0_251, %c3_252, %c0_253], %336 {strides = array<i32>} : memref<2x34x340xf32, #tpu.memory_space<vmem>>, vector<2x1x340xf32>,
    %337 = vector.extract_strided_slice %314 {offsets = [0, 1, 0], sizes = [2, 1, 340], strides = [1, 1, 1]} : vector<2x16x340xf32> to vector<2x1x340xf32>
    %338 = vector.shape_cast %337 : vector<2x1x340xf32> to vector<2x340xf32>
    %c0_254 = arith.constant 0 : index
    %c4_255 = arith.constant 4 : index
    %c0_256 = arith.constant 0 : index
    %339 = vector.load %arg28[%c0_254, %c4_255, %c0_256] : memref<2x34x340xf32, #tpu.memory_space<vmem>>, vector<2x1x340xf32>
    %340 = vector.shape_cast %339 : vector<2x1x340xf32> to vector<2x340xf32>
    %341 = vector.shape_cast %338 : vector<2x340xf32> to vector<2x1x340xf32>
    tpu.vector_store %arg28[%c0_254, %c4_255, %c0_256], %341 {strides = array<i32>} : memref<2x34x340xf32, #tpu.memory_space<vmem>>, vector<2x1x340xf32>,
    %342 = vector.extract_strided_slice %313 {offsets = [0, 2, 0], sizes = [2, 1, 340], strides = [1, 1, 1]} : vector<2x16x340xf32> to vector<2x1x340xf32>
    %343 = vector.shape_cast %342 : vector<2x1x340xf32> to vector<2x340xf32>
    %c0_257 = arith.constant 0 : index
    %c5_258 = arith.constant 5 : index
    %c0_259 = arith.constant 0 : index
    %344 = vector.load %arg28[%c0_257, %c5_258, %c0_259] : memref<2x34x340xf32, #tpu.memory_space<vmem>>, vector<2x1x340xf32>
    %345 = vector.shape_cast %344 : vector<2x1x340xf32> to vector<2x340xf32>
    %346 = vector.shape_cast %343 : vector<2x340xf32> to vector<2x1x340xf32>
    tpu.vector_store %arg28[%c0_257, %c5_258, %c0_259], %346 {strides = array<i32>} : memref<2x34x340xf32, #tpu.memory_space<vmem>>, vector<2x1x340xf32>,
    %347 = vector.extract_strided_slice %314 {offsets = [0, 2, 0], sizes = [2, 1, 340], strides = [1, 1, 1]} : vector<2x16x340xf32> to vector<2x1x340xf32>
    %348 = vector.shape_cast %347 : vector<2x1x340xf32> to vector<2x340xf32>
    %c0_260 = arith.constant 0 : index
    %c6_261 = arith.constant 6 : index
    %c0_262 = arith.constant 0 : index
    %349 = vector.load %arg28[%c0_260, %c6_261, %c0_262] : memref<2x34x340xf32, #tpu.memory_space<vmem>>, vector<2x1x340xf32>
    %350 = vector.shape_cast %349 : vector<2x1x340xf32> to vector<2x340xf32>
    %351 = vector.shape_cast %348 : vector<2x340xf32> to vector<2x1x340xf32>
    tpu.vector_store %arg28[%c0_260, %c6_261, %c0_262], %351 {strides = array<i32>} : memref<2x34x340xf32, #tpu.memory_space<vmem>>, vector<2x1x340xf32>,
    %352 = vector.extract_strided_slice %313 {offsets = [0, 3, 0], sizes = [2, 1, 340], strides = [1, 1, 1]} : vector<2x16x340xf32> to vector<2x1x340xf32>
    %353 = vector.shape_cast %352 : vector<2x1x340xf32> to vector<2x340xf32>
    %c0_263 = arith.constant 0 : index
    %c7_264 = arith.constant 7 : index
    %c0_265 = arith.constant 0 : index
    %354 = vector.load %arg28[%c0_263, %c7_264, %c0_265] : memref<2x34x340xf32, #tpu.memory_space<vmem>>, vector<2x1x340xf32>
    %355 = vector.shape_cast %354 : vector<2x1x340xf32> to vector<2x340xf32>
    %356 = vector.shape_cast %353 : vector<2x340xf32> to vector<2x1x340xf32>
    tpu.vector_store %arg28[%c0_263, %c7_264, %c0_265], %356 {strides = array<i32>} : memref<2x34x340xf32, #tpu.memory_space<vmem>>, vector<2x1x340xf32>,
    %357 = vector.extract_strided_slice %314 {offsets = [0, 3, 0], sizes = [2, 1, 340], strides = [1, 1, 1]} : vector<2x16x340xf32> to vector<2x1x340xf32>
    %358 = vector.shape_cast %357 : vector<2x1x340xf32> to vector<2x340xf32>
    %c0_266 = arith.constant 0 : index
    %c8_267 = arith.constant 8 : index
    %c0_268 = arith.constant 0 : index
    %359 = vector.load %arg28[%c0_266, %c8_267, %c0_268] : memref<2x34x340xf32, #tpu.memory_space<vmem>>, vector<2x1x340xf32>
    %360 = vector.shape_cast %359 : vector<2x1x340xf32> to vector<2x340xf32>
    %361 = vector.shape_cast %358 : vector<2x340xf32> to vector<2x1x340xf32>
    tpu.vector_store %arg28[%c0_266, %c8_267, %c0_268], %361 {strides = array<i32>} : memref<2x34x340xf32, #tpu.memory_space<vmem>>, vector<2x1x340xf32>,
    %362 = vector.extract_strided_slice %313 {offsets = [0, 4, 0], sizes = [2, 1, 340], strides = [1, 1, 1]} : vector<2x16x340xf32> to vector<2x1x340xf32>
    %363 = vector.shape_cast %362 : vector<2x1x340xf32> to vector<2x340xf32>
    %c0_269 = arith.constant 0 : index
    %c9_270 = arith.constant 9 : index
    %c0_271 = arith.constant 0 : index
    %364 = vector.load %arg28[%c0_269, %c9_270, %c0_271] : memref<2x34x340xf32, #tpu.memory_space<vmem>>, vector<2x1x340xf32>
    %365 = vector.shape_cast %364 : vector<2x1x340xf32> to vector<2x340xf32>
    %366 = vector.shape_cast %363 : vector<2x340xf32> to vector<2x1x340xf32>
    tpu.vector_store %arg28[%c0_269, %c9_270, %c0_271], %366 {strides = array<i32>} : memref<2x34x340xf32, #tpu.memory_space<vmem>>, vector<2x1x340xf32>,
    %367 = vector.extract_strided_slice %314 {offsets = [0, 4, 0], sizes = [2, 1, 340], strides = [1, 1, 1]} : vector<2x16x340xf32> to vector<2x1x340xf32>
    %368 = vector.shape_cast %367 : vector<2x1x340xf32> to vector<2x340xf32>
    %c0_272 = arith.constant 0 : index
    %c10_273 = arith.constant 10 : index
    %c0_274 = arith.constant 0 : index
    %369 = vector.load %arg28[%c0_272, %c10_273, %c0_274] : memref<2x34x340xf32, #tpu.memory_space<vmem>>, vector<2x1x340xf32>
    %370 = vector.shape_cast %369 : vector<2x1x340xf32> to vector<2x340xf32>
    %371 = vector.shape_cast %368 : vector<2x340xf32> to vector<2x1x340xf32>
    tpu.vector_store %arg28[%c0_272, %c10_273, %c0_274], %371 {strides = array<i32>} : memref<2x34x340xf32, #tpu.memory_space<vmem>>, vector<2x1x340xf32>,
    %372 = vector.extract_strided_slice %313 {offsets = [0, 5, 0], sizes = [2, 1, 340], strides = [1, 1, 1]} : vector<2x16x340xf32> to vector<2x1x340xf32>
    %373 = vector.shape_cast %372 : vector<2x1x340xf32> to vector<2x340xf32>
    %c0_275 = arith.constant 0 : index
    %c11_276 = arith.constant 11 : index
    %c0_277 = arith.constant 0 : index
    %374 = vector.load %arg28[%c0_275, %c11_276, %c0_277] : memref<2x34x340xf32, #tpu.memory_space<vmem>>, vector<2x1x340xf32>
    %375 = vector.shape_cast %374 : vector<2x1x340xf32> to vector<2x340xf32>
    %376 = vector.shape_cast %373 : vector<2x340xf32> to vector<2x1x340xf32>
    tpu.vector_store %arg28[%c0_275, %c11_276, %c0_277], %376 {strides = array<i32>} : memref<2x34x340xf32, #tpu.memory_space<vmem>>, vector<2x1x340xf32>,
    %377 = vector.extract_strided_slice %314 {offsets = [0, 5, 0], sizes = [2, 1, 340], strides = [1, 1, 1]} : vector<2x16x340xf32> to vector<2x1x340xf32>
    %378 = vector.shape_cast %377 : vector<2x1x340xf32> to vector<2x340xf32>
    %c0_278 = arith.constant 0 : index
    %c12_279 = arith.constant 12 : index
    %c0_280 = arith.constant 0 : index
    %379 = vector.load %arg28[%c0_278, %c12_279, %c0_280] : memref<2x34x340xf32, #tpu.memory_space<vmem>>, vector<2x1x340xf32>
    %380 = vector.shape_cast %379 : vector<2x1x340xf32> to vector<2x340xf32>
    %381 = vector.shape_cast %378 : vector<2x340xf32> to vector<2x1x340xf32>
    tpu.vector_store %arg28[%c0_278, %c12_279, %c0_280], %381 {strides = array<i32>} : memref<2x34x340xf32, #tpu.memory_space<vmem>>, vector<2x1x340xf32>,
    %382 = vector.extract_strided_slice %313 {offsets = [0, 6, 0], sizes = [2, 1, 340], strides = [1, 1, 1]} : vector<2x16x340xf32> to vector<2x1x340xf32>
    %383 = vector.shape_cast %382 : vector<2x1x340xf32> to vector<2x340xf32>
    %c0_281 = arith.constant 0 : index
    %c13_282 = arith.constant 13 : index
    %c0_283 = arith.constant 0 : index
    %384 = vector.load %arg28[%c0_281, %c13_282, %c0_283] : memref<2x34x340xf32, #tpu.memory_space<vmem>>, vector<2x1x340xf32>
    %385 = vector.shape_cast %384 : vector<2x1x340xf32> to vector<2x340xf32>
    %386 = vector.shape_cast %383 : vector<2x340xf32> to vector<2x1x340xf32>
    tpu.vector_store %arg28[%c0_281, %c13_282, %c0_283], %386 {strides = array<i32>} : memref<2x34x340xf32, #tpu.memory_space<vmem>>, vector<2x1x340xf32>,
    %387 = vector.extract_strided_slice %314 {offsets = [0, 6, 0], sizes = [2, 1, 340], strides = [1, 1, 1]} : vector<2x16x340xf32> to vector<2x1x340xf32>
    %388 = vector.shape_cast %387 : vector<2x1x340xf32> to vector<2x340xf32>
    %c0_284 = arith.constant 0 : index
    %c14_285 = arith.constant 14 : index
    %c0_286 = arith.constant 0 : index
    %389 = vector.load %arg28[%c0_284, %c14_285, %c0_286] : memref<2x34x340xf32, #tpu.memory_space<vmem>>, vector<2x1x340xf32>
    %390 = vector.shape_cast %389 : vector<2x1x340xf32> to vector<2x340xf32>
    %391 = vector.shape_cast %388 : vector<2x340xf32> to vector<2x1x340xf32>
    tpu.vector_store %arg28[%c0_284, %c14_285, %c0_286], %391 {strides = array<i32>} : memref<2x34x340xf32, #tpu.memory_space<vmem>>, vector<2x1x340xf32>,
    %392 = vector.extract_strided_slice %313 {offsets = [0, 7, 0], sizes = [2, 1, 340], strides = [1, 1, 1]} : vector<2x16x340xf32> to vector<2x1x340xf32>
    %393 = vector.shape_cast %392 : vector<2x1x340xf32> to vector<2x340xf32>
    %c0_287 = arith.constant 0 : index
    %c15_288 = arith.constant 15 : index
    %c0_289 = arith.constant 0 : index
    %394 = vector.load %arg28[%c0_287, %c15_288, %c0_289] : memref<2x34x340xf32, #tpu.memory_space<vmem>>, vector<2x1x340xf32>
    %395 = vector.shape_cast %394 : vector<2x1x340xf32> to vector<2x340xf32>
    %396 = vector.shape_cast %393 : vector<2x340xf32> to vector<2x1x340xf32>
    tpu.vector_store %arg28[%c0_287, %c15_288, %c0_289], %396 {strides = array<i32>} : memref<2x34x340xf32, #tpu.memory_space<vmem>>, vector<2x1x340xf32>,
    %397 = vector.extract_strided_slice %314 {offsets = [0, 7, 0], sizes = [2, 1, 340], strides = [1, 1, 1]} : vector<2x16x340xf32> to vector<2x1x340xf32>
    %398 = vector.shape_cast %397 : vector<2x1x340xf32> to vector<2x340xf32>
    %c0_290 = arith.constant 0 : index
    %c16_291 = arith.constant 16 : index
    %c0_292 = arith.constant 0 : index
    %399 = vector.load %arg28[%c0_290, %c16_291, %c0_292] : memref<2x34x340xf32, #tpu.memory_space<vmem>>, vector<2x1x340xf32>
    %400 = vector.shape_cast %399 : vector<2x1x340xf32> to vector<2x340xf32>
    %401 = vector.shape_cast %398 : vector<2x340xf32> to vector<2x1x340xf32>
    tpu.vector_store %arg28[%c0_290, %c16_291, %c0_292], %401 {strides = array<i32>} : memref<2x34x340xf32, #tpu.memory_space<vmem>>, vector<2x1x340xf32>,
    %402 = vector.extract_strided_slice %313 {offsets = [0, 8, 0], sizes = [2, 1, 340], strides = [1, 1, 1]} : vector<2x16x340xf32> to vector<2x1x340xf32>
    %403 = vector.shape_cast %402 : vector<2x1x340xf32> to vector<2x340xf32>
    %c0_293 = arith.constant 0 : index
    %c17_294 = arith.constant 17 : index
    %c0_295 = arith.constant 0 : index
    %404 = vector.load %arg28[%c0_293, %c17_294, %c0_295] : memref<2x34x340xf32, #tpu.memory_space<vmem>>, vector<2x1x340xf32>
    %405 = vector.shape_cast %404 : vector<2x1x340xf32> to vector<2x340xf32>
    %406 = vector.shape_cast %403 : vector<2x340xf32> to vector<2x1x340xf32>
    tpu.vector_store %arg28[%c0_293, %c17_294, %c0_295], %406 {strides = array<i32>} : memref<2x34x340xf32, #tpu.memory_space<vmem>>, vector<2x1x340xf32>,
    %407 = vector.extract_strided_slice %314 {offsets = [0, 8, 0], sizes = [2, 1, 340], strides = [1, 1, 1]} : vector<2x16x340xf32> to vector<2x1x340xf32>
    %408 = vector.shape_cast %407 : vector<2x1x340xf32> to vector<2x340xf32>
    %c0_296 = arith.constant 0 : index
    %c18 = arith.constant 18 : index
    %c0_297 = arith.constant 0 : index
    %409 = vector.load %arg28[%c0_296, %c18, %c0_297] : memref<2x34x340xf32, #tpu.memory_space<vmem>>, vector<2x1x340xf32>
    %410 = vector.shape_cast %409 : vector<2x1x340xf32> to vector<2x340xf32>
    %411 = vector.shape_cast %408 : vector<2x340xf32> to vector<2x1x340xf32>
    tpu.vector_store %arg28[%c0_296, %c18, %c0_297], %411 {strides = array<i32>} : memref<2x34x340xf32, #tpu.memory_space<vmem>>, vector<2x1x340xf32>,
    %412 = vector.extract_strided_slice %313 {offsets = [0, 9, 0], sizes = [2, 1, 340], strides = [1, 1, 1]} : vector<2x16x340xf32> to vector<2x1x340xf32>
    %413 = vector.shape_cast %412 : vector<2x1x340xf32> to vector<2x340xf32>
    %c0_298 = arith.constant 0 : index
    %c19 = arith.constant 19 : index
    %c0_299 = arith.constant 0 : index
    %414 = vector.load %arg28[%c0_298, %c19, %c0_299] : memref<2x34x340xf32, #tpu.memory_space<vmem>>, vector<2x1x340xf32>
    %415 = vector.shape_cast %414 : vector<2x1x340xf32> to vector<2x340xf32>
    %416 = vector.shape_cast %413 : vector<2x340xf32> to vector<2x1x340xf32>
    tpu.vector_store %arg28[%c0_298, %c19, %c0_299], %416 {strides = array<i32>} : memref<2x34x340xf32, #tpu.memory_space<vmem>>, vector<2x1x340xf32>,
    %417 = vector.extract_strided_slice %314 {offsets = [0, 9, 0], sizes = [2, 1, 340], strides = [1, 1, 1]} : vector<2x16x340xf32> to vector<2x1x340xf32>
    %418 = vector.shape_cast %417 : vector<2x1x340xf32> to vector<2x340xf32>
    %c0_300 = arith.constant 0 : index
    %c20 = arith.constant 20 : index
    %c0_301 = arith.constant 0 : index
    %419 = vector.load %arg28[%c0_300, %c20, %c0_301] : memref<2x34x340xf32, #tpu.memory_space<vmem>>, vector<2x1x340xf32>
    %420 = vector.shape_cast %419 : vector<2x1x340xf32> to vector<2x340xf32>
    %421 = vector.shape_cast %418 : vector<2x340xf32> to vector<2x1x340xf32>
    tpu.vector_store %arg28[%c0_300, %c20, %c0_301], %421 {strides = array<i32>} : memref<2x34x340xf32, #tpu.memory_space<vmem>>, vector<2x1x340xf32>,
    %422 = vector.extract_strided_slice %313 {offsets = [0, 10, 0], sizes = [2, 1, 340], strides = [1, 1, 1]} : vector<2x16x340xf32> to vector<2x1x340xf32>
    %423 = vector.shape_cast %422 : vector<2x1x340xf32> to vector<2x340xf32>
    %c0_302 = arith.constant 0 : index
    %c21 = arith.constant 21 : index
    %c0_303 = arith.constant 0 : index
    %424 = vector.load %arg28[%c0_302, %c21, %c0_303] : memref<2x34x340xf32, #tpu.memory_space<vmem>>, vector<2x1x340xf32>
    %425 = vector.shape_cast %424 : vector<2x1x340xf32> to vector<2x340xf32>
    %426 = vector.shape_cast %423 : vector<2x340xf32> to vector<2x1x340xf32>
    tpu.vector_store %arg28[%c0_302, %c21, %c0_303], %426 {strides = array<i32>} : memref<2x34x340xf32, #tpu.memory_space<vmem>>, vector<2x1x340xf32>,
    %427 = vector.extract_strided_slice %314 {offsets = [0, 10, 0], sizes = [2, 1, 340], strides = [1, 1, 1]} : vector<2x16x340xf32> to vector<2x1x340xf32>
    %428 = vector.shape_cast %427 : vector<2x1x340xf32> to vector<2x340xf32>
    %c0_304 = arith.constant 0 : index
    %c22 = arith.constant 22 : index
    %c0_305 = arith.constant 0 : index
    %429 = vector.load %arg28[%c0_304, %c22, %c0_305] : memref<2x34x340xf32, #tpu.memory_space<vmem>>, vector<2x1x340xf32>
    %430 = vector.shape_cast %429 : vector<2x1x340xf32> to vector<2x340xf32>
    %431 = vector.shape_cast %428 : vector<2x340xf32> to vector<2x1x340xf32>
    tpu.vector_store %arg28[%c0_304, %c22, %c0_305], %431 {strides = array<i32>} : memref<2x34x340xf32, #tpu.memory_space<vmem>>, vector<2x1x340xf32>,
    %432 = vector.extract_strided_slice %313 {offsets = [0, 11, 0], sizes = [2, 1, 340], strides = [1, 1, 1]} : vector<2x16x340xf32> to vector<2x1x340xf32>
    %433 = vector.shape_cast %432 : vector<2x1x340xf32> to vector<2x340xf32>
    %c0_306 = arith.constant 0 : index
    %c23 = arith.constant 23 : index
    %c0_307 = arith.constant 0 : index
    %434 = vector.load %arg28[%c0_306, %c23, %c0_307] : memref<2x34x340xf32, #tpu.memory_space<vmem>>, vector<2x1x340xf32>
    %435 = vector.shape_cast %434 : vector<2x1x340xf32> to vector<2x340xf32>
    %436 = vector.shape_cast %433 : vector<2x340xf32> to vector<2x1x340xf32>
    tpu.vector_store %arg28[%c0_306, %c23, %c0_307], %436 {strides = array<i32>} : memref<2x34x340xf32, #tpu.memory_space<vmem>>, vector<2x1x340xf32>,
    %437 = vector.extract_strided_slice %314 {offsets = [0, 11, 0], sizes = [2, 1, 340], strides = [1, 1, 1]} : vector<2x16x340xf32> to vector<2x1x340xf32>
    %438 = vector.shape_cast %437 : vector<2x1x340xf32> to vector<2x340xf32>
    %c0_308 = arith.constant 0 : index
    %c24 = arith.constant 24 : index
    %c0_309 = arith.constant 0 : index
    %439 = vector.load %arg28[%c0_308, %c24, %c0_309] : memref<2x34x340xf32, #tpu.memory_space<vmem>>, vector<2x1x340xf32>
    %440 = vector.shape_cast %439 : vector<2x1x340xf32> to vector<2x340xf32>
    %441 = vector.shape_cast %438 : vector<2x340xf32> to vector<2x1x340xf32>
    tpu.vector_store %arg28[%c0_308, %c24, %c0_309], %441 {strides = array<i32>} : memref<2x34x340xf32, #tpu.memory_space<vmem>>, vector<2x1x340xf32>,
    %442 = vector.extract_strided_slice %313 {offsets = [0, 12, 0], sizes = [2, 1, 340], strides = [1, 1, 1]} : vector<2x16x340xf32> to vector<2x1x340xf32>
    %443 = vector.shape_cast %442 : vector<2x1x340xf32> to vector<2x340xf32>
    %c0_310 = arith.constant 0 : index
    %c25 = arith.constant 25 : index
    %c0_311 = arith.constant 0 : index
    %444 = vector.load %arg28[%c0_310, %c25, %c0_311] : memref<2x34x340xf32, #tpu.memory_space<vmem>>, vector<2x1x340xf32>
    %445 = vector.shape_cast %444 : vector<2x1x340xf32> to vector<2x340xf32>
    %446 = vector.shape_cast %443 : vector<2x340xf32> to vector<2x1x340xf32>
    tpu.vector_store %arg28[%c0_310, %c25, %c0_311], %446 {strides = array<i32>} : memref<2x34x340xf32, #tpu.memory_space<vmem>>, vector<2x1x340xf32>,
    %447 = vector.extract_strided_slice %314 {offsets = [0, 12, 0], sizes = [2, 1, 340], strides = [1, 1, 1]} : vector<2x16x340xf32> to vector<2x1x340xf32>
    %448 = vector.shape_cast %447 : vector<2x1x340xf32> to vector<2x340xf32>
    %c0_312 = arith.constant 0 : index
    %c26 = arith.constant 26 : index
    %c0_313 = arith.constant 0 : index
    %449 = vector.load %arg28[%c0_312, %c26, %c0_313] : memref<2x34x340xf32, #tpu.memory_space<vmem>>, vector<2x1x340xf32>
    %450 = vector.shape_cast %449 : vector<2x1x340xf32> to vector<2x340xf32>
    %451 = vector.shape_cast %448 : vector<2x340xf32> to vector<2x1x340xf32>
    tpu.vector_store %arg28[%c0_312, %c26, %c0_313], %451 {strides = array<i32>} : memref<2x34x340xf32, #tpu.memory_space<vmem>>, vector<2x1x340xf32>,
    %452 = vector.extract_strided_slice %313 {offsets = [0, 13, 0], sizes = [2, 1, 340], strides = [1, 1, 1]} : vector<2x16x340xf32> to vector<2x1x340xf32>
    %453 = vector.shape_cast %452 : vector<2x1x340xf32> to vector<2x340xf32>
    %c0_314 = arith.constant 0 : index
    %c27 = arith.constant 27 : index
    %c0_315 = arith.constant 0 : index
    %454 = vector.load %arg28[%c0_314, %c27, %c0_315] : memref<2x34x340xf32, #tpu.memory_space<vmem>>, vector<2x1x340xf32>
    %455 = vector.shape_cast %454 : vector<2x1x340xf32> to vector<2x340xf32>
    %456 = vector.shape_cast %453 : vector<2x340xf32> to vector<2x1x340xf32>
    tpu.vector_store %arg28[%c0_314, %c27, %c0_315], %456 {strides = array<i32>} : memref<2x34x340xf32, #tpu.memory_space<vmem>>, vector<2x1x340xf32>,
    %457 = vector.extract_strided_slice %314 {offsets = [0, 13, 0], sizes = [2, 1, 340], strides = [1, 1, 1]} : vector<2x16x340xf32> to vector<2x1x340xf32>
    %458 = vector.shape_cast %457 : vector<2x1x340xf32> to vector<2x340xf32>
    %c0_316 = arith.constant 0 : index
    %c28 = arith.constant 28 : index
    %c0_317 = arith.constant 0 : index
    %459 = vector.load %arg28[%c0_316, %c28, %c0_317] : memref<2x34x340xf32, #tpu.memory_space<vmem>>, vector<2x1x340xf32>
    %460 = vector.shape_cast %459 : vector<2x1x340xf32> to vector<2x340xf32>
    %461 = vector.shape_cast %458 : vector<2x340xf32> to vector<2x1x340xf32>
    tpu.vector_store %arg28[%c0_316, %c28, %c0_317], %461 {strides = array<i32>} : memref<2x34x340xf32, #tpu.memory_space<vmem>>, vector<2x1x340xf32>,
    %462 = vector.extract_strided_slice %313 {offsets = [0, 14, 0], sizes = [2, 1, 340], strides = [1, 1, 1]} : vector<2x16x340xf32> to vector<2x1x340xf32>
    %463 = vector.shape_cast %462 : vector<2x1x340xf32> to vector<2x340xf32>
    %c0_318 = arith.constant 0 : index
    %c29 = arith.constant 29 : index
    %c0_319 = arith.constant 0 : index
    %464 = vector.load %arg28[%c0_318, %c29, %c0_319] : memref<2x34x340xf32, #tpu.memory_space<vmem>>, vector<2x1x340xf32>
    %465 = vector.shape_cast %464 : vector<2x1x340xf32> to vector<2x340xf32>
    %466 = vector.shape_cast %463 : vector<2x340xf32> to vector<2x1x340xf32>
    tpu.vector_store %arg28[%c0_318, %c29, %c0_319], %466 {strides = array<i32>} : memref<2x34x340xf32, #tpu.memory_space<vmem>>, vector<2x1x340xf32>,
    %467 = vector.extract_strided_slice %314 {offsets = [0, 14, 0], sizes = [2, 1, 340], strides = [1, 1, 1]} : vector<2x16x340xf32> to vector<2x1x340xf32>
    %468 = vector.shape_cast %467 : vector<2x1x340xf32> to vector<2x340xf32>
    %c0_320 = arith.constant 0 : index
    %c30 = arith.constant 30 : index
    %c0_321 = arith.constant 0 : index
    %469 = vector.load %arg28[%c0_320, %c30, %c0_321] : memref<2x34x340xf32, #tpu.memory_space<vmem>>, vector<2x1x340xf32>
    %470 = vector.shape_cast %469 : vector<2x1x340xf32> to vector<2x340xf32>
    %471 = vector.shape_cast %468 : vector<2x340xf32> to vector<2x1x340xf32>
    tpu.vector_store %arg28[%c0_320, %c30, %c0_321], %471 {strides = array<i32>} : memref<2x34x340xf32, #tpu.memory_space<vmem>>, vector<2x1x340xf32>,
    %472 = vector.extract_strided_slice %313 {offsets = [0, 15, 0], sizes = [2, 1, 340], strides = [1, 1, 1]} : vector<2x16x340xf32> to vector<2x1x340xf32>
    %473 = vector.shape_cast %472 : vector<2x1x340xf32> to vector<2x340xf32>
    %c0_322 = arith.constant 0 : index
    %c31 = arith.constant 31 : index
    %c0_323 = arith.constant 0 : index
    %474 = vector.load %arg28[%c0_322, %c31, %c0_323] : memref<2x34x340xf32, #tpu.memory_space<vmem>>, vector<2x1x340xf32>
    %475 = vector.shape_cast %474 : vector<2x1x340xf32> to vector<2x340xf32>
    %476 = vector.shape_cast %473 : vector<2x340xf32> to vector<2x1x340xf32>
    tpu.vector_store %arg28[%c0_322, %c31, %c0_323], %476 {strides = array<i32>} : memref<2x34x340xf32, #tpu.memory_space<vmem>>, vector<2x1x340xf32>,
    %477 = vector.extract_strided_slice %314 {offsets = [0, 15, 0], sizes = [2, 1, 340], strides = [1, 1, 1]} : vector<2x16x340xf32> to vector<2x1x340xf32>
    %478 = vector.shape_cast %477 : vector<2x1x340xf32> to vector<2x340xf32>
    %c0_324 = arith.constant 0 : index
    %c32 = arith.constant 32 : index
    %c0_325 = arith.constant 0 : index
    %479 = vector.load %arg28[%c0_324, %c32, %c0_325] : memref<2x34x340xf32, #tpu.memory_space<vmem>>, vector<2x1x340xf32>
    %480 = vector.shape_cast %479 : vector<2x1x340xf32> to vector<2x340xf32>
    %481 = vector.shape_cast %478 : vector<2x340xf32> to vector<2x1x340xf32>
    tpu.vector_store %arg28[%c0_324, %c32, %c0_325], %481 {strides = array<i32>} : memref<2x34x340xf32, #tpu.memory_space<vmem>>, vector<2x1x340xf32>,
    %c0_326 = arith.constant 0 : index
    %c0_327 = arith.constant 0 : index
    %c0_328 = arith.constant 0 : index
    %482 = vector.load %arg28[%c0_326, %c0_327, %c0_328] : memref<2x34x340xf32, #tpu.memory_space<vmem>>, vector<2x34x340xf32>
    %483 = vector.extract_strided_slice %482 {offsets = [0, 0, 0], sizes = [2, 32, 340], strides = [1, 1, 1]} : vector<2x34x340xf32> to vector<2x32x340xf32>
    %484 = vector.shape_cast %483 : vector<2x32x340xf32> to vector<64x340xf32>
    %c0_329 = arith.constant 0 : index
    %c0_330 = arith.constant 0 : index
    %c0_331 = arith.constant 0 : index
    %485 = vector.load %arg19[%c0_329, %c0_330, %c0_331] : memref<3x340x96xf32, #tpu.memory_space<vmem>>, vector<1x340x96xf32>
    %486 = vector.shape_cast %485 : vector<1x340x96xf32> to vector<340x96xf32>
    %cst_332 = arith.constant dense<0.000000e+00> : vector<64x96xf32>
    %487 = tpu.matmul %484, %486, %cst_332 {dimension_numbers = #tpu.dot_dimension_numbers<[1], [0], [0], [1], [0, 0, 1, 1], [], []>} : vector<64x340xf32>, vector<340x96xf32>, vector<64x96xf32> -> vector<64x96xf32>
    %488 = vector.extract_strided_slice %482 {offsets = [0, 1, 0], sizes = [2, 32, 340], strides = [1, 1, 1]} : vector<2x34x340xf32> to vector<2x32x340xf32>
    %489 = vector.shape_cast %488 : vector<2x32x340xf32> to vector<64x340xf32>
    %c1_333 = arith.constant 1 : index
    %c0_334 = arith.constant 0 : index
    %c0_335 = arith.constant 0 : index
    %490 = vector.load %arg19[%c1_333, %c0_334, %c0_335] : memref<3x340x96xf32, #tpu.memory_space<vmem>>, vector<1x340x96xf32>
    %491 = vector.shape_cast %490 : vector<1x340x96xf32> to vector<340x96xf32>
    %cst_336 = arith.constant dense<0.000000e+00> : vector<64x96xf32>
    %492 = tpu.matmul %489, %491, %cst_336 {dimension_numbers = #tpu.dot_dimension_numbers<[1], [0], [0], [1], [0, 0, 1, 1], [], []>} : vector<64x340xf32>, vector<340x96xf32>, vector<64x96xf32> -> vector<64x96xf32>
    %493 = arith.addf %487, %492 : vector<64x96xf32>
    %494 = vector.extract_strided_slice %482 {offsets = [0, 2, 0], sizes = [2, 32, 340], strides = [1, 1, 1]} : vector<2x34x340xf32> to vector<2x32x340xf32>
    %495 = vector.shape_cast %494 : vector<2x32x340xf32> to vector<64x340xf32>
    %c2_337 = arith.constant 2 : index
    %c0_338 = arith.constant 0 : index
    %c0_339 = arith.constant 0 : index
    %496 = vector.load %arg19[%c2_337, %c0_338, %c0_339] : memref<3x340x96xf32, #tpu.memory_space<vmem>>, vector<1x340x96xf32>
    %497 = vector.shape_cast %496 : vector<1x340x96xf32> to vector<340x96xf32>
    %cst_340 = arith.constant dense<0.000000e+00> : vector<64x96xf32>
    %498 = tpu.matmul %495, %497, %cst_340 {dimension_numbers = #tpu.dot_dimension_numbers<[1], [0], [0], [1], [0, 0, 1, 1], [], []>} : vector<64x340xf32>, vector<340x96xf32>, vector<64x96xf32> -> vector<64x96xf32>
    %499 = arith.addf %493, %498 : vector<64x96xf32>
    %c0_341 = arith.constant 0 : index
    %c0_342 = arith.constant 0 : index
    %500 = vector.load %arg20[%c0_341, %c0_342] : memref<1x3xf32, #tpu.memory_space<vmem>>, vector<1x3xf32>
    %c0_343 = arith.constant 0 : index
    %c0_344 = arith.constant 0 : index
    %501 = vector.load %arg22[%c0_343, %c0_344] : memref<3x96xf32, #tpu.memory_space<vmem>>, vector<3x96xf32>
    %cst_345 = arith.constant dense<0.000000e+00> : vector<1x96xf32>
    %502 = tpu.matmul %500, %501, %cst_345 {dimension_numbers = #tpu.dot_dimension_numbers<[1], [0], [0], [1], [0, 0, 1, 1], [], []>} : vector<1x3xf32>, vector<3x96xf32>, vector<1x96xf32> -> vector<1x96xf32>
    %503 = vector.broadcast %502 : vector<1x96xf32> to vector<64x96xf32>
    %504 = arith.addf %499, %503 : vector<64x96xf32>
    %c0_346 = arith.constant 0 : index
    %c0_347 = arith.constant 0 : index
    %505 = vector.load %arg21[%c0_346, %c0_347] : memref<96x3xf32, #tpu.memory_space<vmem>>, vector<96x3xf32>
    %cst_348 = arith.constant dense<0.000000e+00> : vector<64x3xf32>
    %506 = tpu.matmul %504, %505, %cst_348 {dimension_numbers = #tpu.dot_dimension_numbers<[1], [0], [0], [1], [0, 0, 1, 1], [], []>} : vector<64x96xf32>, vector<96x3xf32>, vector<64x3xf32> -> vector<64x3xf32>
    %cst_349 = arith.constant dense<0.000000e+00> : vector<3xf32>
    %507 = vector.multi_reduction <add>, %506, %cst_349 [0] : vector<64x3xf32> to vector<3xf32>
    %508 = vector.shape_cast %507 : vector<3xf32> to vector<1x3xf32>
    %cst_350 = arith.constant 2.048000e+03 : f32
    %509 = vector.broadcast %cst_350 : f32 to vector<1x3xf32>
    %510 = arith.divf %508, %509 : vector<1x3xf32>
    %c0_351 = arith.constant 0 : index
    %c0_352 = arith.constant 0 : index
    %511 = vector.load %arg22[%c0_351, %c0_352] : memref<3x96xf32, #tpu.memory_space<vmem>>, vector<3x96xf32>
    %cst_353 = arith.constant dense<0.000000e+00> : vector<1x96xf32>
    %512 = tpu.matmul %510, %511, %cst_353 {dimension_numbers = #tpu.dot_dimension_numbers<[1], [0], [0], [1], [0, 0, 1, 1], [], []>} : vector<1x3xf32>, vector<3x96xf32>, vector<1x96xf32> -> vector<1x96xf32>
    %513 = vector.broadcast %512 : vector<1x96xf32> to vector<64x96xf32>
    %514 = arith.subf %504, %513 : vector<64x96xf32>
    %515 = arith.mulf %514, %514 : vector<64x96xf32>
    %c0_354 = arith.constant 0 : index
    %c0_355 = arith.constant 0 : index
    %516 = vector.load %arg21[%c0_354, %c0_355] : memref<96x3xf32, #tpu.memory_space<vmem>>, vector<96x3xf32>
    %cst_356 = arith.constant dense<0.000000e+00> : vector<64x3xf32>
    %517 = tpu.matmul %515, %516, %cst_356 {dimension_numbers = #tpu.dot_dimension_numbers<[1], [0], [0], [1], [0, 0, 1, 1], [], []>} : vector<64x96xf32>, vector<96x3xf32>, vector<64x3xf32> -> vector<64x3xf32>
    %cst_357 = arith.constant dense<0.000000e+00> : vector<3xf32>
    %518 = vector.multi_reduction <add>, %517, %cst_357 [0] : vector<64x3xf32> to vector<3xf32>
    %519 = vector.shape_cast %518 : vector<3xf32> to vector<1x3xf32>
    %cst_358 = arith.constant 2.048000e+03 : f32
    %520 = vector.broadcast %cst_358 : f32 to vector<1x3xf32>
    %521 = arith.divf %519, %520 : vector<1x3xf32>
    %cst_359 = arith.constant 9.99999974E-6 : f32
    %522 = vector.broadcast %cst_359 : f32 to vector<1x3xf32>
    %523 = arith.addf %521, %522 : vector<1x3xf32>
    %524 = math.rsqrt %523 : vector<1x3xf32>
    %c0_360 = arith.constant 0 : index
    %c0_361 = arith.constant 0 : index
    %525 = vector.load %arg23[%c0_360, %c0_361] : memref<1x3xf32, #tpu.memory_space<vmem>>, vector<1x3xf32>
    %526 = arith.mulf %524, %525 : vector<1x3xf32>
    %c0_362 = arith.constant 0 : index
    %c0_363 = arith.constant 0 : index
    %527 = vector.load %arg22[%c0_362, %c0_363] : memref<3x96xf32, #tpu.memory_space<vmem>>, vector<3x96xf32>
    %cst_364 = arith.constant dense<0.000000e+00> : vector<1x96xf32>
    %528 = tpu.matmul %526, %527, %cst_364 {dimension_numbers = #tpu.dot_dimension_numbers<[1], [0], [0], [1], [0, 0, 1, 1], [], []>} : vector<1x3xf32>, vector<3x96xf32>, vector<1x96xf32> -> vector<1x96xf32>
    %c0_365 = arith.constant 0 : index
    %c0_366 = arith.constant 0 : index
    %529 = vector.load %arg24[%c0_365, %c0_366] : memref<1x3xf32, #tpu.memory_space<vmem>>, vector<1x3xf32>
    %c0_367 = arith.constant 0 : index
    %c0_368 = arith.constant 0 : index
    %530 = vector.load %arg22[%c0_367, %c0_368] : memref<3x96xf32, #tpu.memory_space<vmem>>, vector<3x96xf32>
    %cst_369 = arith.constant dense<0.000000e+00> : vector<1x96xf32>
    %531 = tpu.matmul %529, %530, %cst_369 {dimension_numbers = #tpu.dot_dimension_numbers<[1], [0], [0], [1], [0, 0, 1, 1], [], []>} : vector<1x3xf32>, vector<3x96xf32>, vector<1x96xf32> -> vector<1x96xf32>
    %532 = vector.broadcast %528 : vector<1x96xf32> to vector<64x96xf32>
    %533 = arith.mulf %514, %532 : vector<64x96xf32>
    %534 = vector.broadcast %531 : vector<1x96xf32> to vector<64x96xf32>
    %535 = arith.addf %533, %534 : vector<64x96xf32>
    %536 = math.tanh %535 : vector<64x96xf32>
    %c0_370 = arith.constant 0 : index
    %c0_371 = arith.constant 0 : index
    %537 = vector.load %arg25[%c0_370, %c0_371] : memref<64x96xf32, #tpu.memory_space<vmem>>, vector<64x96xf32>
    tpu.vector_store %arg25[%c0_370, %c0_371], %536 {strides = array<i32>} : memref<64x96xf32, #tpu.memory_space<vmem>>, vector<64x96xf32>,
    return
  }
}

</mosaic_0001>

<llo_original>
// kernel: decoder_forward.1
$region0: #{decoder_forward.1}
  #allocation0 [shape = 'u32[]', space=smem, size = 0x4, offset = 0x4, fixed_abs, tag = 'smem constant byte address 0x4 - core index']
  #allocation1 [shape = 'u32[72,128]{1,0:T(1,128)}', space=vmem, size = 0x9000, scoped, tag = 'internal scratch']
  #allocation2 [shape = 'f32[2,10,80]{2,1,0:T(8,128)}', space=vmem, size = 0x4000, scoped, tag = 'scratch operand']
  #allocation3 [shape = 'f32[2,18,288]{2,1,0:T(8,128)}', space=vmem, size = 0x12000, scoped, tag = 'scratch operand']
  #allocation4 [shape = 'f32[2,34,340]{2,1,0:T(8,128)}', space=vmem, size = 0x1e000, scoped, tag = 'scratch operand']
  %s0 = inlined_call_operand.vmem [shape: f32[2,50], index: 0, kind: input, shape index: {}]
  %s1 = inlined_call_operand.vmem [shape: f32[8,50,80], index: 1, kind: input, shape index: {}]
  %s2 = inlined_call_operand.vmem [shape: f32[8,1,80], index: 2, kind: input, shape index: {}]
  %s3 = inlined_call_operand.vmem [shape: f32[3,80,128], index: 3, kind: input, shape index: {}]
  %s4 = inlined_call_operand.vmem [shape: f32[1,16], index: 4, kind: input, shape index: {}]
  %s5 = inlined_call_operand.vmem [shape: f32[128,16], index: 5, kind: input, shape index: {}]
  %s6 = inlined_call_operand.vmem [shape: f32[16,128], index: 6, kind: input, shape index: {}]
  %s7 = inlined_call_operand.vmem [shape: f32[1,16], index: 7, kind: input, shape index: {}]
  %s8 = inlined_call_operand.vmem [shape: f32[1,16], index: 8, kind: input, shape index: {}]
  %s9 = inlined_call_operand.vmem [shape: f32[2,128,288], index: 9, kind: input, shape index: {}]
  %s10 = inlined_call_operand.vmem [shape: f32[1,288], index: 10, kind: input, shape index: {}]
  %s11 = inlined_call_operand.vmem [shape: f32[3,288,160], index: 11, kind: input, shape index: {}]
  %s12 = inlined_call_operand.vmem [shape: f32[1,10], index: 12, kind: input, shape index: {}]
  %s13 = inlined_call_operand.vmem [shape: f32[160,10], index: 13, kind: input, shape index: {}]
  %s14 = inlined_call_operand.vmem [shape: f32[10,160], index: 14, kind: input, shape index: {}]
  %s15 = inlined_call_operand.vmem [shape: f32[1,10], index: 15, kind: input, shape index: {}]
  %s16 = inlined_call_operand.vmem [shape: f32[1,10], index: 16, kind: input, shape index: {}]
  %s17 = inlined_call_operand.vmem [shape: f32[2,160,340], index: 17, kind: input, shape index: {}]
  %s18 = inlined_call_operand.vmem [shape: f32[1,340], index: 18, kind: input, shape index: {}]
  %s19 = inlined_call_operand.vmem [shape: f32[3,340,96], index: 19, kind: input, shape index: {}]
  %s20 = inlined_call_operand.vmem [shape: f32[1,3], index: 20, kind: input, shape index: {}]
  %s21 = inlined_call_operand.vmem [shape: f32[96,3], index: 21, kind: input, shape index: {}]
  %s22 = inlined_call_operand.vmem [shape: f32[3,96], index: 22, kind: input, shape index: {}]
  %s23 = inlined_call_operand.vmem [shape: f32[1,3], index: 23, kind: input, shape index: {}]
  %s24 = inlined_call_operand.vmem [shape: f32[1,3], index: 24, kind: input, shape index: {}]
  %s25 = inlined_call_operand.vmem [shape: f32[64,96], index: 25, kind: output, shape index: {}]
  %s26 = sld [smem:[#allocation0]]
  $region110: #{decoder_forward.1} parent=0
    _
  %s28 = ssub.s32 1, %s26
  %s29 = scalar_select 0, %s28, %s26
  // Predicated region
  $region2: #{decoder_forward.1} parent=0 // pred_check
    _
  $region3: #{decoder_forward.1} parent=0 // pred_check_branch
    %31 = sbr.rel (0) target = $region5
  $region4: #{decoder_forward.1} parent=0 // pred_region
    _
  $region5: #{decoder_forward.1} parent=0 // pred_fallthru
    _
  // Predicated region
  $region6: #{decoder_forward.1} parent=0 // pred_check
    _
  $region7: #{decoder_forward.1} parent=0 // pred_check_branch
    %33 = sbr.rel (0) target = $region9
  $region8: #{decoder_forward.1} parent=0 // pred_region
    _
  $region9: #{decoder_forward.1} parent=0 // pred_fallthru
    _
  // Predicated region
  $region10: #{decoder_forward.1} parent=0 // pred_check
    _
  $region11: #{decoder_forward.1} parent=0 // pred_check_branch
    %35 = sbr.rel (0) target = $region13
  $region12: #{decoder_forward.1} parent=0 // pred_region
    _
  $region13: #{decoder_forward.1} parent=0 // pred_fallthru
    _
  // Predicated region
  $region14: #{decoder_forward.1} parent=0 // pred_check
    _
  $region15: #{decoder_forward.1} parent=0 // pred_check_branch
    %37 = sbr.rel (0) target = $region17
  $region16: #{decoder_forward.1} parent=0 // pred_region
    _
  $region17: #{decoder_forward.1} parent=0 // pred_fallthru
    _
  // Predicated region
  $region18: #{decoder_forward.1} parent=0 // pred_check
    _
  $region19: #{decoder_forward.1} parent=0 // pred_check_branch
    %39 = sbr.rel (0) target = $region21
  $region20: #{decoder_forward.1} parent=0 // pred_region
    _
  $region21: #{decoder_forward.1} parent=0 // pred_fallthru
    _
  // Predicated region
  $region22: #{decoder_forward.1} parent=0 // pred_check
    _
  $region23: #{decoder_forward.1} parent=0 // pred_check_branch
    %41 = sbr.rel (0) target = $region25
  $region24: #{decoder_forward.1} parent=0 // pred_region
    _
  $region25: #{decoder_forward.1} parent=0 // pred_fallthru
    _
  // Predicated region
  $region26: #{decoder_forward.1} parent=0 // pred_check
    _
  $region27: #{decoder_forward.1} parent=0 // pred_check_branch
    %43 = sbr.rel (0) target = $region29
  $region28: #{decoder_forward.1} parent=0 // pred_region
    _
  $region29: #{decoder_forward.1} parent=0 // pred_fallthru
    _
  // Predicated region
  $region30: #{decoder_forward.1} parent=0 // pred_check
    _
  $region31: #{decoder_forward.1} parent=0 // pred_check_branch
    %45 = sbr.rel (0) target = $region33
  $region32: #{decoder_forward.1} parent=0 // pred_region
    _
  $region33: #{decoder_forward.1} parent=0 // pred_fallthru
    _
  // Predicated region
  $region34: #{decoder_forward.1} parent=0 // pred_check
    _
  $region35: #{decoder_forward.1} parent=0 // pred_check_branch
    %47 = sbr.rel (0) target = $region37
  $region36: #{decoder_forward.1} parent=0 // pred_region
    _
  $region37: #{decoder_forward.1} parent=0 // pred_fallthru
    _
  // Predicated region
  $region38: #{decoder_forward.1} parent=0 // pred_check
    _
  $region39: #{decoder_forward.1} parent=0 // pred_check_branch
    %49 = sbr.rel (0) target = $region41
  $region40: #{decoder_forward.1} parent=0 // pred_region
    _
  $region41: #{decoder_forward.1} parent=0 // pred_fallthru
    _
  // Predicated region
  $region42: #{decoder_forward.1} parent=0 // pred_check
    _
  $region43: #{decoder_forward.1} parent=0 // pred_check_branch
    %51 = sbr.rel (0) target = $region45
  $region44: #{decoder_forward.1} parent=0 // pred_region
    _
  $region45: #{decoder_forward.1} parent=0 // pred_fallthru
    _
  // Predicated region
  $region46: #{decoder_forward.1} parent=0 // pred_check
    _
  $region47: #{decoder_forward.1} parent=0 // pred_check_branch
    %53 = sbr.rel (0) target = $region49
  $region48: #{decoder_forward.1} parent=0 // pred_region
    _
  $region49: #{decoder_forward.1} parent=0 // pred_fallthru
    _
  // Predicated region
  $region50: #{decoder_forward.1} parent=0 // pred_check
    _
  $region51: #{decoder_forward.1} parent=0 // pred_check_branch
    %55 = sbr.rel (0) target = $region53
  $region52: #{decoder_forward.1} parent=0 // pred_region
    _
  $region53: #{decoder_forward.1} parent=0 // pred_fallthru
    _
  // Predicated region
  $region54: #{decoder_forward.1} parent=0 // pred_check
    _
  $region55: #{decoder_forward.1} parent=0 // pred_check_branch
    %57 = sbr.rel (0) target = $region57
  $region56: #{decoder_forward.1} parent=0 // pred_region
    _
  $region57: #{decoder_forward.1} parent=0 // pred_fallthru
    _
  // Predicated region
  $region58: #{decoder_forward.1} parent=0 // pred_check
    _
  $region59: #{decoder_forward.1} parent=0 // pred_check_branch
    %59 = sbr.rel (0) target = $region61
  $region60: #{decoder_forward.1} parent=0 // pred_region
    _
  $region61: #{decoder_forward.1} parent=0 // pred_fallthru
    _
  // Predicated region
  $region62: #{decoder_forward.1} parent=0 // pred_check
    _
  $region63: #{decoder_forward.1} parent=0 // pred_check_branch
    %61 = sbr.rel (0) target = $region65
  $region64: #{decoder_forward.1} parent=0 // pred_region
    _
  $region65: #{decoder_forward.1} parent=0 // pred_fallthru
    _
  // Predicated region
  $region66: #{decoder_forward.1} parent=0 // pred_check
    _
  $region67: #{decoder_forward.1} parent=0 // pred_check_branch
    %63 = sbr.rel (0) target = $region69
  $region68: #{decoder_forward.1} parent=0 // pred_region
    _
  $region69: #{decoder_forward.1} parent=0 // pred_fallthru
    _
  // Predicated region
  $region70: #{decoder_forward.1} parent=0 // pred_check
    _
  $region71: #{decoder_forward.1} parent=0 // pred_check_branch
    %65 = sbr.rel (0) target = $region73
  $region72: #{decoder_forward.1} parent=0 // pred_region
    _
  $region73: #{decoder_forward.1} parent=0 // pred_fallthru
    _
  // Predicated region
  $region74: #{decoder_forward.1} parent=0 // pred_check
    _
  $region75: #{decoder_forward.1} parent=0 // pred_check_branch
    %67 = sbr.rel (0) target = $region77
  $region76: #{decoder_forward.1} parent=0 // pred_region
    _
  $region77: #{decoder_forward.1} parent=0 // pred_fallthru
    _
  // Predicated region
  $region78: #{decoder_forward.1} parent=0 // pred_check
    _
  $region79: #{decoder_forward.1} parent=0 // pred_check_branch
    %69 = sbr.rel (0) target = $region81
  $region80: #{decoder_forward.1} parent=0 // pred_region
    _
  $region81: #{decoder_forward.1} parent=0 // pred_fallthru
    _
  // Predicated region
  $region82: #{decoder_forward.1} parent=0 // pred_check
    _
  $region83: #{decoder_forward.1} parent=0 // pred_check_branch
    %71 = sbr.rel (0) target = $region85
  $region84: #{decoder_forward.1} parent=0 // pred_region
    _
  $region85: #{decoder_forward.1} parent=0 // pred_fallthru
    _
  // Predicated region
  $region86: #{decoder_forward.1} parent=0 // pred_check
    _
  $region87: #{decoder_forward.1} parent=0 // pred_check_branch
    %73 = sbr.rel (0) target = $region89
  $region88: #{decoder_forward.1} parent=0 // pred_region
    _
  $region89: #{decoder_forward.1} parent=0 // pred_fallthru
    _
  // Predicated region
  $region90: #{decoder_forward.1} parent=0 // pred_check
    _
  $region91: #{decoder_forward.1} parent=0 // pred_check_branch
    %75 = sbr.rel (0) target = $region93
  $region92: #{decoder_forward.1} parent=0 // pred_region
    _
  $region93: #{decoder_forward.1} parent=0 // pred_fallthru
    _
  // Predicated region
  $region94: #{decoder_forward.1} parent=0 // pred_check
    _
  $region95: #{decoder_forward.1} parent=0 // pred_check_branch
    %77 = sbr.rel (0) target = $region97
  $region96: #{decoder_forward.1} parent=0 // pred_region
    _
  $region97: #{decoder_forward.1} parent=0 // pred_fallthru
    _
  // Predicated region
  $region98: #{decoder_forward.1} parent=0 // pred_check
    _
  $region99: #{decoder_forward.1} parent=0 // pred_check_branch
    %79 = sbr.rel (0) target = $region101
  $region100: #{decoder_forward.1} parent=0 // pred_region
    _
  $region101: #{decoder_forward.1} parent=0 // pred_fallthru
    _
  %v80 = vld [vmem:[%s0] sm:$0x3]
  %vm81 = vcmask 647168
  %82 = vst.msk [vmem:[#allocation2] sm:$0x1] %vm81, 0.0
  %83 = vst.msk [vmem:[#allocation2 + $0x10] sm:$0x1] %vm81, 0.0
  %84 = vst.msk [vmem:[#allocation2 + $0x9] sm:$0x1] %vm81, 0.0
  %85 = vst.msk [vmem:[#allocation2 + $0x19] sm:$0x1] %vm81, 0.0
  %v86 = vld [vmem:[%s1] sm:$0xff]
  %v87 = vld [vmem:[%s1 + $0x8] sm:$0xff]
  %v88 = vld [vmem:[%s1 + $0x10] sm:$0xff]
  %v89 = vld [vmem:[%s1 + $0x18] sm:$0xff]
  %v90 = vld [vmem:[%s1 + $0x20] sm:$0xff]
  %v91 = vld [vmem:[%s1 + $0x28] sm:$0xff]
  %v92 = vld [vmem:[%s1 + $0x30] sm:$0x3]
  %v93 = vld [vmem:[%s2] sm:$0x1]
  %v95 = vperm.slane %v93, 0
  %vm97 = vcmask 408576
  %v99 = vsel %vm97, %v80, 0
  %vm101 = vcmask 1041408
  %v103 = vsel %vm101, %v92, 0
  %105 = vmatpush.msra.mxu0 0.0
  %106 = vmatpush.msra.mxu0 0.0
  %107 = vmatpush.msra.mxu0 0.0
  %108 = vmatpush.msra.mxu0 0.0
  %109 = vmatpush.msra.mxu0 0.0
  %110 = vmatpush.msra.mxu0 0.0
  %111 = vmatpush.msra.mxu0 0.0
  %112 = vmatpush.msra.mxu0 0.0
  %113 = vmatpush.msra.mxu0 0.0
  %114 = vmatpush.msra.mxu0 %v103
  %115 = vmatpush.msra.mxu0 %v91
  %116 = vmatpush.msra.mxu0 %v90
  %117 = vmatpush.msra.mxu0 %v89
  %118 = vmatpush.msra.mxu0 %v88
  %119 = vmatpush.msra.mxu0 %v87
  %120 = vmatpush.msra.mxu0 %v86
  %121 = vmatmul.f32.gmra.mxu0 %v99
  %v122 = vpop.f32.mrf.mxu0
  %v123 = vadd.f32 %v95, %v122
  %124 = vdwg.mxu0
  %v126 = vrot.slane %v123, 1
  %128 = vst.msk [vmem:[#allocation2 + $0x1] sm:$0x1] %vm81, %v123
  %129 = vst.msk [vmem:[#allocation2 + $0x11] sm:$0x1] %vm81, %v126
  %s130 = scalar_lea.vmem %s1, 56
  %v131 = vld [vmem:[%s130] sm:$0xff]
  %v132 = vld [vmem:[%s130 + $0x8] sm:$0xff]
  %v133 = vld [vmem:[%s130 + $0x10] sm:$0xff]
  %v134 = vld [vmem:[%s130 + $0x18] sm:$0xff]
  %v135 = vld [vmem:[%s130 + $0x20] sm:$0xff]
  %v136 = vld [vmem:[%s130 + $0x28] sm:$0xff]
  %v137 = vld [vmem:[%s130 + $0x30] sm:$0x3]
  %s138 = scalar_lea.vmem %s2, 1
  %v139 = vld [vmem:[%s138] sm:$0x1]
  %v141 = vperm.slane %v139, 0
  %v144 = vsel %vm101, %v137, 0
  %146 = vmatpush.msra.mxu0 0.0
  %147 = vmatpush.msra.mxu0 0.0
  %148 = vmatpush.msra.mxu0 0.0
  %149 = vmatpush.msra.mxu0 0.0
  %150 = vmatpush.msra.mxu0 0.0
  %151 = vmatpush.msra.mxu0 0.0
  %152 = vmatpush.msra.mxu0 0.0
  %153 = vmatpush.msra.mxu0 0.0
  %154 = vmatpush.msra.mxu0 0.0
  %155 = vmatpush.msra.mxu0 %v144
  %156 = vmatpush.msra.mxu0 %v136
  %157 = vmatpush.msra.mxu0 %v135
  %158 = vmatpush.msra.mxu0 %v134
  %159 = vmatpush.msra.mxu0 %v133
  %160 = vmatpush.msra.mxu0 %v132
  %161 = vmatpush.msra.mxu0 %v131
  %162 = vmatmul.f32.gmra.mxu0 %v99
  %v163 = vpop.f32.mrf.mxu0
  %v164 = vadd.f32 %v141, %v163
  %165 = vdwg.mxu0
  %v167 = vrot.slane %v164, 1
  %169 = vst.msk [vmem:[#allocation2 + $0x2] sm:$0x1] %vm81, %v164
  %170 = vst.msk [vmem:[#allocation2 + $0x12] sm:$0x1] %vm81, %v167
  %s171 = scalar_lea.vmem %s1, 112
  %v172 = vld [vmem:[%s171] sm:$0xff]
  %v173 = vld [vmem:[%s171 + $0x8] sm:$0xff]
  %v174 = vld [vmem:[%s171 + $0x10] sm:$0xff]
  %v175 = vld [vmem:[%s171 + $0x18] sm:$0xff]
  %v176 = vld [vmem:[%s171 + $0x20] sm:$0xff]
  %v177 = vld [vmem:[%s171 + $0x28] sm:$0xff]
  %v178 = vld [vmem:[%s171 + $0x30] sm:$0x3]
  %s179 = scalar_lea.vmem %s2, 2
  %v180 = vld [vmem:[%s179] sm:$0x1]
  %v182 = vperm.slane %v180, 0
  %v185 = vsel %vm101, %v178, 0
  %187 = vmatpush.msra.mxu0 0.0
  %188 = vmatpush.msra.mxu0 0.0
  %189 = vmatpush.msra.mxu0 0.0
  %190 = vmatpush.msra.mxu0 0.0
  %191 = vmatpush.msra.mxu0 0.0
  %192 = vmatpush.msra.mxu0 0.0
  %193 = vmatpush.msra.mxu0 0.0
  %194 = vmatpush.msra.mxu0 0.0
  %195 = vmatpush.msra.mxu0 0.0
  %196 = vmatpush.msra.mxu0 %v185
  %197 = vmatpush.msra.mxu0 %v177
  %198 = vmatpush.msra.mxu0 %v176
  %199 = vmatpush.msra.mxu0 %v175
  %200 = vmatpush.msra.mxu0 %v174
  %201 = vmatpush.msra.mxu0 %v173
  %202 = vmatpush.msra.mxu0 %v172
  %203 = vmatmul.f32.gmra.mxu0 %v99
  %v204 = vpop.f32.mrf.mxu0
  %v205 = vadd.f32 %v182, %v204
  %206 = vdwg.mxu0
  %v208 = vrot.slane %v205, 1
  %210 = vst.msk [vmem:[#allocation2 + $0x3] sm:$0x1] %vm81, %v205
  %211 = vst.msk [vmem:[#allocation2 + $0x13] sm:$0x1] %vm81, %v208
  %s212 = scalar_lea.vmem %s1, 168
  %v213 = vld [vmem:[%s212] sm:$0xff]
  %v214 = vld [vmem:[%s212 + $0x8] sm:$0xff]
  %v215 = vld [vmem:[%s212 + $0x10] sm:$0xff]
  %v216 = vld [vmem:[%s212 + $0x18] sm:$0xff]
  %v217 = vld [vmem:[%s212 + $0x20] sm:$0xff]
  %v218 = vld [vmem:[%s212 + $0x28] sm:$0xff]
  %v219 = vld [vmem:[%s212 + $0x30] sm:$0x3]
  %s220 = scalar_lea.vmem %s2, 3
  %v221 = vld [vmem:[%s220] sm:$0x1]
  %v223 = vperm.slane %v221, 0
  %v226 = vsel %vm101, %v219, 0
  %228 = vmatpush.msra.mxu0 0.0
  %229 = vmatpush.msra.mxu0 0.0
  %230 = vmatpush.msra.mxu0 0.0
  %231 = vmatpush.msra.mxu0 0.0
  %232 = vmatpush.msra.mxu0 0.0
  %233 = vmatpush.msra.mxu0 0.0
  %234 = vmatpush.msra.mxu0 0.0
  %235 = vmatpush.msra.mxu0 0.0
  %236 = vmatpush.msra.mxu0 0.0
  %237 = vmatpush.msra.mxu0 %v226
  %238 = vmatpush.msra.mxu0 %v218
  %239 = vmatpush.msra.mxu0 %v217
  %240 = vmatpush.msra.mxu0 %v216
  %241 = vmatpush.msra.mxu0 %v215
  %242 = vmatpush.msra.mxu0 %v214
  %243 = vmatpush.msra.mxu0 %v213
  %244 = vmatmul.f32.gmra.mxu0 %v99
  %v245 = vpop.f32.mrf.mxu0
  %v246 = vadd.f32 %v223, %v245
  %247 = vdwg.mxu0
  %v249 = vrot.slane %v246, 1
  %251 = vst.msk [vmem:[#allocation2 + $0x4] sm:$0x1] %vm81, %v246
  %252 = vst.msk [vmem:[#allocation2 + $0x14] sm:$0x1] %vm81, %v249
  %s253 = scalar_lea.vmem %s1, 224
  %v254 = vld [vmem:[%s253] sm:$0xff]
  %v255 = vld [vmem:[%s253 + $0x8] sm:$0xff]
  %v256 = vld [vmem:[%s253 + $0x10] sm:$0xff]
  %v257 = vld [vmem:[%s253 + $0x18] sm:$0xff]
  %v258 = vld [vmem:[%s253 + $0x20] sm:$0xff]
  %v259 = vld [vmem:[%s253 + $0x28] sm:$0xff]
  %v260 = vld [vmem:[%s253 + $0x30] sm:$0x3]
  %s261 = scalar_lea.vmem %s2, 4
  %v262 = vld [vmem:[%s261] sm:$0x1]
  %v264 = vperm.slane %v262, 0
  %v267 = vsel %vm101, %v260, 0
  %269 = vmatpush.msra.mxu0 0.0
  %270 = vmatpush.msra.mxu0 0.0
  %271 = vmatpush.msra.mxu0 0.0
  %272 = vmatpush.msra.mxu0 0.0
  %273 = vmatpush.msra.mxu0 0.0
  %274 = vmatpush.msra.mxu0 0.0
  %275 = vmatpush.msra.mxu0 0.0
  %276 = vmatpush.msra.mxu0 0.0
  %277 = vmatpush.msra.mxu0 0.0
  %278 = vmatpush.msra.mxu0 %v267
  %279 = vmatpush.msra.mxu0 %v259
  %280 = vmatpush.msra.mxu0 %v258
  %281 = vmatpush.msra.mxu0 %v257
  %282 = vmatpush.msra.mxu0 %v256
  %283 = vmatpush.msra.mxu0 %v255
  %284 = vmatpush.msra.mxu0 %v254
  %285 = vmatmul.f32.gmra.mxu0 %v99
  %v286 = vpop.f32.mrf.mxu0
  %v287 = vadd.f32 %v264, %v286
  %288 = vdwg.mxu0
  %v290 = vrot.slane %v287, 1
  %292 = vst.msk [vmem:[#allocation2 + $0x5] sm:$0x1] %vm81, %v287
  %293 = vst.msk [vmem:[#allocation2 + $0x15] sm:$0x1] %vm81, %v290
  %s294 = scalar_lea.vmem %s1, 280
  %v295 = vld [vmem:[%s294] sm:$0xff]
  %v296 = vld [vmem:[%s294 + $0x8] sm:$0xff]
  %v297 = vld [vmem:[%s294 + $0x10] sm:$0xff]
  %v298 = vld [vmem:[%s294 + $0x18] sm:$0xff]
  %v299 = vld [vmem:[%s294 + $0x20] sm:$0xff]
  %v300 = vld [vmem:[%s294 + $0x28] sm:$0xff]
  %v301 = vld [vmem:[%s294 + $0x30] sm:$0x3]
  %s302 = scalar_lea.vmem %s2, 5
  %v303 = vld [vmem:[%s302] sm:$0x1]
  %v305 = vperm.slane %v303, 0
  %v308 = vsel %vm101, %v301, 0
  %310 = vmatpush.msra.mxu0 0.0
  %311 = vmatpush.msra.mxu0 0.0
  %312 = vmatpush.msra.mxu0 0.0
  %313 = vmatpush.msra.mxu0 0.0
  %314 = vmatpush.msra.mxu0 0.0
  %315 = vmatpush.msra.mxu0 0.0
  %316 = vmatpush.msra.mxu0 0.0
  %317 = vmatpush.msra.mxu0 0.0
  %318 = vmatpush.msra.mxu0 0.0
  %319 = vmatpush.msra.mxu0 %v308
  %320 = vmatpush.msra.mxu0 %v300
  %321 = vmatpush.msra.mxu0 %v299
  %322 = vmatpush.msra.mxu0 %v298
  %323 = vmatpush.msra.mxu0 %v297
  %324 = vmatpush.msra.mxu0 %v296
  %325 = vmatpush.msra.mxu0 %v295
  %326 = vmatmul.f32.gmra.mxu0 %v99
  %v327 = vpop.f32.mrf.mxu0
  %v328 = vadd.f32 %v305, %v327
  %329 = vdwg.mxu0
  %v331 = vrot.slane %v328, 1
  %333 = vst.msk [vmem:[#allocation2 + $0x6] sm:$0x1] %vm81, %v328
  %334 = vst.msk [vmem:[#allocation2 + $0x16] sm:$0x1] %vm81, %v331
  %s335 = scalar_lea.vmem %s1, 336
  %v336 = vld [vmem:[%s335] sm:$0xff]
  %v337 = vld [vmem:[%s335 + $0x8] sm:$0xff]
  %v338 = vld [vmem:[%s335 + $0x10] sm:$0xff]
  %v339 = vld [vmem:[%s335 + $0x18] sm:$0xff]
  %v340 = vld [vmem:[%s335 + $0x20] sm:$0xff]
  %v341 = vld [vmem:[%s335 + $0x28] sm:$0xff]
  %v342 = vld [vmem:[%s335 + $0x30] sm:$0x3]
  %s343 = scalar_lea.vmem %s2, 6
  %v344 = vld [vmem:[%s343] sm:$0x1]
  %v346 = vperm.slane %v344, 0
  %v349 = vsel %vm101, %v342, 0
  %351 = vmatpush.msra.mxu0 0.0
  %352 = vmatpush.msra.mxu0 0.0
  %353 = vmatpush.msra.mxu0 0.0
  %354 = vmatpush.msra.mxu0 0.0
  %355 = vmatpush.msra.mxu0 0.0
  %356 = vmatpush.msra.mxu0 0.0
  %357 = vmatpush.msra.mxu0 0.0
  %358 = vmatpush.msra.mxu0 0.0
  %359 = vmatpush.msra.mxu0 0.0
  %360 = vmatpush.msra.mxu0 %v349
  %361 = vmatpush.msra.mxu0 %v341
  %362 = vmatpush.msra.mxu0 %v340
  %363 = vmatpush.msra.mxu0 %v339
  %364 = vmatpush.msra.mxu0 %v338
  %365 = vmatpush.msra.mxu0 %v337
  %366 = vmatpush.msra.mxu0 %v336
  %367 = vmatmul.f32.gmra.mxu0 %v99
  %v368 = vpop.f32.mrf.mxu0
  %v369 = vadd.f32 %v346, %v368
  %370 = vdwg.mxu0
  %v372 = vrot.slane %v369, 1
  %374 = vst.msk [vmem:[#allocation2 + $0x7] sm:$0x1] %vm81, %v369
  %375 = vst.msk [vmem:[#allocation2 + $0x17] sm:$0x1] %vm81, %v372
  %s376 = scalar_lea.vmem %s1, 392
  %v377 = vld [vmem:[%s376] sm:$0xff]
  %v378 = vld [vmem:[%s376 + $0x8] sm:$0xff]
  %v379 = vld [vmem:[%s376 + $0x10] sm:$0xff]
  %v380 = vld [vmem:[%s376 + $0x18] sm:$0xff]
  %v381 = vld [vmem:[%s376 + $0x20] sm:$0xff]
  %v382 = vld [vmem:[%s376 + $0x28] sm:$0xff]
  %v383 = vld [vmem:[%s376 + $0x30] sm:$0x3]
  %s384 = scalar_lea.vmem %s2, 7
  %v385 = vld [vmem:[%s384] sm:$0x1]
  %v387 = vperm.slane %v385, 0
  %v390 = vsel %vm101, %v383, 0
  %392 = vmatpush.msra.mxu0 0.0
  %393 = vmatpush.msra.mxu0 0.0
  %394 = vmatpush.msra.mxu0 0.0
  %395 = vmatpush.msra.mxu0 0.0
  %396 = vmatpush.msra.mxu0 0.0
  %397 = vmatpush.msra.mxu0 0.0
  %398 = vmatpush.msra.mxu0 0.0
  %399 = vmatpush.msra.mxu0 0.0
  %400 = vmatpush.msra.mxu0 0.0
  %401 = vmatpush.msra.mxu0 %v390
  %402 = vmatpush.msra.mxu0 %v382
  %403 = vmatpush.msra.mxu0 %v381
  %404 = vmatpush.msra.mxu0 %v380
  %405 = vmatpush.msra.mxu0 %v379
  %406 = vmatpush.msra.mxu0 %v378
  %407 = vmatpush.msra.mxu0 %v377
  %408 = vmatmul.f32.gmra.mxu0 %v99
  %v409 = vpop.f32.mrf.mxu0
  %v410 = vadd.f32 %v387, %v409
  %411 = vdwg.mxu0
  %v413 = vrot.slane %v410, 1
  %415 = vst.msk [vmem:[#allocation2 + $0x8] sm:$0x1] %vm81, %v410
  %416 = vst.msk [vmem:[#allocation2 + $0x18] sm:$0x1] %vm81, %v413
  %v417 = vld [vmem:[#allocation2] sm:$0xff]
  %v418 = vld [vmem:[#allocation2 + $0x8] sm:$0x3]
  %v419 = vld [vmem:[#allocation2 + $0x10] sm:$0xff]
  %v420 = vld [vmem:[#allocation2 + $0x18] sm:$0x3]
  %v421 = vld [vmem:[%s3] sm:$0xff]
  %v422 = vld [vmem:[%s3 + $0x8] sm:$0xff]
  %v423 = vld [vmem:[%s3 + $0x10] sm:$0xff]
  %v424 = vld [vmem:[%s3 + $0x18] sm:$0xff]
  %v425 = vld [vmem:[%s3 + $0x20] sm:$0xff]
  %v426 = vld [vmem:[%s3 + $0x28] sm:$0xff]
  %v427 = vld [vmem:[%s3 + $0x30] sm:$0xff]
  %v428 = vld [vmem:[%s3 + $0x38] sm:$0xff]
  %v429 = vld [vmem:[%s3 + $0x40] sm:$0xff]
  %v430 = vld [vmem:[%s3 + $0x48] sm:$0xff]
  %vm435 = vcmask 1046528
  %v436 = vrot.slane %v417, 1
  %v437 = vrot.slane %v418, 1
  %v438 = vsel %vm435, %v436, %v437
  %v439 = vrot.slane %v419, 1
  %v440 = vrot.slane %v420, 1
  %v441 = vsel %vm435, %v439, %v440
  %s442 = scalar_lea.vmem %s3, 80
  %v443 = vld [vmem:[%s442] sm:$0xff]
  %v444 = vld [vmem:[%s442 + $0x8] sm:$0xff]
  %v445 = vld [vmem:[%s442 + $0x10] sm:$0xff]
  %v446 = vld [vmem:[%s442 + $0x18] sm:$0xff]
  %v447 = vld [vmem:[%s442 + $0x20] sm:$0xff]
  %v448 = vld [vmem:[%s442 + $0x28] sm:$0xff]
  %v449 = vld [vmem:[%s442 + $0x30] sm:$0xff]
  %v450 = vld [vmem:[%s442 + $0x38] sm:$0xff]
  %v451 = vld [vmem:[%s442 + $0x40] sm:$0xff]
  %v452 = vld [vmem:[%s442 + $0x48] sm:$0xff]
  %vm453 = vcmask 654336
  %v454 = vsel %vm453, %v438, 0
  %v456 = vsel %vm453, %v441, 0
  %458 = vmatpush.msra.mxu0 0.0
  %459 = vmatpush.msra.mxu0 0.0
  %460 = vmatpush.msra.mxu0 0.0
  %461 = vmatpush.msra.mxu0 0.0
  %462 = vmatpush.msra.mxu0 0.0
  %463 = vmatpush.msra.mxu0 0.0
  %464 = vmatpush.msra.mxu0 %v452
  %465 = vmatpush.msra.mxu0 %v451
  %466 = vmatpush.msra.mxu0 %v450
  %467 = vmatpush.msra.mxu0 %v449
  %468 = vmatpush.msra.mxu0 %v448
  %469 = vmatpush.msra.mxu0 %v447
  %470 = vmatpush.msra.mxu0 %v446
  %471 = vmatpush.msra.mxu0 %v445
  %472 = vmatpush.msra.mxu0 %v444
  %473 = vmatpush.msra.mxu0 %v443
  %474 = vmatmul.f32.gmra.mxu0 %v454
  %v475 = vpop.f32.mrf.mxu0
  %v476 = vadd.f32 0.0, %v475
  %477 = vmatmul.f32.gmra.mxu0 %v456
  %v478 = vpop.f32.mrf.mxu0
  %v479 = vadd.f32 0.0, %v478
  %480 = vdwg.mxu0
  %v481 = vsel %vm453, %v417, 0
  %v483 = vsel %vm453, %v419, 0
  %485 = vmatpush.msra.mxu0 0.0
  %486 = vmatpush.msra.mxu0 0.0
  %487 = vmatpush.msra.mxu0 0.0
  %488 = vmatpush.msra.mxu0 0.0
  %489 = vmatpush.msra.mxu0 0.0
  %490 = vmatpush.msra.mxu0 0.0
  %491 = vmatpush.msra.mxu0 %v430
  %492 = vmatpush.msra.mxu0 %v429
  %493 = vmatpush.msra.mxu0 %v428
  %494 = vmatpush.msra.mxu0 %v427
  %495 = vmatpush.msra.mxu0 %v426
  %496 = vmatpush.msra.mxu0 %v425
  %497 = vmatpush.msra.mxu0 %v424
  %498 = vmatpush.msra.mxu0 %v423
  %499 = vmatpush.msra.mxu0 %v422
  %500 = vmatpush.msra.mxu0 %v421
  %501 = vmatmul.f32.gmra.mxu0 %v481
  %v502 = vpop.f32.mrf.mxu0
  %v503 = vadd.f32 %v476, %v502
  %504 = vmatmul.f32.gmra.mxu0 %v483
  %v505 = vpop.f32.mrf.mxu0
  %v506 = vadd.f32 %v479, %v505
  %507 = vdwg.mxu0
  %vm508 = vcmask 1045504
  %v509 = vrot.slane %v417, 2
  %v510 = vrot.slane %v418, 2
  %v511 = vsel %vm508, %v509, %v510
  %v512 = vrot.slane %v419, 2
  %v513 = vrot.slane %v420, 2
  %v514 = vsel %vm508, %v512, %v513
  %s515 = scalar_lea.vmem %s3, 160
  %v516 = vld [vmem:[%s515] sm:$0xff]
  %v517 = vld [vmem:[%s515 + $0x8] sm:$0xff]
  %v518 = vld [vmem:[%s515 + $0x10] sm:$0xff]
  %v519 = vld [vmem:[%s515 + $0x18] sm:$0xff]
  %v520 = vld [vmem:[%s515 + $0x20] sm:$0xff]
  %v521 = vld [vmem:[%s515 + $0x28] sm:$0xff]
  %v522 = vld [vmem:[%s515 + $0x30] sm:$0xff]
  %v523 = vld [vmem:[%s515 + $0x38] sm:$0xff]
  %v524 = vld [vmem:[%s515 + $0x40] sm:$0xff]
  %v525 = vld [vmem:[%s515 + $0x48] sm:$0xff]
  %v526 = vsel %vm453, %v511, 0
  %v528 = vsel %vm453, %v514, 0
  %530 = vmatpush.msra.mxu0 0.0
  %531 = vmatpush.msra.mxu0 0.0
  %532 = vmatpush.msra.mxu0 0.0
  %533 = vmatpush.msra.mxu0 0.0
  %534 = vmatpush.msra.mxu0 0.0
  %535 = vmatpush.msra.mxu0 0.0
  %536 = vmatpush.msra.mxu0 %v525
  %537 = vmatpush.msra.mxu0 %v524
  %538 = vmatpush.msra.mxu0 %v523
  %539 = vmatpush.msra.mxu0 %v522
  %540 = vmatpush.msra.mxu0 %v521
  %541 = vmatpush.msra.mxu0 %v520
  %542 = vmatpush.msra.mxu0 %v519
  %543 = vmatpush.msra.mxu0 %v518
  %544 = vmatpush.msra.mxu0 %v517
  %545 = vmatpush.msra.mxu0 %v516
  %546 = vmatmul.f32.gmra.mxu0 %v526
  %v547 = vpop.f32.mrf.mxu0
  %v548 = vadd.f32 0.0, %v547
  %549 = vmatmul.f32.gmra.mxu0 %v528
  %v550 = vpop.f32.mrf.mxu0
  %v551 = vadd.f32 0.0, %v550
  %552 = vdwg.mxu0
  %v553 = vadd.f32 %v503, %v548
  %v554 = vadd.f32 %v506, %v551
  %v555 = vld [vmem:[%s4] sm:$0x1]
  %v556 = vld [vmem:[%s6] sm:$0xff]
  %v557 = vld [vmem:[%s6 + $0x8] sm:$0xff]
  %vm558 = vcmask 130048
  %v560 = vsel %vm558, %v555, 0
  %562 = vmatpush.msra.mxu0 0.0
  %563 = vmatpush.msra.mxu0 0.0
  %564 = vmatpush.msra.mxu0 0.0
  %565 = vmatpush.msra.mxu0 0.0
  %566 = vmatpush.msra.mxu0 0.0
  %567 = vmatpush.msra.mxu0 0.0
  %568 = vmatpush.msra.mxu0 0.0
  %569 = vmatpush.msra.mxu0 0.0
  %570 = vmatpush.msra.mxu0 0.0
  %571 = vmatpush.msra.mxu0 0.0
  %572 = vmatpush.msra.mxu0 0.0
  %573 = vmatpush.msra.mxu0 0.0
  %574 = vmatpush.msra.mxu0 0.0
  %575 = vmatpush.msra.mxu0 0.0
  %576 = vmatpush.msra.mxu0 %v557
  %577 = vmatpush.msra.mxu0 %v556
  %578 = vmatmul.f32.gmra.mxu0 %v560
  %v579 = vpop.f32.mrf.mxu0
  %v580 = vadd.f32 0.0, %v579
  %581 = vdwg.mxu0
  %v582 = vperm.slane %v580, 0
  %v583 = vadd.f32 %v553, %v582
  %v584 = vadd.f32 %v554, %v582
  %v585 = vld [vmem:[%s5] sm:$0xff]
  %v586 = vld [vmem:[%s5 + $0x8] sm:$0xff]
  %v587 = vld [vmem:[%s5 + $0x10] sm:$0xff]
  %v588 = vld [vmem:[%s5 + $0x18] sm:$0xff]
  %v589 = vld [vmem:[%s5 + $0x20] sm:$0xff]
  %v590 = vld [vmem:[%s5 + $0x28] sm:$0xff]
  %v591 = vld [vmem:[%s5 + $0x30] sm:$0xff]
  %v592 = vld [vmem:[%s5 + $0x38] sm:$0xff]
  %v593 = vld [vmem:[%s5 + $0x40] sm:$0xff]
  %v594 = vld [vmem:[%s5 + $0x48] sm:$0xff]
  %v595 = vld [vmem:[%s5 + $0x50] sm:$0xff]
  %v596 = vld [vmem:[%s5 + $0x58] sm:$0xff]
  %v597 = vld [vmem:[%s5 + $0x60] sm:$0xff]
  %v598 = vld [vmem:[%s5 + $0x68] sm:$0xff]
  %v599 = vld [vmem:[%s5 + $0x70] sm:$0xff]
  %v600 = vld [vmem:[%s5 + $0x78] sm:$0xff]
  %601 = vmatpush.msra.mxu0 %v600
  %602 = vmatpush.msra.mxu0 %v599
  %603 = vmatpush.msra.mxu0 %v598
  %604 = vmatpush.msra.mxu0 %v597
  %605 = vmatpush.msra.mxu0 %v596
  %606 = vmatpush.msra.mxu0 %v595
  %607 = vmatpush.msra.mxu0 %v594
  %608 = vmatpush.msra.mxu0 %v593
  %609 = vmatpush.msra.mxu0 %v592
  %610 = vmatpush.msra.mxu0 %v591
  %611 = vmatpush.msra.mxu0 %v590
  %612 = vmatpush.msra.mxu0 %v589
  %613 = vmatpush.msra.mxu0 %v588
  %614 = vmatpush.msra.mxu0 %v587
  %615 = vmatpush.msra.mxu0 %v586
  %616 = vmatpush.msra.mxu0 %v585
  %617 = vmatmul.f32.gmra.mxu0 %v583
  %v618 = vpop.f32.mrf.mxu0
  %v619 = vadd.f32 0.0, %v618
  %620 = vmatmul.f32.gmra.mxu0 %v584
  %v621 = vpop.f32.mrf.mxu0
  %v622 = vadd.f32 0.0, %v621
  %623 = vdwg.mxu0
  %v624 = vsel %vm558, %v619, 0.0
  %v625 = vsel %vm558, %v622, 0.0
  %v626 = vadd.f32 %v624, %v625
  %v627 = vrot.slane %v626, 4
  %v628 = vadd.f32 %v626, %v627
  %v629 = vrot.slane %v628, 2
  %v630 = vadd.f32 %v628, %v629
  %v631 = vrot.slane %v630, 1
  %v632 = vadd.f32 %v630, %v631
  %v633 = vrcp.pop 128.0
  %v634 = vmul.f32 128.0, %v633
  %v635 = vsub.f32 1.0, %v634
  %v636 = vmul.f32 %v633, %v635
  %v637 = vadd.f32 %v633, %v636
  %vm638 = vweird.f32 %v633
  %v639 = vsel %vm638, %v633, %v637
  %v640 = vmul.f32 %v632, %v639
  %v642 = vsel %vm558, %v640, 0
  %644 = vmatpush.msra.mxu0 0.0
  %645 = vmatpush.msra.mxu0 0.0
  %646 = vmatpush.msra.mxu0 0.0
  %647 = vmatpush.msra.mxu0 0.0
  %648 = vmatpush.msra.mxu0 0.0
  %649 = vmatpush.msra.mxu0 0.0
  %650 = vmatpush.msra.mxu0 0.0
  %651 = vmatpush.msra.mxu0 0.0
  %652 = vmatpush.msra.mxu0 0.0
  %653 = vmatpush.msra.mxu0 0.0
  %654 = vmatpush.msra.mxu0 0.0
  %655 = vmatpush.msra.mxu0 0.0
  %656 = vmatpush.msra.mxu0 0.0
  %657 = vmatpush.msra.mxu0 0.0
  %658 = vmatpush.msra.mxu0 %v557
  %659 = vmatpush.msra.mxu0 %v556
  %660 = vmatmul.f32.gmra.mxu0 %v642
  %v661 = vpop.f32.mrf.mxu0
  %v662 = vadd.f32 0.0, %v661
  %663 = vdwg.mxu0
  %v664 = vperm.slane %v662, 0
  %v665 = vsub.f32 %v583, %v664
  %v666 = vsub.f32 %v584, %v664
  %v667 = vmul.f32 %v665, %v665
  %v668 = vmul.f32 %v666, %v666
  %669 = vmatpush.msra.mxu0 %v600
  %670 = vmatpush.msra.mxu0 %v599
  %671 = vmatpush.msra.mxu0 %v598
  %672 = vmatpush.msra.mxu0 %v597
  %673 = vmatpush.msra.mxu0 %v596
  %674 = vmatpush.msra.mxu0 %v595
  %675 = vmatpush.msra.mxu0 %v594
  %676 = vmatpush.msra.mxu0 %v593
  %677 = vmatpush.msra.mxu0 %v592
  %678 = vmatpush.msra.mxu0 %v591
  %679 = vmatpush.msra.mxu0 %v590
  %680 = vmatpush.msra.mxu0 %v589
  %681 = vmatpush.msra.mxu0 %v588
  %682 = vmatpush.msra.mxu0 %v587
  %683 = vmatpush.msra.mxu0 %v586
  %684 = vmatpush.msra.mxu0 %v585
  %685 = vmatmul.f32.gmra.mxu0 %v667
  %v686 = vpop.f32.mrf.mxu0
  %v687 = vadd.f32 0.0, %v686
  %688 = vmatmul.f32.gmra.mxu0 %v668
  %v689 = vpop.f32.mrf.mxu0
  %v690 = vadd.f32 0.0, %v689
  %691 = vdwg.mxu0
  %v692 = vsel %vm558, %v687, 0.0
  %v693 = vsel %vm558, %v690, 0.0
  %v694 = vadd.f32 %v692, %v693
  %v695 = vrot.slane %v694, 4
  %v696 = vadd.f32 %v694, %v695
  %v697 = vrot.slane %v696, 2
  %v698 = vadd.f32 %v696, %v697
  %v699 = vrot.slane %v698, 1
  %v700 = vadd.f32 %v698, %v699
  %v701 = vmul.f32 %v700, %v639
  %v702 = vadd.f32 %v701, 1e-05
  %v703 = vrsqrt.pop %v702
  %v704 = vmul.f32 %v703, %v702
  %v705 = vmul.f32 %v704, %v703
  %v706 = vmul.f32 0.5, %v705
  %v707 = vsub.f32 1.5, %v706
  %v708 = vmul.f32 %v703, %v707
  %vm709 = vweird.f32 %v702
  %vm710 = vweird.f32 %v703
  %vm711 = vmor %vm709, %vm710
  %v712 = vsel %vm711, %v703, %v708
  %v713 = vld [vmem:[%s7] sm:$0x1]
  %v714 = vmul.f32 %v712, %v713
  %v716 = vsel %vm558, %v714, 0
  %718 = vmatpush.msra.mxu0 0.0
  %719 = vmatpush.msra.mxu0 0.0
  %720 = vmatpush.msra.mxu0 0.0
  %721 = vmatpush.msra.mxu0 0.0
  %722 = vmatpush.msra.mxu0 0.0
  %723 = vmatpush.msra.mxu0 0.0
  %724 = vmatpush.msra.mxu0 0.0
  %725 = vmatpush.msra.mxu0 0.0
  %726 = vmatpush.msra.mxu0 0.0
  %727 = vmatpush.msra.mxu0 0.0
  %728 = vmatpush.msra.mxu0 0.0
  %729 = vmatpush.msra.mxu0 0.0
  %730 = vmatpush.msra.mxu0 0.0
  %731 = vmatpush.msra.mxu0 0.0
  %732 = vmatpush.msra.mxu0 %v557
  %733 = vmatpush.msra.mxu0 %v556
  %734 = vmatmul.f32.gmra.mxu0 %v716
  %v735 = vpop.f32.mrf.mxu0
  %v736 = vadd.f32 0.0, %v735
  %737 = vdwg.mxu0
  %v738 = vld [vmem:[%s8] sm:$0x1]
  %v740 = vsel %vm558, %v738, 0
  %742 = vmatpush.msra.mxu0 0.0
  %743 = vmatpush.msra.mxu0 0.0
  %744 = vmatpush.msra.mxu0 0.0
  %745 = vmatpush.msra.mxu0 0.0
  %746 = vmatpush.msra.mxu0 0.0
  %747 = vmatpush.msra.mxu0 0.0
  %748 = vmatpush.msra.mxu0 0.0
  %749 = vmatpush.msra.mxu0 0.0
  %750 = vmatpush.msra.mxu0 0.0
  %751 = vmatpush.msra.mxu0 0.0
  %752 = vmatpush.msra.mxu0 0.0
  %753 = vmatpush.msra.mxu0 0.0
  %754 = vmatpush.msra.mxu0 0.0
  %755 = vmatpush.msra.mxu0 0.0
  %756 = vmatpush.msra.mxu0 %v557
  %757 = vmatpush.msra.mxu0 %v556
  %758 = vmatmul.f32.gmra.mxu0 %v740
  %v759 = vpop.f32.mrf.mxu0
  %v760 = vadd.f32 0.0, %v759
  %761 = vdwg.mxu0
  %v762 = vperm.slane %v736, 0
  %v763 = vmul.f32 %v665, %v762
  %v764 = vmul.f32 %v666, %v762
  %v765 = vperm.slane %v760, 0
  %v766 = vadd.f32 %v763, %v765
  %v767 = vadd.f32 %v764, %v765
  %v768 = vmax.f32 %v766, 0.0
  %v769 = vmax.f32 %v767, 0.0
  %v770 = vld [vmem:[%s9] sm:$0xff]
  %v771 = vld [vmem:[%s9 + $0x8] sm:$0xff]
  %v772 = vld [vmem:[%s9 + $0x10] sm:$0xff]
  %v773 = vld [vmem:[%s9 + $0x18] sm:$0xff]
  %v774 = vld [vmem:[%s9 + $0x20] sm:$0xff]
  %v775 = vld [vmem:[%s9 + $0x28] sm:$0xff]
  %v776 = vld [vmem:[%s9 + $0x30] sm:$0xff]
  %v777 = vld [vmem:[%s9 + $0x38] sm:$0xff]
  %v778 = vld [vmem:[%s9 + $0x40] sm:$0xff]
  %v779 = vld [vmem:[%s9 + $0x48] sm:$0xff]
  %v780 = vld [vmem:[%s9 + $0x50] sm:$0xff]
  %v781 = vld [vmem:[%s9 + $0x58] sm:$0xff]
  %v782 = vld [vmem:[%s9 + $0x60] sm:$0xff]
  %v783 = vld [vmem:[%s9 + $0x68] sm:$0xff]
  %v784 = vld [vmem:[%s9 + $0x70] sm:$0xff]
  %v785 = vld [vmem:[%s9 + $0x78] sm:$0xff]
  %v786 = vld [vmem:[%s9 + $0x80] sm:$0xff]
  %v787 = vld [vmem:[%s9 + $0x88] sm:$0xff]
  %v788 = vld [vmem:[%s9 + $0x90] sm:$0xff]
  %v789 = vld [vmem:[%s9 + $0x98] sm:$0xff]
  %v790 = vld [vmem:[%s9 + $0xa0] sm:$0xff]
  %v791 = vld [vmem:[%s9 + $0xa8] sm:$0xff]
  %v792 = vld [vmem:[%s9 + $0xb0] sm:$0xff]
  %v793 = vld [vmem:[%s9 + $0xb8] sm:$0xff]
  %v794 = vld [vmem:[%s9 + $0xc0] sm:$0xff]
  %v795 = vld [vmem:[%s9 + $0xc8] sm:$0xff]
  %v796 = vld [vmem:[%s9 + $0xd0] sm:$0xff]
  %v797 = vld [vmem:[%s9 + $0xd8] sm:$0xff]
  %v798 = vld [vmem:[%s9 + $0xe0] sm:$0xff]
  %v799 = vld [vmem:[%s9 + $0xe8] sm:$0xff]
  %v800 = vld [vmem:[%s9 + $0xf0] sm:$0xff]
  %v801 = vld [vmem:[%s9 + $0xf8] sm:$0xff]
  %v802 = vld [vmem:[%s9 + $0x100] sm:$0xff]
  %v803 = vld [vmem:[%s9 + $0x108] sm:$0xff]
  %v804 = vld [vmem:[%s9 + $0x110] sm:$0xff]
  %v805 = vld [vmem:[%s9 + $0x118] sm:$0xff]
  %v806 = vld [vmem:[%s9 + $0x120] sm:$0xff]
  %v807 = vld [vmem:[%s9 + $0x128] sm:$0xff]
  %v808 = vld [vmem:[%s9 + $0x130] sm:$0xff]
  %v809 = vld [vmem:[%s9 + $0x138] sm:$0xff]
  %v810 = vld [vmem:[%s9 + $0x140] sm:$0xff]
  %v811 = vld [vmem:[%s9 + $0x148] sm:$0xff]
  %v812 = vld [vmem:[%s9 + $0x150] sm:$0xff]
  %v813 = vld [vmem:[%s9 + $0x158] sm:$0xff]
  %v814 = vld [vmem:[%s9 + $0x160] sm:$0xff]
  %v815 = vld [vmem:[%s9 + $0x168] sm:$0xff]
  %v816 = vld [vmem:[%s9 + $0x170] sm:$0xff]
  %v817 = vld [vmem:[%s9 + $0x178] sm:$0xff]
  %v818 = vld [vmem:[%s10] sm:$0x7]
  %v820 = vperm.slane %v818, 0
  %v821 = vperm.slane %v818, 1
  %v822 = vperm.slane %v818, 2
  %826 = vmatpush.msra.mxu0 %v815
  %827 = vmatpush.msra.mxu0 %v812
  %828 = vmatpush.msra.mxu0 %v809
  %829 = vmatpush.msra.mxu0 %v806
  %830 = vmatpush.msra.mxu0 %v803
  %831 = vmatpush.msra.mxu0 %v800
  %832 = vmatpush.msra.mxu0 %v797
  %833 = vmatpush.msra.mxu0 %v794
  %834 = vmatpush.msra.mxu0 %v791
  %835 = vmatpush.msra.mxu0 %v788
  %836 = vmatpush.msra.mxu0 %v785
  %837 = vmatpush.msra.mxu0 %v782
  %838 = vmatpush.msra.mxu0 %v779
  %839 = vmatpush.msra.mxu0 %v776
  %840 = vmatpush.msra.mxu0 %v773
  %841 = vmatpush.msra.mxu0 %v770
  %842 = vmatmul.f32.gmra.mxu0 %v768
  %v843 = vpop.f32.mrf.mxu0
  %v844 = vadd.f32 %v820, %v843
  %845 = vmatmul.f32.gmra.mxu0 %v769
  %v846 = vpop.f32.mrf.mxu0
  %v847 = vadd.f32 %v820, %v846
  %848 = vdwg.mxu0
  %849 = vmatpush.msra.mxu0 %v816
  %850 = vmatpush.msra.mxu0 %v813
  %851 = vmatpush.msra.mxu0 %v810
  %852 = vmatpush.msra.mxu0 %v807
  %853 = vmatpush.msra.mxu0 %v804
  %854 = vmatpush.msra.mxu0 %v801
  %855 = vmatpush.msra.mxu0 %v798
  %856 = vmatpush.msra.mxu0 %v795
  %857 = vmatpush.msra.mxu0 %v792
  %858 = vmatpush.msra.mxu0 %v789
  %859 = vmatpush.msra.mxu0 %v786
  %860 = vmatpush.msra.mxu0 %v783
  %861 = vmatpush.msra.mxu0 %v780
  %862 = vmatpush.msra.mxu0 %v777
  %863 = vmatpush.msra.mxu0 %v774
  %864 = vmatpush.msra.mxu0 %v771
  %865 = vmatmul.f32.gmra.mxu0 %v768
  %v866 = vpop.f32.mrf.mxu0
  %v867 = vadd.f32 %v821, %v866
  %868 = vmatmul.f32.gmra.mxu0 %v769
  %v869 = vpop.f32.mrf.mxu0
  %v870 = vadd.f32 %v821, %v869
  %871 = vdwg.mxu0
  %872 = vmatpush.msra.mxu0 %v817
  %873 = vmatpush.msra.mxu0 %v814
  %874 = vmatpush.msra.mxu0 %v811
  %875 = vmatpush.msra.mxu0 %v808
  %876 = vmatpush.msra.mxu0 %v805
  %877 = vmatpush.msra.mxu0 %v802
  %878 = vmatpush.msra.mxu0 %v799
  %879 = vmatpush.msra.mxu0 %v796
  %880 = vmatpush.msra.mxu0 %v793
  %881 = vmatpush.msra.mxu0 %v790
  %882 = vmatpush.msra.mxu0 %v787
  %883 = vmatpush.msra.mxu0 %v784
  %884 = vmatpush.msra.mxu0 %v781
  %885 = vmatpush.msra.mxu0 %v778
  %886 = vmatpush.msra.mxu0 %v775
  %887 = vmatpush.msra.mxu0 %v772
  %888 = vmatmul.f32.gmra.mxu0 %v768
  %v889 = vpop.f32.mrf.mxu0
  %v890 = vadd.f32 %v822, %v889
  %891 = vmatmul.f32.gmra.mxu0 %v769
  %v892 = vpop.f32.mrf.mxu0
  %v893 = vadd.f32 %v822, %v892
  %894 = vdwg.mxu0
  %s895 = scalar_lea.vmem %s9, 384
  %v896 = vld [vmem:[%s895] sm:$0xff]
  %v897 = vld [vmem:[%s895 + $0x8] sm:$0xff]
  %v898 = vld [vmem:[%s895 + $0x10] sm:$0xff]
  %v899 = vld [vmem:[%s895 + $0x18] sm:$0xff]
  %v900 = vld [vmem:[%s895 + $0x20] sm:$0xff]
  %v901 = vld [vmem:[%s895 + $0x28] sm:$0xff]
  %v902 = vld [vmem:[%s895 + $0x30] sm:$0xff]
  %v903 = vld [vmem:[%s895 + $0x38] sm:$0xff]
  %v904 = vld [vmem:[%s895 + $0x40] sm:$0xff]
  %v905 = vld [vmem:[%s895 + $0x48] sm:$0xff]
  %v906 = vld [vmem:[%s895 + $0x50] sm:$0xff]
  %v907 = vld [vmem:[%s895 + $0x58] sm:$0xff]
  %v908 = vld [vmem:[%s895 + $0x60] sm:$0xff]
  %v909 = vld [vmem:[%s895 + $0x68] sm:$0xff]
  %v910 = vld [vmem:[%s895 + $0x70] sm:$0xff]
  %v911 = vld [vmem:[%s895 + $0x78] sm:$0xff]
  %v912 = vld [vmem:[%s895 + $0x80] sm:$0xff]
  %v913 = vld [vmem:[%s895 + $0x88] sm:$0xff]
  %v914 = vld [vmem:[%s895 + $0x90] sm:$0xff]
  %v915 = vld [vmem:[%s895 + $0x98] sm:$0xff]
  %v916 = vld [vmem:[%s895 + $0xa0] sm:$0xff]
  %v917 = vld [vmem:[%s895 + $0xa8] sm:$0xff]
  %v918 = vld [vmem:[%s895 + $0xb0] sm:$0xff]
  %v919 = vld [vmem:[%s895 + $0xb8] sm:$0xff]
  %v920 = vld [vmem:[%s895 + $0xc0] sm:$0xff]
  %v921 = vld [vmem:[%s895 + $0xc8] sm:$0xff]
  %v922 = vld [vmem:[%s895 + $0xd0] sm:$0xff]
  %v923 = vld [vmem:[%s895 + $0xd8] sm:$0xff]
  %v924 = vld [vmem:[%s895 + $0xe0] sm:$0xff]
  %v925 = vld [vmem:[%s895 + $0xe8] sm:$0xff]
  %v926 = vld [vmem:[%s895 + $0xf0] sm:$0xff]
  %v927 = vld [vmem:[%s895 + $0xf8] sm:$0xff]
  %v928 = vld [vmem:[%s895 + $0x100] sm:$0xff]
  %v929 = vld [vmem:[%s895 + $0x108] sm:$0xff]
  %v930 = vld [vmem:[%s895 + $0x110] sm:$0xff]
  %v931 = vld [vmem:[%s895 + $0x118] sm:$0xff]
  %v932 = vld [vmem:[%s895 + $0x120] sm:$0xff]
  %v933 = vld [vmem:[%s895 + $0x128] sm:$0xff]
  %v934 = vld [vmem:[%s895 + $0x130] sm:$0xff]
  %v935 = vld [vmem:[%s895 + $0x138] sm:$0xff]
  %v936 = vld [vmem:[%s895 + $0x140] sm:$0xff]
  %v937 = vld [vmem:[%s895 + $0x148] sm:$0xff]
  %v938 = vld [vmem:[%s895 + $0x150] sm:$0xff]
  %v939 = vld [vmem:[%s895 + $0x158] sm:$0xff]
  %v940 = vld [vmem:[%s895 + $0x160] sm:$0xff]
  %v941 = vld [vmem:[%s895 + $0x168] sm:$0xff]
  %v942 = vld [vmem:[%s895 + $0x170] sm:$0xff]
  %v943 = vld [vmem:[%s895 + $0x178] sm:$0xff]
  %944 = vmatpush.msra.mxu0 %v941
  %945 = vmatpush.msra.mxu0 %v938
  %946 = vmatpush.msra.mxu0 %v935
  %947 = vmatpush.msra.mxu0 %v932
  %948 = vmatpush.msra.mxu0 %v929
  %949 = vmatpush.msra.mxu0 %v926
  %950 = vmatpush.msra.mxu0 %v923
  %951 = vmatpush.msra.mxu0 %v920
  %952 = vmatpush.msra.mxu0 %v917
  %953 = vmatpush.msra.mxu0 %v914
  %954 = vmatpush.msra.mxu0 %v911
  %955 = vmatpush.msra.mxu0 %v908
  %956 = vmatpush.msra.mxu0 %v905
  %957 = vmatpush.msra.mxu0 %v902
  %958 = vmatpush.msra.mxu0 %v899
  %959 = vmatpush.msra.mxu0 %v896
  %960 = vmatmul.f32.gmra.mxu0 %v768
  %v961 = vpop.f32.mrf.mxu0
  %v962 = vadd.f32 %v820, %v961
  %963 = vmatmul.f32.gmra.mxu0 %v769
  %v964 = vpop.f32.mrf.mxu0
  %v965 = vadd.f32 %v820, %v964
  %966 = vdwg.mxu0
  %967 = vmatpush.msra.mxu0 %v942
  %968 = vmatpush.msra.mxu0 %v939
  %969 = vmatpush.msra.mxu0 %v936
  %970 = vmatpush.msra.mxu0 %v933
  %971 = vmatpush.msra.mxu0 %v930
  %972 = vmatpush.msra.mxu0 %v927
  %973 = vmatpush.msra.mxu0 %v924
  %974 = vmatpush.msra.mxu0 %v921
  %975 = vmatpush.msra.mxu0 %v918
  %976 = vmatpush.msra.mxu0 %v915
  %977 = vmatpush.msra.mxu0 %v912
  %978 = vmatpush.msra.mxu0 %v909
  %979 = vmatpush.msra.mxu0 %v906
  %980 = vmatpush.msra.mxu0 %v903
  %981 = vmatpush.msra.mxu0 %v900
  %982 = vmatpush.msra.mxu0 %v897
  %983 = vmatmul.f32.gmra.mxu0 %v768
  %v984 = vpop.f32.mrf.mxu0
  %v985 = vadd.f32 %v821, %v984
  %986 = vmatmul.f32.gmra.mxu0 %v769
  %v987 = vpop.f32.mrf.mxu0
  %v988 = vadd.f32 %v821, %v987
  %989 = vdwg.mxu0
  %990 = vmatpush.msra.mxu0 %v943
  %991 = vmatpush.msra.mxu0 %v940
  %992 = vmatpush.msra.mxu0 %v937
  %993 = vmatpush.msra.mxu0 %v934
  %994 = vmatpush.msra.mxu0 %v931
  %995 = vmatpush.msra.mxu0 %v928
  %996 = vmatpush.msra.mxu0 %v925
  %997 = vmatpush.msra.mxu0 %v922
  %998 = vmatpush.msra.mxu0 %v919
  %999 = vmatpush.msra.mxu0 %v916
  %1000 = vmatpush.msra.mxu0 %v913
  %1001 = vmatpush.msra.mxu0 %v910
  %1002 = vmatpush.msra.mxu0 %v907
  %1003 = vmatpush.msra.mxu0 %v904
  %1004 = vmatpush.msra.mxu0 %v901
  %1005 = vmatpush.msra.mxu0 %v898
  %1006 = vmatmul.f32.gmra.mxu0 %v768
  %v1007 = vpop.f32.mrf.mxu0
  %v1008 = vadd.f32 %v822, %v1007
  %1009 = vmatmul.f32.gmra.mxu0 %v769
  %v1010 = vpop.f32.mrf.mxu0
  %v1011 = vadd.f32 %v822, %v1010
  %1012 = vdwg.mxu0
  %v1013 = vlaneseq
  %vm1014 = vcmp.ge.s32.totalorder %v1013, 0
  %vm1015 = vcmp.lt.s32.totalorder %v1013, 288
  %vm1016 = vmand %vm1014, %vm1015
  %1017 = vst.msk [vmem:[#allocation3] ss:$8 sm:$0x7] %vm1016, 0.0
  %1018 = vst.msk [vmem:[#allocation3] ss:$8 sm:$0x0] %vm1016, 0.0
  %s1019 = scalar_lea.vmem [#allocation3], 72
  %1020 = vst.msk [vmem:[%s1019] ss:$8 sm:$0x7] %vm1016, 0.0
  %1021 = vst.msk [vmem:[%s1019] ss:$8 sm:$0x0] %vm1016, 0.0
  %s1022 = scalar_lea.vmem [#allocation3], 49
  %1023 = vst.msk [vmem:[%s1022] ss:$8 sm:$0x7] %vm1016, 0.0
  %1024 = vst.msk [vmem:[%s1022] ss:$8 sm:$0x0] %vm1016, 0.0
  %s1025 = scalar_lea.vmem [#allocation3], 121
  %1026 = vst.msk [vmem:[%s1025] ss:$8 sm:$0x7] %vm1016, 0.0
  %1027 = vst.msk [vmem:[%s1025] ss:$8 sm:$0x0] %vm1016, 0.0
  %v1034 = vrot.slane %v867, 7
  %v1035 = vrot.slane %v890, 6
  %v1036 = vrot.slane %v870, 7
  %v1037 = vrot.slane %v893, 6
  %vm1038 = vcmask 1040384
  %v1039 = vsel %vm1038, %v844, %v1034
  %v1040 = vsel %vm101, %v1039, %v1035
  %v1041 = vsel %vm1038, %v847, %v1036
  %v1042 = vsel %vm101, %v1041, %v1037
  %s1045 = scalar_lea.vmem [#allocation3], 1
  %1046 = vst.msk [vmem:[%s1045] ss:$8 sm:$0x7] %vm1016, %v1040
  %1047 = vst.msk [vmem:[%s1045] ss:$8 sm:$0x0] %vm1016, %v1040
  %s1048 = scalar_lea.vmem [#allocation3], 73
  %1049 = vst.msk [vmem:[%s1048] ss:$8 sm:$0x7] %vm1016, %v1042
  %1050 = vst.msk [vmem:[%s1048] ss:$8 sm:$0x0] %vm1016, %v1042
  %v1057 = vrot.slane %v985, 7
  %v1058 = vrot.slane %v1008, 6
  %v1059 = vrot.slane %v988, 7
  %v1060 = vrot.slane %v1011, 6
  %v1061 = vsel %vm1038, %v962, %v1057
  %v1062 = vsel %vm101, %v1061, %v1058
  %v1063 = vsel %vm1038, %v965, %v1059
  %v1064 = vsel %vm101, %v1063, %v1060
  %s1067 = scalar_lea.vmem [#allocation3], 2
  %1068 = vst.msk [vmem:[%s1067] ss:$8 sm:$0x7] %vm1016, %v1062
  %1069 = vst.msk [vmem:[%s1067] ss:$8 sm:$0x0] %vm1016, %v1062
  %s1070 = scalar_lea.vmem [#allocation3], 74
  %1071 = vst.msk [vmem:[%s1070] ss:$8 sm:$0x7] %vm1016, %v1064
  %1072 = vst.msk [vmem:[%s1070] ss:$8 sm:$0x0] %vm1016, %v1064
  %1073 = vst [vmem:[#allocation1] sm:$0xff] %v844
  %1074 = vst [vmem:[#allocation1 + $0x9] sm:$0xff] %v867
  %1075 = vst [vmem:[#allocation1 + $0x12] sm:$0xff] %v890
  %s1076 = scalar_lea.vmem [#allocation1], 1
  %v1077 = vld [vmem:[%s1076] ss:$9 sm:$0xff]
  %1078 = vst [vmem:[#allocation1] sm:$0xff] %v847
  %1079 = vst [vmem:[#allocation1 + $0x9] sm:$0xff] %v870
  %1080 = vst [vmem:[#allocation1 + $0x12] sm:$0xff] %v893
  %v1081 = vld [vmem:[%s1076] ss:$9 sm:$0xff]
  %s1084 = scalar_lea.vmem [#allocation3], 3
  %1085 = vst.msk [vmem:[%s1084] ss:$8 sm:$0x7] %vm1016, %v1077
  %1086 = vst.msk [vmem:[%s1084] ss:$8 sm:$0x0] %vm1016, %v1077
  %s1087 = scalar_lea.vmem [#allocation3], 75
  %1088 = vst.msk [vmem:[%s1087] ss:$8 sm:$0x7] %vm1016, %v1081
  %1089 = vst.msk [vmem:[%s1087] ss:$8 sm:$0x0] %vm1016, %v1081
  %1090 = vst [vmem:[#allocation1] sm:$0xff] %v962
  %1091 = vst [vmem:[#allocation1 + $0x9] sm:$0xff] %v985
  %1092 = vst [vmem:[#allocation1 + $0x12] sm:$0xff] %v1008
  %s1093 = scalar_lea.vmem [#allocation1], 1
  %v1094 = vld [vmem:[%s1093] ss:$9 sm:$0xff]
  %1095 = vst [vmem:[#allocation1] sm:$0xff] %v965
  %1096 = vst [vmem:[#allocation1 + $0x9] sm:$0xff] %v988
  %1097 = vst [vmem:[#allocation1 + $0x12] sm:$0xff] %v1011
  %v1098 = vld [vmem:[%s1093] ss:$9 sm:$0xff]
  %s1101 = scalar_lea.vmem [#allocation3], 4
  %1102 = vst.msk [vmem:[%s1101] ss:$8 sm:$0x7] %vm1016, %v1094
  %1103 = vst.msk [vmem:[%s1101] ss:$8 sm:$0x0] %vm1016, %v1094
  %s1104 = scalar_lea.vmem [#allocation3], 76
  %1105 = vst.msk [vmem:[%s1104] ss:$8 sm:$0x7] %vm1016, %v1098
  %1106 = vst.msk [vmem:[%s1104] ss:$8 sm:$0x0] %vm1016, %v1098
  %1107 = vst [vmem:[#allocation1] sm:$0xff] %v844
  %1108 = vst [vmem:[#allocation1 + $0x9] sm:$0xff] %v867
  %1109 = vst [vmem:[#allocation1 + $0x12] sm:$0xff] %v890
  %s1110 = scalar_lea.vmem [#allocation1], 2
  %v1111 = vld [vmem:[%s1110] ss:$9 sm:$0xff]
  %1112 = vst [vmem:[#allocation1] sm:$0xff] %v847
  %1113 = vst [vmem:[#allocation1 + $0x9] sm:$0xff] %v870
  %1114 = vst [vmem:[#allocation1 + $0x12] sm:$0xff] %v893
  %v1115 = vld [vmem:[%s1110] ss:$9 sm:$0xff]
  %s1118 = scalar_lea.vmem [#allocation3], 5
  %1119 = vst.msk [vmem:[%s1118] ss:$8 sm:$0x7] %vm1016, %v1111
  %1120 = vst.msk [vmem:[%s1118] ss:$8 sm:$0x0] %vm1016, %v1111
  %s1121 = scalar_lea.vmem [#allocation3], 77
  %1122 = vst.msk [vmem:[%s1121] ss:$8 sm:$0x7] %vm1016, %v1115
  %1123 = vst.msk [vmem:[%s1121] ss:$8 sm:$0x0] %vm1016, %v1115
  %1124 = vst [vmem:[#allocation1] sm:$0xff] %v962
  %1125 = vst [vmem:[#allocation1 + $0x9] sm:$0xff] %v985
  %1126 = vst [vmem:[#allocation1 + $0x12] sm:$0xff] %v1008
  %s1127 = scalar_lea.vmem [#allocation1], 2
  %v1128 = vld [vmem:[%s1127] ss:$9 sm:$0xff]
  %1129 = vst [vmem:[#allocation1] sm:$0xff] %v965
  %1130 = vst [vmem:[#allocation1 + $0x9] sm:$0xff] %v988
  %1131 = vst [vmem:[#allocation1 + $0x12] sm:$0xff] %v1011
  %v1132 = vld [vmem:[%s1127] ss:$9 sm:$0xff]
  %s1135 = scalar_lea.vmem [#allocation3], 6
  %1136 = vst.msk [vmem:[%s1135] ss:$8 sm:$0x7] %vm1016, %v1128
  %1137 = vst.msk [vmem:[%s1135] ss:$8 sm:$0x0] %vm1016, %v1128
  %s1138 = scalar_lea.vmem [#allocation3], 78
  %1139 = vst.msk [vmem:[%s1138] ss:$8 sm:$0x7] %vm1016, %v1132
  %1140 = vst.msk [vmem:[%s1138] ss:$8 sm:$0x0] %vm1016, %v1132
  %1141 = vst [vmem:[#allocation1] sm:$0xff] %v844
  %1142 = vst [vmem:[#allocation1 + $0x9] sm:$0xff] %v867
  %1143 = vst [vmem:[#allocation1 + $0x12] sm:$0xff] %v890
  %s1144 = scalar_lea.vmem [#allocation1], 3
  %v1145 = vld [vmem:[%s1144] ss:$9 sm:$0xff]
  %1146 = vst [vmem:[#allocation1] sm:$0xff] %v847
  %1147 = vst [vmem:[#allocation1 + $0x9] sm:$0xff] %v870
  %1148 = vst [vmem:[#allocation1 + $0x12] sm:$0xff] %v893
  %v1149 = vld [vmem:[%s1144] ss:$9 sm:$0xff]
  %s1152 = scalar_lea.vmem [#allocation3], 7
  %1153 = vst.msk [vmem:[%s1152] ss:$8 sm:$0x7] %vm1016, %v1145
  %1154 = vst.msk [vmem:[%s1152] ss:$8 sm:$0x0] %vm1016, %v1145
  %s1155 = scalar_lea.vmem [#allocation3], 79
  %1156 = vst.msk [vmem:[%s1155] ss:$8 sm:$0x7] %vm1016, %v1149
  %1157 = vst.msk [vmem:[%s1155] ss:$8 sm:$0x0] %vm1016, %v1149
  %1158 = vst [vmem:[#allocation1] sm:$0xff] %v962
  %1159 = vst [vmem:[#allocation1 + $0x9] sm:$0xff] %v985
  %1160 = vst [vmem:[#allocation1 + $0x12] sm:$0xff] %v1008
  %s1161 = scalar_lea.vmem [#allocation1], 3
  %v1162 = vld [vmem:[%s1161] ss:$9 sm:$0xff]
  %1163 = vst [vmem:[#allocation1] sm:$0xff] %v965
  %1164 = vst [vmem:[#allocation1 + $0x9] sm:$0xff] %v988
  %1165 = vst [vmem:[#allocation1 + $0x12] sm:$0xff] %v1011
  %v1166 = vld [vmem:[%s1161] ss:$9 sm:$0xff]
  %s1169 = scalar_lea.vmem [#allocation3], 24
  %1170 = vst.msk [vmem:[%s1169] ss:$8 sm:$0x7] %vm1016, %v1162
  %1171 = vst.msk [vmem:[%s1169] ss:$8 sm:$0x0] %vm1016, %v1162
  %s1172 = scalar_lea.vmem [#allocation3], 96
  %1173 = vst.msk [vmem:[%s1172] ss:$8 sm:$0x7] %vm1016, %v1166
  %1174 = vst.msk [vmem:[%s1172] ss:$8 sm:$0x0] %vm1016, %v1166
  %1175 = vst [vmem:[#allocation1] sm:$0xff] %v844
  %1176 = vst [vmem:[#allocation1 + $0x9] sm:$0xff] %v867
  %1177 = vst [vmem:[#allocation1 + $0x12] sm:$0xff] %v890
  %s1178 = scalar_lea.vmem [#allocation1], 4
  %v1179 = vld [vmem:[%s1178] ss:$9 sm:$0xff]
  %1180 = vst [vmem:[#allocation1] sm:$0xff] %v847
  %1181 = vst [vmem:[#allocation1 + $0x9] sm:$0xff] %v870
  %1182 = vst [vmem:[#allocation1 + $0x12] sm:$0xff] %v893
  %v1183 = vld [vmem:[%s1178] ss:$9 sm:$0xff]
  %s1186 = scalar_lea.vmem [#allocation3], 25
  %1187 = vst.msk [vmem:[%s1186] ss:$8 sm:$0x7] %vm1016, %v1179
  %1188 = vst.msk [vmem:[%s1186] ss:$8 sm:$0x0] %vm1016, %v1179
  %s1189 = scalar_lea.vmem [#allocation3], 97
  %1190 = vst.msk [vmem:[%s1189] ss:$8 sm:$0x7] %vm1016, %v1183
  %1191 = vst.msk [vmem:[%s1189] ss:$8 sm:$0x0] %vm1016, %v1183
  %1192 = vst [vmem:[#allocation1] sm:$0xff] %v962
  %1193 = vst [vmem:[#allocation1 + $0x9] sm:$0xff] %v985
  %1194 = vst [vmem:[#allocation1 + $0x12] sm:$0xff] %v1008
  %s1195 = scalar_lea.vmem [#allocation1], 4
  %v1196 = vld [vmem:[%s1195] ss:$9 sm:$0xff]
  %1197 = vst [vmem:[#allocation1] sm:$0xff] %v965
  %1198 = vst [vmem:[#allocation1 + $0x9] sm:$0xff] %v988
  %1199 = vst [vmem:[#allocation1 + $0x12] sm:$0xff] %v1011
  %v1200 = vld [vmem:[%s1195] ss:$9 sm:$0xff]
  %s1203 = scalar_lea.vmem [#allocation3], 26
  %1204 = vst.msk [vmem:[%s1203] ss:$8 sm:$0x7] %vm1016, %v1196
  %1205 = vst.msk [vmem:[%s1203] ss:$8 sm:$0x0] %vm1016, %v1196
  %s1206 = scalar_lea.vmem [#allocation3], 98
  %1207 = vst.msk [vmem:[%s1206] ss:$8 sm:$0x7] %vm1016, %v1200
  %1208 = vst.msk [vmem:[%s1206] ss:$8 sm:$0x0] %vm1016, %v1200
  %1209 = vst [vmem:[#allocation1] sm:$0xff] %v844
  %1210 = vst [vmem:[#allocation1 + $0x9] sm:$0xff] %v867
  %1211 = vst [vmem:[#allocation1 + $0x12] sm:$0xff] %v890
  %s1212 = scalar_lea.vmem [#allocation1], 5
  %v1213 = vld [vmem:[%s1212] ss:$9 sm:$0xff]
  %1214 = vst [vmem:[#allocation1] sm:$0xff] %v847
  %1215 = vst [vmem:[#allocation1 + $0x9] sm:$0xff] %v870
  %1216 = vst [vmem:[#allocation1 + $0x12] sm:$0xff] %v893
  %v1217 = vld [vmem:[%s1212] ss:$9 sm:$0xff]
  %s1220 = scalar_lea.vmem [#allocation3], 27
  %1221 = vst.msk [vmem:[%s1220] ss:$8 sm:$0x7] %vm1016, %v1213
  %1222 = vst.msk [vmem:[%s1220] ss:$8 sm:$0x0] %vm1016, %v1213
  %s1223 = scalar_lea.vmem [#allocation3], 99
  %1224 = vst.msk [vmem:[%s1223] ss:$8 sm:$0x7] %vm1016, %v1217
  %1225 = vst.msk [vmem:[%s1223] ss:$8 sm:$0x0] %vm1016, %v1217
  %1226 = vst [vmem:[#allocation1] sm:$0xff] %v962
  %1227 = vst [vmem:[#allocation1 + $0x9] sm:$0xff] %v985
  %1228 = vst [vmem:[#allocation1 + $0x12] sm:$0xff] %v1008
  %s1229 = scalar_lea.vmem [#allocation1], 5
  %v1230 = vld [vmem:[%s1229] ss:$9 sm:$0xff]
  %1231 = vst [vmem:[#allocation1] sm:$0xff] %v965
  %1232 = vst [vmem:[#allocation1 + $0x9] sm:$0xff] %v988
  %1233 = vst [vmem:[#allocation1 + $0x12] sm:$0xff] %v1011
  %v1234 = vld [vmem:[%s1229] ss:$9 sm:$0xff]
  %s1237 = scalar_lea.vmem [#allocation3], 28
  %1238 = vst.msk [vmem:[%s1237] ss:$8 sm:$0x7] %vm1016, %v1230
  %1239 = vst.msk [vmem:[%s1237] ss:$8 sm:$0x0] %vm1016, %v1230
  %s1240 = scalar_lea.vmem [#allocation3], 100
  %1241 = vst.msk [vmem:[%s1240] ss:$8 sm:$0x7] %vm1016, %v1234
  %1242 = vst.msk [vmem:[%s1240] ss:$8 sm:$0x0] %vm1016, %v1234
  %1243 = vst [vmem:[#allocation1] sm:$0xff] %v844
  %1244 = vst [vmem:[#allocation1 + $0x9] sm:$0xff] %v867
  %1245 = vst [vmem:[#allocation1 + $0x12] sm:$0xff] %v890
  %s1246 = scalar_lea.vmem [#allocation1], 6
  %v1247 = vld [vmem:[%s1246] ss:$9 sm:$0xff]
  %1248 = vst [vmem:[#allocation1] sm:$0xff] %v847
  %1249 = vst [vmem:[#allocation1 + $0x9] sm:$0xff] %v870
  %1250 = vst [vmem:[#allocation1 + $0x12] sm:$0xff] %v893
  %v1251 = vld [vmem:[%s1246] ss:$9 sm:$0xff]
  %s1254 = scalar_lea.vmem [#allocation3], 29
  %1255 = vst.msk [vmem:[%s1254] ss:$8 sm:$0x7] %vm1016, %v1247
  %1256 = vst.msk [vmem:[%s1254] ss:$8 sm:$0x0] %vm1016, %v1247
  %s1257 = scalar_lea.vmem [#allocation3], 101
  %1258 = vst.msk [vmem:[%s1257] ss:$8 sm:$0x7] %vm1016, %v1251
  %1259 = vst.msk [vmem:[%s1257] ss:$8 sm:$0x0] %vm1016, %v1251
  %1260 = vst [vmem:[#allocation1] sm:$0xff] %v962
  %1261 = vst [vmem:[#allocation1 + $0x9] sm:$0xff] %v985
  %1262 = vst [vmem:[#allocation1 + $0x12] sm:$0xff] %v1008
  %s1263 = scalar_lea.vmem [#allocation1], 6
  %v1264 = vld [vmem:[%s1263] ss:$9 sm:$0xff]
  %1265 = vst [vmem:[#allocation1] sm:$0xff] %v965
  %1266 = vst [vmem:[#allocation1 + $0x9] sm:$0xff] %v988
  %1267 = vst [vmem:[#allocation1 + $0x12] sm:$0xff] %v1011
  %v1268 = vld [vmem:[%s1263] ss:$9 sm:$0xff]
  %s1271 = scalar_lea.vmem [#allocation3], 30
  %1272 = vst.msk [vmem:[%s1271] ss:$8 sm:$0x7] %vm1016, %v1264
  %1273 = vst.msk [vmem:[%s1271] ss:$8 sm:$0x0] %vm1016, %v1264
  %s1274 = scalar_lea.vmem [#allocation3], 102
  %1275 = vst.msk [vmem:[%s1274] ss:$8 sm:$0x7] %vm1016, %v1268
  %1276 = vst.msk [vmem:[%s1274] ss:$8 sm:$0x0] %vm1016, %v1268
  %1277 = vst [vmem:[#allocation1] sm:$0xff] %v844
  %1278 = vst [vmem:[#allocation1 + $0x9] sm:$0xff] %v867
  %1279 = vst [vmem:[#allocation1 + $0x12] sm:$0xff] %v890
  %s1280 = scalar_lea.vmem [#allocation1], 7
  %v1281 = vld [vmem:[%s1280] ss:$9 sm:$0xff]
  %1282 = vst [vmem:[#allocation1] sm:$0xff] %v847
  %1283 = vst [vmem:[#allocation1 + $0x9] sm:$0xff] %v870
  %1284 = vst [vmem:[#allocation1 + $0x12] sm:$0xff] %v893
  %v1285 = vld [vmem:[%s1280] ss:$9 sm:$0xff]
  %s1288 = scalar_lea.vmem [#allocation3], 31
  %1289 = vst.msk [vmem:[%s1288] ss:$8 sm:$0x7] %vm1016, %v1281
  %1290 = vst.msk [vmem:[%s1288] ss:$8 sm:$0x0] %vm1016, %v1281
  %s1291 = scalar_lea.vmem [#allocation3], 103
  %1292 = vst.msk [vmem:[%s1291] ss:$8 sm:$0x7] %vm1016, %v1285
  %1293 = vst.msk [vmem:[%s1291] ss:$8 sm:$0x0] %vm1016, %v1285
  %1294 = vst [vmem:[#allocation1] sm:$0xff] %v962
  %1295 = vst [vmem:[#allocation1 + $0x9] sm:$0xff] %v985
  %1296 = vst [vmem:[#allocation1 + $0x12] sm:$0xff] %v1008
  %s1297 = scalar_lea.vmem [#allocation1], 7
  %v1298 = vld [vmem:[%s1297] ss:$9 sm:$0xff]
  %1299 = vst [vmem:[#allocation1] sm:$0xff] %v965
  %1300 = vst [vmem:[#allocation1 + $0x9] sm:$0xff] %v988
  %1301 = vst [vmem:[#allocation1 + $0x12] sm:$0xff] %v1011
  %v1302 = vld [vmem:[%s1297] ss:$9 sm:$0xff]
  %s1305 = scalar_lea.vmem [#allocation3], 48
  %1306 = vst.msk [vmem:[%s1305] ss:$8 sm:$0x7] %vm1016, %v1298
  %1307 = vst.msk [vmem:[%s1305] ss:$8 sm:$0x0] %vm1016, %v1298
  %s1308 = scalar_lea.vmem [#allocation3], 120
  %1309 = vst.msk [vmem:[%s1308] ss:$8 sm:$0x7] %vm1016, %v1302
  %1310 = vst.msk [vmem:[%s1308] ss:$8 sm:$0x0] %vm1016, %v1302
  %v1311 = vld [vmem:[#allocation3] sm:$0xff]
  %v1312 = vld [vmem:[#allocation3 + $0x8] sm:$0xff]
  %v1313 = vld [vmem:[#allocation3 + $0x10] sm:$0xff]
  %v1314 = vld [vmem:[#allocation3 + $0x18] sm:$0xff]
  %v1315 = vld [vmem:[#allocation3 + $0x20] sm:$0xff]
  %v1316 = vld [vmem:[#allocation3 + $0x28] sm:$0xff]
  %v1317 = vld [vmem:[#allocation3 + $0x30] sm:$0x3]
  %v1318 = vld [vmem:[#allocation3 + $0x38] sm:$0x3]
  %v1319 = vld [vmem:[#allocation3 + $0x40] sm:$0x3]
  %v1320 = vld [vmem:[#allocation3 + $0x48] sm:$0xff]
  %v1321 = vld [vmem:[#allocation3 + $0x50] sm:$0xff]
  %v1322 = vld [vmem:[#allocation3 + $0x58] sm:$0xff]
  %v1323 = vld [vmem:[#allocation3 + $0x60] sm:$0xff]
  %v1324 = vld [vmem:[#allocation3 + $0x68] sm:$0xff]
  %v1325 = vld [vmem:[#allocation3 + $0x70] sm:$0xff]
  %v1326 = vld [vmem:[#allocation3 + $0x78] sm:$0x3]
  %v1327 = vld [vmem:[#allocation3 + $0x80] sm:$0x3]
  %v1328 = vld [vmem:[#allocation3 + $0x88] sm:$0x3]
  %v1329 = vld [vmem:[%s11] sm:$0xff]
  %v1330 = vld [vmem:[%s11 + $0x8] sm:$0xff]
  %v1331 = vld [vmem:[%s11 + $0x10] sm:$0xff]
  %v1332 = vld [vmem:[%s11 + $0x18] sm:$0xff]
  %v1333 = vld [vmem:[%s11 + $0x20] sm:$0xff]
  %v1334 = vld [vmem:[%s11 + $0x28] sm:$0xff]
  %v1335 = vld [vmem:[%s11 + $0x30] sm:$0xff]
  %v1336 = vld [vmem:[%s11 + $0x38] sm:$0xff]
  %v1337 = vld [vmem:[%s11 + $0x40] sm:$0xff]
  %v1338 = vld [vmem:[%s11 + $0x48] sm:$0xff]
  %v1339 = vld [vmem:[%s11 + $0x50] sm:$0xff]
  %v1340 = vld [vmem:[%s11 + $0x58] sm:$0xff]
  %v1341 = vld [vmem:[%s11 + $0x60] sm:$0xff]
  %v1342 = vld [vmem:[%s11 + $0x68] sm:$0xff]
  %v1343 = vld [vmem:[%s11 + $0x70] sm:$0xff]
  %v1344 = vld [vmem:[%s11 + $0x78] sm:$0xff]
  %v1345 = vld [vmem:[%s11 + $0x80] sm:$0xff]
  %v1346 = vld [vmem:[%s11 + $0x88] sm:$0xff]
  %v1347 = vld [vmem:[%s11 + $0x90] sm:$0xff]
  %v1348 = vld [vmem:[%s11 + $0x98] sm:$0xff]
  %v1349 = vld [vmem:[%s11 + $0xa0] sm:$0xff]
  %v1350 = vld [vmem:[%s11 + $0xa8] sm:$0xff]
  %v1351 = vld [vmem:[%s11 + $0xb0] sm:$0xff]
  %v1352 = vld [vmem:[%s11 + $0xb8] sm:$0xff]
  %v1353 = vld [vmem:[%s11 + $0xc0] sm:$0xff]
  %v1354 = vld [vmem:[%s11 + $0xc8] sm:$0xff]
  %v1355 = vld [vmem:[%s11 + $0xd0] sm:$0xff]
  %v1356 = vld [vmem:[%s11 + $0xd8] sm:$0xff]
  %v1357 = vld [vmem:[%s11 + $0xe0] sm:$0xff]
  %v1358 = vld [vmem:[%s11 + $0xe8] sm:$0xff]
  %v1359 = vld [vmem:[%s11 + $0xf0] sm:$0xff]
  %v1360 = vld [vmem:[%s11 + $0xf8] sm:$0xff]
  %v1361 = vld [vmem:[%s11 + $0x100] sm:$0xff]
  %v1362 = vld [vmem:[%s11 + $0x108] sm:$0xff]
  %v1363 = vld [vmem:[%s11 + $0x110] sm:$0xff]
  %v1364 = vld [vmem:[%s11 + $0x118] sm:$0xff]
  %v1365 = vld [vmem:[%s11 + $0x120] sm:$0xff]
  %v1366 = vld [vmem:[%s11 + $0x128] sm:$0xff]
  %v1367 = vld [vmem:[%s11 + $0x130] sm:$0xff]
  %v1368 = vld [vmem:[%s11 + $0x138] sm:$0xff]
  %v1369 = vld [vmem:[%s11 + $0x140] sm:$0xff]
  %v1370 = vld [vmem:[%s11 + $0x148] sm:$0xff]
  %v1371 = vld [vmem:[%s11 + $0x150] sm:$0xff]
  %v1372 = vld [vmem:[%s11 + $0x158] sm:$0xff]
  %v1373 = vld [vmem:[%s11 + $0x160] sm:$0xff]
  %v1374 = vld [vmem:[%s11 + $0x168] sm:$0xff]
  %v1375 = vld [vmem:[%s11 + $0x170] sm:$0xff]
  %v1376 = vld [vmem:[%s11 + $0x178] sm:$0xff]
  %v1377 = vld [vmem:[%s11 + $0x180] sm:$0xff]
  %v1378 = vld [vmem:[%s11 + $0x188] sm:$0xff]
  %v1379 = vld [vmem:[%s11 + $0x190] sm:$0xff]
  %v1380 = vld [vmem:[%s11 + $0x198] sm:$0xff]
  %v1381 = vld [vmem:[%s11 + $0x1a0] sm:$0xff]
  %v1382 = vld [vmem:[%s11 + $0x1a8] sm:$0xff]
  %v1383 = vld [vmem:[%s11 + $0x1b0] sm:$0xff]
  %v1384 = vld [vmem:[%s11 + $0x1b8] sm:$0xff]
  %v1385 = vld [vmem:[%s11 + $0x1c0] sm:$0xff]
  %v1386 = vld [vmem:[%s11 + $0x1c8] sm:$0xff]
  %v1387 = vld [vmem:[%s11 + $0x1d0] sm:$0xff]
  %v1388 = vld [vmem:[%s11 + $0x1d8] sm:$0xff]
  %v1389 = vld [vmem:[%s11 + $0x1e0] sm:$0xff]
  %v1390 = vld [vmem:[%s11 + $0x1e8] sm:$0xff]
  %v1391 = vld [vmem:[%s11 + $0x1f0] sm:$0xff]
  %v1392 = vld [vmem:[%s11 + $0x1f8] sm:$0xff]
  %v1393 = vld [vmem:[%s11 + $0x200] sm:$0xff]
  %v1394 = vld [vmem:[%s11 + $0x208] sm:$0xff]
  %v1395 = vld [vmem:[%s11 + $0x210] sm:$0xff]
  %v1396 = vld [vmem:[%s11 + $0x218] sm:$0xff]
  %v1397 = vld [vmem:[%s11 + $0x220] sm:$0xff]
  %v1398 = vld [vmem:[%s11 + $0x228] sm:$0xff]
  %v1399 = vld [vmem:[%s11 + $0x230] sm:$0xff]
  %v1400 = vld [vmem:[%s11 + $0x238] sm:$0xff]
  %v1419 = vrot.slane %v1311, 1
  %v1420 = vrot.slane %v1314, 1
  %v1421 = vsel %vm435, %v1419, %v1420
  %v1422 = vrot.slane %v1312, 1
  %v1423 = vrot.slane %v1315, 1
  %v1424 = vsel %vm435, %v1422, %v1423
  %v1425 = vrot.slane %v1313, 1
  %v1426 = vrot.slane %v1316, 1
  %v1427 = vsel %vm435, %v1425, %v1426
  %v1428 = vrot.slane %v1317, 1
  %v1429 = vsel %vm435, %v1420, %v1428
  %v1430 = vrot.slane %v1318, 1
  %v1431 = vsel %vm435, %v1423, %v1430
  %v1432 = vrot.slane %v1319, 1
  %v1433 = vsel %vm435, %v1426, %v1432
  %v1434 = vrot.slane %v1320, 1
  %v1435 = vrot.slane %v1323, 1
  %v1436 = vsel %vm435, %v1434, %v1435
  %v1437 = vrot.slane %v1321, 1
  %v1438 = vrot.slane %v1324, 1
  %v1439 = vsel %vm435, %v1437, %v1438
  %v1440 = vrot.slane %v1322, 1
  %v1441 = vrot.slane %v1325, 1
  %v1442 = vsel %vm435, %v1440, %v1441
  %v1443 = vrot.slane %v1326, 1
  %v1444 = vsel %vm435, %v1435, %v1443
  %v1445 = vrot.slane %v1327, 1
  %v1446 = vsel %vm435, %v1438, %v1445
  %v1447 = vrot.slane %v1328, 1
  %v1448 = vsel %vm435, %v1441, %v1447
  %s1457 = scalar_lea.vmem %s11, 576
  %v1458 = vld [vmem:[%s1457] sm:$0xff]
  %v1459 = vld [vmem:[%s1457 + $0x8] sm:$0xff]
  %v1460 = vld [vmem:[%s1457 + $0x10] sm:$0xff]
  %v1461 = vld [vmem:[%s1457 + $0x18] sm:$0xff]
  %v1462 = vld [vmem:[%s1457 + $0x20] sm:$0xff]
  %v1463 = vld [vmem:[%s1457 + $0x28] sm:$0xff]
  %v1464 = vld [vmem:[%s1457 + $0x30] sm:$0xff]
  %v1465 = vld [vmem:[%s1457 + $0x38] sm:$0xff]
  %v1466 = vld [vmem:[%s1457 + $0x40] sm:$0xff]
  %v1467 = vld [vmem:[%s1457 + $0x48] sm:$0xff]
  %v1468 = vld [vmem:[%s1457 + $0x50] sm:$0xff]
  %v1469 = vld [vmem:[%s1457 + $0x58] sm:$0xff]
  %v1470 = vld [vmem:[%s1457 + $0x60] sm:$0xff]
  %v1471 = vld [vmem:[%s1457 + $0x68] sm:$0xff]
  %v1472 = vld [vmem:[%s1457 + $0x70] sm:$0xff]
  %v1473 = vld [vmem:[%s1457 + $0x78] sm:$0xff]
  %v1474 = vld [vmem:[%s1457 + $0x80] sm:$0xff]
  %v1475 = vld [vmem:[%s1457 + $0x88] sm:$0xff]
  %v1476 = vld [vmem:[%s1457 + $0x90] sm:$0xff]
  %v1477 = vld [vmem:[%s1457 + $0x98] sm:$0xff]
  %v1478 = vld [vmem:[%s1457 + $0xa0] sm:$0xff]
  %v1479 = vld [vmem:[%s1457 + $0xa8] sm:$0xff]
  %v1480 = vld [vmem:[%s1457 + $0xb0] sm:$0xff]
  %v1481 = vld [vmem:[%s1457 + $0xb8] sm:$0xff]
  %v1482 = vld [vmem:[%s1457 + $0xc0] sm:$0xff]
  %v1483 = vld [vmem:[%s1457 + $0xc8] sm:$0xff]
  %v1484 = vld [vmem:[%s1457 + $0xd0] sm:$0xff]
  %v1485 = vld [vmem:[%s1457 + $0xd8] sm:$0xff]
  %v1486 = vld [vmem:[%s1457 + $0xe0] sm:$0xff]
  %v1487 = vld [vmem:[%s1457 + $0xe8] sm:$0xff]
  %v1488 = vld [vmem:[%s1457 + $0xf0] sm:$0xff]
  %v1489 = vld [vmem:[%s1457 + $0xf8] sm:$0xff]
  %v1490 = vld [vmem:[%s1457 + $0x100] sm:$0xff]
  %v1491 = vld [vmem:[%s1457 + $0x108] sm:$0xff]
  %v1492 = vld [vmem:[%s1457 + $0x110] sm:$0xff]
  %v1493 = vld [vmem:[%s1457 + $0x118] sm:$0xff]
  %v1494 = vld [vmem:[%s1457 + $0x120] sm:$0xff]
  %v1495 = vld [vmem:[%s1457 + $0x128] sm:$0xff]
  %v1496 = vld [vmem:[%s1457 + $0x130] sm:$0xff]
  %v1497 = vld [vmem:[%s1457 + $0x138] sm:$0xff]
  %v1498 = vld [vmem:[%s1457 + $0x140] sm:$0xff]
  %v1499 = vld [vmem:[%s1457 + $0x148] sm:$0xff]
  %v1500 = vld [vmem:[%s1457 + $0x150] sm:$0xff]
  %v1501 = vld [vmem:[%s1457 + $0x158] sm:$0xff]
  %v1502 = vld [vmem:[%s1457 + $0x160] sm:$0xff]
  %v1503 = vld [vmem:[%s1457 + $0x168] sm:$0xff]
  %v1504 = vld [vmem:[%s1457 + $0x170] sm:$0xff]
  %v1505 = vld [vmem:[%s1457 + $0x178] sm:$0xff]
  %v1506 = vld [vmem:[%s1457 + $0x180] sm:$0xff]
  %v1507 = vld [vmem:[%s1457 + $0x188] sm:$0xff]
  %v1508 = vld [vmem:[%s1457 + $0x190] sm:$0xff]
  %v1509 = vld [vmem:[%s1457 + $0x198] sm:$0xff]
  %v1510 = vld [vmem:[%s1457 + $0x1a0] sm:$0xff]
  %v1511 = vld [vmem:[%s1457 + $0x1a8] sm:$0xff]
  %v1512 = vld [vmem:[%s1457 + $0x1b0] sm:$0xff]
  %v1513 = vld [vmem:[%s1457 + $0x1b8] sm:$0xff]
  %v1514 = vld [vmem:[%s1457 + $0x1c0] sm:$0xff]
  %v1515 = vld [vmem:[%s1457 + $0x1c8] sm:$0xff]
  %v1516 = vld [vmem:[%s1457 + $0x1d0] sm:$0xff]
  %v1517 = vld [vmem:[%s1457 + $0x1d8] sm:$0xff]
  %v1518 = vld [vmem:[%s1457 + $0x1e0] sm:$0xff]
  %v1519 = vld [vmem:[%s1457 + $0x1e8] sm:$0xff]
  %v1520 = vld [vmem:[%s1457 + $0x1f0] sm:$0xff]
  %v1521 = vld [vmem:[%s1457 + $0x1f8] sm:$0xff]
  %v1522 = vld [vmem:[%s1457 + $0x200] sm:$0xff]
  %v1523 = vld [vmem:[%s1457 + $0x208] sm:$0xff]
  %v1524 = vld [vmem:[%s1457 + $0x210] sm:$0xff]
  %v1525 = vld [vmem:[%s1457 + $0x218] sm:$0xff]
  %v1526 = vld [vmem:[%s1457 + $0x220] sm:$0xff]
  %v1527 = vld [vmem:[%s1457 + $0x228] sm:$0xff]
  %v1528 = vld [vmem:[%s1457 + $0x230] sm:$0xff]
  %v1529 = vld [vmem:[%s1457 + $0x238] sm:$0xff]
  %vm1530 = vcmask 261120
  %v1531 = vsel %vm1530, %v1427, 0
  %v1533 = vsel %vm1530, %v1433, 0
  %v1535 = vsel %vm1530, %v1442, 0
  %v1537 = vsel %vm1530, %v1448, 0
  %1539 = vmatpush.msra.mxu0 %v1488
  %1540 = vmatpush.msra.mxu0 %v1486
  %1541 = vmatpush.msra.mxu0 %v1484
  %1542 = vmatpush.msra.mxu0 %v1482
  %1543 = vmatpush.msra.mxu0 %v1480
  %1544 = vmatpush.msra.mxu0 %v1478
  %1545 = vmatpush.msra.mxu0 %v1476
  %1546 = vmatpush.msra.mxu0 %v1474
  %1547 = vmatpush.msra.mxu0 %v1472
  %1548 = vmatpush.msra.mxu0 %v1470
  %1549 = vmatpush.msra.mxu0 %v1468
  %1550 = vmatpush.msra.mxu0 %v1466
  %1551 = vmatpush.msra.mxu0 %v1464
  %1552 = vmatpush.msra.mxu0 %v1462
  %1553 = vmatpush.msra.mxu0 %v1460
  %1554 = vmatpush.msra.mxu0 %v1458
  %1555 = vmatmul.f32.gmra.mxu0 %v1421
  %v1556 = vpop.f32.mrf.mxu0
  %v1557 = vadd.f32 0.0, %v1556
  %1558 = vmatmul.f32.gmra.mxu0 %v1429
  %v1559 = vpop.f32.mrf.mxu0
  %v1560 = vadd.f32 0.0, %v1559
  %1561 = vmatmul.f32.gmra.mxu0 %v1436
  %v1562 = vpop.f32.mrf.mxu0
  %v1563 = vadd.f32 0.0, %v1562
  %1564 = vmatmul.f32.gmra.mxu0 %v1444
  %v1565 = vpop.f32.mrf.mxu0
  %v1566 = vadd.f32 0.0, %v1565
  %1567 = vdwg.mxu0
  %1568 = vmatpush.msra.mxu0 %v1520
  %1569 = vmatpush.msra.mxu0 %v1518
  %1570 = vmatpush.msra.mxu0 %v1516
  %1571 = vmatpush.msra.mxu0 %v1514
  %1572 = vmatpush.msra.mxu0 %v1512
  %1573 = vmatpush.msra.mxu0 %v1510
  %1574 = vmatpush.msra.mxu0 %v1508
  %1575 = vmatpush.msra.mxu0 %v1506
  %1576 = vmatpush.msra.mxu0 %v1504
  %1577 = vmatpush.msra.mxu0 %v1502
  %1578 = vmatpush.msra.mxu0 %v1500
  %1579 = vmatpush.msra.mxu0 %v1498
  %1580 = vmatpush.msra.mxu0 %v1496
  %1581 = vmatpush.msra.mxu0 %v1494
  %1582 = vmatpush.msra.mxu0 %v1492
  %1583 = vmatpush.msra.mxu0 %v1490
  %1584 = vmatmul.f32.gmra.mxu0 %v1424
  %v1585 = vpop.f32.mrf.mxu0
  %v1586 = vadd.f32 %v1557, %v1585
  %1587 = vmatmul.f32.gmra.mxu0 %v1431
  %v1588 = vpop.f32.mrf.mxu0
  %v1589 = vadd.f32 %v1560, %v1588
  %1590 = vmatmul.f32.gmra.mxu0 %v1439
  %v1591 = vpop.f32.mrf.mxu0
  %v1592 = vadd.f32 %v1563, %v1591
  %1593 = vmatmul.f32.gmra.mxu0 %v1446
  %v1594 = vpop.f32.mrf.mxu0
  %v1595 = vadd.f32 %v1566, %v1594
  %1596 = vdwg.mxu0
  %1597 = vmatpush.msra.mxu0 0.0
  %1598 = vmatpush.msra.mxu0 0.0
  %1599 = vmatpush.msra.mxu0 0.0
  %1600 = vmatpush.msra.mxu0 0.0
  %1601 = vmatpush.msra.mxu0 0.0
  %1602 = vmatpush.msra.mxu0 0.0
  %1603 = vmatpush.msra.mxu0 0.0
  %1604 = vmatpush.msra.mxu0 0.0
  %1605 = vmatpush.msra.mxu0 0.0
  %1606 = vmatpush.msra.mxu0 0.0
  %1607 = vmatpush.msra.mxu0 0.0
  %1608 = vmatpush.msra.mxu0 0.0
  %1609 = vmatpush.msra.mxu0 %v1528
  %1610 = vmatpush.msra.mxu0 %v1526
  %1611 = vmatpush.msra.mxu0 %v1524
  %1612 = vmatpush.msra.mxu0 %v1522
  %1613 = vmatmul.f32.gmra.mxu0 %v1531
  %v1614 = vpop.f32.mrf.mxu0
  %v1615 = vadd.f32 %v1586, %v1614
  %1616 = vmatmul.f32.gmra.mxu0 %v1533
  %v1617 = vpop.f32.mrf.mxu0
  %v1618 = vadd.f32 %v1589, %v1617
  %1619 = vmatmul.f32.gmra.mxu0 %v1535
  %v1620 = vpop.f32.mrf.mxu0
  %v1621 = vadd.f32 %v1592, %v1620
  %1622 = vmatmul.f32.gmra.mxu0 %v1537
  %v1623 = vpop.f32.mrf.mxu0
  %v1624 = vadd.f32 %v1595, %v1623
  %1625 = vdwg.mxu0
  %1626 = vmatpush.msra.mxu0 %v1489
  %1627 = vmatpush.msra.mxu0 %v1487
  %1628 = vmatpush.msra.mxu0 %v1485
  %1629 = vmatpush.msra.mxu0 %v1483
  %1630 = vmatpush.msra.mxu0 %v1481
  %1631 = vmatpush.msra.mxu0 %v1479
  %1632 = vmatpush.msra.mxu0 %v1477
  %1633 = vmatpush.msra.mxu0 %v1475
  %1634 = vmatpush.msra.mxu0 %v1473
  %1635 = vmatpush.msra.mxu0 %v1471
  %1636 = vmatpush.msra.mxu0 %v1469
  %1637 = vmatpush.msra.mxu0 %v1467
  %1638 = vmatpush.msra.mxu0 %v1465
  %1639 = vmatpush.msra.mxu0 %v1463
  %1640 = vmatpush.msra.mxu0 %v1461
  %1641 = vmatpush.msra.mxu0 %v1459
  %1642 = vmatmul.f32.gmra.mxu0 %v1421
  %v1643 = vpop.f32.mrf.mxu0
  %v1644 = vadd.f32 0.0, %v1643
  %1645 = vmatmul.f32.gmra.mxu0 %v1429
  %v1646 = vpop.f32.mrf.mxu0
  %v1647 = vadd.f32 0.0, %v1646
  %1648 = vmatmul.f32.gmra.mxu0 %v1436
  %v1649 = vpop.f32.mrf.mxu0
  %v1650 = vadd.f32 0.0, %v1649
  %1651 = vmatmul.f32.gmra.mxu0 %v1444
  %v1652 = vpop.f32.mrf.mxu0
  %v1653 = vadd.f32 0.0, %v1652
  %1654 = vdwg.mxu0
  %1655 = vmatpush.msra.mxu0 %v1521
  %1656 = vmatpush.msra.mxu0 %v1519
  %1657 = vmatpush.msra.mxu0 %v1517
  %1658 = vmatpush.msra.mxu0 %v1515
  %1659 = vmatpush.msra.mxu0 %v1513
  %1660 = vmatpush.msra.mxu0 %v1511
  %1661 = vmatpush.msra.mxu0 %v1509
  %1662 = vmatpush.msra.mxu0 %v1507
  %1663 = vmatpush.msra.mxu0 %v1505
  %1664 = vmatpush.msra.mxu0 %v1503
  %1665 = vmatpush.msra.mxu0 %v1501
  %1666 = vmatpush.msra.mxu0 %v1499
  %1667 = vmatpush.msra.mxu0 %v1497
  %1668 = vmatpush.msra.mxu0 %v1495
  %1669 = vmatpush.msra.mxu0 %v1493
  %1670 = vmatpush.msra.mxu0 %v1491
  %1671 = vmatmul.f32.gmra.mxu0 %v1424
  %v1672 = vpop.f32.mrf.mxu0
  %v1673 = vadd.f32 %v1644, %v1672
  %1674 = vmatmul.f32.gmra.mxu0 %v1431
  %v1675 = vpop.f32.mrf.mxu0
  %v1676 = vadd.f32 %v1647, %v1675
  %1677 = vmatmul.f32.gmra.mxu0 %v1439
  %v1678 = vpop.f32.mrf.mxu0
  %v1679 = vadd.f32 %v1650, %v1678
  %1680 = vmatmul.f32.gmra.mxu0 %v1446
  %v1681 = vpop.f32.mrf.mxu0
  %v1682 = vadd.f32 %v1653, %v1681
  %1683 = vdwg.mxu0
  %1684 = vmatpush.msra.mxu0 0.0
  %1685 = vmatpush.msra.mxu0 0.0
  %1686 = vmatpush.msra.mxu0 0.0
  %1687 = vmatpush.msra.mxu0 0.0
  %1688 = vmatpush.msra.mxu0 0.0
  %1689 = vmatpush.msra.mxu0 0.0
  %1690 = vmatpush.msra.mxu0 0.0
  %1691 = vmatpush.msra.mxu0 0.0
  %1692 = vmatpush.msra.mxu0 0.0
  %1693 = vmatpush.msra.mxu0 0.0
  %1694 = vmatpush.msra.mxu0 0.0
  %1695 = vmatpush.msra.mxu0 0.0
  %1696 = vmatpush.msra.mxu0 %v1529
  %1697 = vmatpush.msra.mxu0 %v1527
  %1698 = vmatpush.msra.mxu0 %v1525
  %1699 = vmatpush.msra.mxu0 %v1523
  %1700 = vmatmul.f32.gmra.mxu0 %v1531
  %v1701 = vpop.f32.mrf.mxu0
  %v1702 = vadd.f32 %v1673, %v1701
  %1703 = vmatmul.f32.gmra.mxu0 %v1533
  %v1704 = vpop.f32.mrf.mxu0
  %v1705 = vadd.f32 %v1676, %v1704
  %1706 = vmatmul.f32.gmra.mxu0 %v1535
  %v1707 = vpop.f32.mrf.mxu0
  %v1708 = vadd.f32 %v1679, %v1707
  %1709 = vmatmul.f32.gmra.mxu0 %v1537
  %v1710 = vpop.f32.mrf.mxu0
  %v1711 = vadd.f32 %v1682, %v1710
  %1712 = vdwg.mxu0
  %v1713 = vsel %vm1530, %v1313, 0
  %v1715 = vsel %vm1530, %v1316, 0
  %v1717 = vsel %vm1530, %v1322, 0
  %v1719 = vsel %vm1530, %v1325, 0
  %1721 = vmatpush.msra.mxu0 %v1359
  %1722 = vmatpush.msra.mxu0 %v1357
  %1723 = vmatpush.msra.mxu0 %v1355
  %1724 = vmatpush.msra.mxu0 %v1353
  %1725 = vmatpush.msra.mxu0 %v1351
  %1726 = vmatpush.msra.mxu0 %v1349
  %1727 = vmatpush.msra.mxu0 %v1347
  %1728 = vmatpush.msra.mxu0 %v1345
  %1729 = vmatpush.msra.mxu0 %v1343
  %1730 = vmatpush.msra.mxu0 %v1341
  %1731 = vmatpush.msra.mxu0 %v1339
  %1732 = vmatpush.msra.mxu0 %v1337
  %1733 = vmatpush.msra.mxu0 %v1335
  %1734 = vmatpush.msra.mxu0 %v1333
  %1735 = vmatpush.msra.mxu0 %v1331
  %1736 = vmatpush.msra.mxu0 %v1329
  %1737 = vmatmul.f32.gmra.mxu0 %v1311
  %v1738 = vpop.f32.mrf.mxu0
  %v1739 = vadd.f32 %v1615, %v1738
  %1740 = vmatmul.f32.gmra.mxu0 %v1314
  %v1741 = vpop.f32.mrf.mxu0
  %v1742 = vadd.f32 %v1618, %v1741
  %1743 = vmatmul.f32.gmra.mxu0 %v1320
  %v1744 = vpop.f32.mrf.mxu0
  %v1745 = vadd.f32 %v1621, %v1744
  %1746 = vmatmul.f32.gmra.mxu0 %v1323
  %v1747 = vpop.f32.mrf.mxu0
  %v1748 = vadd.f32 %v1624, %v1747
  %1749 = vdwg.mxu0
  %1750 = vmatpush.msra.mxu0 %v1391
  %1751 = vmatpush.msra.mxu0 %v1389
  %1752 = vmatpush.msra.mxu0 %v1387
  %1753 = vmatpush.msra.mxu0 %v1385
  %1754 = vmatpush.msra.mxu0 %v1383
  %1755 = vmatpush.msra.mxu0 %v1381
  %1756 = vmatpush.msra.mxu0 %v1379
  %1757 = vmatpush.msra.mxu0 %v1377
  %1758 = vmatpush.msra.mxu0 %v1375
  %1759 = vmatpush.msra.mxu0 %v1373
  %1760 = vmatpush.msra.mxu0 %v1371
  %1761 = vmatpush.msra.mxu0 %v1369
  %1762 = vmatpush.msra.mxu0 %v1367
  %1763 = vmatpush.msra.mxu0 %v1365
  %1764 = vmatpush.msra.mxu0 %v1363
  %1765 = vmatpush.msra.mxu0 %v1361
  %1766 = vmatmul.f32.gmra.mxu0 %v1312
  %v1767 = vpop.f32.mrf.mxu0
  %v1768 = vadd.f32 %v1739, %v1767
  %1769 = vmatmul.f32.gmra.mxu0 %v1315
  %v1770 = vpop.f32.mrf.mxu0
  %v1771 = vadd.f32 %v1742, %v1770
  %1772 = vmatmul.f32.gmra.mxu0 %v1321
  %v1773 = vpop.f32.mrf.mxu0
  %v1774 = vadd.f32 %v1745, %v1773
  %1775 = vmatmul.f32.gmra.mxu0 %v1324
  %v1776 = vpop.f32.mrf.mxu0
  %v1777 = vadd.f32 %v1748, %v1776
  %1778 = vdwg.mxu0
  %1779 = vmatpush.msra.mxu0 0.0
  %1780 = vmatpush.msra.mxu0 0.0
  %1781 = vmatpush.msra.mxu0 0.0
  %1782 = vmatpush.msra.mxu0 0.0
  %1783 = vmatpush.msra.mxu0 0.0
  %1784 = vmatpush.msra.mxu0 0.0
  %1785 = vmatpush.msra.mxu0 0.0
  %1786 = vmatpush.msra.mxu0 0.0
  %1787 = vmatpush.msra.mxu0 0.0
  %1788 = vmatpush.msra.mxu0 0.0
  %1789 = vmatpush.msra.mxu0 0.0
  %1790 = vmatpush.msra.mxu0 0.0
  %1791 = vmatpush.msra.mxu0 %v1399
  %1792 = vmatpush.msra.mxu0 %v1397
  %1793 = vmatpush.msra.mxu0 %v1395
  %1794 = vmatpush.msra.mxu0 %v1393
  %1795 = vmatmul.f32.gmra.mxu0 %v1713
  %v1796 = vpop.f32.mrf.mxu0
  %v1797 = vadd.f32 %v1768, %v1796
  %1798 = vmatmul.f32.gmra.mxu0 %v1715
  %v1799 = vpop.f32.mrf.mxu0
  %v1800 = vadd.f32 %v1771, %v1799
  %1801 = vmatmul.f32.gmra.mxu0 %v1717
  %v1802 = vpop.f32.mrf.mxu0
  %v1803 = vadd.f32 %v1774, %v1802
  %1804 = vmatmul.f32.gmra.mxu0 %v1719
  %v1805 = vpop.f32.mrf.mxu0
  %v1806 = vadd.f32 %v1777, %v1805
  %1807 = vdwg.mxu0
  %1808 = vmatpush.msra.mxu0 %v1360
  %1809 = vmatpush.msra.mxu0 %v1358
  %1810 = vmatpush.msra.mxu0 %v1356
  %1811 = vmatpush.msra.mxu0 %v1354
  %1812 = vmatpush.msra.mxu0 %v1352
  %1813 = vmatpush.msra.mxu0 %v1350
  %1814 = vmatpush.msra.mxu0 %v1348
  %1815 = vmatpush.msra.mxu0 %v1346
  %1816 = vmatpush.msra.mxu0 %v1344
  %1817 = vmatpush.msra.mxu0 %v1342
  %1818 = vmatpush.msra.mxu0 %v1340
  %1819 = vmatpush.msra.mxu0 %v1338
  %1820 = vmatpush.msra.mxu0 %v1336
  %1821 = vmatpush.msra.mxu0 %v1334
  %1822 = vmatpush.msra.mxu0 %v1332
  %1823 = vmatpush.msra.mxu0 %v1330
  %1824 = vmatmul.f32.gmra.mxu0 %v1311
  %v1825 = vpop.f32.mrf.mxu0
  %v1826 = vadd.f32 %v1702, %v1825
  %1827 = vmatmul.f32.gmra.mxu0 %v1314
  %v1828 = vpop.f32.mrf.mxu0
  %v1829 = vadd.f32 %v1705, %v1828
  %1830 = vmatmul.f32.gmra.mxu0 %v1320
  %v1831 = vpop.f32.mrf.mxu0
  %v1832 = vadd.f32 %v1708, %v1831
  %1833 = vmatmul.f32.gmra.mxu0 %v1323
  %v1834 = vpop.f32.mrf.mxu0
  %v1835 = vadd.f32 %v1711, %v1834
  %1836 = vdwg.mxu0
  %1837 = vmatpush.msra.mxu0 %v1392
  %1838 = vmatpush.msra.mxu0 %v1390
  %1839 = vmatpush.msra.mxu0 %v1388
  %1840 = vmatpush.msra.mxu0 %v1386
  %1841 = vmatpush.msra.mxu0 %v1384
  %1842 = vmatpush.msra.mxu0 %v1382
  %1843 = vmatpush.msra.mxu0 %v1380
  %1844 = vmatpush.msra.mxu0 %v1378
  %1845 = vmatpush.msra.mxu0 %v1376
  %1846 = vmatpush.msra.mxu0 %v1374
  %1847 = vmatpush.msra.mxu0 %v1372
  %1848 = vmatpush.msra.mxu0 %v1370
  %1849 = vmatpush.msra.mxu0 %v1368
  %1850 = vmatpush.msra.mxu0 %v1366
  %1851 = vmatpush.msra.mxu0 %v1364
  %1852 = vmatpush.msra.mxu0 %v1362
  %1853 = vmatmul.f32.gmra.mxu0 %v1312
  %v1854 = vpop.f32.mrf.mxu0
  %v1855 = vadd.f32 %v1826, %v1854
  %1856 = vmatmul.f32.gmra.mxu0 %v1315
  %v1857 = vpop.f32.mrf.mxu0
  %v1858 = vadd.f32 %v1829, %v1857
  %1859 = vmatmul.f32.gmra.mxu0 %v1321
  %v1860 = vpop.f32.mrf.mxu0
  %v1861 = vadd.f32 %v1832, %v1860
  %1862 = vmatmul.f32.gmra.mxu0 %v1324
  %v1863 = vpop.f32.mrf.mxu0
  %v1864 = vadd.f32 %v1835, %v1863
  %1865 = vdwg.mxu0
  %1866 = vmatpush.msra.mxu0 0.0
  %1867 = vmatpush.msra.mxu0 0.0
  %1868 = vmatpush.msra.mxu0 0.0
  %1869 = vmatpush.msra.mxu0 0.0
  %1870 = vmatpush.msra.mxu0 0.0
  %1871 = vmatpush.msra.mxu0 0.0
  %1872 = vmatpush.msra.mxu0 0.0
  %1873 = vmatpush.msra.mxu0 0.0
  %1874 = vmatpush.msra.mxu0 0.0
  %1875 = vmatpush.msra.mxu0 0.0
  %1876 = vmatpush.msra.mxu0 0.0
  %1877 = vmatpush.msra.mxu0 0.0
  %1878 = vmatpush.msra.mxu0 %v1400
  %1879 = vmatpush.msra.mxu0 %v1398
  %1880 = vmatpush.msra.mxu0 %v1396
  %1881 = vmatpush.msra.mxu0 %v1394
  %1882 = vmatmul.f32.gmra.mxu0 %v1713
  %v1883 = vpop.f32.mrf.mxu0
  %v1884 = vadd.f32 %v1855, %v1883
  %1885 = vmatmul.f32.gmra.mxu0 %v1715
  %v1886 = vpop.f32.mrf.mxu0
  %v1887 = vadd.f32 %v1858, %v1886
  %1888 = vmatmul.f32.gmra.mxu0 %v1717
  %v1889 = vpop.f32.mrf.mxu0
  %v1890 = vadd.f32 %v1861, %v1889
  %1891 = vmatmul.f32.gmra.mxu0 %v1719
  %v1892 = vpop.f32.mrf.mxu0
  %v1893 = vadd.f32 %v1864, %v1892
  %1894 = vdwg.mxu0
  %v1895 = vrot.slane %v1311, 2
  %v1896 = vrot.slane %v1314, 2
  %v1897 = vsel %vm508, %v1895, %v1896
  %v1898 = vrot.slane %v1312, 2
  %v1899 = vrot.slane %v1315, 2
  %v1900 = vsel %vm508, %v1898, %v1899
  %v1901 = vrot.slane %v1313, 2
  %v1902 = vrot.slane %v1316, 2
  %v1903 = vsel %vm508, %v1901, %v1902
  %v1904 = vrot.slane %v1317, 2
  %v1905 = vsel %vm508, %v1896, %v1904
  %v1906 = vrot.slane %v1318, 2
  %v1907 = vsel %vm508, %v1899, %v1906
  %v1908 = vrot.slane %v1319, 2
  %v1909 = vsel %vm508, %v1902, %v1908
  %v1910 = vrot.slane %v1320, 2
  %v1911 = vrot.slane %v1323, 2
  %v1912 = vsel %vm508, %v1910, %v1911
  %v1913 = vrot.slane %v1321, 2
  %v1914 = vrot.slane %v1324, 2
  %v1915 = vsel %vm508, %v1913, %v1914
  %v1916 = vrot.slane %v1322, 2
  %v1917 = vrot.slane %v1325, 2
  %v1918 = vsel %vm508, %v1916, %v1917
  %v1919 = vrot.slane %v1326, 2
  %v1920 = vsel %vm508, %v1911, %v1919
  %v1921 = vrot.slane %v1327, 2
  %v1922 = vsel %vm508, %v1914, %v1921
  %v1923 = vrot.slane %v1328, 2
  %v1924 = vsel %vm508, %v1917, %v1923
  %s1933 = scalar_lea.vmem %s11, 1152
  %v1934 = vld [vmem:[%s1933] sm:$0xff]
  %v1935 = vld [vmem:[%s1933 + $0x8] sm:$0xff]
  %v1936 = vld [vmem:[%s1933 + $0x10] sm:$0xff]
  %v1937 = vld [vmem:[%s1933 + $0x18] sm:$0xff]
  %v1938 = vld [vmem:[%s1933 + $0x20] sm:$0xff]
  %v1939 = vld [vmem:[%s1933 + $0x28] sm:$0xff]
  %v1940 = vld [vmem:[%s1933 + $0x30] sm:$0xff]
  %v1941 = vld [vmem:[%s1933 + $0x38] sm:$0xff]
  %v1942 = vld [vmem:[%s1933 + $0x40] sm:$0xff]
  %v1943 = vld [vmem:[%s1933 + $0x48] sm:$0xff]
  %v1944 = vld [vmem:[%s1933 + $0x50] sm:$0xff]
  %v1945 = vld [vmem:[%s1933 + $0x58] sm:$0xff]
  %v1946 = vld [vmem:[%s1933 + $0x60] sm:$0xff]
  %v1947 = vld [vmem:[%s1933 + $0x68] sm:$0xff]
  %v1948 = vld [vmem:[%s1933 + $0x70] sm:$0xff]
  %v1949 = vld [vmem:[%s1933 + $0x78] sm:$0xff]
  %v1950 = vld [vmem:[%s1933 + $0x80] sm:$0xff]
  %v1951 = vld [vmem:[%s1933 + $0x88] sm:$0xff]
  %v1952 = vld [vmem:[%s1933 + $0x90] sm:$0xff]
  %v1953 = vld [vmem:[%s1933 + $0x98] sm:$0xff]
  %v1954 = vld [vmem:[%s1933 + $0xa0] sm:$0xff]
  %v1955 = vld [vmem:[%s1933 + $0xa8] sm:$0xff]
  %v1956 = vld [vmem:[%s1933 + $0xb0] sm:$0xff]
  %v1957 = vld [vmem:[%s1933 + $0xb8] sm:$0xff]
  %v1958 = vld [vmem:[%s1933 + $0xc0] sm:$0xff]
  %v1959 = vld [vmem:[%s1933 + $0xc8] sm:$0xff]
  %v1960 = vld [vmem:[%s1933 + $0xd0] sm:$0xff]
  %v1961 = vld [vmem:[%s1933 + $0xd8] sm:$0xff]
  %v1962 = vld [vmem:[%s1933 + $0xe0] sm:$0xff]
  %v1963 = vld [vmem:[%s1933 + $0xe8] sm:$0xff]
  %v1964 = vld [vmem:[%s1933 + $0xf0] sm:$0xff]
  %v1965 = vld [vmem:[%s1933 + $0xf8] sm:$0xff]
  %v1966 = vld [vmem:[%s1933 + $0x100] sm:$0xff]
  %v1967 = vld [vmem:[%s1933 + $0x108] sm:$0xff]
  %v1968 = vld [vmem:[%s1933 + $0x110] sm:$0xff]
  %v1969 = vld [vmem:[%s1933 + $0x118] sm:$0xff]
  %v1970 = vld [vmem:[%s1933 + $0x120] sm:$0xff]
  %v1971 = vld [vmem:[%s1933 + $0x128] sm:$0xff]
  %v1972 = vld [vmem:[%s1933 + $0x130] sm:$0xff]
  %v1973 = vld [vmem:[%s1933 + $0x138] sm:$0xff]
  %v1974 = vld [vmem:[%s1933 + $0x140] sm:$0xff]
  %v1975 = vld [vmem:[%s1933 + $0x148] sm:$0xff]
  %v1976 = vld [vmem:[%s1933 + $0x150] sm:$0xff]
  %v1977 = vld [vmem:[%s1933 + $0x158] sm:$0xff]
  %v1978 = vld [vmem:[%s1933 + $0x160] sm:$0xff]
  %v1979 = vld [vmem:[%s1933 + $0x168] sm:$0xff]
  %v1980 = vld [vmem:[%s1933 + $0x170] sm:$0xff]
  %v1981 = vld [vmem:[%s1933 + $0x178] sm:$0xff]
  %v1982 = vld [vmem:[%s1933 + $0x180] sm:$0xff]
  %v1983 = vld [vmem:[%s1933 + $0x188] sm:$0xff]
  %v1984 = vld [vmem:[%s1933 + $0x190] sm:$0xff]
  %v1985 = vld [vmem:[%s1933 + $0x198] sm:$0xff]
  %v1986 = vld [vmem:[%s1933 + $0x1a0] sm:$0xff]
  %v1987 = vld [vmem:[%s1933 + $0x1a8] sm:$0xff]
  %v1988 = vld [vmem:[%s1933 + $0x1b0] sm:$0xff]
  %v1989 = vld [vmem:[%s1933 + $0x1b8] sm:$0xff]
  %v1990 = vld [vmem:[%s1933 + $0x1c0] sm:$0xff]
  %v1991 = vld [vmem:[%s1933 + $0x1c8] sm:$0xff]
  %v1992 = vld [vmem:[%s1933 + $0x1d0] sm:$0xff]
  %v1993 = vld [vmem:[%s1933 + $0x1d8] sm:$0xff]
  %v1994 = vld [vmem:[%s1933 + $0x1e0] sm:$0xff]
  %v1995 = vld [vmem:[%s1933 + $0x1e8] sm:$0xff]
  %v1996 = vld [vmem:[%s1933 + $0x1f0] sm:$0xff]
  %v1997 = vld [vmem:[%s1933 + $0x1f8] sm:$0xff]
  %v1998 = vld [vmem:[%s1933 + $0x200] sm:$0xff]
  %v1999 = vld [vmem:[%s1933 + $0x208] sm:$0xff]
  %v2000 = vld [vmem:[%s1933 + $0x210] sm:$0xff]
  %v2001 = vld [vmem:[%s1933 + $0x218] sm:$0xff]
  %v2002 = vld [vmem:[%s1933 + $0x220] sm:$0xff]
  %v2003 = vld [vmem:[%s1933 + $0x228] sm:$0xff]
  %v2004 = vld [vmem:[%s1933 + $0x230] sm:$0xff]
  %v2005 = vld [vmem:[%s1933 + $0x238] sm:$0xff]
  %v2006 = vsel %vm1530, %v1903, 0
  %v2008 = vsel %vm1530, %v1909, 0
  %v2010 = vsel %vm1530, %v1918, 0
  %v2012 = vsel %vm1530, %v1924, 0
  %2014 = vmatpush.msra.mxu0 %v1964
  %2015 = vmatpush.msra.mxu0 %v1962
  %2016 = vmatpush.msra.mxu0 %v1960
  %2017 = vmatpush.msra.mxu0 %v1958
  %2018 = vmatpush.msra.mxu0 %v1956
  %2019 = vmatpush.msra.mxu0 %v1954
  %2020 = vmatpush.msra.mxu0 %v1952
  %2021 = vmatpush.msra.mxu0 %v1950
  %2022 = vmatpush.msra.mxu0 %v1948
  %2023 = vmatpush.msra.mxu0 %v1946
  %2024 = vmatpush.msra.mxu0 %v1944
  %2025 = vmatpush.msra.mxu0 %v1942
  %2026 = vmatpush.msra.mxu0 %v1940
  %2027 = vmatpush.msra.mxu0 %v1938
  %2028 = vmatpush.msra.mxu0 %v1936
  %2029 = vmatpush.msra.mxu0 %v1934
  %2030 = vmatmul.f32.gmra.mxu0 %v1897
  %v2031 = vpop.f32.mrf.mxu0
  %v2032 = vadd.f32 0.0, %v2031
  %2033 = vmatmul.f32.gmra.mxu0 %v1905
  %v2034 = vpop.f32.mrf.mxu0
  %v2035 = vadd.f32 0.0, %v2034
  %2036 = vmatmul.f32.gmra.mxu0 %v1912
  %v2037 = vpop.f32.mrf.mxu0
  %v2038 = vadd.f32 0.0, %v2037
  %2039 = vmatmul.f32.gmra.mxu0 %v1920
  %v2040 = vpop.f32.mrf.mxu0
  %v2041 = vadd.f32 0.0, %v2040
  %2042 = vdwg.mxu0
  %2043 = vmatpush.msra.mxu0 %v1996
  %2044 = vmatpush.msra.mxu0 %v1994
  %2045 = vmatpush.msra.mxu0 %v1992
  %2046 = vmatpush.msra.mxu0 %v1990
  %2047 = vmatpush.msra.mxu0 %v1988
  %2048 = vmatpush.msra.mxu0 %v1986
  %2049 = vmatpush.msra.mxu0 %v1984
  %2050 = vmatpush.msra.mxu0 %v1982
  %2051 = vmatpush.msra.mxu0 %v1980
  %2052 = vmatpush.msra.mxu0 %v1978
  %2053 = vmatpush.msra.mxu0 %v1976
  %2054 = vmatpush.msra.mxu0 %v1974
  %2055 = vmatpush.msra.mxu0 %v1972
  %2056 = vmatpush.msra.mxu0 %v1970
  %2057 = vmatpush.msra.mxu0 %v1968
  %2058 = vmatpush.msra.mxu0 %v1966
  %2059 = vmatmul.f32.gmra.mxu0 %v1900
  %v2060 = vpop.f32.mrf.mxu0
  %v2061 = vadd.f32 %v2032, %v2060
  %2062 = vmatmul.f32.gmra.mxu0 %v1907
  %v2063 = vpop.f32.mrf.mxu0
  %v2064 = vadd.f32 %v2035, %v2063
  %2065 = vmatmul.f32.gmra.mxu0 %v1915
  %v2066 = vpop.f32.mrf.mxu0
  %v2067 = vadd.f32 %v2038, %v2066
  %2068 = vmatmul.f32.gmra.mxu0 %v1922
  %v2069 = vpop.f32.mrf.mxu0
  %v2070 = vadd.f32 %v2041, %v2069
  %2071 = vdwg.mxu0
  %2072 = vmatpush.msra.mxu0 0.0
  %2073 = vmatpush.msra.mxu0 0.0
  %2074 = vmatpush.msra.mxu0 0.0
  %2075 = vmatpush.msra.mxu0 0.0
  %2076 = vmatpush.msra.mxu0 0.0
  %2077 = vmatpush.msra.mxu0 0.0
  %2078 = vmatpush.msra.mxu0 0.0
  %2079 = vmatpush.msra.mxu0 0.0
  %2080 = vmatpush.msra.mxu0 0.0
  %2081 = vmatpush.msra.mxu0 0.0
  %2082 = vmatpush.msra.mxu0 0.0
  %2083 = vmatpush.msra.mxu0 0.0
  %2084 = vmatpush.msra.mxu0 %v2004
  %2085 = vmatpush.msra.mxu0 %v2002
  %2086 = vmatpush.msra.mxu0 %v2000
  %2087 = vmatpush.msra.mxu0 %v1998
  %2088 = vmatmul.f32.gmra.mxu0 %v2006
  %v2089 = vpop.f32.mrf.mxu0
  %v2090 = vadd.f32 %v2061, %v2089
  %2091 = vmatmul.f32.gmra.mxu0 %v2008
  %v2092 = vpop.f32.mrf.mxu0
  %v2093 = vadd.f32 %v2064, %v2092
  %2094 = vmatmul.f32.gmra.mxu0 %v2010
  %v2095 = vpop.f32.mrf.mxu0
  %v2096 = vadd.f32 %v2067, %v2095
  %2097 = vmatmul.f32.gmra.mxu0 %v2012
  %v2098 = vpop.f32.mrf.mxu0
  %v2099 = vadd.f32 %v2070, %v2098
  %2100 = vdwg.mxu0
  %2101 = vmatpush.msra.mxu0 %v1965
  %2102 = vmatpush.msra.mxu0 %v1963
  %2103 = vmatpush.msra.mxu0 %v1961
  %2104 = vmatpush.msra.mxu0 %v1959
  %2105 = vmatpush.msra.mxu0 %v1957
  %2106 = vmatpush.msra.mxu0 %v1955
  %2107 = vmatpush.msra.mxu0 %v1953
  %2108 = vmatpush.msra.mxu0 %v1951
  %2109 = vmatpush.msra.mxu0 %v1949
  %2110 = vmatpush.msra.mxu0 %v1947
  %2111 = vmatpush.msra.mxu0 %v1945
  %2112 = vmatpush.msra.mxu0 %v1943
  %2113 = vmatpush.msra.mxu0 %v1941
  %2114 = vmatpush.msra.mxu0 %v1939
  %2115 = vmatpush.msra.mxu0 %v1937
  %2116 = vmatpush.msra.mxu0 %v1935
  %2117 = vmatmul.f32.gmra.mxu0 %v1897
  %v2118 = vpop.f32.mrf.mxu0
  %v2119 = vadd.f32 0.0, %v2118
  %2120 = vmatmul.f32.gmra.mxu0 %v1905
  %v2121 = vpop.f32.mrf.mxu0
  %v2122 = vadd.f32 0.0, %v2121
  %2123 = vmatmul.f32.gmra.mxu0 %v1912
  %v2124 = vpop.f32.mrf.mxu0
  %v2125 = vadd.f32 0.0, %v2124
  %2126 = vmatmul.f32.gmra.mxu0 %v1920
  %v2127 = vpop.f32.mrf.mxu0
  %v2128 = vadd.f32 0.0, %v2127
  %2129 = vdwg.mxu0
  %2130 = vmatpush.msra.mxu0 %v1997
  %2131 = vmatpush.msra.mxu0 %v1995
  %2132 = vmatpush.msra.mxu0 %v1993
  %2133 = vmatpush.msra.mxu0 %v1991
  %2134 = vmatpush.msra.mxu0 %v1989
  %2135 = vmatpush.msra.mxu0 %v1987
  %2136 = vmatpush.msra.mxu0 %v1985
  %2137 = vmatpush.msra.mxu0 %v1983
  %2138 = vmatpush.msra.mxu0 %v1981
  %2139 = vmatpush.msra.mxu0 %v1979
  %2140 = vmatpush.msra.mxu0 %v1977
  %2141 = vmatpush.msra.mxu0 %v1975
  %2142 = vmatpush.msra.mxu0 %v1973
  %2143 = vmatpush.msra.mxu0 %v1971
  %2144 = vmatpush.msra.mxu0 %v1969
  %2145 = vmatpush.msra.mxu0 %v1967
  %2146 = vmatmul.f32.gmra.mxu0 %v1900
  %v2147 = vpop.f32.mrf.mxu0
  %v2148 = vadd.f32 %v2119, %v2147
  %2149 = vmatmul.f32.gmra.mxu0 %v1907
  %v2150 = vpop.f32.mrf.mxu0
  %v2151 = vadd.f32 %v2122, %v2150
  %2152 = vmatmul.f32.gmra.mxu0 %v1915
  %v2153 = vpop.f32.mrf.mxu0
  %v2154 = vadd.f32 %v2125, %v2153
  %2155 = vmatmul.f32.gmra.mxu0 %v1922
  %v2156 = vpop.f32.mrf.mxu0
  %v2157 = vadd.f32 %v2128, %v2156
  %2158 = vdwg.mxu0
  %2159 = vmatpush.msra.mxu0 0.0
  %2160 = vmatpush.msra.mxu0 0.0
  %2161 = vmatpush.msra.mxu0 0.0
  %2162 = vmatpush.msra.mxu0 0.0
  %2163 = vmatpush.msra.mxu0 0.0
  %2164 = vmatpush.msra.mxu0 0.0
  %2165 = vmatpush.msra.mxu0 0.0
  %2166 = vmatpush.msra.mxu0 0.0
  %2167 = vmatpush.msra.mxu0 0.0
  %2168 = vmatpush.msra.mxu0 0.0
  %2169 = vmatpush.msra.mxu0 0.0
  %2170 = vmatpush.msra.mxu0 0.0
  %2171 = vmatpush.msra.mxu0 %v2005
  %2172 = vmatpush.msra.mxu0 %v2003
  %2173 = vmatpush.msra.mxu0 %v2001
  %2174 = vmatpush.msra.mxu0 %v1999
  %2175 = vmatmul.f32.gmra.mxu0 %v2006
  %v2176 = vpop.f32.mrf.mxu0
  %v2177 = vadd.f32 %v2148, %v2176
  %2178 = vmatmul.f32.gmra.mxu0 %v2008
  %v2179 = vpop.f32.mrf.mxu0
  %v2180 = vadd.f32 %v2151, %v2179
  %2181 = vmatmul.f32.gmra.mxu0 %v2010
  %v2182 = vpop.f32.mrf.mxu0
  %v2183 = vadd.f32 %v2154, %v2182
  %2184 = vmatmul.f32.gmra.mxu0 %v2012
  %v2185 = vpop.f32.mrf.mxu0
  %v2186 = vadd.f32 %v2157, %v2185
  %2187 = vdwg.mxu0
  %v2188 = vadd.f32 %v1797, %v2090
  %v2189 = vadd.f32 %v1884, %v2177
  %v2190 = vadd.f32 %v1800, %v2093
  %v2191 = vadd.f32 %v1887, %v2180
  %v2192 = vadd.f32 %v1803, %v2096
  %v2193 = vadd.f32 %v1890, %v2183
  %v2194 = vadd.f32 %v1806, %v2099
  %v2195 = vadd.f32 %v1893, %v2186
  %v2196 = vld [vmem:[%s12] sm:$0x1]
  %v2197 = vld [vmem:[%s14] sm:$0xff]
  %v2198 = vld [vmem:[%s14 + $0x8] sm:$0xff]
  %v2199 = vld [vmem:[%s14 + $0x10] sm:$0x3]
  %v2200 = vld [vmem:[%s14 + $0x18] sm:$0x3]
  %vm2201 = vcmask 80896
  %v2203 = vsel %vm2201, %v2196, 0
  %v2206 = vsel %vm101, %v2199, 0
  %v2209 = vsel %vm101, %v2200, 0
  %2211 = vmatpush.msra.mxu0 0.0
  %2212 = vmatpush.msra.mxu0 0.0
  %2213 = vmatpush.msra.mxu0 0.0
  %2214 = vmatpush.msra.mxu0 0.0
  %2215 = vmatpush.msra.mxu0 0.0
  %2216 = vmatpush.msra.mxu0 0.0
  %2217 = vmatpush.msra.mxu0 0.0
  %2218 = vmatpush.msra.mxu0 0.0
  %2219 = vmatpush.msra.mxu0 0.0
  %2220 = vmatpush.msra.mxu0 0.0
  %2221 = vmatpush.msra.mxu0 0.0
  %2222 = vmatpush.msra.mxu0 0.0
  %2223 = vmatpush.msra.mxu0 0.0
  %2224 = vmatpush.msra.mxu0 0.0
  %2225 = vmatpush.msra.mxu0 %v2206
  %2226 = vmatpush.msra.mxu0 %v2197
  %2227 = vmatmul.f32.gmra.mxu0 %v2203
  %v2228 = vpop.f32.mrf.mxu0
  %v2229 = vadd.f32 0.0, %v2228
  %2230 = vdwg.mxu0
  %2231 = vmatpush.msra.mxu0 0.0
  %2232 = vmatpush.msra.mxu0 0.0
  %2233 = vmatpush.msra.mxu0 0.0
  %2234 = vmatpush.msra.mxu0 0.0
  %2235 = vmatpush.msra.mxu0 0.0
  %2236 = vmatpush.msra.mxu0 0.0
  %2237 = vmatpush.msra.mxu0 0.0
  %2238 = vmatpush.msra.mxu0 0.0
  %2239 = vmatpush.msra.mxu0 0.0
  %2240 = vmatpush.msra.mxu0 0.0
  %2241 = vmatpush.msra.mxu0 0.0
  %2242 = vmatpush.msra.mxu0 0.0
  %2243 = vmatpush.msra.mxu0 0.0
  %2244 = vmatpush.msra.mxu0 0.0
  %2245 = vmatpush.msra.mxu0 %v2209
  %2246 = vmatpush.msra.mxu0 %v2198
  %2247 = vmatmul.f32.gmra.mxu0 %v2203
  %v2248 = vpop.f32.mrf.mxu0
  %v2249 = vadd.f32 0.0, %v2248
  %2250 = vdwg.mxu0
  %v2251 = vperm.slane %v2229, 0
  %v2252 = vperm.slane %v2249, 0
  %v2253 = vadd.f32 %v2188, %v2251
  %v2254 = vadd.f32 %v2189, %v2252
  %v2255 = vadd.f32 %v2190, %v2251
  %v2256 = vadd.f32 %v2191, %v2252
  %v2257 = vadd.f32 %v2192, %v2251
  %v2258 = vadd.f32 %v2193, %v2252
  %v2259 = vadd.f32 %v2194, %v2251
  %v2260 = vadd.f32 %v2195, %v2252
  %v2261 = vld [vmem:[%s13] sm:$0xff]
  %v2262 = vld [vmem:[%s13 + $0x8] sm:$0xff]
  %v2263 = vld [vmem:[%s13 + $0x10] sm:$0xff]
  %v2264 = vld [vmem:[%s13 + $0x18] sm:$0xff]
  %v2265 = vld [vmem:[%s13 + $0x20] sm:$0xff]
  %v2266 = vld [vmem:[%s13 + $0x28] sm:$0xff]
  %v2267 = vld [vmem:[%s13 + $0x30] sm:$0xff]
  %v2268 = vld [vmem:[%s13 + $0x38] sm:$0xff]
  %v2269 = vld [vmem:[%s13 + $0x40] sm:$0xff]
  %v2270 = vld [vmem:[%s13 + $0x48] sm:$0xff]
  %v2271 = vld [vmem:[%s13 + $0x50] sm:$0xff]
  %v2272 = vld [vmem:[%s13 + $0x58] sm:$0xff]
  %v2273 = vld [vmem:[%s13 + $0x60] sm:$0xff]
  %v2274 = vld [vmem:[%s13 + $0x68] sm:$0xff]
  %v2275 = vld [vmem:[%s13 + $0x70] sm:$0xff]
  %v2276 = vld [vmem:[%s13 + $0x78] sm:$0xff]
  %v2277 = vld [vmem:[%s13 + $0x80] sm:$0xff]
  %v2278 = vld [vmem:[%s13 + $0x88] sm:$0xff]
  %v2279 = vld [vmem:[%s13 + $0x90] sm:$0xff]
  %v2280 = vld [vmem:[%s13 + $0x98] sm:$0xff]
  %v2282 = vsel %vm1530, %v2254, 0
  %v2285 = vsel %vm1530, %v2256, 0
  %v2288 = vsel %vm1530, %v2258, 0
  %v2291 = vsel %vm1530, %v2260, 0
  %2293 = vmatpush.msra.mxu0 %v2276
  %2294 = vmatpush.msra.mxu0 %v2275
  %2295 = vmatpush.msra.mxu0 %v2274
  %2296 = vmatpush.msra.mxu0 %v2273
  %2297 = vmatpush.msra.mxu0 %v2272
  %2298 = vmatpush.msra.mxu0 %v2271
  %2299 = vmatpush.msra.mxu0 %v2270
  %2300 = vmatpush.msra.mxu0 %v2269
  %2301 = vmatpush.msra.mxu0 %v2268
  %2302 = vmatpush.msra.mxu0 %v2267
  %2303 = vmatpush.msra.mxu0 %v2266
  %2304 = vmatpush.msra.mxu0 %v2265
  %2305 = vmatpush.msra.mxu0 %v2264
  %2306 = vmatpush.msra.mxu0 %v2263
  %2307 = vmatpush.msra.mxu0 %v2262
  %2308 = vmatpush.msra.mxu0 %v2261
  %2309 = vmatmul.f32.gmra.mxu0 %v2253
  %v2310 = vpop.f32.mrf.mxu0
  %v2311 = vadd.f32 0.0, %v2310
  %2312 = vmatmul.f32.gmra.mxu0 %v2255
  %v2313 = vpop.f32.mrf.mxu0
  %v2314 = vadd.f32 0.0, %v2313
  %2315 = vmatmul.f32.gmra.mxu0 %v2257
  %v2316 = vpop.f32.mrf.mxu0
  %v2317 = vadd.f32 0.0, %v2316
  %2318 = vmatmul.f32.gmra.mxu0 %v2259
  %v2319 = vpop.f32.mrf.mxu0
  %v2320 = vadd.f32 0.0, %v2319
  %2321 = vdwg.mxu0
  %2322 = vmatpush.msra.mxu0 0.0
  %2323 = vmatpush.msra.mxu0 0.0
  %2324 = vmatpush.msra.mxu0 0.0
  %2325 = vmatpush.msra.mxu0 0.0
  %2326 = vmatpush.msra.mxu0 0.0
  %2327 = vmatpush.msra.mxu0 0.0
  %2328 = vmatpush.msra.mxu0 0.0
  %2329 = vmatpush.msra.mxu0 0.0
  %2330 = vmatpush.msra.mxu0 0.0
  %2331 = vmatpush.msra.mxu0 0.0
  %2332 = vmatpush.msra.mxu0 0.0
  %2333 = vmatpush.msra.mxu0 0.0
  %2334 = vmatpush.msra.mxu0 %v2280
  %2335 = vmatpush.msra.mxu0 %v2279
  %2336 = vmatpush.msra.mxu0 %v2278
  %2337 = vmatpush.msra.mxu0 %v2277
  %2338 = vmatmul.f32.gmra.mxu0 %v2282
  %v2339 = vpop.f32.mrf.mxu0
  %v2340 = vadd.f32 %v2311, %v2339
  %2341 = vmatmul.f32.gmra.mxu0 %v2285
  %v2342 = vpop.f32.mrf.mxu0
  %v2343 = vadd.f32 %v2314, %v2342
  %2344 = vmatmul.f32.gmra.mxu0 %v2288
  %v2345 = vpop.f32.mrf.mxu0
  %v2346 = vadd.f32 %v2317, %v2345
  %2347 = vmatmul.f32.gmra.mxu0 %v2291
  %v2348 = vpop.f32.mrf.mxu0
  %v2349 = vadd.f32 %v2320, %v2348
  %2350 = vdwg.mxu0
  %v2351 = vsel %vm2201, %v2340, 0.0
  %v2352 = vsel %vm2201, %v2343, 0.0
  %v2353 = vadd.f32 %v2351, %v2352
  %v2354 = vsel %vm2201, %v2346, 0.0
  %v2355 = vadd.f32 %v2353, %v2354
  %v2356 = vsel %vm2201, %v2349, 0.0
  %v2357 = vadd.f32 %v2355, %v2356
  %v2358 = vrot.slane %v2357, 4
  %v2359 = vadd.f32 %v2357, %v2358
  %v2360 = vrot.slane %v2359, 2
  %v2361 = vadd.f32 %v2359, %v2360
  %v2362 = vrot.slane %v2361, 1
  %v2363 = vadd.f32 %v2361, %v2362
  %v2364 = vrcp.pop 512.0
  %v2365 = vmul.f32 512.0, %v2364
  %v2366 = vsub.f32 1.0, %v2365
  %v2367 = vmul.f32 %v2364, %v2366
  %v2368 = vadd.f32 %v2364, %v2367
  %vm2369 = vweird.f32 %v2364
  %v2370 = vsel %vm2369, %v2364, %v2368
  %v2371 = vmul.f32 %v2363, %v2370
  %v2373 = vsel %vm2201, %v2371, 0
  %2375 = vmatpush.msra.mxu0 0.0
  %2376 = vmatpush.msra.mxu0 0.0
  %2377 = vmatpush.msra.mxu0 0.0
  %2378 = vmatpush.msra.mxu0 0.0
  %2379 = vmatpush.msra.mxu0 0.0
  %2380 = vmatpush.msra.mxu0 0.0
  %2381 = vmatpush.msra.mxu0 0.0
  %2382 = vmatpush.msra.mxu0 0.0
  %2383 = vmatpush.msra.mxu0 0.0
  %2384 = vmatpush.msra.mxu0 0.0
  %2385 = vmatpush.msra.mxu0 0.0
  %2386 = vmatpush.msra.mxu0 0.0
  %2387 = vmatpush.msra.mxu0 0.0
  %2388 = vmatpush.msra.mxu0 0.0
  %2389 = vmatpush.msra.mxu0 %v2206
  %2390 = vmatpush.msra.mxu0 %v2197
  %2391 = vmatmul.f32.gmra.mxu0 %v2373
  %v2392 = vpop.f32.mrf.mxu0
  %v2393 = vadd.f32 0.0, %v2392
  %2394 = vdwg.mxu0
  %2395 = vmatpush.msra.mxu0 0.0
  %2396 = vmatpush.msra.mxu0 0.0
  %2397 = vmatpush.msra.mxu0 0.0
  %2398 = vmatpush.msra.mxu0 0.0
  %2399 = vmatpush.msra.mxu0 0.0
  %2400 = vmatpush.msra.mxu0 0.0
  %2401 = vmatpush.msra.mxu0 0.0
  %2402 = vmatpush.msra.mxu0 0.0
  %2403 = vmatpush.msra.mxu0 0.0
  %2404 = vmatpush.msra.mxu0 0.0
  %2405 = vmatpush.msra.mxu0 0.0
  %2406 = vmatpush.msra.mxu0 0.0
  %2407 = vmatpush.msra.mxu0 0.0
  %2408 = vmatpush.msra.mxu0 0.0
  %2409 = vmatpush.msra.mxu0 %v2209
  %2410 = vmatpush.msra.mxu0 %v2198
  %2411 = vmatmul.f32.gmra.mxu0 %v2373
  %v2412 = vpop.f32.mrf.mxu0
  %v2413 = vadd.f32 0.0, %v2412
  %2414 = vdwg.mxu0
  %v2415 = vperm.slane %v2393, 0
  %v2416 = vperm.slane %v2413, 0
  %v2417 = vsub.f32 %v2253, %v2415
  %v2418 = vsub.f32 %v2254, %v2416
  %v2419 = vsub.f32 %v2255, %v2415
  %v2420 = vsub.f32 %v2256, %v2416
  %v2421 = vsub.f32 %v2257, %v2415
  %v2422 = vsub.f32 %v2258, %v2416
  %v2423 = vsub.f32 %v2259, %v2415
  %v2424 = vsub.f32 %v2260, %v2416
  %v2425 = vmul.f32 %v2417, %v2417
  %v2426 = vmul.f32 %v2418, %v2418
  %v2427 = vmul.f32 %v2419, %v2419
  %v2428 = vmul.f32 %v2420, %v2420
  %v2429 = vmul.f32 %v2421, %v2421
  %v2430 = vmul.f32 %v2422, %v2422
  %v2431 = vmul.f32 %v2423, %v2423
  %v2432 = vmul.f32 %v2424, %v2424
  %v2434 = vsel %vm1530, %v2426, 0
  %v2437 = vsel %vm1530, %v2428, 0
  %v2440 = vsel %vm1530, %v2430, 0
  %v2443 = vsel %vm1530, %v2432, 0
  %2445 = vmatpush.msra.mxu0 %v2276
  %2446 = vmatpush.msra.mxu0 %v2275
  %2447 = vmatpush.msra.mxu0 %v2274
  %2448 = vmatpush.msra.mxu0 %v2273
  %2449 = vmatpush.msra.mxu0 %v2272
  %2450 = vmatpush.msra.mxu0 %v2271
  %2451 = vmatpush.msra.mxu0 %v2270
  %2452 = vmatpush.msra.mxu0 %v2269
  %2453 = vmatpush.msra.mxu0 %v2268
  %2454 = vmatpush.msra.mxu0 %v2267
  %2455 = vmatpush.msra.mxu0 %v2266
  %2456 = vmatpush.msra.mxu0 %v2265
  %2457 = vmatpush.msra.mxu0 %v2264
  %2458 = vmatpush.msra.mxu0 %v2263
  %2459 = vmatpush.msra.mxu0 %v2262
  %2460 = vmatpush.msra.mxu0 %v2261
  %2461 = vmatmul.f32.gmra.mxu0 %v2425
  %v2462 = vpop.f32.mrf.mxu0
  %v2463 = vadd.f32 0.0, %v2462
  %2464 = vmatmul.f32.gmra.mxu0 %v2427
  %v2465 = vpop.f32.mrf.mxu0
  %v2466 = vadd.f32 0.0, %v2465
  %2467 = vmatmul.f32.gmra.mxu0 %v2429
  %v2468 = vpop.f32.mrf.mxu0
  %v2469 = vadd.f32 0.0, %v2468
  %2470 = vmatmul.f32.gmra.mxu0 %v2431
  %v2471 = vpop.f32.mrf.mxu0
  %v2472 = vadd.f32 0.0, %v2471
  %2473 = vdwg.mxu0
  %2474 = vmatpush.msra.mxu0 0.0
  %2475 = vmatpush.msra.mxu0 0.0
  %2476 = vmatpush.msra.mxu0 0.0
  %2477 = vmatpush.msra.mxu0 0.0
  %2478 = vmatpush.msra.mxu0 0.0
  %2479 = vmatpush.msra.mxu0 0.0
  %2480 = vmatpush.msra.mxu0 0.0
  %2481 = vmatpush.msra.mxu0 0.0
  %2482 = vmatpush.msra.mxu0 0.0
  %2483 = vmatpush.msra.mxu0 0.0
  %2484 = vmatpush.msra.mxu0 0.0
  %2485 = vmatpush.msra.mxu0 0.0
  %2486 = vmatpush.msra.mxu0 %v2280
  %2487 = vmatpush.msra.mxu0 %v2279
  %2488 = vmatpush.msra.mxu0 %v2278
  %2489 = vmatpush.msra.mxu0 %v2277
  %2490 = vmatmul.f32.gmra.mxu0 %v2434
  %v2491 = vpop.f32.mrf.mxu0
  %v2492 = vadd.f32 %v2463, %v2491
  %2493 = vmatmul.f32.gmra.mxu0 %v2437
  %v2494 = vpop.f32.mrf.mxu0
  %v2495 = vadd.f32 %v2466, %v2494
  %2496 = vmatmul.f32.gmra.mxu0 %v2440
  %v2497 = vpop.f32.mrf.mxu0
  %v2498 = vadd.f32 %v2469, %v2497
  %2499 = vmatmul.f32.gmra.mxu0 %v2443
  %v2500 = vpop.f32.mrf.mxu0
  %v2501 = vadd.f32 %v2472, %v2500
  %2502 = vdwg.mxu0
  %v2503 = vsel %vm2201, %v2492, 0.0
  %v2504 = vsel %vm2201, %v2495, 0.0
  %v2505 = vadd.f32 %v2503, %v2504
  %v2506 = vsel %vm2201, %v2498, 0.0
  %v2507 = vadd.f32 %v2505, %v2506
  %v2508 = vsel %vm2201, %v2501, 0.0
  %v2509 = vadd.f32 %v2507, %v2508
  %v2510 = vrot.slane %v2509, 4
  %v2511 = vadd.f32 %v2509, %v2510
  %v2512 = vrot.slane %v2511, 2
  %v2513 = vadd.f32 %v2511, %v2512
  %v2514 = vrot.slane %v2513, 1
  %v2515 = vadd.f32 %v2513, %v2514
  %v2516 = vmul.f32 %v2515, %v2370
  %v2517 = vadd.f32 %v2516, 1e-05
  %v2518 = vrsqrt.pop %v2517
  %v2519 = vmul.f32 %v2518, %v2517
  %v2520 = vmul.f32 %v2519, %v2518
  %v2521 = vmul.f32 0.5, %v2520
  %v2522 = vsub.f32 1.5, %v2521
  %v2523 = vmul.f32 %v2518, %v2522
  %vm2524 = vweird.f32 %v2517
  %vm2525 = vweird.f32 %v2518
  %vm2526 = vmor %vm2524, %vm2525
  %v2527 = vsel %vm2526, %v2518, %v2523
  %v2528 = vld [vmem:[%s15] sm:$0x1]
  %v2529 = vmul.f32 %v2527, %v2528
  %v2531 = vsel %vm2201, %v2529, 0
  %2533 = vmatpush.msra.mxu0 0.0
  %2534 = vmatpush.msra.mxu0 0.0
  %2535 = vmatpush.msra.mxu0 0.0
  %2536 = vmatpush.msra.mxu0 0.0
  %2537 = vmatpush.msra.mxu0 0.0
  %2538 = vmatpush.msra.mxu0 0.0
  %2539 = vmatpush.msra.mxu0 0.0
  %2540 = vmatpush.msra.mxu0 0.0
  %2541 = vmatpush.msra.mxu0 0.0
  %2542 = vmatpush.msra.mxu0 0.0
  %2543 = vmatpush.msra.mxu0 0.0
  %2544 = vmatpush.msra.mxu0 0.0
  %2545 = vmatpush.msra.mxu0 0.0
  %2546 = vmatpush.msra.mxu0 0.0
  %2547 = vmatpush.msra.mxu0 %v2206
  %2548 = vmatpush.msra.mxu0 %v2197
  %2549 = vmatmul.f32.gmra.mxu0 %v2531
  %v2550 = vpop.f32.mrf.mxu0
  %v2551 = vadd.f32 0.0, %v2550
  %2552 = vdwg.mxu0
  %2553 = vmatpush.msra.mxu0 0.0
  %2554 = vmatpush.msra.mxu0 0.0
  %2555 = vmatpush.msra.mxu0 0.0
  %2556 = vmatpush.msra.mxu0 0.0
  %2557 = vmatpush.msra.mxu0 0.0
  %2558 = vmatpush.msra.mxu0 0.0
  %2559 = vmatpush.msra.mxu0 0.0
  %2560 = vmatpush.msra.mxu0 0.0
  %2561 = vmatpush.msra.mxu0 0.0
  %2562 = vmatpush.msra.mxu0 0.0
  %2563 = vmatpush.msra.mxu0 0.0
  %2564 = vmatpush.msra.mxu0 0.0
  %2565 = vmatpush.msra.mxu0 0.0
  %2566 = vmatpush.msra.mxu0 0.0
  %2567 = vmatpush.msra.mxu0 %v2209
  %2568 = vmatpush.msra.mxu0 %v2198
  %2569 = vmatmul.f32.gmra.mxu0 %v2531
  %v2570 = vpop.f32.mrf.mxu0
  %v2571 = vadd.f32 0.0, %v2570
  %2572 = vdwg.mxu0
  %v2573 = vld [vmem:[%s16] sm:$0x1]
  %v2575 = vsel %vm2201, %v2573, 0
  %2577 = vmatpush.msra.mxu0 0.0
  %2578 = vmatpush.msra.mxu0 0.0
  %2579 = vmatpush.msra.mxu0 0.0
  %2580 = vmatpush.msra.mxu0 0.0
  %2581 = vmatpush.msra.mxu0 0.0
  %2582 = vmatpush.msra.mxu0 0.0
  %2583 = vmatpush.msra.mxu0 0.0
  %2584 = vmatpush.msra.mxu0 0.0
  %2585 = vmatpush.msra.mxu0 0.0
  %2586 = vmatpush.msra.mxu0 0.0
  %2587 = vmatpush.msra.mxu0 0.0
  %2588 = vmatpush.msra.mxu0 0.0
  %2589 = vmatpush.msra.mxu0 0.0
  %2590 = vmatpush.msra.mxu0 0.0
  %2591 = vmatpush.msra.mxu0 %v2206
  %2592 = vmatpush.msra.mxu0 %v2197
  %2593 = vmatmul.f32.gmra.mxu0 %v2575
  %v2594 = vpop.f32.mrf.mxu0
  %v2595 = vadd.f32 0.0, %v2594
  %2596 = vdwg.mxu0
  %2597 = vmatpush.msra.mxu0 0.0
  %2598 = vmatpush.msra.mxu0 0.0
  %2599 = vmatpush.msra.mxu0 0.0
  %2600 = vmatpush.msra.mxu0 0.0
  %2601 = vmatpush.msra.mxu0 0.0
  %2602 = vmatpush.msra.mxu0 0.0
  %2603 = vmatpush.msra.mxu0 0.0
  %2604 = vmatpush.msra.mxu0 0.0
  %2605 = vmatpush.msra.mxu0 0.0
  %2606 = vmatpush.msra.mxu0 0.0
  %2607 = vmatpush.msra.mxu0 0.0
  %2608 = vmatpush.msra.mxu0 0.0
  %2609 = vmatpush.msra.mxu0 0.0
  %2610 = vmatpush.msra.mxu0 0.0
  %2611 = vmatpush.msra.mxu0 %v2209
  %2612 = vmatpush.msra.mxu0 %v2198
  %2613 = vmatmul.f32.gmra.mxu0 %v2575
  %v2614 = vpop.f32.mrf.mxu0
  %v2615 = vadd.f32 0.0, %v2614
  %2616 = vdwg.mxu0
  %v2617 = vperm.slane %v2551, 0
  %v2618 = vperm.slane %v2571, 0
  %v2619 = vmul.f32 %v2417, %v2617
  %v2620 = vmul.f32 %v2418, %v2618
  %v2621 = vmul.f32 %v2419, %v2617
  %v2622 = vmul.f32 %v2420, %v2618
  %v2623 = vmul.f32 %v2421, %v2617
  %v2624 = vmul.f32 %v2422, %v2618
  %v2625 = vmul.f32 %v2423, %v2617
  %v2626 = vmul.f32 %v2424, %v2618
  %v2627 = vperm.slane %v2595, 0
  %v2628 = vperm.slane %v2615, 0
  %v2629 = vadd.f32 %v2619, %v2627
  %v2630 = vadd.f32 %v2620, %v2628
  %v2631 = vadd.f32 %v2621, %v2627
  %v2632 = vadd.f32 %v2622, %v2628
  %v2633 = vadd.f32 %v2623, %v2627
  %v2634 = vadd.f32 %v2624, %v2628
  %v2635 = vadd.f32 %v2625, %v2627
  %v2636 = vadd.f32 %v2626, %v2628
  %v2637 = vmax.f32 %v2629, 0.0
  %v2638 = vmax.f32 %v2630, 0.0
  %v2639 = vmax.f32 %v2631, 0.0
  %v2640 = vmax.f32 %v2632, 0.0
  %v2641 = vmax.f32 %v2633, 0.0
  %v2642 = vmax.f32 %v2634, 0.0
  %v2643 = vmax.f32 %v2635, 0.0
  %v2644 = vmax.f32 %v2636, 0.0
  %v2645 = vld [vmem:[%s17] sm:$0xff]
  %v2646 = vld [vmem:[%s17 + $0x8] sm:$0xff]
  %v2647 = vld [vmem:[%s17 + $0x10] sm:$0xff]
  %v2648 = vld [vmem:[%s17 + $0x18] sm:$0xff]
  %v2649 = vld [vmem:[%s17 + $0x20] sm:$0xff]
  %v2650 = vld [vmem:[%s17 + $0x28] sm:$0xff]
  %v2651 = vld [vmem:[%s17 + $0x30] sm:$0xff]
  %v2652 = vld [vmem:[%s17 + $0x38] sm:$0xff]
  %v2653 = vld [vmem:[%s17 + $0x40] sm:$0xff]
  %v2654 = vld [vmem:[%s17 + $0x48] sm:$0xff]
  %v2655 = vld [vmem:[%s17 + $0x50] sm:$0xff]
  %v2656 = vld [vmem:[%s17 + $0x58] sm:$0xff]
  %v2657 = vld [vmem:[%s17 + $0x60] sm:$0xff]
  %v2658 = vld [vmem:[%s17 + $0x68] sm:$0xff]
  %v2659 = vld [vmem:[%s17 + $0x70] sm:$0xff]
  %v2660 = vld [vmem:[%s17 + $0x78] sm:$0xff]
  %v2661 = vld [vmem:[%s17 + $0x80] sm:$0xff]
  %v2662 = vld [vmem:[%s17 + $0x88] sm:$0xff]
  %v2663 = vld [vmem:[%s17 + $0x90] sm:$0xff]
  %v2664 = vld [vmem:[%s17 + $0x98] sm:$0xff]
  %v2665 = vld [vmem:[%s17 + $0xa0] sm:$0xff]
  %v2666 = vld [vmem:[%s17 + $0xa8] sm:$0xff]
  %v2667 = vld [vmem:[%s17 + $0xb0] sm:$0xff]
  %v2668 = vld [vmem:[%s17 + $0xb8] sm:$0xff]
  %v2669 = vld [vmem:[%s17 + $0xc0] sm:$0xff]
  %v2670 = vld [vmem:[%s17 + $0xc8] sm:$0xff]
  %v2671 = vld [vmem:[%s17 + $0xd0] sm:$0xff]
  %v2672 = vld [vmem:[%s17 + $0xd8] sm:$0xff]
  %v2673 = vld [vmem:[%s17 + $0xe0] sm:$0xff]
  %v2674 = vld [vmem:[%s17 + $0xe8] sm:$0xff]
  %v2675 = vld [vmem:[%s17 + $0xf0] sm:$0xff]
  %v2676 = vld [vmem:[%s17 + $0xf8] sm:$0xff]
  %v2677 = vld [vmem:[%s17 + $0x100] sm:$0xff]
  %v2678 = vld [vmem:[%s17 + $0x108] sm:$0xff]
  %v2679 = vld [vmem:[%s17 + $0x110] sm:$0xff]
  %v2680 = vld [vmem:[%s17 + $0x118] sm:$0xff]
  %v2681 = vld [vmem:[%s17 + $0x120] sm:$0xff]
  %v2682 = vld [vmem:[%s17 + $0x128] sm:$0xff]
  %v2683 = vld [vmem:[%s17 + $0x130] sm:$0xff]
  %v2684 = vld [vmem:[%s17 + $0x138] sm:$0xff]
  %v2685 = vld [vmem:[%s17 + $0x140] sm:$0xff]
  %v2686 = vld [vmem:[%s17 + $0x148] sm:$0xff]
  %v2687 = vld [vmem:[%s17 + $0x150] sm:$0xff]
  %v2688 = vld [vmem:[%s17 + $0x158] sm:$0xff]
  %v2689 = vld [vmem:[%s17 + $0x160] sm:$0xff]
  %v2690 = vld [vmem:[%s17 + $0x168] sm:$0xff]
  %v2691 = vld [vmem:[%s17 + $0x170] sm:$0xff]
  %v2692 = vld [vmem:[%s17 + $0x178] sm:$0xff]
  %v2693 = vld [vmem:[%s17 + $0x180] sm:$0xff]
  %v2694 = vld [vmem:[%s17 + $0x188] sm:$0xff]
  %v2695 = vld [vmem:[%s17 + $0x190] sm:$0xff]
  %v2696 = vld [vmem:[%s17 + $0x198] sm:$0xff]
  %v2697 = vld [vmem:[%s17 + $0x1a0] sm:$0xff]
  %v2698 = vld [vmem:[%s17 + $0x1a8] sm:$0xff]
  %v2699 = vld [vmem:[%s17 + $0x1b0] sm:$0xff]
  %v2700 = vld [vmem:[%s17 + $0x1b8] sm:$0xff]
  %v2701 = vld [vmem:[%s17 + $0x1c0] sm:$0xff]
  %v2702 = vld [vmem:[%s17 + $0x1c8] sm:$0xff]
  %v2703 = vld [vmem:[%s17 + $0x1d0] sm:$0xff]
  %v2704 = vld [vmem:[%s17 + $0x1d8] sm:$0xff]
  %v2705 = vld [vmem:[%s18] sm:$0x7]
  %v2707 = vperm.slane %v2705, 0
  %v2708 = vperm.slane %v2705, 1
  %v2709 = vperm.slane %v2705, 2
  %v2714 = vsel %vm1530, %v2638, 0
  %v2717 = vsel %vm1530, %v2640, 0
  %v2720 = vsel %vm1530, %v2642, 0
  %v2723 = vsel %vm1530, %v2644, 0
  %2725 = vmatpush.msra.mxu0 %v2690
  %2726 = vmatpush.msra.mxu0 %v2687
  %2727 = vmatpush.msra.mxu0 %v2684
  %2728 = vmatpush.msra.mxu0 %v2681
  %2729 = vmatpush.msra.mxu0 %v2678
  %2730 = vmatpush.msra.mxu0 %v2675
  %2731 = vmatpush.msra.mxu0 %v2672
  %2732 = vmatpush.msra.mxu0 %v2669
  %2733 = vmatpush.msra.mxu0 %v2666
  %2734 = vmatpush.msra.mxu0 %v2663
  %2735 = vmatpush.msra.mxu0 %v2660
  %2736 = vmatpush.msra.mxu0 %v2657
  %2737 = vmatpush.msra.mxu0 %v2654
  %2738 = vmatpush.msra.mxu0 %v2651
  %2739 = vmatpush.msra.mxu0 %v2648
  %2740 = vmatpush.msra.mxu0 %v2645
  %2741 = vmatmul.f32.gmra.mxu0 %v2637
  %v2742 = vpop.f32.mrf.mxu0
  %v2743 = vadd.f32 %v2707, %v2742
  %2744 = vmatmul.f32.gmra.mxu0 %v2639
  %v2745 = vpop.f32.mrf.mxu0
  %v2746 = vadd.f32 %v2707, %v2745
  %2747 = vmatmul.f32.gmra.mxu0 %v2641
  %v2748 = vpop.f32.mrf.mxu0
  %v2749 = vadd.f32 %v2707, %v2748
  %2750 = vmatmul.f32.gmra.mxu0 %v2643
  %v2751 = vpop.f32.mrf.mxu0
  %v2752 = vadd.f32 %v2707, %v2751
  %2753 = vdwg.mxu0
  %2754 = vmatpush.msra.mxu0 0.0
  %2755 = vmatpush.msra.mxu0 0.0
  %2756 = vmatpush.msra.mxu0 0.0
  %2757 = vmatpush.msra.mxu0 0.0
  %2758 = vmatpush.msra.mxu0 0.0
  %2759 = vmatpush.msra.mxu0 0.0
  %2760 = vmatpush.msra.mxu0 0.0
  %2761 = vmatpush.msra.mxu0 0.0
  %2762 = vmatpush.msra.mxu0 0.0
  %2763 = vmatpush.msra.mxu0 0.0
  %2764 = vmatpush.msra.mxu0 0.0
  %2765 = vmatpush.msra.mxu0 0.0
  %2766 = vmatpush.msra.mxu0 %v2702
  %2767 = vmatpush.msra.mxu0 %v2699
  %2768 = vmatpush.msra.mxu0 %v2696
  %2769 = vmatpush.msra.mxu0 %v2693
  %2770 = vmatmul.f32.gmra.mxu0 %v2714
  %v2771 = vpop.f32.mrf.mxu0
  %v2772 = vadd.f32 %v2743, %v2771
  %2773 = vmatmul.f32.gmra.mxu0 %v2717
  %v2774 = vpop.f32.mrf.mxu0
  %v2775 = vadd.f32 %v2746, %v2774
  %2776 = vmatmul.f32.gmra.mxu0 %v2720
  %v2777 = vpop.f32.mrf.mxu0
  %v2778 = vadd.f32 %v2749, %v2777
  %2779 = vmatmul.f32.gmra.mxu0 %v2723
  %v2780 = vpop.f32.mrf.mxu0
  %v2781 = vadd.f32 %v2752, %v2780
  %2782 = vdwg.mxu0
  %2783 = vmatpush.msra.mxu0 %v2691
  %2784 = vmatpush.msra.mxu0 %v2688
  %2785 = vmatpush.msra.mxu0 %v2685
  %2786 = vmatpush.msra.mxu0 %v2682
  %2787 = vmatpush.msra.mxu0 %v2679
  %2788 = vmatpush.msra.mxu0 %v2676
  %2789 = vmatpush.msra.mxu0 %v2673
  %2790 = vmatpush.msra.mxu0 %v2670
  %2791 = vmatpush.msra.mxu0 %v2667
  %2792 = vmatpush.msra.mxu0 %v2664
  %2793 = vmatpush.msra.mxu0 %v2661
  %2794 = vmatpush.msra.mxu0 %v2658
  %2795 = vmatpush.msra.mxu0 %v2655
  %2796 = vmatpush.msra.mxu0 %v2652
  %2797 = vmatpush.msra.mxu0 %v2649
  %2798 = vmatpush.msra.mxu0 %v2646
  %2799 = vmatmul.f32.gmra.mxu0 %v2637
  %v2800 = vpop.f32.mrf.mxu0
  %v2801 = vadd.f32 %v2708, %v2800
  %2802 = vmatmul.f32.gmra.mxu0 %v2639
  %v2803 = vpop.f32.mrf.mxu0
  %v2804 = vadd.f32 %v2708, %v2803
  %2805 = vmatmul.f32.gmra.mxu0 %v2641
  %v2806 = vpop.f32.mrf.mxu0
  %v2807 = vadd.f32 %v2708, %v2806
  %2808 = vmatmul.f32.gmra.mxu0 %v2643
  %v2809 = vpop.f32.mrf.mxu0
  %v2810 = vadd.f32 %v2708, %v2809
  %2811 = vdwg.mxu0
  %2812 = vmatpush.msra.mxu0 0.0
  %2813 = vmatpush.msra.mxu0 0.0
  %2814 = vmatpush.msra.mxu0 0.0
  %2815 = vmatpush.msra.mxu0 0.0
  %2816 = vmatpush.msra.mxu0 0.0
  %2817 = vmatpush.msra.mxu0 0.0
  %2818 = vmatpush.msra.mxu0 0.0
  %2819 = vmatpush.msra.mxu0 0.0
  %2820 = vmatpush.msra.mxu0 0.0
  %2821 = vmatpush.msra.mxu0 0.0
  %2822 = vmatpush.msra.mxu0 0.0
  %2823 = vmatpush.msra.mxu0 0.0
  %2824 = vmatpush.msra.mxu0 %v2703
  %2825 = vmatpush.msra.mxu0 %v2700
  %2826 = vmatpush.msra.mxu0 %v2697
  %2827 = vmatpush.msra.mxu0 %v2694
  %2828 = vmatmul.f32.gmra.mxu0 %v2714
  %v2829 = vpop.f32.mrf.mxu0
  %v2830 = vadd.f32 %v2801, %v2829
  %2831 = vmatmul.f32.gmra.mxu0 %v2717
  %v2832 = vpop.f32.mrf.mxu0
  %v2833 = vadd.f32 %v2804, %v2832
  %2834 = vmatmul.f32.gmra.mxu0 %v2720
  %v2835 = vpop.f32.mrf.mxu0
  %v2836 = vadd.f32 %v2807, %v2835
  %2837 = vmatmul.f32.gmra.mxu0 %v2723
  %v2838 = vpop.f32.mrf.mxu0
  %v2839 = vadd.f32 %v2810, %v2838
  %2840 = vdwg.mxu0
  %2841 = vmatpush.msra.mxu0 %v2692
  %2842 = vmatpush.msra.mxu0 %v2689
  %2843 = vmatpush.msra.mxu0 %v2686
  %2844 = vmatpush.msra.mxu0 %v2683
  %2845 = vmatpush.msra.mxu0 %v2680
  %2846 = vmatpush.msra.mxu0 %v2677
  %2847 = vmatpush.msra.mxu0 %v2674
  %2848 = vmatpush.msra.mxu0 %v2671
  %2849 = vmatpush.msra.mxu0 %v2668
  %2850 = vmatpush.msra.mxu0 %v2665
  %2851 = vmatpush.msra.mxu0 %v2662
  %2852 = vmatpush.msra.mxu0 %v2659
  %2853 = vmatpush.msra.mxu0 %v2656
  %2854 = vmatpush.msra.mxu0 %v2653
  %2855 = vmatpush.msra.mxu0 %v2650
  %2856 = vmatpush.msra.mxu0 %v2647
  %2857 = vmatmul.f32.gmra.mxu0 %v2637
  %v2858 = vpop.f32.mrf.mxu0
  %v2859 = vadd.f32 %v2709, %v2858
  %2860 = vmatmul.f32.gmra.mxu0 %v2639
  %v2861 = vpop.f32.mrf.mxu0
  %v2862 = vadd.f32 %v2709, %v2861
  %2863 = vmatmul.f32.gmra.mxu0 %v2641
  %v2864 = vpop.f32.mrf.mxu0
  %v2865 = vadd.f32 %v2709, %v2864
  %2866 = vmatmul.f32.gmra.mxu0 %v2643
  %v2867 = vpop.f32.mrf.mxu0
  %v2868 = vadd.f32 %v2709, %v2867
  %2869 = vdwg.mxu0
  %2870 = vmatpush.msra.mxu0 0.0
  %2871 = vmatpush.msra.mxu0 0.0
  %2872 = vmatpush.msra.mxu0 0.0
  %2873 = vmatpush.msra.mxu0 0.0
  %2874 = vmatpush.msra.mxu0 0.0
  %2875 = vmatpush.msra.mxu0 0.0
  %2876 = vmatpush.msra.mxu0 0.0
  %2877 = vmatpush.msra.mxu0 0.0
  %2878 = vmatpush.msra.mxu0 0.0
  %2879 = vmatpush.msra.mxu0 0.0
  %2880 = vmatpush.msra.mxu0 0.0
  %2881 = vmatpush.msra.mxu0 0.0
  %2882 = vmatpush.msra.mxu0 %v2704
  %2883 = vmatpush.msra.mxu0 %v2701
  %2884 = vmatpush.msra.mxu0 %v2698
  %2885 = vmatpush.msra.mxu0 %v2695
  %2886 = vmatmul.f32.gmra.mxu0 %v2714
  %v2887 = vpop.f32.mrf.mxu0
  %v2888 = vadd.f32 %v2859, %v2887
  %2889 = vmatmul.f32.gmra.mxu0 %v2717
  %v2890 = vpop.f32.mrf.mxu0
  %v2891 = vadd.f32 %v2862, %v2890
  %2892 = vmatmul.f32.gmra.mxu0 %v2720
  %v2893 = vpop.f32.mrf.mxu0
  %v2894 = vadd.f32 %v2865, %v2893
  %2895 = vmatmul.f32.gmra.mxu0 %v2723
  %v2896 = vpop.f32.mrf.mxu0
  %v2897 = vadd.f32 %v2868, %v2896
  %2898 = vdwg.mxu0
  %s2899 = scalar_lea.vmem %s17, 480
  %v2900 = vld [vmem:[%s2899] sm:$0xff]
  %v2901 = vld [vmem:[%s2899 + $0x8] sm:$0xff]
  %v2902 = vld [vmem:[%s2899 + $0x10] sm:$0xff]
  %v2903 = vld [vmem:[%s2899 + $0x18] sm:$0xff]
  %v2904 = vld [vmem:[%s2899 + $0x20] sm:$0xff]
  %v2905 = vld [vmem:[%s2899 + $0x28] sm:$0xff]
  %v2906 = vld [vmem:[%s2899 + $0x30] sm:$0xff]
  %v2907 = vld [vmem:[%s2899 + $0x38] sm:$0xff]
  %v2908 = vld [vmem:[%s2899 + $0x40] sm:$0xff]
  %v2909 = vld [vmem:[%s2899 + $0x48] sm:$0xff]
  %v2910 = vld [vmem:[%s2899 + $0x50] sm:$0xff]
  %v2911 = vld [vmem:[%s2899 + $0x58] sm:$0xff]
  %v2912 = vld [vmem:[%s2899 + $0x60] sm:$0xff]
  %v2913 = vld [vmem:[%s2899 + $0x68] sm:$0xff]
  %v2914 = vld [vmem:[%s2899 + $0x70] sm:$0xff]
  %v2915 = vld [vmem:[%s2899 + $0x78] sm:$0xff]
  %v2916 = vld [vmem:[%s2899 + $0x80] sm:$0xff]
  %v2917 = vld [vmem:[%s2899 + $0x88] sm:$0xff]
  %v2918 = vld [vmem:[%s2899 + $0x90] sm:$0xff]
  %v2919 = vld [vmem:[%s2899 + $0x98] sm:$0xff]
  %v2920 = vld [vmem:[%s2899 + $0xa0] sm:$0xff]
  %v2921 = vld [vmem:[%s2899 + $0xa8] sm:$0xff]
  %v2922 = vld [vmem:[%s2899 + $0xb0] sm:$0xff]
  %v2923 = vld [vmem:[%s2899 + $0xb8] sm:$0xff]
  %v2924 = vld [vmem:[%s2899 + $0xc0] sm:$0xff]
  %v2925 = vld [vmem:[%s2899 + $0xc8] sm:$0xff]
  %v2926 = vld [vmem:[%s2899 + $0xd0] sm:$0xff]
  %v2927 = vld [vmem:[%s2899 + $0xd8] sm:$0xff]
  %v2928 = vld [vmem:[%s2899 + $0xe0] sm:$0xff]
  %v2929 = vld [vmem:[%s2899 + $0xe8] sm:$0xff]
  %v2930 = vld [vmem:[%s2899 + $0xf0] sm:$0xff]
  %v2931 = vld [vmem:[%s2899 + $0xf8] sm:$0xff]
  %v2932 = vld [vmem:[%s2899 + $0x100] sm:$0xff]
  %v2933 = vld [vmem:[%s2899 + $0x108] sm:$0xff]
  %v2934 = vld [vmem:[%s2899 + $0x110] sm:$0xff]
  %v2935 = vld [vmem:[%s2899 + $0x118] sm:$0xff]
  %v2936 = vld [vmem:[%s2899 + $0x120] sm:$0xff]
  %v2937 = vld [vmem:[%s2899 + $0x128] sm:$0xff]
  %v2938 = vld [vmem:[%s2899 + $0x130] sm:$0xff]
  %v2939 = vld [vmem:[%s2899 + $0x138] sm:$0xff]
  %v2940 = vld [vmem:[%s2899 + $0x140] sm:$0xff]
  %v2941 = vld [vmem:[%s2899 + $0x148] sm:$0xff]
  %v2942 = vld [vmem:[%s2899 + $0x150] sm:$0xff]
  %v2943 = vld [vmem:[%s2899 + $0x158] sm:$0xff]
  %v2944 = vld [vmem:[%s2899 + $0x160] sm:$0xff]
  %v2945 = vld [vmem:[%s2899 + $0x168] sm:$0xff]
  %v2946 = vld [vmem:[%s2899 + $0x170] sm:$0xff]
  %v2947 = vld [vmem:[%s2899 + $0x178] sm:$0xff]
  %v2948 = vld [vmem:[%s2899 + $0x180] sm:$0xff]
  %v2949 = vld [vmem:[%s2899 + $0x188] sm:$0xff]
  %v2950 = vld [vmem:[%s2899 + $0x190] sm:$0xff]
  %v2951 = vld [vmem:[%s2899 + $0x198] sm:$0xff]
  %v2952 = vld [vmem:[%s2899 + $0x1a0] sm:$0xff]
  %v2953 = vld [vmem:[%s2899 + $0x1a8] sm:$0xff]
  %v2954 = vld [vmem:[%s2899 + $0x1b0] sm:$0xff]
  %v2955 = vld [vmem:[%s2899 + $0x1b8] sm:$0xff]
  %v2956 = vld [vmem:[%s2899 + $0x1c0] sm:$0xff]
  %v2957 = vld [vmem:[%s2899 + $0x1c8] sm:$0xff]
  %v2958 = vld [vmem:[%s2899 + $0x1d0] sm:$0xff]
  %v2959 = vld [vmem:[%s2899 + $0x1d8] sm:$0xff]
  %2960 = vmatpush.msra.mxu0 %v2945
  %2961 = vmatpush.msra.mxu0 %v2942
  %2962 = vmatpush.msra.mxu0 %v2939
  %2963 = vmatpush.msra.mxu0 %v2936
  %2964 = vmatpush.msra.mxu0 %v2933
  %2965 = vmatpush.msra.mxu0 %v2930
  %2966 = vmatpush.msra.mxu0 %v2927
  %2967 = vmatpush.msra.mxu0 %v2924
  %2968 = vmatpush.msra.mxu0 %v2921
  %2969 = vmatpush.msra.mxu0 %v2918
  %2970 = vmatpush.msra.mxu0 %v2915
  %2971 = vmatpush.msra.mxu0 %v2912
  %2972 = vmatpush.msra.mxu0 %v2909
  %2973 = vmatpush.msra.mxu0 %v2906
  %2974 = vmatpush.msra.mxu0 %v2903
  %2975 = vmatpush.msra.mxu0 %v2900
  %2976 = vmatmul.f32.gmra.mxu0 %v2637
  %v2977 = vpop.f32.mrf.mxu0
  %v2978 = vadd.f32 %v2707, %v2977
  %2979 = vmatmul.f32.gmra.mxu0 %v2639
  %v2980 = vpop.f32.mrf.mxu0
  %v2981 = vadd.f32 %v2707, %v2980
  %2982 = vmatmul.f32.gmra.mxu0 %v2641
  %v2983 = vpop.f32.mrf.mxu0
  %v2984 = vadd.f32 %v2707, %v2983
  %2985 = vmatmul.f32.gmra.mxu0 %v2643
  %v2986 = vpop.f32.mrf.mxu0
  %v2987 = vadd.f32 %v2707, %v2986
  %2988 = vdwg.mxu0
  %2989 = vmatpush.msra.mxu0 0.0
  %2990 = vmatpush.msra.mxu0 0.0
  %2991 = vmatpush.msra.mxu0 0.0
  %2992 = vmatpush.msra.mxu0 0.0
  %2993 = vmatpush.msra.mxu0 0.0
  %2994 = vmatpush.msra.mxu0 0.0
  %2995 = vmatpush.msra.mxu0 0.0
  %2996 = vmatpush.msra.mxu0 0.0
  %2997 = vmatpush.msra.mxu0 0.0
  %2998 = vmatpush.msra.mxu0 0.0
  %2999 = vmatpush.msra.mxu0 0.0
  %3000 = vmatpush.msra.mxu0 0.0
  %3001 = vmatpush.msra.mxu0 %v2957
  %3002 = vmatpush.msra.mxu0 %v2954
  %3003 = vmatpush.msra.mxu0 %v2951
  %3004 = vmatpush.msra.mxu0 %v2948
  %3005 = vmatmul.f32.gmra.mxu0 %v2714
  %v3006 = vpop.f32.mrf.mxu0
  %v3007 = vadd.f32 %v2978, %v3006
  %3008 = vmatmul.f32.gmra.mxu0 %v2717
  %v3009 = vpop.f32.mrf.mxu0
  %v3010 = vadd.f32 %v2981, %v3009
  %3011 = vmatmul.f32.gmra.mxu0 %v2720
  %v3012 = vpop.f32.mrf.mxu0
  %v3013 = vadd.f32 %v2984, %v3012
  %3014 = vmatmul.f32.gmra.mxu0 %v2723
  %v3015 = vpop.f32.mrf.mxu0
  %v3016 = vadd.f32 %v2987, %v3015
  %3017 = vdwg.mxu0
  %3018 = vmatpush.msra.mxu0 %v2946
  %3019 = vmatpush.msra.mxu0 %v2943
  %3020 = vmatpush.msra.mxu0 %v2940
  %3021 = vmatpush.msra.mxu0 %v2937
  %3022 = vmatpush.msra.mxu0 %v2934
  %3023 = vmatpush.msra.mxu0 %v2931
  %3024 = vmatpush.msra.mxu0 %v2928
  %3025 = vmatpush.msra.mxu0 %v2925
  %3026 = vmatpush.msra.mxu0 %v2922
  %3027 = vmatpush.msra.mxu0 %v2919
  %3028 = vmatpush.msra.mxu0 %v2916
  %3029 = vmatpush.msra.mxu0 %v2913
  %3030 = vmatpush.msra.mxu0 %v2910
  %3031 = vmatpush.msra.mxu0 %v2907
  %3032 = vmatpush.msra.mxu0 %v2904
  %3033 = vmatpush.msra.mxu0 %v2901
  %3034 = vmatmul.f32.gmra.mxu0 %v2637
  %v3035 = vpop.f32.mrf.mxu0
  %v3036 = vadd.f32 %v2708, %v3035
  %3037 = vmatmul.f32.gmra.mxu0 %v2639
  %v3038 = vpop.f32.mrf.mxu0
  %v3039 = vadd.f32 %v2708, %v3038
  %3040 = vmatmul.f32.gmra.mxu0 %v2641
  %v3041 = vpop.f32.mrf.mxu0
  %v3042 = vadd.f32 %v2708, %v3041
  %3043 = vmatmul.f32.gmra.mxu0 %v2643
  %v3044 = vpop.f32.mrf.mxu0
  %v3045 = vadd.f32 %v2708, %v3044
  %3046 = vdwg.mxu0
  %3047 = vmatpush.msra.mxu0 0.0
  %3048 = vmatpush.msra.mxu0 0.0
  %3049 = vmatpush.msra.mxu0 0.0
  %3050 = vmatpush.msra.mxu0 0.0
  %3051 = vmatpush.msra.mxu0 0.0
  %3052 = vmatpush.msra.mxu0 0.0
  %3053 = vmatpush.msra.mxu0 0.0
  %3054 = vmatpush.msra.mxu0 0.0
  %3055 = vmatpush.msra.mxu0 0.0
  %3056 = vmatpush.msra.mxu0 0.0
  %3057 = vmatpush.msra.mxu0 0.0
  %3058 = vmatpush.msra.mxu0 0.0
  %3059 = vmatpush.msra.mxu0 %v2958
  %3060 = vmatpush.msra.mxu0 %v2955
  %3061 = vmatpush.msra.mxu0 %v2952
  %3062 = vmatpush.msra.mxu0 %v2949
  %3063 = vmatmul.f32.gmra.mxu0 %v2714
  %v3064 = vpop.f32.mrf.mxu0
  %v3065 = vadd.f32 %v3036, %v3064
  %3066 = vmatmul.f32.gmra.mxu0 %v2717
  %v3067 = vpop.f32.mrf.mxu0
  %v3068 = vadd.f32 %v3039, %v3067
  %3069 = vmatmul.f32.gmra.mxu0 %v2720
  %v3070 = vpop.f32.mrf.mxu0
  %v3071 = vadd.f32 %v3042, %v3070
  %3072 = vmatmul.f32.gmra.mxu0 %v2723
  %v3073 = vpop.f32.mrf.mxu0
  %v3074 = vadd.f32 %v3045, %v3073
  %3075 = vdwg.mxu0
  %3076 = vmatpush.msra.mxu0 %v2947
  %3077 = vmatpush.msra.mxu0 %v2944
  %3078 = vmatpush.msra.mxu0 %v2941
  %3079 = vmatpush.msra.mxu0 %v2938
  %3080 = vmatpush.msra.mxu0 %v2935
  %3081 = vmatpush.msra.mxu0 %v2932
  %3082 = vmatpush.msra.mxu0 %v2929
  %3083 = vmatpush.msra.mxu0 %v2926
  %3084 = vmatpush.msra.mxu0 %v2923
  %3085 = vmatpush.msra.mxu0 %v2920
  %3086 = vmatpush.msra.mxu0 %v2917
  %3087 = vmatpush.msra.mxu0 %v2914
  %3088 = vmatpush.msra.mxu0 %v2911
  %3089 = vmatpush.msra.mxu0 %v2908
  %3090 = vmatpush.msra.mxu0 %v2905
  %3091 = vmatpush.msra.mxu0 %v2902
  %3092 = vmatmul.f32.gmra.mxu0 %v2637
  %v3093 = vpop.f32.mrf.mxu0
  %v3094 = vadd.f32 %v2709, %v3093
  %3095 = vmatmul.f32.gmra.mxu0 %v2639
  %v3096 = vpop.f32.mrf.mxu0
  %v3097 = vadd.f32 %v2709, %v3096
  %3098 = vmatmul.f32.gmra.mxu0 %v2641
  %v3099 = vpop.f32.mrf.mxu0
  %v3100 = vadd.f32 %v2709, %v3099
  %3101 = vmatmul.f32.gmra.mxu0 %v2643
  %v3102 = vpop.f32.mrf.mxu0
  %v3103 = vadd.f32 %v2709, %v3102
  %3104 = vdwg.mxu0
  %3105 = vmatpush.msra.mxu0 0.0
  %3106 = vmatpush.msra.mxu0 0.0
  %3107 = vmatpush.msra.mxu0 0.0
  %3108 = vmatpush.msra.mxu0 0.0
  %3109 = vmatpush.msra.mxu0 0.0
  %3110 = vmatpush.msra.mxu0 0.0
  %3111 = vmatpush.msra.mxu0 0.0
  %3112 = vmatpush.msra.mxu0 0.0
  %3113 = vmatpush.msra.mxu0 0.0
  %3114 = vmatpush.msra.mxu0 0.0
  %3115 = vmatpush.msra.mxu0 0.0
  %3116 = vmatpush.msra.mxu0 0.0
  %3117 = vmatpush.msra.mxu0 %v2959
  %3118 = vmatpush.msra.mxu0 %v2956
  %3119 = vmatpush.msra.mxu0 %v2953
  %3120 = vmatpush.msra.mxu0 %v2950
  %3121 = vmatmul.f32.gmra.mxu0 %v2714
  %v3122 = vpop.f32.mrf.mxu0
  %v3123 = vadd.f32 %v3094, %v3122
  %3124 = vmatmul.f32.gmra.mxu0 %v2717
  %v3125 = vpop.f32.mrf.mxu0
  %v3126 = vadd.f32 %v3097, %v3125
  %3127 = vmatmul.f32.gmra.mxu0 %v2720
  %v3128 = vpop.f32.mrf.mxu0
  %v3129 = vadd.f32 %v3100, %v3128
  %3130 = vmatmul.f32.gmra.mxu0 %v2723
  %v3131 = vpop.f32.mrf.mxu0
  %v3132 = vadd.f32 %v3103, %v3131
  %3133 = vdwg.mxu0
  %vm3134 = vcmp.lt.s32.totalorder %v1013, 340
  %vm3135 = vmand %vm1014, %vm3134
  %3136 = vst.msk [vmem:[#allocation4] ss:$8 sm:$0x7] %vm3135, 0.0
  %3137 = vst.msk [vmem:[#allocation4] ss:$8 sm:$0x0] %vm3135, 0.0
  %s3138 = scalar_lea.vmem [#allocation4], 120
  %3139 = vst.msk [vmem:[%s3138] ss:$8 sm:$0x7] %vm3135, 0.0
  %3140 = vst.msk [vmem:[%s3138] ss:$8 sm:$0x0] %vm3135, 0.0
  %s3141 = scalar_lea.vmem [#allocation4], 97
  %3142 = vst.msk [vmem:[%s3141] ss:$8 sm:$0x7] %vm3135, 0.0
  %3143 = vst.msk [vmem:[%s3141] ss:$8 sm:$0x0] %vm3135, 0.0
  %s3144 = scalar_lea.vmem [#allocation4], 217
  %3145 = vst.msk [vmem:[%s3144] ss:$8 sm:$0x7] %vm3135, 0.0
  %3146 = vst.msk [vmem:[%s3144] ss:$8 sm:$0x0] %vm3135, 0.0
  %v3153 = vrot.slane %v2830, 7
  %v3154 = vrot.slane %v2888, 6
  %v3155 = vrot.slane %v2836, 7
  %v3156 = vrot.slane %v2894, 6
  %v3157 = vsel %vm1038, %v2772, %v3153
  %v3158 = vsel %vm101, %v3157, %v3154
  %v3159 = vsel %vm1038, %v2778, %v3155
  %v3160 = vsel %vm101, %v3159, %v3156
  %s3163 = scalar_lea.vmem [#allocation4], 1
  %3164 = vst.msk [vmem:[%s3163] ss:$8 sm:$0x7] %vm3135, %v3158
  %3165 = vst.msk [vmem:[%s3163] ss:$8 sm:$0x0] %vm3135, %v3158
  %s3166 = scalar_lea.vmem [#allocation4], 121
  %3167 = vst.msk [vmem:[%s3166] ss:$8 sm:$0x7] %vm3135, %v3160
  %3168 = vst.msk [vmem:[%s3166] ss:$8 sm:$0x0] %vm3135, %v3160
  %v3175 = vrot.slane %v3065, 7
  %v3176 = vrot.slane %v3123, 6
  %v3177 = vrot.slane %v3071, 7
  %v3178 = vrot.slane %v3129, 6
  %v3179 = vsel %vm1038, %v3007, %v3175
  %v3180 = vsel %vm101, %v3179, %v3176
  %v3181 = vsel %vm1038, %v3013, %v3177
  %v3182 = vsel %vm101, %v3181, %v3178
  %s3185 = scalar_lea.vmem [#allocation4], 2
  %3186 = vst.msk [vmem:[%s3185] ss:$8 sm:$0x7] %vm3135, %v3180
  %3187 = vst.msk [vmem:[%s3185] ss:$8 sm:$0x0] %vm3135, %v3180
  %s3188 = scalar_lea.vmem [#allocation4], 122
  %3189 = vst.msk [vmem:[%s3188] ss:$8 sm:$0x7] %vm3135, %v3182
  %3190 = vst.msk [vmem:[%s3188] ss:$8 sm:$0x0] %vm3135, %v3182
  %3191 = vst [vmem:[#allocation1] sm:$0xff] %v2772
  %3192 = vst [vmem:[#allocation1 + $0x9] sm:$0xff] %v2830
  %3193 = vst [vmem:[#allocation1 + $0x12] sm:$0xff] %v2888
  %s3194 = scalar_lea.vmem [#allocation1], 1
  %v3195 = vld [vmem:[%s3194] ss:$9 sm:$0xff]
  %3196 = vst [vmem:[#allocation1] sm:$0xff] %v2778
  %3197 = vst [vmem:[#allocation1 + $0x9] sm:$0xff] %v2836
  %3198 = vst [vmem:[#allocation1 + $0x12] sm:$0xff] %v2894
  %v3199 = vld [vmem:[%s3194] ss:$9 sm:$0xff]
  %s3202 = scalar_lea.vmem [#allocation4], 3
  %3203 = vst.msk [vmem:[%s3202] ss:$8 sm:$0x7] %vm3135, %v3195
  %3204 = vst.msk [vmem:[%s3202] ss:$8 sm:$0x0] %vm3135, %v3195
  %s3205 = scalar_lea.vmem [#allocation4], 123
  %3206 = vst.msk [vmem:[%s3205] ss:$8 sm:$0x7] %vm3135, %v3199
  %3207 = vst.msk [vmem:[%s3205] ss:$8 sm:$0x0] %vm3135, %v3199
  %3208 = vst [vmem:[#allocation1] sm:$0xff] %v3007
  %3209 = vst [vmem:[#allocation1 + $0x9] sm:$0xff] %v3065
  %3210 = vst [vmem:[#allocation1 + $0x12] sm:$0xff] %v3123
  %s3211 = scalar_lea.vmem [#allocation1], 1
  %v3212 = vld [vmem:[%s3211] ss:$9 sm:$0xff]
  %3213 = vst [vmem:[#allocation1] sm:$0xff] %v3013
  %3214 = vst [vmem:[#allocation1 + $0x9] sm:$0xff] %v3071
  %3215 = vst [vmem:[#allocation1 + $0x12] sm:$0xff] %v3129
  %v3216 = vld [vmem:[%s3211] ss:$9 sm:$0xff]
  %s3219 = scalar_lea.vmem [#allocation4], 4
  %3220 = vst.msk [vmem:[%s3219] ss:$8 sm:$0x7] %vm3135, %v3212
  %3221 = vst.msk [vmem:[%s3219] ss:$8 sm:$0x0] %vm3135, %v3212
  %s3222 = scalar_lea.vmem [#allocation4], 124
  %3223 = vst.msk [vmem:[%s3222] ss:$8 sm:$0x7] %vm3135, %v3216
  %3224 = vst.msk [vmem:[%s3222] ss:$8 sm:$0x0] %vm3135, %v3216
  %3225 = vst [vmem:[#allocation1] sm:$0xff] %v2772
  %3226 = vst [vmem:[#allocation1 + $0x9] sm:$0xff] %v2830
  %3227 = vst [vmem:[#allocation1 + $0x12] sm:$0xff] %v2888
  %s3228 = scalar_lea.vmem [#allocation1], 2
  %v3229 = vld [vmem:[%s3228] ss:$9 sm:$0xff]
  %3230 = vst [vmem:[#allocation1] sm:$0xff] %v2778
  %3231 = vst [vmem:[#allocation1 + $0x9] sm:$0xff] %v2836
  %3232 = vst [vmem:[#allocation1 + $0x12] sm:$0xff] %v2894
  %v3233 = vld [vmem:[%s3228] ss:$9 sm:$0xff]
  %s3236 = scalar_lea.vmem [#allocation4], 5
  %3237 = vst.msk [vmem:[%s3236] ss:$8 sm:$0x7] %vm3135, %v3229
  %3238 = vst.msk [vmem:[%s3236] ss:$8 sm:$0x0] %vm3135, %v3229
  %s3239 = scalar_lea.vmem [#allocation4], 125
  %3240 = vst.msk [vmem:[%s3239] ss:$8 sm:$0x7] %vm3135, %v3233
  %3241 = vst.msk [vmem:[%s3239] ss:$8 sm:$0x0] %vm3135, %v3233
  %3242 = vst [vmem:[#allocation1] sm:$0xff] %v3007
  %3243 = vst [vmem:[#allocation1 + $0x9] sm:$0xff] %v3065
  %3244 = vst [vmem:[#allocation1 + $0x12] sm:$0xff] %v3123
  %s3245 = scalar_lea.vmem [#allocation1], 2
  %v3246 = vld [vmem:[%s3245] ss:$9 sm:$0xff]
  %3247 = vst [vmem:[#allocation1] sm:$0xff] %v3013
  %3248 = vst [vmem:[#allocation1 + $0x9] sm:$0xff] %v3071
  %3249 = vst [vmem:[#allocation1 + $0x12] sm:$0xff] %v3129
  %v3250 = vld [vmem:[%s3245] ss:$9 sm:$0xff]
  %s3253 = scalar_lea.vmem [#allocation4], 6
  %3254 = vst.msk [vmem:[%s3253] ss:$8 sm:$0x7] %vm3135, %v3246
  %3255 = vst.msk [vmem:[%s3253] ss:$8 sm:$0x0] %vm3135, %v3246
  %s3256 = scalar_lea.vmem [#allocation4], 126
  %3257 = vst.msk [vmem:[%s3256] ss:$8 sm:$0x7] %vm3135, %v3250
  %3258 = vst.msk [vmem:[%s3256] ss:$8 sm:$0x0] %vm3135, %v3250
  %3259 = vst [vmem:[#allocation1] sm:$0xff] %v2772
  %3260 = vst [vmem:[#allocation1 + $0x9] sm:$0xff] %v2830
  %3261 = vst [vmem:[#allocation1 + $0x12] sm:$0xff] %v2888
  %s3262 = scalar_lea.vmem [#allocation1], 3
  %v3263 = vld [vmem:[%s3262] ss:$9 sm:$0xff]
  %3264 = vst [vmem:[#allocation1] sm:$0xff] %v2778
  %3265 = vst [vmem:[#allocation1 + $0x9] sm:$0xff] %v2836
  %3266 = vst [vmem:[#allocation1 + $0x12] sm:$0xff] %v2894
  %v3267 = vld [vmem:[%s3262] ss:$9 sm:$0xff]
  %s3270 = scalar_lea.vmem [#allocation4], 7
  %3271 = vst.msk [vmem:[%s3270] ss:$8 sm:$0x7] %vm3135, %v3263
  %3272 = vst.msk [vmem:[%s3270] ss:$8 sm:$0x0] %vm3135, %v3263
  %s3273 = scalar_lea.vmem [#allocation4], 127
  %3274 = vst.msk [vmem:[%s3273] ss:$8 sm:$0x7] %vm3135, %v3267
  %3275 = vst.msk [vmem:[%s3273] ss:$8 sm:$0x0] %vm3135, %v3267
  %3276 = vst [vmem:[#allocation1] sm:$0xff] %v3007
  %3277 = vst [vmem:[#allocation1 + $0x9] sm:$0xff] %v3065
  %3278 = vst [vmem:[#allocation1 + $0x12] sm:$0xff] %v3123
  %s3279 = scalar_lea.vmem [#allocation1], 3
  %v3280 = vld [vmem:[%s3279] ss:$9 sm:$0xff]
  %3281 = vst [vmem:[#allocation1] sm:$0xff] %v3013
  %3282 = vst [vmem:[#allocation1 + $0x9] sm:$0xff] %v3071
  %3283 = vst [vmem:[#allocation1 + $0x12] sm:$0xff] %v3129
  %v3284 = vld [vmem:[%s3279] ss:$9 sm:$0xff]
  %s3287 = scalar_lea.vmem [#allocation4], 24
  %3288 = vst.msk [vmem:[%s3287] ss:$8 sm:$0x7] %vm3135, %v3280
  %3289 = vst.msk [vmem:[%s3287] ss:$8 sm:$0x0] %vm3135, %v3280
  %s3290 = scalar_lea.vmem [#allocation4], 144
  %3291 = vst.msk [vmem:[%s3290] ss:$8 sm:$0x7] %vm3135, %v3284
  %3292 = vst.msk [vmem:[%s3290] ss:$8 sm:$0x0] %vm3135, %v3284
  %3293 = vst [vmem:[#allocation1] sm:$0xff] %v2772
  %3294 = vst [vmem:[#allocation1 + $0x9] sm:$0xff] %v2830
  %3295 = vst [vmem:[#allocation1 + $0x12] sm:$0xff] %v2888
  %s3296 = scalar_lea.vmem [#allocation1], 4
  %v3297 = vld [vmem:[%s3296] ss:$9 sm:$0xff]
  %3298 = vst [vmem:[#allocation1] sm:$0xff] %v2778
  %3299 = vst [vmem:[#allocation1 + $0x9] sm:$0xff] %v2836
  %3300 = vst [vmem:[#allocation1 + $0x12] sm:$0xff] %v2894
  %v3301 = vld [vmem:[%s3296] ss:$9 sm:$0xff]
  %s3304 = scalar_lea.vmem [#allocation4], 25
  %3305 = vst.msk [vmem:[%s3304] ss:$8 sm:$0x7] %vm3135, %v3297
  %3306 = vst.msk [vmem:[%s3304] ss:$8 sm:$0x0] %vm3135, %v3297
  %s3307 = scalar_lea.vmem [#allocation4], 145
  %3308 = vst.msk [vmem:[%s3307] ss:$8 sm:$0x7] %vm3135, %v3301
  %3309 = vst.msk [vmem:[%s3307] ss:$8 sm:$0x0] %vm3135, %v3301
  %3310 = vst [vmem:[#allocation1] sm:$0xff] %v3007
  %3311 = vst [vmem:[#allocation1 + $0x9] sm:$0xff] %v3065
  %3312 = vst [vmem:[#allocation1 + $0x12] sm:$0xff] %v3123
  %s3313 = scalar_lea.vmem [#allocation1], 4
  %v3314 = vld [vmem:[%s3313] ss:$9 sm:$0xff]
  %3315 = vst [vmem:[#allocation1] sm:$0xff] %v3013
  %3316 = vst [vmem:[#allocation1 + $0x9] sm:$0xff] %v3071
  %3317 = vst [vmem:[#allocation1 + $0x12] sm:$0xff] %v3129
  %v3318 = vld [vmem:[%s3313] ss:$9 sm:$0xff]
  %s3321 = scalar_lea.vmem [#allocation4], 26
  %3322 = vst.msk [vmem:[%s3321] ss:$8 sm:$0x7] %vm3135, %v3314
  %3323 = vst.msk [vmem:[%s3321] ss:$8 sm:$0x0] %vm3135, %v3314
  %s3324 = scalar_lea.vmem [#allocation4], 146
  %3325 = vst.msk [vmem:[%s3324] ss:$8 sm:$0x7] %vm3135, %v3318
  %3326 = vst.msk [vmem:[%s3324] ss:$8 sm:$0x0] %vm3135, %v3318
  %3327 = vst [vmem:[#allocation1] sm:$0xff] %v2772
  %3328 = vst [vmem:[#allocation1 + $0x9] sm:$0xff] %v2830
  %3329 = vst [vmem:[#allocation1 + $0x12] sm:$0xff] %v2888
  %s3330 = scalar_lea.vmem [#allocation1], 5
  %v3331 = vld [vmem:[%s3330] ss:$9 sm:$0xff]
  %3332 = vst [vmem:[#allocation1] sm:$0xff] %v2778
  %3333 = vst [vmem:[#allocation1 + $0x9] sm:$0xff] %v2836
  %3334 = vst [vmem:[#allocation1 + $0x12] sm:$0xff] %v2894
  %v3335 = vld [vmem:[%s3330] ss:$9 sm:$0xff]
  %s3338 = scalar_lea.vmem [#allocation4], 27
  %3339 = vst.msk [vmem:[%s3338] ss:$8 sm:$0x7] %vm3135, %v3331
  %3340 = vst.msk [vmem:[%s3338] ss:$8 sm:$0x0] %vm3135, %v3331
  %s3341 = scalar_lea.vmem [#allocation4], 147
  %3342 = vst.msk [vmem:[%s3341] ss:$8 sm:$0x7] %vm3135, %v3335
  %3343 = vst.msk [vmem:[%s3341] ss:$8 sm:$0x0] %vm3135, %v3335
  %3344 = vst [vmem:[#allocation1] sm:$0xff] %v3007
  %3345 = vst [vmem:[#allocation1 + $0x9] sm:$0xff] %v3065
  %3346 = vst [vmem:[#allocation1 + $0x12] sm:$0xff] %v3123
  %s3347 = scalar_lea.vmem [#allocation1], 5
  %v3348 = vld [vmem:[%s3347] ss:$9 sm:$0xff]
  %3349 = vst [vmem:[#allocation1] sm:$0xff] %v3013
  %3350 = vst [vmem:[#allocation1 + $0x9] sm:$0xff] %v3071
  %3351 = vst [vmem:[#allocation1 + $0x12] sm:$0xff] %v3129
  %v3352 = vld [vmem:[%s3347] ss:$9 sm:$0xff]
  %s3355 = scalar_lea.vmem [#allocation4], 28
  %3356 = vst.msk [vmem:[%s3355] ss:$8 sm:$0x7] %vm3135, %v3348
  %3357 = vst.msk [vmem:[%s3355] ss:$8 sm:$0x0] %vm3135, %v3348
  %s3358 = scalar_lea.vmem [#allocation4], 148
  %3359 = vst.msk [vmem:[%s3358] ss:$8 sm:$0x7] %vm3135, %v3352
  %3360 = vst.msk [vmem:[%s3358] ss:$8 sm:$0x0] %vm3135, %v3352
  %3361 = vst [vmem:[#allocation1] sm:$0xff] %v2772
  %3362 = vst [vmem:[#allocation1 + $0x9] sm:$0xff] %v2830
  %3363 = vst [vmem:[#allocation1 + $0x12] sm:$0xff] %v2888
  %s3364 = scalar_lea.vmem [#allocation1], 6
  %v3365 = vld [vmem:[%s3364] ss:$9 sm:$0xff]
  %3366 = vst [vmem:[#allocation1] sm:$0xff] %v2778
  %3367 = vst [vmem:[#allocation1 + $0x9] sm:$0xff] %v2836
  %3368 = vst [vmem:[#allocation1 + $0x12] sm:$0xff] %v2894
  %v3369 = vld [vmem:[%s3364] ss:$9 sm:$0xff]
  %s3372 = scalar_lea.vmem [#allocation4], 29
  %3373 = vst.msk [vmem:[%s3372] ss:$8 sm:$0x7] %vm3135, %v3365
  %3374 = vst.msk [vmem:[%s3372] ss:$8 sm:$0x0] %vm3135, %v3365
  %s3375 = scalar_lea.vmem [#allocation4], 149
  %3376 = vst.msk [vmem:[%s3375] ss:$8 sm:$0x7] %vm3135, %v3369
  %3377 = vst.msk [vmem:[%s3375] ss:$8 sm:$0x0] %vm3135, %v3369
  %3378 = vst [vmem:[#allocation1] sm:$0xff] %v3007
  %3379 = vst [vmem:[#allocation1 + $0x9] sm:$0xff] %v3065
  %3380 = vst [vmem:[#allocation1 + $0x12] sm:$0xff] %v3123
  %s3381 = scalar_lea.vmem [#allocation1], 6
  %v3382 = vld [vmem:[%s3381] ss:$9 sm:$0xff]
  %3383 = vst [vmem:[#allocation1] sm:$0xff] %v3013
  %3384 = vst [vmem:[#allocation1 + $0x9] sm:$0xff] %v3071
  %3385 = vst [vmem:[#allocation1 + $0x12] sm:$0xff] %v3129
  %v3386 = vld [vmem:[%s3381] ss:$9 sm:$0xff]
  %s3389 = scalar_lea.vmem [#allocation4], 30
  %3390 = vst.msk [vmem:[%s3389] ss:$8 sm:$0x7] %vm3135, %v3382
  %3391 = vst.msk [vmem:[%s3389] ss:$8 sm:$0x0] %vm3135, %v3382
  %s3392 = scalar_lea.vmem [#allocation4], 150
  %3393 = vst.msk [vmem:[%s3392] ss:$8 sm:$0x7] %vm3135, %v3386
  %3394 = vst.msk [vmem:[%s3392] ss:$8 sm:$0x0] %vm3135, %v3386
  %3395 = vst [vmem:[#allocation1] sm:$0xff] %v2772
  %3396 = vst [vmem:[#allocation1 + $0x9] sm:$0xff] %v2830
  %3397 = vst [vmem:[#allocation1 + $0x12] sm:$0xff] %v2888
  %s3398 = scalar_lea.vmem [#allocation1], 7
  %v3399 = vld [vmem:[%s3398] ss:$9 sm:$0xff]
  %3400 = vst [vmem:[#allocation1] sm:$0xff] %v2778
  %3401 = vst [vmem:[#allocation1 + $0x9] sm:$0xff] %v2836
  %3402 = vst [vmem:[#allocation1 + $0x12] sm:$0xff] %v2894
  %v3403 = vld [vmem:[%s3398] ss:$9 sm:$0xff]
  %s3406 = scalar_lea.vmem [#allocation4], 31
  %3407 = vst.msk [vmem:[%s3406] ss:$8 sm:$0x7] %vm3135, %v3399
  %3408 = vst.msk [vmem:[%s3406] ss:$8 sm:$0x0] %vm3135, %v3399
  %s3409 = scalar_lea.vmem [#allocation4], 151
  %3410 = vst.msk [vmem:[%s3409] ss:$8 sm:$0x7] %vm3135, %v3403
  %3411 = vst.msk [vmem:[%s3409] ss:$8 sm:$0x0] %vm3135, %v3403
  %3412 = vst [vmem:[#allocation1] sm:$0xff] %v3007
  %3413 = vst [vmem:[#allocation1 + $0x9] sm:$0xff] %v3065
  %3414 = vst [vmem:[#allocation1 + $0x12] sm:$0xff] %v3123
  %s3415 = scalar_lea.vmem [#allocation1], 7
  %v3416 = vld [vmem:[%s3415] ss:$9 sm:$0xff]
  %3417 = vst [vmem:[#allocation1] sm:$0xff] %v3013
  %3418 = vst [vmem:[#allocation1 + $0x9] sm:$0xff] %v3071
  %3419 = vst [vmem:[#allocation1 + $0x12] sm:$0xff] %v3129
  %v3420 = vld [vmem:[%s3415] ss:$9 sm:$0xff]
  %s3423 = scalar_lea.vmem [#allocation4], 48
  %3424 = vst.msk [vmem:[%s3423] ss:$8 sm:$0x7] %vm3135, %v3416
  %3425 = vst.msk [vmem:[%s3423] ss:$8 sm:$0x0] %vm3135, %v3416
  %s3426 = scalar_lea.vmem [#allocation4], 168
  %3427 = vst.msk [vmem:[%s3426] ss:$8 sm:$0x7] %vm3135, %v3420
  %3428 = vst.msk [vmem:[%s3426] ss:$8 sm:$0x0] %vm3135, %v3420
  %v3435 = vrot.slane %v2833, 7
  %v3436 = vrot.slane %v2891, 6
  %v3437 = vrot.slane %v2839, 7
  %v3438 = vrot.slane %v2897, 6
  %v3439 = vsel %vm1038, %v2775, %v3435
  %v3440 = vsel %vm101, %v3439, %v3436
  %v3441 = vsel %vm1038, %v2781, %v3437
  %v3442 = vsel %vm101, %v3441, %v3438
  %s3445 = scalar_lea.vmem [#allocation4], 49
  %3446 = vst.msk [vmem:[%s3445] ss:$8 sm:$0x7] %vm3135, %v3440
  %3447 = vst.msk [vmem:[%s3445] ss:$8 sm:$0x0] %vm3135, %v3440
  %s3448 = scalar_lea.vmem [#allocation4], 169
  %3449 = vst.msk [vmem:[%s3448] ss:$8 sm:$0x7] %vm3135, %v3442
  %3450 = vst.msk [vmem:[%s3448] ss:$8 sm:$0x0] %vm3135, %v3442
  %v3457 = vrot.slane %v3068, 7
  %v3458 = vrot.slane %v3126, 6
  %v3459 = vrot.slane %v3074, 7
  %v3460 = vrot.slane %v3132, 6
  %v3461 = vsel %vm1038, %v3010, %v3457
  %v3462 = vsel %vm101, %v3461, %v3458
  %v3463 = vsel %vm1038, %v3016, %v3459
  %v3464 = vsel %vm101, %v3463, %v3460
  %s3467 = scalar_lea.vmem [#allocation4], 50
  %3468 = vst.msk [vmem:[%s3467] ss:$8 sm:$0x7] %vm3135, %v3462
  %3469 = vst.msk [vmem:[%s3467] ss:$8 sm:$0x0] %vm3135, %v3462
  %s3470 = scalar_lea.vmem [#allocation4], 170
  %3471 = vst.msk [vmem:[%s3470] ss:$8 sm:$0x7] %vm3135, %v3464
  %3472 = vst.msk [vmem:[%s3470] ss:$8 sm:$0x0] %vm3135, %v3464
  %3473 = vst [vmem:[#allocation1] sm:$0xff] %v2775
  %3474 = vst [vmem:[#allocation1 + $0x9] sm:$0xff] %v2833
  %3475 = vst [vmem:[#allocation1 + $0x12] sm:$0xff] %v2891
  %s3476 = scalar_lea.vmem [#allocation1], 1
  %v3477 = vld [vmem:[%s3476] ss:$9 sm:$0xff]
  %3478 = vst [vmem:[#allocation1] sm:$0xff] %v2781
  %3479 = vst [vmem:[#allocation1 + $0x9] sm:$0xff] %v2839
  %3480 = vst [vmem:[#allocation1 + $0x12] sm:$0xff] %v2897
  %v3481 = vld [vmem:[%s3476] ss:$9 sm:$0xff]
  %s3484 = scalar_lea.vmem [#allocation4], 51
  %3485 = vst.msk [vmem:[%s3484] ss:$8 sm:$0x7] %vm3135, %v3477
  %3486 = vst.msk [vmem:[%s3484] ss:$8 sm:$0x0] %vm3135, %v3477
  %s3487 = scalar_lea.vmem [#allocation4], 171
  %3488 = vst.msk [vmem:[%s3487] ss:$8 sm:$0x7] %vm3135, %v3481
  %3489 = vst.msk [vmem:[%s3487] ss:$8 sm:$0x0] %vm3135, %v3481
  %3490 = vst [vmem:[#allocation1] sm:$0xff] %v3010
  %3491 = vst [vmem:[#allocation1 + $0x9] sm:$0xff] %v3068
  %3492 = vst [vmem:[#allocation1 + $0x12] sm:$0xff] %v3126
  %s3493 = scalar_lea.vmem [#allocation1], 1
  %v3494 = vld [vmem:[%s3493] ss:$9 sm:$0xff]
  %3495 = vst [vmem:[#allocation1] sm:$0xff] %v3016
  %3496 = vst [vmem:[#allocation1 + $0x9] sm:$0xff] %v3074
  %3497 = vst [vmem:[#allocation1 + $0x12] sm:$0xff] %v3132
  %v3498 = vld [vmem:[%s3493] ss:$9 sm:$0xff]
  %s3501 = scalar_lea.vmem [#allocation4], 52
  %3502 = vst.msk [vmem:[%s3501] ss:$8 sm:$0x7] %vm3135, %v3494
  %3503 = vst.msk [vmem:[%s3501] ss:$8 sm:$0x0] %vm3135, %v3494
  %s3504 = scalar_lea.vmem [#allocation4], 172
  %3505 = vst.msk [vmem:[%s3504] ss:$8 sm:$0x7] %vm3135, %v3498
  %3506 = vst.msk [vmem:[%s3504] ss:$8 sm:$0x0] %vm3135, %v3498
  %3507 = vst [vmem:[#allocation1] sm:$0xff] %v2775
  %3508 = vst [vmem:[#allocation1 + $0x9] sm:$0xff] %v2833
  %3509 = vst [vmem:[#allocation1 + $0x12] sm:$0xff] %v2891
  %s3510 = scalar_lea.vmem [#allocation1], 2
  %v3511 = vld [vmem:[%s3510] ss:$9 sm:$0xff]
  %3512 = vst [vmem:[#allocation1] sm:$0xff] %v2781
  %3513 = vst [vmem:[#allocation1 + $0x9] sm:$0xff] %v2839
  %3514 = vst [vmem:[#allocation1 + $0x12] sm:$0xff] %v2897
  %v3515 = vld [vmem:[%s3510] ss:$9 sm:$0xff]
  %s3518 = scalar_lea.vmem [#allocation4], 53
  %3519 = vst.msk [vmem:[%s3518] ss:$8 sm:$0x7] %vm3135, %v3511
  %3520 = vst.msk [vmem:[%s3518] ss:$8 sm:$0x0] %vm3135, %v3511
  %s3521 = scalar_lea.vmem [#allocation4], 173
  %3522 = vst.msk [vmem:[%s3521] ss:$8 sm:$0x7] %vm3135, %v3515
  %3523 = vst.msk [vmem:[%s3521] ss:$8 sm:$0x0] %vm3135, %v3515
  %3524 = vst [vmem:[#allocation1] sm:$0xff] %v3010
  %3525 = vst [vmem:[#allocation1 + $0x9] sm:$0xff] %v3068
  %3526 = vst [vmem:[#allocation1 + $0x12] sm:$0xff] %v3126
  %s3527 = scalar_lea.vmem [#allocation1], 2
  %v3528 = vld [vmem:[%s3527] ss:$9 sm:$0xff]
  %3529 = vst [vmem:[#allocation1] sm:$0xff] %v3016
  %3530 = vst [vmem:[#allocation1 + $0x9] sm:$0xff] %v3074
  %3531 = vst [vmem:[#allocation1 + $0x12] sm:$0xff] %v3132
  %v3532 = vld [vmem:[%s3527] ss:$9 sm:$0xff]
  %s3535 = scalar_lea.vmem [#allocation4], 54
  %3536 = vst.msk [vmem:[%s3535] ss:$8 sm:$0x7] %vm3135, %v3528
  %3537 = vst.msk [vmem:[%s3535] ss:$8 sm:$0x0] %vm3135, %v3528
  %s3538 = scalar_lea.vmem [#allocation4], 174
  %3539 = vst.msk [vmem:[%s3538] ss:$8 sm:$0x7] %vm3135, %v3532
  %3540 = vst.msk [vmem:[%s3538] ss:$8 sm:$0x0] %vm3135, %v3532
  %3541 = vst [vmem:[#allocation1] sm:$0xff] %v2775
  %3542 = vst [vmem:[#allocation1 + $0x9] sm:$0xff] %v2833
  %3543 = vst [vmem:[#allocation1 + $0x12] sm:$0xff] %v2891
  %s3544 = scalar_lea.vmem [#allocation1], 3
  %v3545 = vld [vmem:[%s3544] ss:$9 sm:$0xff]
  %3546 = vst [vmem:[#allocation1] sm:$0xff] %v2781
  %3547 = vst [vmem:[#allocation1 + $0x9] sm:$0xff] %v2839
  %3548 = vst [vmem:[#allocation1 + $0x12] sm:$0xff] %v2897
  %v3549 = vld [vmem:[%s3544] ss:$9 sm:$0xff]
  %s3552 = scalar_lea.vmem [#allocation4], 55
  %3553 = vst.msk [vmem:[%s3552] ss:$8 sm:$0x7] %vm3135, %v3545
  %3554 = vst.msk [vmem:[%s3552] ss:$8 sm:$0x0] %vm3135, %v3545
  %s3555 = scalar_lea.vmem [#allocation4], 175
  %3556 = vst.msk [vmem:[%s3555] ss:$8 sm:$0x7] %vm3135, %v3549
  %3557 = vst.msk [vmem:[%s3555] ss:$8 sm:$0x0] %vm3135, %v3549
  %3558 = vst [vmem:[#allocation1] sm:$0xff] %v3010
  %3559 = vst [vmem:[#allocation1 + $0x9] sm:$0xff] %v3068
  %3560 = vst [vmem:[#allocation1 + $0x12] sm:$0xff] %v3126
  %s3561 = scalar_lea.vmem [#allocation1], 3
  %v3562 = vld [vmem:[%s3561] ss:$9 sm:$0xff]
  %3563 = vst [vmem:[#allocation1] sm:$0xff] %v3016
  %3564 = vst [vmem:[#allocation1 + $0x9] sm:$0xff] %v3074
  %3565 = vst [vmem:[#allocation1 + $0x12] sm:$0xff] %v3132
  %v3566 = vld [vmem:[%s3561] ss:$9 sm:$0xff]
  %s3569 = scalar_lea.vmem [#allocation4], 72
  %3570 = vst.msk [vmem:[%s3569] ss:$8 sm:$0x7] %vm3135, %v3562
  %3571 = vst.msk [vmem:[%s3569] ss:$8 sm:$0x0] %vm3135, %v3562
  %s3572 = scalar_lea.vmem [#allocation4], 192
  %3573 = vst.msk [vmem:[%s3572] ss:$8 sm:$0x7] %vm3135, %v3566
  %3574 = vst.msk [vmem:[%s3572] ss:$8 sm:$0x0] %vm3135, %v3566
  %3575 = vst [vmem:[#allocation1] sm:$0xff] %v2775
  %3576 = vst [vmem:[#allocation1 + $0x9] sm:$0xff] %v2833
  %3577 = vst [vmem:[#allocation1 + $0x12] sm:$0xff] %v2891
  %s3578 = scalar_lea.vmem [#allocation1], 4
  %v3579 = vld [vmem:[%s3578] ss:$9 sm:$0xff]
  %3580 = vst [vmem:[#allocation1] sm:$0xff] %v2781
  %3581 = vst [vmem:[#allocation1 + $0x9] sm:$0xff] %v2839
  %3582 = vst [vmem:[#allocation1 + $0x12] sm:$0xff] %v2897
  %v3583 = vld [vmem:[%s3578] ss:$9 sm:$0xff]
  %s3586 = scalar_lea.vmem [#allocation4], 73
  %3587 = vst.msk [vmem:[%s3586] ss:$8 sm:$0x7] %vm3135, %v3579
  %3588 = vst.msk [vmem:[%s3586] ss:$8 sm:$0x0] %vm3135, %v3579
  %s3589 = scalar_lea.vmem [#allocation4], 193
  %3590 = vst.msk [vmem:[%s3589] ss:$8 sm:$0x7] %vm3135, %v3583
  %3591 = vst.msk [vmem:[%s3589] ss:$8 sm:$0x0] %vm3135, %v3583
  %3592 = vst [vmem:[#allocation1] sm:$0xff] %v3010
  %3593 = vst [vmem:[#allocation1 + $0x9] sm:$0xff] %v3068
  %3594 = vst [vmem:[#allocation1 + $0x12] sm:$0xff] %v3126
  %s3595 = scalar_lea.vmem [#allocation1], 4
  %v3596 = vld [vmem:[%s3595] ss:$9 sm:$0xff]
  %3597 = vst [vmem:[#allocation1] sm:$0xff] %v3016
  %3598 = vst [vmem:[#allocation1 + $0x9] sm:$0xff] %v3074
  %3599 = vst [vmem:[#allocation1 + $0x12] sm:$0xff] %v3132
  %v3600 = vld [vmem:[%s3595] ss:$9 sm:$0xff]
  %s3603 = scalar_lea.vmem [#allocation4], 74
  %3604 = vst.msk [vmem:[%s3603] ss:$8 sm:$0x7] %vm3135, %v3596
  %3605 = vst.msk [vmem:[%s3603] ss:$8 sm:$0x0] %vm3135, %v3596
  %s3606 = scalar_lea.vmem [#allocation4], 194
  %3607 = vst.msk [vmem:[%s3606] ss:$8 sm:$0x7] %vm3135, %v3600
  %3608 = vst.msk [vmem:[%s3606] ss:$8 sm:$0x0] %vm3135, %v3600
  %3609 = vst [vmem:[#allocation1] sm:$0xff] %v2775
  %3610 = vst [vmem:[#allocation1 + $0x9] sm:$0xff] %v2833
  %3611 = vst [vmem:[#allocation1 + $0x12] sm:$0xff] %v2891
  %s3612 = scalar_lea.vmem [#allocation1], 5
  %v3613 = vld [vmem:[%s3612] ss:$9 sm:$0xff]
  %3614 = vst [vmem:[#allocation1] sm:$0xff] %v2781
  %3615 = vst [vmem:[#allocation1 + $0x9] sm:$0xff] %v2839
  %3616 = vst [vmem:[#allocation1 + $0x12] sm:$0xff] %v2897
  %v3617 = vld [vmem:[%s3612] ss:$9 sm:$0xff]
  %s3620 = scalar_lea.vmem [#allocation4], 75
  %3621 = vst.msk [vmem:[%s3620] ss:$8 sm:$0x7] %vm3135, %v3613
  %3622 = vst.msk [vmem:[%s3620] ss:$8 sm:$0x0] %vm3135, %v3613
  %s3623 = scalar_lea.vmem [#allocation4], 195
  %3624 = vst.msk [vmem:[%s3623] ss:$8 sm:$0x7] %vm3135, %v3617
  %3625 = vst.msk [vmem:[%s3623] ss:$8 sm:$0x0] %vm3135, %v3617
  %3626 = vst [vmem:[#allocation1] sm:$0xff] %v3010
  %3627 = vst [vmem:[#allocation1 + $0x9] sm:$0xff] %v3068
  %3628 = vst [vmem:[#allocation1 + $0x12] sm:$0xff] %v3126
  %s3629 = scalar_lea.vmem [#allocation1], 5
  %v3630 = vld [vmem:[%s3629] ss:$9 sm:$0xff]
  %3631 = vst [vmem:[#allocation1] sm:$0xff] %v3016
  %3632 = vst [vmem:[#allocation1 + $0x9] sm:$0xff] %v3074
  %3633 = vst [vmem:[#allocation1 + $0x12] sm:$0xff] %v3132
  %v3634 = vld [vmem:[%s3629] ss:$9 sm:$0xff]
  %s3637 = scalar_lea.vmem [#allocation4], 76
  %3638 = vst.msk [vmem:[%s3637] ss:$8 sm:$0x7] %vm3135, %v3630
  %3639 = vst.msk [vmem:[%s3637] ss:$8 sm:$0x0] %vm3135, %v3630
  %s3640 = scalar_lea.vmem [#allocation4], 196
  %3641 = vst.msk [vmem:[%s3640] ss:$8 sm:$0x7] %vm3135, %v3634
  %3642 = vst.msk [vmem:[%s3640] ss:$8 sm:$0x0] %vm3135, %v3634
  %3643 = vst [vmem:[#allocation1] sm:$0xff] %v2775
  %3644 = vst [vmem:[#allocation1 + $0x9] sm:$0xff] %v2833
  %3645 = vst [vmem:[#allocation1 + $0x12] sm:$0xff] %v2891
  %s3646 = scalar_lea.vmem [#allocation1], 6
  %v3647 = vld [vmem:[%s3646] ss:$9 sm:$0xff]
  %3648 = vst [vmem:[#allocation1] sm:$0xff] %v2781
  %3649 = vst [vmem:[#allocation1 + $0x9] sm:$0xff] %v2839
  %3650 = vst [vmem:[#allocation1 + $0x12] sm:$0xff] %v2897
  %v3651 = vld [vmem:[%s3646] ss:$9 sm:$0xff]
  %s3654 = scalar_lea.vmem [#allocation4], 77
  %3655 = vst.msk [vmem:[%s3654] ss:$8 sm:$0x7] %vm3135, %v3647
  %3656 = vst.msk [vmem:[%s3654] ss:$8 sm:$0x0] %vm3135, %v3647
  %s3657 = scalar_lea.vmem [#allocation4], 197
  %3658 = vst.msk [vmem:[%s3657] ss:$8 sm:$0x7] %vm3135, %v3651
  %3659 = vst.msk [vmem:[%s3657] ss:$8 sm:$0x0] %vm3135, %v3651
  %3660 = vst [vmem:[#allocation1] sm:$0xff] %v3010
  %3661 = vst [vmem:[#allocation1 + $0x9] sm:$0xff] %v3068
  %3662 = vst [vmem:[#allocation1 + $0x12] sm:$0xff] %v3126
  %s3663 = scalar_lea.vmem [#allocation1], 6
  %v3664 = vld [vmem:[%s3663] ss:$9 sm:$0xff]
  %3665 = vst [vmem:[#allocation1] sm:$0xff] %v3016
  %3666 = vst [vmem:[#allocation1 + $0x9] sm:$0xff] %v3074
  %3667 = vst [vmem:[#allocation1 + $0x12] sm:$0xff] %v3132
  %v3668 = vld [vmem:[%s3663] ss:$9 sm:$0xff]
  %s3671 = scalar_lea.vmem [#allocation4], 78
  %3672 = vst.msk [vmem:[%s3671] ss:$8 sm:$0x7] %vm3135, %v3664
  %3673 = vst.msk [vmem:[%s3671] ss:$8 sm:$0x0] %vm3135, %v3664
  %s3674 = scalar_lea.vmem [#allocation4], 198
  %3675 = vst.msk [vmem:[%s3674] ss:$8 sm:$0x7] %vm3135, %v3668
  %3676 = vst.msk [vmem:[%s3674] ss:$8 sm:$0x0] %vm3135, %v3668
  %3677 = vst [vmem:[#allocation1] sm:$0xff] %v2775
  %3678 = vst [vmem:[#allocation1 + $0x9] sm:$0xff] %v2833
  %3679 = vst [vmem:[#allocation1 + $0x12] sm:$0xff] %v2891
  %s3680 = scalar_lea.vmem [#allocation1], 7
  %v3681 = vld [vmem:[%s3680] ss:$9 sm:$0xff]
  %3682 = vst [vmem:[#allocation1] sm:$0xff] %v2781
  %3683 = vst [vmem:[#allocation1 + $0x9] sm:$0xff] %v2839
  %3684 = vst [vmem:[#allocation1 + $0x12] sm:$0xff] %v2897
  %v3685 = vld [vmem:[%s3680] ss:$9 sm:$0xff]
  %s3688 = scalar_lea.vmem [#allocation4], 79
  %3689 = vst.msk [vmem:[%s3688] ss:$8 sm:$0x7] %vm3135, %v3681
  %3690 = vst.msk [vmem:[%s3688] ss:$8 sm:$0x0] %vm3135, %v3681
  %s3691 = scalar_lea.vmem [#allocation4], 199
  %3692 = vst.msk [vmem:[%s3691] ss:$8 sm:$0x7] %vm3135, %v3685
  %3693 = vst.msk [vmem:[%s3691] ss:$8 sm:$0x0] %vm3135, %v3685
  %3694 = vst [vmem:[#allocation1] sm:$0xff] %v3010
  %3695 = vst [vmem:[#allocation1 + $0x9] sm:$0xff] %v3068
  %3696 = vst [vmem:[#allocation1 + $0x12] sm:$0xff] %v3126
  %s3697 = scalar_lea.vmem [#allocation1], 7
  %v3698 = vld [vmem:[%s3697] ss:$9 sm:$0xff]
  %3699 = vst [vmem:[#allocation1] sm:$0xff] %v3016
  %3700 = vst [vmem:[#allocation1 + $0x9] sm:$0xff] %v3074
  %3701 = vst [vmem:[#allocation1 + $0x12] sm:$0xff] %v3132
  %v3702 = vld [vmem:[%s3697] ss:$9 sm:$0xff]
  %s3705 = scalar_lea.vmem [#allocation4], 96
  %3706 = vst.msk [vmem:[%s3705] ss:$8 sm:$0x7] %vm3135, %v3698
  %3707 = vst.msk [vmem:[%s3705] ss:$8 sm:$0x0] %vm3135, %v3698
  %s3708 = scalar_lea.vmem [#allocation4], 216
  %3709 = vst.msk [vmem:[%s3708] ss:$8 sm:$0x7] %vm3135, %v3702
  %3710 = vst.msk [vmem:[%s3708] ss:$8 sm:$0x0] %vm3135, %v3702
  %v3711 = vld [vmem:[#allocation4] sm:$0xff]
  %v3712 = vld [vmem:[#allocation4 + $0x8] sm:$0xff]
  %v3713 = vld [vmem:[#allocation4 + $0x10] sm:$0xff]
  %v3714 = vld [vmem:[#allocation4 + $0x18] sm:$0xff]
  %v3715 = vld [vmem:[#allocation4 + $0x20] sm:$0xff]
  %v3716 = vld [vmem:[#allocation4 + $0x28] sm:$0xff]
  %v3717 = vld [vmem:[#allocation4 + $0x30] sm:$0xff]
  %v3718 = vld [vmem:[#allocation4 + $0x38] sm:$0xff]
  %v3719 = vld [vmem:[#allocation4 + $0x40] sm:$0xff]
  %v3720 = vld [vmem:[#allocation4 + $0x48] sm:$0xff]
  %v3721 = vld [vmem:[#allocation4 + $0x50] sm:$0xff]
  %v3722 = vld [vmem:[#allocation4 + $0x58] sm:$0xff]
  %v3723 = vld [vmem:[#allocation4 + $0x60] sm:$0x3]
  %v3724 = vld [vmem:[#allocation4 + $0x68] sm:$0x3]
  %v3725 = vld [vmem:[#allocation4 + $0x70] sm:$0x3]
  %v3726 = vld [vmem:[#allocation4 + $0x78] sm:$0xff]
  %v3727 = vld [vmem:[#allocation4 + $0x80] sm:$0xff]
  %v3728 = vld [vmem:[#allocation4 + $0x88] sm:$0xff]
  %v3729 = vld [vmem:[#allocation4 + $0x90] sm:$0xff]
  %v3730 = vld [vmem:[#allocation4 + $0x98] sm:$0xff]
  %v3731 = vld [vmem:[#allocation4 + $0xa0] sm:$0xff]
  %v3732 = vld [vmem:[#allocation4 + $0xa8] sm:$0xff]
  %v3733 = vld [vmem:[#allocation4 + $0xb0] sm:$0xff]
  %v3734 = vld [vmem:[#allocation4 + $0xb8] sm:$0xff]
  %v3735 = vld [vmem:[#allocation4 + $0xc0] sm:$0xff]
  %v3736 = vld [vmem:[#allocation4 + $0xc8] sm:$0xff]
  %v3737 = vld [vmem:[#allocation4 + $0xd0] sm:$0xff]
  %v3738 = vld [vmem:[#allocation4 + $0xd8] sm:$0x3]
  %v3739 = vld [vmem:[#allocation4 + $0xe0] sm:$0x3]
  %v3740 = vld [vmem:[#allocation4 + $0xe8] sm:$0x3]
  %v3741 = vld [vmem:[%s19] sm:$0xff]
  %v3742 = vld [vmem:[%s19 + $0x8] sm:$0xff]
  %v3743 = vld [vmem:[%s19 + $0x10] sm:$0xff]
  %v3744 = vld [vmem:[%s19 + $0x18] sm:$0xff]
  %v3745 = vld [vmem:[%s19 + $0x20] sm:$0xff]
  %v3746 = vld [vmem:[%s19 + $0x28] sm:$0xff]
  %v3747 = vld [vmem:[%s19 + $0x30] sm:$0xff]
  %v3748 = vld [vmem:[%s19 + $0x38] sm:$0xff]
  %v3749 = vld [vmem:[%s19 + $0x40] sm:$0xff]
  %v3750 = vld [vmem:[%s19 + $0x48] sm:$0xff]
  %v3751 = vld [vmem:[%s19 + $0x50] sm:$0xff]
  %v3752 = vld [vmem:[%s19 + $0x58] sm:$0xff]
  %v3753 = vld [vmem:[%s19 + $0x60] sm:$0xff]
  %v3754 = vld [vmem:[%s19 + $0x68] sm:$0xff]
  %v3755 = vld [vmem:[%s19 + $0x70] sm:$0xff]
  %v3756 = vld [vmem:[%s19 + $0x78] sm:$0xff]
  %v3757 = vld [vmem:[%s19 + $0x80] sm:$0xff]
  %v3758 = vld [vmem:[%s19 + $0x88] sm:$0xff]
  %v3759 = vld [vmem:[%s19 + $0x90] sm:$0xff]
  %v3760 = vld [vmem:[%s19 + $0x98] sm:$0xff]
  %v3761 = vld [vmem:[%s19 + $0xa0] sm:$0xff]
  %v3762 = vld [vmem:[%s19 + $0xa8] sm:$0xff]
  %v3763 = vld [vmem:[%s19 + $0xb0] sm:$0xff]
  %v3764 = vld [vmem:[%s19 + $0xb8] sm:$0xff]
  %v3765 = vld [vmem:[%s19 + $0xc0] sm:$0xff]
  %v3766 = vld [vmem:[%s19 + $0xc8] sm:$0xff]
  %v3767 = vld [vmem:[%s19 + $0xd0] sm:$0xff]
  %v3768 = vld [vmem:[%s19 + $0xd8] sm:$0xff]
  %v3769 = vld [vmem:[%s19 + $0xe0] sm:$0xff]
  %v3770 = vld [vmem:[%s19 + $0xe8] sm:$0xff]
  %v3771 = vld [vmem:[%s19 + $0xf0] sm:$0xff]
  %v3772 = vld [vmem:[%s19 + $0xf8] sm:$0xff]
  %v3773 = vld [vmem:[%s19 + $0x100] sm:$0xff]
  %v3774 = vld [vmem:[%s19 + $0x108] sm:$0xff]
  %v3775 = vld [vmem:[%s19 + $0x110] sm:$0xff]
  %v3776 = vld [vmem:[%s19 + $0x118] sm:$0xff]
  %v3777 = vld [vmem:[%s19 + $0x120] sm:$0xff]
  %v3778 = vld [vmem:[%s19 + $0x128] sm:$0xff]
  %v3779 = vld [vmem:[%s19 + $0x130] sm:$0xff]
  %v3780 = vld [vmem:[%s19 + $0x138] sm:$0xff]
  %v3781 = vld [vmem:[%s19 + $0x140] sm:$0xff]
  %v3782 = vld [vmem:[%s19 + $0x148] sm:$0xff]
  %v3783 = vld [vmem:[%s19 + $0x150] sm:$0xf]
  %v3814 = vrot.slane %v3711, 1
  %v3815 = vrot.slane %v3714, 1
  %v3816 = vsel %vm435, %v3814, %v3815
  %v3817 = vrot.slane %v3712, 1
  %v3818 = vrot.slane %v3715, 1
  %v3819 = vsel %vm435, %v3817, %v3818
  %v3820 = vrot.slane %v3713, 1
  %v3821 = vrot.slane %v3716, 1
  %v3822 = vsel %vm435, %v3820, %v3821
  %v3823 = vrot.slane %v3717, 1
  %v3824 = vsel %vm435, %v3815, %v3823
  %v3825 = vrot.slane %v3718, 1
  %v3826 = vsel %vm435, %v3818, %v3825
  %v3827 = vrot.slane %v3719, 1
  %v3828 = vsel %vm435, %v3821, %v3827
  %v3829 = vrot.slane %v3720, 1
  %v3830 = vsel %vm435, %v3823, %v3829
  %v3831 = vrot.slane %v3721, 1
  %v3832 = vsel %vm435, %v3825, %v3831
  %v3833 = vrot.slane %v3722, 1
  %v3834 = vsel %vm435, %v3827, %v3833
  %v3835 = vrot.slane %v3723, 1
  %v3836 = vsel %vm435, %v3829, %v3835
  %v3837 = vrot.slane %v3724, 1
  %v3838 = vsel %vm435, %v3831, %v3837
  %v3839 = vrot.slane %v3725, 1
  %v3840 = vsel %vm435, %v3833, %v3839
  %v3841 = vrot.slane %v3726, 1
  %v3842 = vrot.slane %v3729, 1
  %v3843 = vsel %vm435, %v3841, %v3842
  %v3844 = vrot.slane %v3727, 1
  %v3845 = vrot.slane %v3730, 1
  %v3846 = vsel %vm435, %v3844, %v3845
  %v3847 = vrot.slane %v3728, 1
  %v3848 = vrot.slane %v3731, 1
  %v3849 = vsel %vm435, %v3847, %v3848
  %v3850 = vrot.slane %v3732, 1
  %v3851 = vsel %vm435, %v3842, %v3850
  %v3852 = vrot.slane %v3733, 1
  %v3853 = vsel %vm435, %v3845, %v3852
  %v3854 = vrot.slane %v3734, 1
  %v3855 = vsel %vm435, %v3848, %v3854
  %v3856 = vrot.slane %v3735, 1
  %v3857 = vsel %vm435, %v3850, %v3856
  %v3858 = vrot.slane %v3736, 1
  %v3859 = vsel %vm435, %v3852, %v3858
  %v3860 = vrot.slane %v3737, 1
  %v3861 = vsel %vm435, %v3854, %v3860
  %v3862 = vrot.slane %v3738, 1
  %v3863 = vsel %vm435, %v3856, %v3862
  %v3864 = vrot.slane %v3739, 1
  %v3865 = vsel %vm435, %v3858, %v3864
  %v3866 = vrot.slane %v3740, 1
  %v3867 = vsel %vm435, %v3860, %v3866
  %s3884 = scalar_lea.vmem %s19, 344
  %v3885 = vld [vmem:[%s3884] sm:$0xff]
  %v3886 = vld [vmem:[%s3884 + $0x8] sm:$0xff]
  %v3887 = vld [vmem:[%s3884 + $0x10] sm:$0xff]
  %v3888 = vld [vmem:[%s3884 + $0x18] sm:$0xff]
  %v3889 = vld [vmem:[%s3884 + $0x20] sm:$0xff]
  %v3890 = vld [vmem:[%s3884 + $0x28] sm:$0xff]
  %v3891 = vld [vmem:[%s3884 + $0x30] sm:$0xff]
  %v3892 = vld [vmem:[%s3884 + $0x38] sm:$0xff]
  %v3893 = vld [vmem:[%s3884 + $0x40] sm:$0xff]
  %v3894 = vld [vmem:[%s3884 + $0x48] sm:$0xff]
  %v3895 = vld [vmem:[%s3884 + $0x50] sm:$0xff]
  %v3896 = vld [vmem:[%s3884 + $0x58] sm:$0xff]
  %v3897 = vld [vmem:[%s3884 + $0x60] sm:$0xff]
  %v3898 = vld [vmem:[%s3884 + $0x68] sm:$0xff]
  %v3899 = vld [vmem:[%s3884 + $0x70] sm:$0xff]
  %v3900 = vld [vmem:[%s3884 + $0x78] sm:$0xff]
  %v3901 = vld [vmem:[%s3884 + $0x80] sm:$0xff]
  %v3902 = vld [vmem:[%s3884 + $0x88] sm:$0xff]
  %v3903 = vld [vmem:[%s3884 + $0x90] sm:$0xff]
  %v3904 = vld [vmem:[%s3884 + $0x98] sm:$0xff]
  %v3905 = vld [vmem:[%s3884 + $0xa0] sm:$0xff]
  %v3906 = vld [vmem:[%s3884 + $0xa8] sm:$0xff]
  %v3907 = vld [vmem:[%s3884 + $0xb0] sm:$0xff]
  %v3908 = vld [vmem:[%s3884 + $0xb8] sm:$0xff]
  %v3909 = vld [vmem:[%s3884 + $0xc0] sm:$0xff]
  %v3910 = vld [vmem:[%s3884 + $0xc8] sm:$0xff]
  %v3911 = vld [vmem:[%s3884 + $0xd0] sm:$0xff]
  %v3912 = vld [vmem:[%s3884 + $0xd8] sm:$0xff]
  %v3913 = vld [vmem:[%s3884 + $0xe0] sm:$0xff]
  %v3914 = vld [vmem:[%s3884 + $0xe8] sm:$0xff]
  %v3915 = vld [vmem:[%s3884 + $0xf0] sm:$0xff]
  %v3916 = vld [vmem:[%s3884 + $0xf8] sm:$0xff]
  %v3917 = vld [vmem:[%s3884 + $0x100] sm:$0xff]
  %v3918 = vld [vmem:[%s3884 + $0x108] sm:$0xff]
  %v3919 = vld [vmem:[%s3884 + $0x110] sm:$0xff]
  %v3920 = vld [vmem:[%s3884 + $0x118] sm:$0xff]
  %v3921 = vld [vmem:[%s3884 + $0x120] sm:$0xff]
  %v3922 = vld [vmem:[%s3884 + $0x128] sm:$0xff]
  %v3923 = vld [vmem:[%s3884 + $0x130] sm:$0xff]
  %v3924 = vld [vmem:[%s3884 + $0x138] sm:$0xff]
  %v3925 = vld [vmem:[%s3884 + $0x140] sm:$0xff]
  %v3926 = vld [vmem:[%s3884 + $0x148] sm:$0xff]
  %v3927 = vld [vmem:[%s3884 + $0x150] sm:$0xf]
  %vm3928 = vcmask 687104
  %v3929 = vsel %vm3928, %v3822, 0
  %v3931 = vsel %vm3928, %v3828, 0
  %v3933 = vsel %vm3928, %v3834, 0
  %v3935 = vsel %vm3928, %v3840, 0
  %v3937 = vsel %vm3928, %v3849, 0
  %v3939 = vsel %vm3928, %v3855, 0
  %v3941 = vsel %vm3928, %v3861, 0
  %v3943 = vsel %vm3928, %v3867, 0
  %vm3945 = vcmask 1043456
  %v3947 = vsel %vm3945, %v3927, 0
  %3949 = vmatpush.msra.mxu0 %v3900
  %3950 = vmatpush.msra.mxu0 %v3899
  %3951 = vmatpush.msra.mxu0 %v3898
  %3952 = vmatpush.msra.mxu0 %v3897
  %3953 = vmatpush.msra.mxu0 %v3896
  %3954 = vmatpush.msra.mxu0 %v3895
  %3955 = vmatpush.msra.mxu0 %v3894
  %3956 = vmatpush.msra.mxu0 %v3893
  %3957 = vmatpush.msra.mxu0 %v3892
  %3958 = vmatpush.msra.mxu0 %v3891
  %3959 = vmatpush.msra.mxu0 %v3890
  %3960 = vmatpush.msra.mxu0 %v3889
  %3961 = vmatpush.msra.mxu0 %v3888
  %3962 = vmatpush.msra.mxu0 %v3887
  %3963 = vmatpush.msra.mxu0 %v3886
  %3964 = vmatpush.msra.mxu0 %v3885
  %3965 = vmatmul.f32.gmra.mxu0 %v3816
  %v3966 = vpop.f32.mrf.mxu0
  %v3967 = vadd.f32 0.0, %v3966
  %3968 = vmatmul.f32.gmra.mxu0 %v3824
  %v3969 = vpop.f32.mrf.mxu0
  %v3970 = vadd.f32 0.0, %v3969
  %3971 = vmatmul.f32.gmra.mxu0 %v3830
  %v3972 = vpop.f32.mrf.mxu0
  %v3973 = vadd.f32 0.0, %v3972
  %3974 = vmatmul.f32.gmra.mxu0 %v3836
  %v3975 = vpop.f32.mrf.mxu0
  %v3976 = vadd.f32 0.0, %v3975
  %3977 = vmatmul.f32.gmra.mxu0 %v3843
  %v3978 = vpop.f32.mrf.mxu0
  %v3979 = vadd.f32 0.0, %v3978
  %3980 = vmatmul.f32.gmra.mxu0 %v3851
  %v3981 = vpop.f32.mrf.mxu0
  %v3982 = vadd.f32 0.0, %v3981
  %3983 = vmatmul.f32.gmra.mxu0 %v3857
  %v3984 = vpop.f32.mrf.mxu0
  %v3985 = vadd.f32 0.0, %v3984
  %3986 = vmatmul.f32.gmra.mxu0 %v3863
  %v3987 = vpop.f32.mrf.mxu0
  %v3988 = vadd.f32 0.0, %v3987
  %3989 = vdwg.mxu0
  %3990 = vmatpush.msra.mxu0 %v3916
  %3991 = vmatpush.msra.mxu0 %v3915
  %3992 = vmatpush.msra.mxu0 %v3914
  %3993 = vmatpush.msra.mxu0 %v3913
  %3994 = vmatpush.msra.mxu0 %v3912
  %3995 = vmatpush.msra.mxu0 %v3911
  %3996 = vmatpush.msra.mxu0 %v3910
  %3997 = vmatpush.msra.mxu0 %v3909
  %3998 = vmatpush.msra.mxu0 %v3908
  %3999 = vmatpush.msra.mxu0 %v3907
  %4000 = vmatpush.msra.mxu0 %v3906
  %4001 = vmatpush.msra.mxu0 %v3905
  %4002 = vmatpush.msra.mxu0 %v3904
  %4003 = vmatpush.msra.mxu0 %v3903
  %4004 = vmatpush.msra.mxu0 %v3902
  %4005 = vmatpush.msra.mxu0 %v3901
  %4006 = vmatmul.f32.gmra.mxu0 %v3819
  %v4007 = vpop.f32.mrf.mxu0
  %v4008 = vadd.f32 %v3967, %v4007
  %4009 = vmatmul.f32.gmra.mxu0 %v3826
  %v4010 = vpop.f32.mrf.mxu0
  %v4011 = vadd.f32 %v3970, %v4010
  %4012 = vmatmul.f32.gmra.mxu0 %v3832
  %v4013 = vpop.f32.mrf.mxu0
  %v4014 = vadd.f32 %v3973, %v4013
  %4015 = vmatmul.f32.gmra.mxu0 %v3838
  %v4016 = vpop.f32.mrf.mxu0
  %v4017 = vadd.f32 %v3976, %v4016
  %4018 = vmatmul.f32.gmra.mxu0 %v3846
  %v4019 = vpop.f32.mrf.mxu0
  %v4020 = vadd.f32 %v3979, %v4019
  %4021 = vmatmul.f32.gmra.mxu0 %v3853
  %v4022 = vpop.f32.mrf.mxu0
  %v4023 = vadd.f32 %v3982, %v4022
  %4024 = vmatmul.f32.gmra.mxu0 %v3859
  %v4025 = vpop.f32.mrf.mxu0
  %v4026 = vadd.f32 %v3985, %v4025
  %4027 = vmatmul.f32.gmra.mxu0 %v3865
  %v4028 = vpop.f32.mrf.mxu0
  %v4029 = vadd.f32 %v3988, %v4028
  %4030 = vdwg.mxu0
  %4031 = vmatpush.msra.mxu0 0.0
  %4032 = vmatpush.msra.mxu0 0.0
  %4033 = vmatpush.msra.mxu0 0.0
  %4034 = vmatpush.msra.mxu0 0.0
  %4035 = vmatpush.msra.mxu0 0.0
  %4036 = vmatpush.msra.mxu0 %v3947
  %4037 = vmatpush.msra.mxu0 %v3926
  %4038 = vmatpush.msra.mxu0 %v3925
  %4039 = vmatpush.msra.mxu0 %v3924
  %4040 = vmatpush.msra.mxu0 %v3923
  %4041 = vmatpush.msra.mxu0 %v3922
  %4042 = vmatpush.msra.mxu0 %v3921
  %4043 = vmatpush.msra.mxu0 %v3920
  %4044 = vmatpush.msra.mxu0 %v3919
  %4045 = vmatpush.msra.mxu0 %v3918
  %4046 = vmatpush.msra.mxu0 %v3917
  %4047 = vmatmul.f32.gmra.mxu0 %v3929
  %v4048 = vpop.f32.mrf.mxu0
  %v4049 = vadd.f32 %v4008, %v4048
  %4050 = vmatmul.f32.gmra.mxu0 %v3931
  %v4051 = vpop.f32.mrf.mxu0
  %v4052 = vadd.f32 %v4011, %v4051
  %4053 = vmatmul.f32.gmra.mxu0 %v3933
  %v4054 = vpop.f32.mrf.mxu0
  %v4055 = vadd.f32 %v4014, %v4054
  %4056 = vmatmul.f32.gmra.mxu0 %v3935
  %v4057 = vpop.f32.mrf.mxu0
  %v4058 = vadd.f32 %v4017, %v4057
  %4059 = vmatmul.f32.gmra.mxu0 %v3937
  %v4060 = vpop.f32.mrf.mxu0
  %v4061 = vadd.f32 %v4020, %v4060
  %4062 = vmatmul.f32.gmra.mxu0 %v3939
  %v4063 = vpop.f32.mrf.mxu0
  %v4064 = vadd.f32 %v4023, %v4063
  %4065 = vmatmul.f32.gmra.mxu0 %v3941
  %v4066 = vpop.f32.mrf.mxu0
  %v4067 = vadd.f32 %v4026, %v4066
  %4068 = vmatmul.f32.gmra.mxu0 %v3943
  %v4069 = vpop.f32.mrf.mxu0
  %v4070 = vadd.f32 %v4029, %v4069
  %4071 = vdwg.mxu0
  %v4072 = vsel %vm3928, %v3713, 0
  %v4074 = vsel %vm3928, %v3716, 0
  %v4076 = vsel %vm3928, %v3719, 0
  %v4078 = vsel %vm3928, %v3722, 0
  %v4080 = vsel %vm3928, %v3728, 0
  %v4082 = vsel %vm3928, %v3731, 0
  %v4084 = vsel %vm3928, %v3734, 0
  %v4086 = vsel %vm3928, %v3737, 0
  %v4089 = vsel %vm3945, %v3783, 0
  %4091 = vmatpush.msra.mxu0 %v3756
  %4092 = vmatpush.msra.mxu0 %v3755
  %4093 = vmatpush.msra.mxu0 %v3754
  %4094 = vmatpush.msra.mxu0 %v3753
  %4095 = vmatpush.msra.mxu0 %v3752
  %4096 = vmatpush.msra.mxu0 %v3751
  %4097 = vmatpush.msra.mxu0 %v3750
  %4098 = vmatpush.msra.mxu0 %v3749
  %4099 = vmatpush.msra.mxu0 %v3748
  %4100 = vmatpush.msra.mxu0 %v3747
  %4101 = vmatpush.msra.mxu0 %v3746
  %4102 = vmatpush.msra.mxu0 %v3745
  %4103 = vmatpush.msra.mxu0 %v3744
  %4104 = vmatpush.msra.mxu0 %v3743
  %4105 = vmatpush.msra.mxu0 %v3742
  %4106 = vmatpush.msra.mxu0 %v3741
  %4107 = vmatmul.f32.gmra.mxu0 %v3711
  %v4108 = vpop.f32.mrf.mxu0
  %v4109 = vadd.f32 %v4049, %v4108
  %4110 = vmatmul.f32.gmra.mxu0 %v3714
  %v4111 = vpop.f32.mrf.mxu0
  %v4112 = vadd.f32 %v4052, %v4111
  %4113 = vmatmul.f32.gmra.mxu0 %v3717
  %v4114 = vpop.f32.mrf.mxu0
  %v4115 = vadd.f32 %v4055, %v4114
  %4116 = vmatmul.f32.gmra.mxu0 %v3720
  %v4117 = vpop.f32.mrf.mxu0
  %v4118 = vadd.f32 %v4058, %v4117
  %4119 = vmatmul.f32.gmra.mxu0 %v3726
  %v4120 = vpop.f32.mrf.mxu0
  %v4121 = vadd.f32 %v4061, %v4120
  %4122 = vmatmul.f32.gmra.mxu0 %v3729
  %v4123 = vpop.f32.mrf.mxu0
  %v4124 = vadd.f32 %v4064, %v4123
  %4125 = vmatmul.f32.gmra.mxu0 %v3732
  %v4126 = vpop.f32.mrf.mxu0
  %v4127 = vadd.f32 %v4067, %v4126
  %4128 = vmatmul.f32.gmra.mxu0 %v3735
  %v4129 = vpop.f32.mrf.mxu0
  %v4130 = vadd.f32 %v4070, %v4129
  %4131 = vdwg.mxu0
  %4132 = vmatpush.msra.mxu0 %v3772
  %4133 = vmatpush.msra.mxu0 %v3771
  %4134 = vmatpush.msra.mxu0 %v3770
  %4135 = vmatpush.msra.mxu0 %v3769
  %4136 = vmatpush.msra.mxu0 %v3768
  %4137 = vmatpush.msra.mxu0 %v3767
  %4138 = vmatpush.msra.mxu0 %v3766
  %4139 = vmatpush.msra.mxu0 %v3765
  %4140 = vmatpush.msra.mxu0 %v3764
  %4141 = vmatpush.msra.mxu0 %v3763
  %4142 = vmatpush.msra.mxu0 %v3762
  %4143 = vmatpush.msra.mxu0 %v3761
  %4144 = vmatpush.msra.mxu0 %v3760
  %4145 = vmatpush.msra.mxu0 %v3759
  %4146 = vmatpush.msra.mxu0 %v3758
  %4147 = vmatpush.msra.mxu0 %v3757
  %4148 = vmatmul.f32.gmra.mxu0 %v3712
  %v4149 = vpop.f32.mrf.mxu0
  %v4150 = vadd.f32 %v4109, %v4149
  %4151 = vmatmul.f32.gmra.mxu0 %v3715
  %v4152 = vpop.f32.mrf.mxu0
  %v4153 = vadd.f32 %v4112, %v4152
  %4154 = vmatmul.f32.gmra.mxu0 %v3718
  %v4155 = vpop.f32.mrf.mxu0
  %v4156 = vadd.f32 %v4115, %v4155
  %4157 = vmatmul.f32.gmra.mxu0 %v3721
  %v4158 = vpop.f32.mrf.mxu0
  %v4159 = vadd.f32 %v4118, %v4158
  %4160 = vmatmul.f32.gmra.mxu0 %v3727
  %v4161 = vpop.f32.mrf.mxu0
  %v4162 = vadd.f32 %v4121, %v4161
  %4163 = vmatmul.f32.gmra.mxu0 %v3730
  %v4164 = vpop.f32.mrf.mxu0
  %v4165 = vadd.f32 %v4124, %v4164
  %4166 = vmatmul.f32.gmra.mxu0 %v3733
  %v4167 = vpop.f32.mrf.mxu0
  %v4168 = vadd.f32 %v4127, %v4167
  %4169 = vmatmul.f32.gmra.mxu0 %v3736
  %v4170 = vpop.f32.mrf.mxu0
  %v4171 = vadd.f32 %v4130, %v4170
  %4172 = vdwg.mxu0
  %4173 = vmatpush.msra.mxu0 0.0
  %4174 = vmatpush.msra.mxu0 0.0
  %4175 = vmatpush.msra.mxu0 0.0
  %4176 = vmatpush.msra.mxu0 0.0
  %4177 = vmatpush.msra.mxu0 0.0
  %4178 = vmatpush.msra.mxu0 %v4089
  %4179 = vmatpush.msra.mxu0 %v3782
  %4180 = vmatpush.msra.mxu0 %v3781
  %4181 = vmatpush.msra.mxu0 %v3780
  %4182 = vmatpush.msra.mxu0 %v3779
  %4183 = vmatpush.msra.mxu0 %v3778
  %4184 = vmatpush.msra.mxu0 %v3777
  %4185 = vmatpush.msra.mxu0 %v3776
  %4186 = vmatpush.msra.mxu0 %v3775
  %4187 = vmatpush.msra.mxu0 %v3774
  %4188 = vmatpush.msra.mxu0 %v3773
  %4189 = vmatmul.f32.gmra.mxu0 %v4072
  %v4190 = vpop.f32.mrf.mxu0
  %v4191 = vadd.f32 %v4150, %v4190
  %4192 = vmatmul.f32.gmra.mxu0 %v4074
  %v4193 = vpop.f32.mrf.mxu0
  %v4194 = vadd.f32 %v4153, %v4193
  %4195 = vmatmul.f32.gmra.mxu0 %v4076
  %v4196 = vpop.f32.mrf.mxu0
  %v4197 = vadd.f32 %v4156, %v4196
  %4198 = vmatmul.f32.gmra.mxu0 %v4078
  %v4199 = vpop.f32.mrf.mxu0
  %v4200 = vadd.f32 %v4159, %v4199
  %4201 = vmatmul.f32.gmra.mxu0 %v4080
  %v4202 = vpop.f32.mrf.mxu0
  %v4203 = vadd.f32 %v4162, %v4202
  %4204 = vmatmul.f32.gmra.mxu0 %v4082
  %v4205 = vpop.f32.mrf.mxu0
  %v4206 = vadd.f32 %v4165, %v4205
  %4207 = vmatmul.f32.gmra.mxu0 %v4084
  %v4208 = vpop.f32.mrf.mxu0
  %v4209 = vadd.f32 %v4168, %v4208
  %4210 = vmatmul.f32.gmra.mxu0 %v4086
  %v4211 = vpop.f32.mrf.mxu0
  %v4212 = vadd.f32 %v4171, %v4211
  %4213 = vdwg.mxu0
  %v4214 = vrot.slane %v3711, 2
  %v4215 = vrot.slane %v3714, 2
  %v4216 = vsel %vm508, %v4214, %v4215
  %v4217 = vrot.slane %v3712, 2
  %v4218 = vrot.slane %v3715, 2
  %v4219 = vsel %vm508, %v4217, %v4218
  %v4220 = vrot.slane %v3713, 2
  %v4221 = vrot.slane %v3716, 2
  %v4222 = vsel %vm508, %v4220, %v4221
  %v4223 = vrot.slane %v3717, 2
  %v4224 = vsel %vm508, %v4215, %v4223
  %v4225 = vrot.slane %v3718, 2
  %v4226 = vsel %vm508, %v4218, %v4225
  %v4227 = vrot.slane %v3719, 2
  %v4228 = vsel %vm508, %v4221, %v4227
  %v4229 = vrot.slane %v3720, 2
  %v4230 = vsel %vm508, %v4223, %v4229
  %v4231 = vrot.slane %v3721, 2
  %v4232 = vsel %vm508, %v4225, %v4231
  %v4233 = vrot.slane %v3722, 2
  %v4234 = vsel %vm508, %v4227, %v4233
  %v4235 = vrot.slane %v3723, 2
  %v4236 = vsel %vm508, %v4229, %v4235
  %v4237 = vrot.slane %v3724, 2
  %v4238 = vsel %vm508, %v4231, %v4237
  %v4239 = vrot.slane %v3725, 2
  %v4240 = vsel %vm508, %v4233, %v4239
  %v4241 = vrot.slane %v3726, 2
  %v4242 = vrot.slane %v3729, 2
  %v4243 = vsel %vm508, %v4241, %v4242
  %v4244 = vrot.slane %v3727, 2
  %v4245 = vrot.slane %v3730, 2
  %v4246 = vsel %vm508, %v4244, %v4245
  %v4247 = vrot.slane %v3728, 2
  %v4248 = vrot.slane %v3731, 2
  %v4249 = vsel %vm508, %v4247, %v4248
  %v4250 = vrot.slane %v3732, 2
  %v4251 = vsel %vm508, %v4242, %v4250
  %v4252 = vrot.slane %v3733, 2
  %v4253 = vsel %vm508, %v4245, %v4252
  %v4254 = vrot.slane %v3734, 2
  %v4255 = vsel %vm508, %v4248, %v4254
  %v4256 = vrot.slane %v3735, 2
  %v4257 = vsel %vm508, %v4250, %v4256
  %v4258 = vrot.slane %v3736, 2
  %v4259 = vsel %vm508, %v4252, %v4258
  %v4260 = vrot.slane %v3737, 2
  %v4261 = vsel %vm508, %v4254, %v4260
  %v4262 = vrot.slane %v3738, 2
  %v4263 = vsel %vm508, %v4256, %v4262
  %v4264 = vrot.slane %v3739, 2
  %v4265 = vsel %vm508, %v4258, %v4264
  %v4266 = vrot.slane %v3740, 2
  %v4267 = vsel %vm508, %v4260, %v4266
  %s4284 = scalar_lea.vmem %s19, 688
  %v4285 = vld [vmem:[%s4284] sm:$0xff]
  %v4286 = vld [vmem:[%s4284 + $0x8] sm:$0xff]
  %v4287 = vld [vmem:[%s4284 + $0x10] sm:$0xff]
  %v4288 = vld [vmem:[%s4284 + $0x18] sm:$0xff]
  %v4289 = vld [vmem:[%s4284 + $0x20] sm:$0xff]
  %v4290 = vld [vmem:[%s4284 + $0x28] sm:$0xff]
  %v4291 = vld [vmem:[%s4284 + $0x30] sm:$0xff]
  %v4292 = vld [vmem:[%s4284 + $0x38] sm:$0xff]
  %v4293 = vld [vmem:[%s4284 + $0x40] sm:$0xff]
  %v4294 = vld [vmem:[%s4284 + $0x48] sm:$0xff]
  %v4295 = vld [vmem:[%s4284 + $0x50] sm:$0xff]
  %v4296 = vld [vmem:[%s4284 + $0x58] sm:$0xff]
  %v4297 = vld [vmem:[%s4284 + $0x60] sm:$0xff]
  %v4298 = vld [vmem:[%s4284 + $0x68] sm:$0xff]
  %v4299 = vld [vmem:[%s4284 + $0x70] sm:$0xff]
  %v4300 = vld [vmem:[%s4284 + $0x78] sm:$0xff]
  %v4301 = vld [vmem:[%s4284 + $0x80] sm:$0xff]
  %v4302 = vld [vmem:[%s4284 + $0x88] sm:$0xff]
  %v4303 = vld [vmem:[%s4284 + $0x90] sm:$0xff]
  %v4304 = vld [vmem:[%s4284 + $0x98] sm:$0xff]
  %v4305 = vld [vmem:[%s4284 + $0xa0] sm:$0xff]
  %v4306 = vld [vmem:[%s4284 + $0xa8] sm:$0xff]
  %v4307 = vld [vmem:[%s4284 + $0xb0] sm:$0xff]
  %v4308 = vld [vmem:[%s4284 + $0xb8] sm:$0xff]
  %v4309 = vld [vmem:[%s4284 + $0xc0] sm:$0xff]
  %v4310 = vld [vmem:[%s4284 + $0xc8] sm:$0xff]
  %v4311 = vld [vmem:[%s4284 + $0xd0] sm:$0xff]
  %v4312 = vld [vmem:[%s4284 + $0xd8] sm:$0xff]
  %v4313 = vld [vmem:[%s4284 + $0xe0] sm:$0xff]
  %v4314 = vld [vmem:[%s4284 + $0xe8] sm:$0xff]
  %v4315 = vld [vmem:[%s4284 + $0xf0] sm:$0xff]
  %v4316 = vld [vmem:[%s4284 + $0xf8] sm:$0xff]
  %v4317 = vld [vmem:[%s4284 + $0x100] sm:$0xff]
  %v4318 = vld [vmem:[%s4284 + $0x108] sm:$0xff]
  %v4319 = vld [vmem:[%s4284 + $0x110] sm:$0xff]
  %v4320 = vld [vmem:[%s4284 + $0x118] sm:$0xff]
  %v4321 = vld [vmem:[%s4284 + $0x120] sm:$0xff]
  %v4322 = vld [vmem:[%s4284 + $0x128] sm:$0xff]
  %v4323 = vld [vmem:[%s4284 + $0x130] sm:$0xff]
  %v4324 = vld [vmem:[%s4284 + $0x138] sm:$0xff]
  %v4325 = vld [vmem:[%s4284 + $0x140] sm:$0xff]
  %v4326 = vld [vmem:[%s4284 + $0x148] sm:$0xff]
  %v4327 = vld [vmem:[%s4284 + $0x150] sm:$0xf]
  %v4328 = vsel %vm3928, %v4222, 0
  %v4330 = vsel %vm3928, %v4228, 0
  %v4332 = vsel %vm3928, %v4234, 0
  %v4334 = vsel %vm3928, %v4240, 0
  %v4336 = vsel %vm3928, %v4249, 0
  %v4338 = vsel %vm3928, %v4255, 0
  %v4340 = vsel %vm3928, %v4261, 0
  %v4342 = vsel %vm3928, %v4267, 0
  %v4345 = vsel %vm3945, %v4327, 0
  %4347 = vmatpush.msra.mxu0 %v4300
  %4348 = vmatpush.msra.mxu0 %v4299
  %4349 = vmatpush.msra.mxu0 %v4298
  %4350 = vmatpush.msra.mxu0 %v4297
  %4351 = vmatpush.msra.mxu0 %v4296
  %4352 = vmatpush.msra.mxu0 %v4295
  %4353 = vmatpush.msra.mxu0 %v4294
  %4354 = vmatpush.msra.mxu0 %v4293
  %4355 = vmatpush.msra.mxu0 %v4292
  %4356 = vmatpush.msra.mxu0 %v4291
  %4357 = vmatpush.msra.mxu0 %v4290
  %4358 = vmatpush.msra.mxu0 %v4289
  %4359 = vmatpush.msra.mxu0 %v4288
  %4360 = vmatpush.msra.mxu0 %v4287
  %4361 = vmatpush.msra.mxu0 %v4286
  %4362 = vmatpush.msra.mxu0 %v4285
  %4363 = vmatmul.f32.gmra.mxu0 %v4216
  %v4364 = vpop.f32.mrf.mxu0
  %v4365 = vadd.f32 0.0, %v4364
  %4366 = vmatmul.f32.gmra.mxu0 %v4224
  %v4367 = vpop.f32.mrf.mxu0
  %v4368 = vadd.f32 0.0, %v4367
  %4369 = vmatmul.f32.gmra.mxu0 %v4230
  %v4370 = vpop.f32.mrf.mxu0
  %v4371 = vadd.f32 0.0, %v4370
  %4372 = vmatmul.f32.gmra.mxu0 %v4236
  %v4373 = vpop.f32.mrf.mxu0
  %v4374 = vadd.f32 0.0, %v4373
  %4375 = vmatmul.f32.gmra.mxu0 %v4243
  %v4376 = vpop.f32.mrf.mxu0
  %v4377 = vadd.f32 0.0, %v4376
  %4378 = vmatmul.f32.gmra.mxu0 %v4251
  %v4379 = vpop.f32.mrf.mxu0
  %v4380 = vadd.f32 0.0, %v4379
  %4381 = vmatmul.f32.gmra.mxu0 %v4257
  %v4382 = vpop.f32.mrf.mxu0
  %v4383 = vadd.f32 0.0, %v4382
  %4384 = vmatmul.f32.gmra.mxu0 %v4263
  %v4385 = vpop.f32.mrf.mxu0
  %v4386 = vadd.f32 0.0, %v4385
  %4387 = vdwg.mxu0
  %4388 = vmatpush.msra.mxu0 %v4316
  %4389 = vmatpush.msra.mxu0 %v4315
  %4390 = vmatpush.msra.mxu0 %v4314
  %4391 = vmatpush.msra.mxu0 %v4313
  %4392 = vmatpush.msra.mxu0 %v4312
  %4393 = vmatpush.msra.mxu0 %v4311
  %4394 = vmatpush.msra.mxu0 %v4310
  %4395 = vmatpush.msra.mxu0 %v4309
  %4396 = vmatpush.msra.mxu0 %v4308
  %4397 = vmatpush.msra.mxu0 %v4307
  %4398 = vmatpush.msra.mxu0 %v4306
  %4399 = vmatpush.msra.mxu0 %v4305
  %4400 = vmatpush.msra.mxu0 %v4304
  %4401 = vmatpush.msra.mxu0 %v4303
  %4402 = vmatpush.msra.mxu0 %v4302
  %4403 = vmatpush.msra.mxu0 %v4301
  %4404 = vmatmul.f32.gmra.mxu0 %v4219
  %v4405 = vpop.f32.mrf.mxu0
  %v4406 = vadd.f32 %v4365, %v4405
  %4407 = vmatmul.f32.gmra.mxu0 %v4226
  %v4408 = vpop.f32.mrf.mxu0
  %v4409 = vadd.f32 %v4368, %v4408
  %4410 = vmatmul.f32.gmra.mxu0 %v4232
  %v4411 = vpop.f32.mrf.mxu0
  %v4412 = vadd.f32 %v4371, %v4411
  %4413 = vmatmul.f32.gmra.mxu0 %v4238
  %v4414 = vpop.f32.mrf.mxu0
  %v4415 = vadd.f32 %v4374, %v4414
  %4416 = vmatmul.f32.gmra.mxu0 %v4246
  %v4417 = vpop.f32.mrf.mxu0
  %v4418 = vadd.f32 %v4377, %v4417
  %4419 = vmatmul.f32.gmra.mxu0 %v4253
  %v4420 = vpop.f32.mrf.mxu0
  %v4421 = vadd.f32 %v4380, %v4420
  %4422 = vmatmul.f32.gmra.mxu0 %v4259
  %v4423 = vpop.f32.mrf.mxu0
  %v4424 = vadd.f32 %v4383, %v4423
  %4425 = vmatmul.f32.gmra.mxu0 %v4265
  %v4426 = vpop.f32.mrf.mxu0
  %v4427 = vadd.f32 %v4386, %v4426
  %4428 = vdwg.mxu0
  %4429 = vmatpush.msra.mxu0 0.0
  %4430 = vmatpush.msra.mxu0 0.0
  %4431 = vmatpush.msra.mxu0 0.0
  %4432 = vmatpush.msra.mxu0 0.0
  %4433 = vmatpush.msra.mxu0 0.0
  %4434 = vmatpush.msra.mxu0 %v4345
  %4435 = vmatpush.msra.mxu0 %v4326
  %4436 = vmatpush.msra.mxu0 %v4325
  %4437 = vmatpush.msra.mxu0 %v4324
  %4438 = vmatpush.msra.mxu0 %v4323
  %4439 = vmatpush.msra.mxu0 %v4322
  %4440 = vmatpush.msra.mxu0 %v4321
  %4441 = vmatpush.msra.mxu0 %v4320
  %4442 = vmatpush.msra.mxu0 %v4319
  %4443 = vmatpush.msra.mxu0 %v4318
  %4444 = vmatpush.msra.mxu0 %v4317
  %4445 = vmatmul.f32.gmra.mxu0 %v4328
  %v4446 = vpop.f32.mrf.mxu0
  %v4447 = vadd.f32 %v4406, %v4446
  %4448 = vmatmul.f32.gmra.mxu0 %v4330
  %v4449 = vpop.f32.mrf.mxu0
  %v4450 = vadd.f32 %v4409, %v4449
  %4451 = vmatmul.f32.gmra.mxu0 %v4332
  %v4452 = vpop.f32.mrf.mxu0
  %v4453 = vadd.f32 %v4412, %v4452
  %4454 = vmatmul.f32.gmra.mxu0 %v4334
  %v4455 = vpop.f32.mrf.mxu0
  %v4456 = vadd.f32 %v4415, %v4455
  %4457 = vmatmul.f32.gmra.mxu0 %v4336
  %v4458 = vpop.f32.mrf.mxu0
  %v4459 = vadd.f32 %v4418, %v4458
  %4460 = vmatmul.f32.gmra.mxu0 %v4338
  %v4461 = vpop.f32.mrf.mxu0
  %v4462 = vadd.f32 %v4421, %v4461
  %4463 = vmatmul.f32.gmra.mxu0 %v4340
  %v4464 = vpop.f32.mrf.mxu0
  %v4465 = vadd.f32 %v4424, %v4464
  %4466 = vmatmul.f32.gmra.mxu0 %v4342
  %v4467 = vpop.f32.mrf.mxu0
  %v4468 = vadd.f32 %v4427, %v4467
  %4469 = vdwg.mxu0
  %v4470 = vadd.f32 %v4191, %v4447
  %v4471 = vadd.f32 %v4194, %v4450
  %v4472 = vadd.f32 %v4197, %v4453
  %v4473 = vadd.f32 %v4200, %v4456
  %v4474 = vadd.f32 %v4203, %v4459
  %v4475 = vadd.f32 %v4206, %v4462
  %v4476 = vadd.f32 %v4209, %v4465
  %v4477 = vadd.f32 %v4212, %v4468
  %v4478 = vld [vmem:[%s20] sm:$0x1]
  %v4479 = vld [vmem:[%s22] sm:$0x7]
  %vm4480 = vcmask 23552
  %v4482 = vsel %vm4480, %v4478, 0
  %vm4484 = vcmask 1042432
  %v4486 = vsel %vm4484, %v4479, 0
  %4488 = vmatpush.msra.mxu0 0.0
  %4489 = vmatpush.msra.mxu0 0.0
  %4490 = vmatpush.msra.mxu0 0.0
  %4491 = vmatpush.msra.mxu0 0.0
  %4492 = vmatpush.msra.mxu0 0.0
  %4493 = vmatpush.msra.mxu0 0.0
  %4494 = vmatpush.msra.mxu0 0.0
  %4495 = vmatpush.msra.mxu0 0.0
  %4496 = vmatpush.msra.mxu0 0.0
  %4497 = vmatpush.msra.mxu0 0.0
  %4498 = vmatpush.msra.mxu0 0.0
  %4499 = vmatpush.msra.mxu0 0.0
  %4500 = vmatpush.msra.mxu0 0.0
  %4501 = vmatpush.msra.mxu0 0.0
  %4502 = vmatpush.msra.mxu0 0.0
  %4503 = vmatpush.msra.mxu0 %v4486
  %4504 = vmatmul.f32.gmra.mxu0 %v4482
  %v4505 = vpop.f32.mrf.mxu0
  %v4506 = vadd.f32 0.0, %v4505
  %4507 = vdwg.mxu0
  %v4508 = vperm.slane %v4506, 0
  %v4509 = vadd.f32 %v4470, %v4508
  %v4510 = vadd.f32 %v4471, %v4508
  %v4511 = vadd.f32 %v4472, %v4508
  %v4512 = vadd.f32 %v4473, %v4508
  %v4513 = vadd.f32 %v4474, %v4508
  %v4514 = vadd.f32 %v4475, %v4508
  %v4515 = vadd.f32 %v4476, %v4508
  %v4516 = vadd.f32 %v4477, %v4508
  %v4517 = vld [vmem:[%s21] sm:$0xff]
  %v4518 = vld [vmem:[%s21 + $0x8] sm:$0xff]
  %v4519 = vld [vmem:[%s21 + $0x10] sm:$0xff]
  %v4520 = vld [vmem:[%s21 + $0x18] sm:$0xff]
  %v4521 = vld [vmem:[%s21 + $0x20] sm:$0xff]
  %v4522 = vld [vmem:[%s21 + $0x28] sm:$0xff]
  %v4523 = vld [vmem:[%s21 + $0x30] sm:$0xff]
  %v4524 = vld [vmem:[%s21 + $0x38] sm:$0xff]
  %v4525 = vld [vmem:[%s21 + $0x40] sm:$0xff]
  %v4526 = vld [vmem:[%s21 + $0x48] sm:$0xff]
  %v4527 = vld [vmem:[%s21 + $0x50] sm:$0xff]
  %v4528 = vld [vmem:[%s21 + $0x58] sm:$0xff]
  %vm4529 = vcmask 785408
  %v4531 = vsel %vm4529, %v4509, 0
  %v4534 = vsel %vm4529, %v4510, 0
  %v4537 = vsel %vm4529, %v4511, 0
  %v4540 = vsel %vm4529, %v4512, 0
  %v4543 = vsel %vm4529, %v4513, 0
  %v4546 = vsel %vm4529, %v4514, 0
  %v4549 = vsel %vm4529, %v4515, 0
  %v4552 = vsel %vm4529, %v4516, 0
  %4554 = vmatpush.msra.mxu0 0.0
  %4555 = vmatpush.msra.mxu0 0.0
  %4556 = vmatpush.msra.mxu0 0.0
  %4557 = vmatpush.msra.mxu0 0.0
  %4558 = vmatpush.msra.mxu0 %v4528
  %4559 = vmatpush.msra.mxu0 %v4527
  %4560 = vmatpush.msra.mxu0 %v4526
  %4561 = vmatpush.msra.mxu0 %v4525
  %4562 = vmatpush.msra.mxu0 %v4524
  %4563 = vmatpush.msra.mxu0 %v4523
  %4564 = vmatpush.msra.mxu0 %v4522
  %4565 = vmatpush.msra.mxu0 %v4521
  %4566 = vmatpush.msra.mxu0 %v4520
  %4567 = vmatpush.msra.mxu0 %v4519
  %4568 = vmatpush.msra.mxu0 %v4518
  %4569 = vmatpush.msra.mxu0 %v4517
  %4570 = vmatmul.f32.gmra.mxu0 %v4531
  %v4571 = vpop.f32.mrf.mxu0
  %v4572 = vadd.f32 0.0, %v4571
  %4573 = vmatmul.f32.gmra.mxu0 %v4534
  %v4574 = vpop.f32.mrf.mxu0
  %v4575 = vadd.f32 0.0, %v4574
  %4576 = vmatmul.f32.gmra.mxu0 %v4537
  %v4577 = vpop.f32.mrf.mxu0
  %v4578 = vadd.f32 0.0, %v4577
  %4579 = vmatmul.f32.gmra.mxu0 %v4540
  %v4580 = vpop.f32.mrf.mxu0
  %v4581 = vadd.f32 0.0, %v4580
  %4582 = vmatmul.f32.gmra.mxu0 %v4543
  %v4583 = vpop.f32.mrf.mxu0
  %v4584 = vadd.f32 0.0, %v4583
  %4585 = vmatmul.f32.gmra.mxu0 %v4546
  %v4586 = vpop.f32.mrf.mxu0
  %v4587 = vadd.f32 0.0, %v4586
  %4588 = vmatmul.f32.gmra.mxu0 %v4549
  %v4589 = vpop.f32.mrf.mxu0
  %v4590 = vadd.f32 0.0, %v4589
  %4591 = vmatmul.f32.gmra.mxu0 %v4552
  %v4592 = vpop.f32.mrf.mxu0
  %v4593 = vadd.f32 0.0, %v4592
  %4594 = vdwg.mxu0
  %v4595 = vsel %vm4480, %v4572, 0.0
  %v4596 = vsel %vm4480, %v4575, 0.0
  %v4597 = vadd.f32 %v4595, %v4596
  %v4598 = vsel %vm4480, %v4578, 0.0
  %v4599 = vadd.f32 %v4597, %v4598
  %v4600 = vsel %vm4480, %v4581, 0.0
  %v4601 = vadd.f32 %v4599, %v4600
  %v4602 = vsel %vm4480, %v4584, 0.0
  %v4603 = vadd.f32 %v4601, %v4602
  %v4604 = vsel %vm4480, %v4587, 0.0
  %v4605 = vadd.f32 %v4603, %v4604
  %v4606 = vsel %vm4480, %v4590, 0.0
  %v4607 = vadd.f32 %v4605, %v4606
  %v4608 = vsel %vm4480, %v4593, 0.0
  %v4609 = vadd.f32 %v4607, %v4608
  %v4610 = vrot.slane %v4609, 4
  %v4611 = vadd.f32 %v4609, %v4610
  %v4612 = vrot.slane %v4611, 2
  %v4613 = vadd.f32 %v4611, %v4612
  %v4614 = vrot.slane %v4613, 1
  %v4615 = vadd.f32 %v4613, %v4614
  %v4616 = vrcp.pop 2048.0
  %v4617 = vmul.f32 2048.0, %v4616
  %v4618 = vsub.f32 1.0, %v4617
  %v4619 = vmul.f32 %v4616, %v4618
  %v4620 = vadd.f32 %v4616, %v4619
  %vm4621 = vweird.f32 %v4616
  %v4622 = vsel %vm4621, %v4616, %v4620
  %v4623 = vmul.f32 %v4615, %v4622
  %v4625 = vsel %vm4480, %v4623, 0
  %4627 = vmatpush.msra.mxu0 0.0
  %4628 = vmatpush.msra.mxu0 0.0
  %4629 = vmatpush.msra.mxu0 0.0
  %4630 = vmatpush.msra.mxu0 0.0
  %4631 = vmatpush.msra.mxu0 0.0
  %4632 = vmatpush.msra.mxu0 0.0
  %4633 = vmatpush.msra.mxu0 0.0
  %4634 = vmatpush.msra.mxu0 0.0
  %4635 = vmatpush.msra.mxu0 0.0
  %4636 = vmatpush.msra.mxu0 0.0
  %4637 = vmatpush.msra.mxu0 0.0
  %4638 = vmatpush.msra.mxu0 0.0
  %4639 = vmatpush.msra.mxu0 0.0
  %4640 = vmatpush.msra.mxu0 0.0
  %4641 = vmatpush.msra.mxu0 0.0
  %4642 = vmatpush.msra.mxu0 %v4486
  %4643 = vmatmul.f32.gmra.mxu0 %v4625
  %v4644 = vpop.f32.mrf.mxu0
  %v4645 = vadd.f32 0.0, %v4644
  %4646 = vdwg.mxu0
  %v4647 = vperm.slane %v4645, 0
  %v4648 = vsub.f32 %v4509, %v4647
  %v4649 = vsub.f32 %v4510, %v4647
  %v4650 = vsub.f32 %v4511, %v4647
  %v4651 = vsub.f32 %v4512, %v4647
  %v4652 = vsub.f32 %v4513, %v4647
  %v4653 = vsub.f32 %v4514, %v4647
  %v4654 = vsub.f32 %v4515, %v4647
  %v4655 = vsub.f32 %v4516, %v4647
  %v4656 = vmul.f32 %v4648, %v4648
  %v4657 = vmul.f32 %v4649, %v4649
  %v4658 = vmul.f32 %v4650, %v4650
  %v4659 = vmul.f32 %v4651, %v4651
  %v4660 = vmul.f32 %v4652, %v4652
  %v4661 = vmul.f32 %v4653, %v4653
  %v4662 = vmul.f32 %v4654, %v4654
  %v4663 = vmul.f32 %v4655, %v4655
  %v4665 = vsel %vm4529, %v4656, 0
  %v4668 = vsel %vm4529, %v4657, 0
  %v4671 = vsel %vm4529, %v4658, 0
  %v4674 = vsel %vm4529, %v4659, 0
  %v4677 = vsel %vm4529, %v4660, 0
  %v4680 = vsel %vm4529, %v4661, 0
  %v4683 = vsel %vm4529, %v4662, 0
  %v4686 = vsel %vm4529, %v4663, 0
  %4688 = vmatpush.msra.mxu0 0.0
  %4689 = vmatpush.msra.mxu0 0.0
  %4690 = vmatpush.msra.mxu0 0.0
  %4691 = vmatpush.msra.mxu0 0.0
  %4692 = vmatpush.msra.mxu0 %v4528
  %4693 = vmatpush.msra.mxu0 %v4527
  %4694 = vmatpush.msra.mxu0 %v4526
  %4695 = vmatpush.msra.mxu0 %v4525
  %4696 = vmatpush.msra.mxu0 %v4524
  %4697 = vmatpush.msra.mxu0 %v4523
  %4698 = vmatpush.msra.mxu0 %v4522
  %4699 = vmatpush.msra.mxu0 %v4521
  %4700 = vmatpush.msra.mxu0 %v4520
  %4701 = vmatpush.msra.mxu0 %v4519
  %4702 = vmatpush.msra.mxu0 %v4518
  %4703 = vmatpush.msra.mxu0 %v4517
  %4704 = vmatmul.f32.gmra.mxu0 %v4665
  %v4705 = vpop.f32.mrf.mxu0
  %v4706 = vadd.f32 0.0, %v4705
  %4707 = vmatmul.f32.gmra.mxu0 %v4668
  %v4708 = vpop.f32.mrf.mxu0
  %v4709 = vadd.f32 0.0, %v4708
  %4710 = vmatmul.f32.gmra.mxu0 %v4671
  %v4711 = vpop.f32.mrf.mxu0
  %v4712 = vadd.f32 0.0, %v4711
  %4713 = vmatmul.f32.gmra.mxu0 %v4674
  %v4714 = vpop.f32.mrf.mxu0
  %v4715 = vadd.f32 0.0, %v4714
  %4716 = vmatmul.f32.gmra.mxu0 %v4677
  %v4717 = vpop.f32.mrf.mxu0
  %v4718 = vadd.f32 0.0, %v4717
  %4719 = vmatmul.f32.gmra.mxu0 %v4680
  %v4720 = vpop.f32.mrf.mxu0
  %v4721 = vadd.f32 0.0, %v4720
  %4722 = vmatmul.f32.gmra.mxu0 %v4683
  %v4723 = vpop.f32.mrf.mxu0
  %v4724 = vadd.f32 0.0, %v4723
  %4725 = vmatmul.f32.gmra.mxu0 %v4686
  %v4726 = vpop.f32.mrf.mxu0
  %v4727 = vadd.f32 0.0, %v4726
  %4728 = vdwg.mxu0
  %v4729 = vsel %vm4480, %v4706, 0.0
  %v4730 = vsel %vm4480, %v4709, 0.0
  %v4731 = vadd.f32 %v4729, %v4730
  %v4732 = vsel %vm4480, %v4712, 0.0
  %v4733 = vadd.f32 %v4731, %v4732
  %v4734 = vsel %vm4480, %v4715, 0.0
  %v4735 = vadd.f32 %v4733, %v4734
  %v4736 = vsel %vm4480, %v4718, 0.0
  %v4737 = vadd.f32 %v4735, %v4736
  %v4738 = vsel %vm4480, %v4721, 0.0
  %v4739 = vadd.f32 %v4737, %v4738
  %v4740 = vsel %vm4480, %v4724, 0.0
  %v4741 = vadd.f32 %v4739, %v4740
  %v4742 = vsel %vm4480, %v4727, 0.0
  %v4743 = vadd.f32 %v4741, %v4742
  %v4744 = vrot.slane %v4743, 4
  %v4745 = vadd.f32 %v4743, %v4744
  %v4746 = vrot.slane %v4745, 2
  %v4747 = vadd.f32 %v4745, %v4746
  %v4748 = vrot.slane %v4747, 1
  %v4749 = vadd.f32 %v4747, %v4748
  %v4750 = vmul.f32 %v4749, %v4622
  %v4751 = vadd.f32 %v4750, 1e-05
  %v4752 = vrsqrt.pop %v4751
  %v4753 = vmul.f32 %v4752, %v4751
  %v4754 = vmul.f32 %v4753, %v4752
  %v4755 = vmul.f32 0.5, %v4754
  %v4756 = vsub.f32 1.5, %v4755
  %v4757 = vmul.f32 %v4752, %v4756
  %vm4758 = vweird.f32 %v4751
  %vm4759 = vweird.f32 %v4752
  %vm4760 = vmor %vm4758, %vm4759
  %v4761 = vsel %vm4760, %v4752, %v4757
  %v4762 = vld [vmem:[%s23] sm:$0x1]
  %v4763 = vmul.f32 %v4761, %v4762
  %v4765 = vsel %vm4480, %v4763, 0
  %4767 = vmatpush.msra.mxu0 0.0
  %4768 = vmatpush.msra.mxu0 0.0
  %4769 = vmatpush.msra.mxu0 0.0
  %4770 = vmatpush.msra.mxu0 0.0
  %4771 = vmatpush.msra.mxu0 0.0
  %4772 = vmatpush.msra.mxu0 0.0
  %4773 = vmatpush.msra.mxu0 0.0
  %4774 = vmatpush.msra.mxu0 0.0
  %4775 = vmatpush.msra.mxu0 0.0
  %4776 = vmatpush.msra.mxu0 0.0
  %4777 = vmatpush.msra.mxu0 0.0
  %4778 = vmatpush.msra.mxu0 0.0
  %4779 = vmatpush.msra.mxu0 0.0
  %4780 = vmatpush.msra.mxu0 0.0
  %4781 = vmatpush.msra.mxu0 0.0
  %4782 = vmatpush.msra.mxu0 %v4486
  %4783 = vmatmul.f32.gmra.mxu0 %v4765
  %v4784 = vpop.f32.mrf.mxu0
  %v4785 = vadd.f32 0.0, %v4784
  %4786 = vdwg.mxu0
  %v4787 = vld [vmem:[%s24] sm:$0x1]
  %v4789 = vsel %vm4480, %v4787, 0
  %4791 = vmatpush.msra.mxu0 0.0
  %4792 = vmatpush.msra.mxu0 0.0
  %4793 = vmatpush.msra.mxu0 0.0
  %4794 = vmatpush.msra.mxu0 0.0
  %4795 = vmatpush.msra.mxu0 0.0
  %4796 = vmatpush.msra.mxu0 0.0
  %4797 = vmatpush.msra.mxu0 0.0
  %4798 = vmatpush.msra.mxu0 0.0
  %4799 = vmatpush.msra.mxu0 0.0
  %4800 = vmatpush.msra.mxu0 0.0
  %4801 = vmatpush.msra.mxu0 0.0
  %4802 = vmatpush.msra.mxu0 0.0
  %4803 = vmatpush.msra.mxu0 0.0
  %4804 = vmatpush.msra.mxu0 0.0
  %4805 = vmatpush.msra.mxu0 0.0
  %4806 = vmatpush.msra.mxu0 %v4486
  %4807 = vmatmul.f32.gmra.mxu0 %v4789
  %v4808 = vpop.f32.mrf.mxu0
  %v4809 = vadd.f32 0.0, %v4808
  %4810 = vdwg.mxu0
  %v4811 = vperm.slane %v4785, 0
  %v4812 = vmul.f32 %v4648, %v4811
  %v4813 = vmul.f32 %v4649, %v4811
  %v4814 = vmul.f32 %v4650, %v4811
  %v4815 = vmul.f32 %v4651, %v4811
  %v4816 = vmul.f32 %v4652, %v4811
  %v4817 = vmul.f32 %v4653, %v4811
  %v4818 = vmul.f32 %v4654, %v4811
  %v4819 = vmul.f32 %v4655, %v4811
  %v4820 = vperm.slane %v4809, 0
  %v4821 = vadd.f32 %v4812, %v4820
  %v4822 = vadd.f32 %v4813, %v4820
  %v4823 = vadd.f32 %v4814, %v4820
  %v4824 = vadd.f32 %v4815, %v4820
  %v4825 = vadd.f32 %v4816, %v4820
  %v4826 = vadd.f32 %v4817, %v4820
  %v4827 = vadd.f32 %v4818, %v4820
  %v4828 = vadd.f32 %v4819, %v4820
  %v4829 = vtanh.pop %v4821
  %v4830 = vtanh.pop %v4822
  %v4831 = vtanh.pop %v4823
  %v4832 = vtanh.pop %v4824
  %v4833 = vtanh.pop %v4825
  %v4834 = vtanh.pop %v4826
  %v4835 = vtanh.pop %v4827
  %v4836 = vtanh.pop %v4828
  %4837 = vst.msk [vmem:[%s25] sm:$0xff] %vm4529, %v4829
  %4838 = vst.msk [vmem:[%s25 + $0x8] sm:$0xff] %vm4529, %v4830
  %4839 = vst.msk [vmem:[%s25 + $0x10] sm:$0xff] %vm4529, %v4831
  %4840 = vst.msk [vmem:[%s25 + $0x18] sm:$0xff] %vm4529, %v4832
  %4841 = vst.msk [vmem:[%s25 + $0x20] sm:$0xff] %vm4529, %v4833
  %4842 = vst.msk [vmem:[%s25 + $0x28] sm:$0xff] %vm4529, %v4834
  %4843 = vst.msk [vmem:[%s25 + $0x30] sm:$0xff] %vm4529, %v4835
  %4844 = vst.msk [vmem:[%s25 + $0x38] sm:$0xff] %vm4529, %v4836
  // Predicated region
  $region102: #{decoder_forward.1} parent=0 // pred_check
    _
  $region103: #{decoder_forward.1} parent=0 // pred_check_branch
    %4846 = sbr.rel (0) target = $region105
  $region104: #{decoder_forward.1} parent=0 // pred_region
    _
  $region105: #{decoder_forward.1} parent=0 // pred_fallthru
    _
  // Predicated region
  $region106: #{decoder_forward.1} parent=0 // pred_check
    _
  $region107: #{decoder_forward.1} parent=0 // pred_check_branch
    %4848 = sbr.rel (0) target = $region109
  $region108: #{decoder_forward.1} parent=0 // pred_region
    _
  $region109: #{decoder_forward.1} parent=0 // pred_fallthru
    _

</llo_original>
